<compile_context>
chip_gen: v6e
topology: v6e:2x2x1
jax: 0.10.0
libtpu: 0.0.40
codegen_flags: <defaults>
</compile_context>

<pallas_src>
import numpy as np
import jax
import jax.numpy as jnp
from jax.experimental import pallas as pl
from jax.experimental.pallas import tpu as pltpu

# ----------------------------- configuration -------------------------------
N_FEAT_IMG = 6          # "features" input width
N_FEAT_CMD = 2          # "command" input width
N_FEATURES = N_FEAT_IMG + N_FEAT_CMD
N_NEURONS = 19          # AutoNCP units
N_OUTPUTS = 3           # steer / throttle / brake
B = 2
T = 8

BP = 8                  # padded batch (sublanes)
P = 128                 # padded lane width (features / hidden / weight dims)
G = 4                   # CfC gates: ff1, ff2, time_a, time_b
N_LAYERS = 3            # NCP layers: inter, command, motor
BIAS_LANE = P - 1       # constant-1 lane driving the bias row of the weights


# ------------- AutoNCP wiring (re-implementation of ncps wiring) -----------
# Builds the NCP sparsity masks used by WiredCfCCell (ff1 / ff2 weights are
# masked; time_a / time_b are dense, as in ncps CfCCell).
# TODO(synk): exact RNG call order of ncps.wirings.AutoNCP(seed=0) is
# approximated (same algorithm / fanouts, synthetic deterministic graph).
def build_ncp_masks(n_sensory, units, outputs, sparsity_level=0.5, seed=0):
    rng = np.random.RandomState(seed)
    density = 1.0 - sparsity_level
    inter_and_command = units - outputs
    n_command = max(int(0.4 * inter_and_command), 1)
    n_inter = inter_and_command - n_command
    sensory_fanout = max(int(n_inter * density), 1)
    inter_fanout = max(int(n_command * density), 1)
    recurrent_command = max(int(n_command * density * 2), 1)
    motor_fanin = max(int(n_command * density), 1)

    motor = list(range(0, outputs))
    command = list(range(outputs, outputs + n_command))
    inter = list(range(outputs + n_command, units))
    sensory = list(range(n_sensory))

    adj = np.zeros((units, units), dtype=np.float32)
    sens_adj = np.zeros((n_sensory, units), dtype=np.float32)

    # sensory -> inter
    unreachable = list(inter)
    for src in sensory:
        for dest in rng.choice(inter, size=sensory_fanout, replace=False):
            if dest in unreachable:
                unreachable.remove(dest)
            sens_adj[src, dest] = rng.choice([-1, 1])
    mean_fanin = int(np.clip(int(n_sensory * sensory_fanout / n_inter), 1, n_sensory))
    for dest in unreachable:
        for src in rng.choice(sensory, size=mean_fanin, replace=False):
            sens_adj[src, dest] = rng.choice([-1, 1])

    # inter -> command
    unreachable = list(command)
    for src in inter:
        for dest in rng.choice(command, size=inter_fanout, replace=False):
            if dest in unreachable:
                unreachable.remove(dest)
            adj[src, dest] = rng.choice([-1, 1])
    mean_fanin = int(np.clip(int(n_inter * inter_fanout / n_command), 1, n_command))
    for dest in unreachable:
        for src in rng.choice(inter, size=mean_fanin, replace=False):
            adj[src, dest] = rng.choice([-1, 1])

    # recurrent command synapses
    for _ in range(recurrent_command):
        src = int(rng.choice(command))
        dest = int(rng.choice(command))
        adj[src, dest] = rng.choice([-1, 1])

    # command -> motor
    unreachable = list(command)
    for dest in motor:
        for src in rng.choice(command, size=motor_fanin, replace=False):
            if src in unreachable:
                unreachable.remove(src)
            adj[src, dest] = rng.choice([-1, 1])
    mean_fanout = int(np.clip(int(outputs * motor_fanin / n_command), 1, outputs))
    for src in unreachable:
        for dest in rng.choice(motor, size=mean_fanout, replace=False):
            adj[src, dest] = rng.choice([-1, 1])

    # per-layer sparsity masks, shape (in_l + hid_l, hid_l), ordered [input; hidden]
    layers = [inter, command, motor]
    masks = []
    for l, neurons in enumerate(layers):
        if l == 0:
            inp_sp = sens_adj[:, neurons]
        else:
            inp_sp = adj[:, neurons][layers[l - 1], :]
        mask = np.concatenate(
            [np.abs(inp_sp), np.ones((len(neurons), len(neurons)), np.float32)], axis=0)
        masks.append(mask.astype(np.float32))
    layer_sizes = [len(x) for x in layers]
    return masks, layer_sizes


# ------------------------------ parameters ---------------------------------
def make_params(key):
    masks, layer_sizes = build_ncp_masks(N_FEATURES, N_NEURONS, N_OUTPUTS, seed=0)
    in_dims = [N_FEATURES, layer_sizes[0], layer_sizes[1]]

    # Disjoint lane bands per layer: layer l's INPUT lives at lanes
    # [in_off[l], in_off[l]+in_l), its HIDDEN state at [hid_off[l], +hid_l).
    # Layer l+1's input band == layer l's hidden band (its output).  The motor
    # layer's output is placed at lanes [0, N_OUTPUTS) so the control heads and
    # output slicing are trivial.  Lane 127 is reserved for the bias "1".
    in_off = [0]
    hid_off = []
    for l in range(N_LAYERS):
        if l < N_LAYERS - 1:
            hid_off.append(in_off[l] + in_dims[l])
            in_off.append(hid_off[l])
        else:
            hid_off.append(0)
    for l in range(N_LAYERS):          # sanity: bands disjoint & fit, bias lane free
        a, c = in_off[l], hid_off[l]
        assert a + in_dims[l] <= BIAS_LANE and c + layer_sizes[l] <= BIAS_LANE
        assert (a + in_dims[l] <= c) or (c + layer_sizes[l] <= a)

    # One packed weight tile per layer: rows = lane positions of [input|hidden|bias],
    # columns = 4 gates side by side (gate g's hidden units at cols g*P+hid_off..).
    w_packed = np.zeros((N_LAYERS, P, G * P), np.float32)

    W_list, b_list = [], []
    for l in range(N_LAYERS):
        in_l, hid_l = in_dims[l], layer_sizes[l]
        a, c = in_off[l], hid_off[l]
        cat = in_l + hid_l
        Wg, bg = [], []
        for g in range(G):           # gates: ff1, ff2, time_a, time_b
            key, k1, k2 = jax.random.split(key, 3)
            w = jax.random.normal(k1, (cat, hid_l), jnp.float32) / np.sqrt(cat)
            b = jax.random.normal(k2, (hid_l,), jnp.float32) * 0.1
            if g in (0, 1):          # NCP sparsity applied to ff1 / ff2 only
                w = w * masks[l]
            w = np.asarray(w)
            b = np.asarray(b)
            Wg.append(w)
            bg.append(b)
            col = g * P + c
            w_packed[l, a:a + in_l, col:col + hid_l] = w[:in_l]      # input part
            w_packed[l, c:c + hid_l, col:col + hid_l] = w[in_l:]     # hidden part
            w_packed[l, BIAS_LANE, col:col + hid_l] = b              # bias row
        W_list.append(Wg)
        b_list.append(bg)

    return dict(
        w_packed=jnp.asarray(w_packed, dtype=jnp.bfloat16),   # bf16 for MXU / HBM
        layer_sizes=layer_sizes, in_dims=in_dims,
        in_off=in_off, hid_off=hid_off,
        W=W_list, b=b_list)


# ------------------------------ Pallas kernel -------------------------------
def cfc_seq_kernel(x_ref, w_ref, ctrl_ref, hx_ref):
    # x_ref   : (T, BP, P)       f32  -- time-major padded inputs
    # w_ref   : (N_LAYERS, P, 4P) bf16 -- packed [input|hidden|bias] x 4 gates
    # ctrl_ref: (T, BP, P)       f32  -- control heads (lanes 0..2 valid)
    # hx_ref  : (N_LAYERS, BP, P) f32 -- final hidden state per layer (lane bands)

    # hoisted constants (JAX does not CSE broadcast_in_dim inside loops)
    lane = jax.lax.broadcasted_iota(jnp.int32, (BP, P), 1)
    one_lane = (lane == BIAS_LANE).astype(jnp.float32)   # constant-1 bias lane
    is_lane0 = lane == 0                                  # steer lane (tanh head)

    # hidden state carried in vregs; hx=None -> zeros
    hs = [jnp.zeros((BP, P), jnp.float32) for _ in range(N_LAYERS)]

    # T and N_LAYERS are tiny and static: fully unroll (straight-line 24 matmuls).
    for t in range(T):
        inp = x_ref[t]                                    # (BP, P) f32
        for l in range(N_LAYERS):
            # "concat([input, hidden]) + bias-one": disjoint lane bands -> plain add
            cat = inp + hs[l] + one_lane
            # one (8,128)x(128,512) bf16 matmul covers all 4 gates of this layer
            z = jnp.dot(cat.astype(jnp.bfloat16), w_ref[l],
                        preferred_element_type=jnp.float32)          # (BP, 4P) f32
            ff1 = jnp.tanh(z[:, 0 * P:1 * P])
            ff2 = jnp.tanh(z[:, 1 * P:2 * P])
            t_interp = jax.nn.sigmoid(z[:, 2 * P:3 * P] + z[:, 3 * P:4 * P])  # ts=1.0
            h_new = ff1 * (1.0 - t_interp) + t_interp * ff2          # CfC "default"
            hs[l] = h_new
            inp = h_new                                              # feeds next layer

        # control heads on motor output (lane 0: tanh / steer, others: sigmoid)
        ctrl_ref[t] = jnp.where(is_lane0, jnp.tanh(inp), jax.nn.sigmoid(inp))

    for l in range(N_LAYERS):
        hx_ref[l] = hs[l]


# ------------------------------ wrapper -------------------------------------
def cond_ncp_forward(features, command, params):
    # glue: concat + pad to the kernel layout (T, BP, P)
    x = jnp.concatenate([features, command], axis=-1)        # (B, T, F)
    x = jnp.transpose(x, (1, 0, 2)).astype(jnp.float32)      # (T, B, F)
    x_pad = jnp.zeros((T, BP, P), jnp.float32).at[:, :B, :N_FEATURES].set(x)

    ctrl_pad, hx_pad = pl.pallas_call(
        cfc_seq_kernel,
        out_shape=(jax.ShapeDtypeStruct((T, BP, P), jnp.float32),
                   jax.ShapeDtypeStruct((N_LAYERS, BP, P), jnp.float32)),
        in_specs=[pl.BlockSpec(memory_space=pltpu.MemorySpace.VMEM),
                  pl.BlockSpec(memory_space=pltpu.MemorySpace.VMEM)],
        out_specs=(pl.BlockSpec(memory_space=pltpu.MemorySpace.VMEM),
                   pl.BlockSpec(memory_space=pltpu.MemorySpace.VMEM)),
    )(x_pad, params["w_packed"])

    controls = jnp.transpose(ctrl_pad[:, :B, :N_OUTPUTS], (1, 0, 2))   # (B, T, 3)
    ls = params["layer_sizes"]
    off = params["hid_off"]
    hx = jnp.concatenate(
        [hx_pad[l, :B, off[l]:off[l] + ls[l]] for l in range(N_LAYERS)], axis=-1)
    return controls, hx


# --------------------------- plain-JAX reference ----------------------------
def ref_forward(features, command, params):
    x = jnp.concatenate([features, command], axis=-1)
    ls = params["layer_sizes"]
    h = [jnp.zeros((B, s), jnp.float32) for s in ls]
    outs = []
    for t in range(T):
        inp = x[:, t]
        for l in range(N_LAYERS):
            cat = jnp.concatenate([inp, h[l]], axis=-1)
            W, bb = params["W"][l], params["b"][l]
            ff1 = jnp.tanh(cat @ W[0] + bb[0])
            ff2 = jnp.tanh(cat @ W[1] + bb[1])
            ti = jax.nn.sigmoid((cat @ W[2] + bb[2]) * 1.0 + (cat @ W[3] + bb[3]))
            hn = ff1 * (1.0 - ti) + ti * ff2
            h[l] = hn
            inp = hn
        outs.append(inp)
    y = jnp.stack(outs, axis=1)                                # (B, T, n_outputs)
    controls = jnp.stack([jnp.tanh(y[:, :, 0]),
                          jax.nn.sigmoid(y[:, :, 1]),
                          jax.nn.sigmoid(y[:, :, 2])], axis=2)
    hx = jnp.concatenate(h, axis=-1)
    return controls, hx


# --------------------------------- main --------------------------------------
if __name__ == "__main__":
    key = jax.random.PRNGKey(0)
    kp, kf, kc = jax.random.split(key, 3)
    params = make_params(kp)

    features = jax.random.normal(kf, (B, T, N_FEAT_IMG), jnp.float32)
    command = jax.random.normal(kc, (B, T, N_FEAT_CMD), jnp.float32)

    controls, hx = cond_ncp_forward(features, command, params)
    jax.block_until_ready((controls, hx))

    assert controls.shape == (B, T, 3) and hx.shape == (B, N_NEURONS)

    c_ref, h_ref = ref_forward(features, command, params)
    np.testing.assert_allclose(np.asarray(controls), np.asarray(c_ref),
                               rtol=2e-2, atol=2e-2)
    np.testing.assert_allclose(np.asarray(hx), np.asarray(h_ref),
                               rtol=2e-2, atol=2e-2)

    print("KERNEL_OK")
</pallas_src>

<mosaic_0001>
module attributes {stable_mosaic.version = 11 : i64} {
  func.func @cfc_seq_kernel(%arg0: memref<8x8x128xf32, #tpu.memory_space<vmem>>, %arg1: memref<3x128x512xbf16, #tpu.memory_space<vmem>>, %arg2: memref<8x8x128xf32, #tpu.memory_space<vmem>>, %arg3: memref<3x8x128xf32, #tpu.memory_space<vmem>>) attributes {dimension_semantics = [], scalar_prefetch = 0 : i64, scratch_operands = 0 : i64, tpu.core_type = #tpu.core_type<tc>} {
    %0 = tpu.iota {dimensions = array<i32: 1>} : vector<8x128xi32>
    %c127_i32 = arith.constant 127 : i32
    %1 = vector.broadcast %c127_i32 : i32 to vector<8x128xi32>
    %2 = arith.cmpi eq, %0, %1 : vector<8x128xi32>
    %3 = arith.extui %2 : vector<8x128xi1> to vector<8x128xi32>
    %4 = arith.sitofp %3 : vector<8x128xi32> to vector<8x128xf32>
    %c0_i32 = arith.constant 0 : i32
    %5 = vector.broadcast %c0_i32 : i32 to vector<8x128xi32>
    %6 = arith.cmpi eq, %0, %5 : vector<8x128xi32>
    %cst = arith.constant 0.000000e+00 : f32
    %7 = vector.broadcast %cst : f32 to vector<8x128xf32>
    %cst_0 = arith.constant 0.000000e+00 : f32
    %8 = vector.broadcast %cst_0 : f32 to vector<8x128xf32>
    %cst_1 = arith.constant 0.000000e+00 : f32
    %9 = vector.broadcast %cst_1 : f32 to vector<8x128xf32>
    %c0 = arith.constant 0 : index
    %c0_2 = arith.constant 0 : index
    %c0_3 = arith.constant 0 : index
    %10 = vector.load %arg0[%c0, %c0_2, %c0_3] : memref<8x8x128xf32, #tpu.memory_space<vmem>>, vector<1x8x128xf32>
    %11 = vector.shape_cast %10 : vector<1x8x128xf32> to vector<8x128xf32>
    %12 = arith.addf %11, %7 : vector<8x128xf32>
    %13 = arith.addf %12, %4 : vector<8x128xf32>
    %14 = arith.truncf %13 : vector<8x128xf32> to vector<8x128xbf16>
    %c0_4 = arith.constant 0 : index
    %c0_5 = arith.constant 0 : index
    %c0_6 = arith.constant 0 : index
    %15 = vector.load %arg1[%c0_4, %c0_5, %c0_6] : memref<3x128x512xbf16, #tpu.memory_space<vmem>>, vector<1x128x512xbf16>
    %16 = vector.shape_cast %15 : vector<1x128x512xbf16> to vector<128x512xbf16>
    %cst_7 = arith.constant dense<0.000000e+00> : vector<8x512xf32>
    %17 = tpu.matmul %14, %16, %cst_7 {dimension_numbers = #tpu.dot_dimension_numbers<[1], [0], [0], [1], [0, 0, 1, 1], [], []>} : vector<8x128xbf16>, vector<128x512xbf16>, vector<8x512xf32> -> vector<8x512xf32>
    %18 = vector.extract_strided_slice %17 {offsets = [0, 0], sizes = [8, 128], strides = [1, 1]} : vector<8x512xf32> to vector<8x128xf32>
    %19 = math.tanh %18 : vector<8x128xf32>
    %20 = vector.extract_strided_slice %17 {offsets = [0, 128], sizes = [8, 128], strides = [1, 1]} : vector<8x512xf32> to vector<8x128xf32>
    %21 = math.tanh %20 : vector<8x128xf32>
    %22 = vector.extract_strided_slice %17 {offsets = [0, 256], sizes = [8, 128], strides = [1, 1]} : vector<8x512xf32> to vector<8x128xf32>
    %23 = vector.extract_strided_slice %17 {offsets = [0, 384], sizes = [8, 128], strides = [1, 1]} : vector<8x512xf32> to vector<8x128xf32>
    %24 = arith.addf %22, %23 : vector<8x128xf32>
    %25 = arith.negf %24 : vector<8x128xf32>
    %26 = math.exp %25 : vector<8x128xf32>
    %cst_8 = arith.constant 1.000000e+00 : f32
    %27 = vector.broadcast %cst_8 : f32 to vector<8x128xf32>
    %28 = arith.addf %27, %26 : vector<8x128xf32>
    %29 = arith.divf %27, %28 : vector<8x128xf32>
    %cst_9 = arith.constant 1.000000e+00 : f32
    %30 = vector.broadcast %cst_9 : f32 to vector<8x128xf32>
    %31 = arith.subf %30, %29 : vector<8x128xf32>
    %32 = arith.mulf %19, %31 : vector<8x128xf32>
    %33 = arith.mulf %29, %21 : vector<8x128xf32>
    %34 = arith.addf %32, %33 : vector<8x128xf32>
    %35 = arith.addf %34, %8 : vector<8x128xf32>
    %36 = arith.addf %35, %4 : vector<8x128xf32>
    %37 = arith.truncf %36 : vector<8x128xf32> to vector<8x128xbf16>
    %c1 = arith.constant 1 : index
    %c0_10 = arith.constant 0 : index
    %c0_11 = arith.constant 0 : index
    %38 = vector.load %arg1[%c1, %c0_10, %c0_11] : memref<3x128x512xbf16, #tpu.memory_space<vmem>>, vector<1x128x512xbf16>
    %39 = vector.shape_cast %38 : vector<1x128x512xbf16> to vector<128x512xbf16>
    %cst_12 = arith.constant dense<0.000000e+00> : vector<8x512xf32>
    %40 = tpu.matmul %37, %39, %cst_12 {dimension_numbers = #tpu.dot_dimension_numbers<[1], [0], [0], [1], [0, 0, 1, 1], [], []>} : vector<8x128xbf16>, vector<128x512xbf16>, vector<8x512xf32> -> vector<8x512xf32>
    %41 = vector.extract_strided_slice %40 {offsets = [0, 0], sizes = [8, 128], strides = [1, 1]} : vector<8x512xf32> to vector<8x128xf32>
    %42 = math.tanh %41 : vector<8x128xf32>
    %43 = vector.extract_strided_slice %40 {offsets = [0, 128], sizes = [8, 128], strides = [1, 1]} : vector<8x512xf32> to vector<8x128xf32>
    %44 = math.tanh %43 : vector<8x128xf32>
    %45 = vector.extract_strided_slice %40 {offsets = [0, 256], sizes = [8, 128], strides = [1, 1]} : vector<8x512xf32> to vector<8x128xf32>
    %46 = vector.extract_strided_slice %40 {offsets = [0, 384], sizes = [8, 128], strides = [1, 1]} : vector<8x512xf32> to vector<8x128xf32>
    %47 = arith.addf %45, %46 : vector<8x128xf32>
    %48 = arith.negf %47 : vector<8x128xf32>
    %49 = math.exp %48 : vector<8x128xf32>
    %cst_13 = arith.constant 1.000000e+00 : f32
    %50 = vector.broadcast %cst_13 : f32 to vector<8x128xf32>
    %51 = arith.addf %50, %49 : vector<8x128xf32>
    %52 = arith.divf %50, %51 : vector<8x128xf32>
    %cst_14 = arith.constant 1.000000e+00 : f32
    %53 = vector.broadcast %cst_14 : f32 to vector<8x128xf32>
    %54 = arith.subf %53, %52 : vector<8x128xf32>
    %55 = arith.mulf %42, %54 : vector<8x128xf32>
    %56 = arith.mulf %52, %44 : vector<8x128xf32>
    %57 = arith.addf %55, %56 : vector<8x128xf32>
    %58 = arith.addf %57, %9 : vector<8x128xf32>
    %59 = arith.addf %58, %4 : vector<8x128xf32>
    %60 = arith.truncf %59 : vector<8x128xf32> to vector<8x128xbf16>
    %c2 = arith.constant 2 : index
    %c0_15 = arith.constant 0 : index
    %c0_16 = arith.constant 0 : index
    %61 = vector.load %arg1[%c2, %c0_15, %c0_16] : memref<3x128x512xbf16, #tpu.memory_space<vmem>>, vector<1x128x512xbf16>
    %62 = vector.shape_cast %61 : vector<1x128x512xbf16> to vector<128x512xbf16>
    %cst_17 = arith.constant dense<0.000000e+00> : vector<8x512xf32>
    %63 = tpu.matmul %60, %62, %cst_17 {dimension_numbers = #tpu.dot_dimension_numbers<[1], [0], [0], [1], [0, 0, 1, 1], [], []>} : vector<8x128xbf16>, vector<128x512xbf16>, vector<8x512xf32> -> vector<8x512xf32>
    %64 = vector.extract_strided_slice %63 {offsets = [0, 0], sizes = [8, 128], strides = [1, 1]} : vector<8x512xf32> to vector<8x128xf32>
    %65 = math.tanh %64 : vector<8x128xf32>
    %66 = vector.extract_strided_slice %63 {offsets = [0, 128], sizes = [8, 128], strides = [1, 1]} : vector<8x512xf32> to vector<8x128xf32>
    %67 = math.tanh %66 : vector<8x128xf32>
    %68 = vector.extract_strided_slice %63 {offsets = [0, 256], sizes = [8, 128], strides = [1, 1]} : vector<8x512xf32> to vector<8x128xf32>
    %69 = vector.extract_strided_slice %63 {offsets = [0, 384], sizes = [8, 128], strides = [1, 1]} : vector<8x512xf32> to vector<8x128xf32>
    %70 = arith.addf %68, %69 : vector<8x128xf32>
    %71 = arith.negf %70 : vector<8x128xf32>
    %72 = math.exp %71 : vector<8x128xf32>
    %cst_18 = arith.constant 1.000000e+00 : f32
    %73 = vector.broadcast %cst_18 : f32 to vector<8x128xf32>
    %74 = arith.addf %73, %72 : vector<8x128xf32>
    %75 = arith.divf %73, %74 : vector<8x128xf32>
    %cst_19 = arith.constant 1.000000e+00 : f32
    %76 = vector.broadcast %cst_19 : f32 to vector<8x128xf32>
    %77 = arith.subf %76, %75 : vector<8x128xf32>
    %78 = arith.mulf %65, %77 : vector<8x128xf32>
    %79 = arith.mulf %75, %67 : vector<8x128xf32>
    %80 = arith.addf %78, %79 : vector<8x128xf32>
    %81 = math.tanh %80 : vector<8x128xf32>
    %82 = arith.negf %80 : vector<8x128xf32>
    %83 = math.exp %82 : vector<8x128xf32>
    %cst_20 = arith.constant 1.000000e+00 : f32
    %84 = vector.broadcast %cst_20 : f32 to vector<8x128xf32>
    %85 = arith.addf %84, %83 : vector<8x128xf32>
    %86 = arith.divf %84, %85 : vector<8x128xf32>
    %87 = arith.select %6, %81, %86 : vector<8x128xi1>, vector<8x128xf32>
    %c0_21 = arith.constant 0 : index
    %c0_22 = arith.constant 0 : index
    %c0_23 = arith.constant 0 : index
    %88 = vector.load %arg2[%c0_21, %c0_22, %c0_23] : memref<8x8x128xf32, #tpu.memory_space<vmem>>, vector<1x8x128xf32>
    %89 = vector.shape_cast %88 : vector<1x8x128xf32> to vector<8x128xf32>
    %90 = vector.shape_cast %87 : vector<8x128xf32> to vector<1x8x128xf32>
    tpu.vector_store %arg2[%c0_21, %c0_22, %c0_23], %90 {strides = array<i32>} : memref<8x8x128xf32, #tpu.memory_space<vmem>>, vector<1x8x128xf32>,
    %c1_24 = arith.constant 1 : index
    %c0_25 = arith.constant 0 : index
    %c0_26 = arith.constant 0 : index
    %91 = vector.load %arg0[%c1_24, %c0_25, %c0_26] : memref<8x8x128xf32, #tpu.memory_space<vmem>>, vector<1x8x128xf32>
    %92 = vector.shape_cast %91 : vector<1x8x128xf32> to vector<8x128xf32>
    %93 = arith.addf %92, %34 : vector<8x128xf32>
    %94 = arith.addf %93, %4 : vector<8x128xf32>
    %95 = arith.truncf %94 : vector<8x128xf32> to vector<8x128xbf16>
    %c0_27 = arith.constant 0 : index
    %c0_28 = arith.constant 0 : index
    %c0_29 = arith.constant 0 : index
    %96 = vector.load %arg1[%c0_27, %c0_28, %c0_29] : memref<3x128x512xbf16, #tpu.memory_space<vmem>>, vector<1x128x512xbf16>
    %97 = vector.shape_cast %96 : vector<1x128x512xbf16> to vector<128x512xbf16>
    %cst_30 = arith.constant dense<0.000000e+00> : vector<8x512xf32>
    %98 = tpu.matmul %95, %97, %cst_30 {dimension_numbers = #tpu.dot_dimension_numbers<[1], [0], [0], [1], [0, 0, 1, 1], [], []>} : vector<8x128xbf16>, vector<128x512xbf16>, vector<8x512xf32> -> vector<8x512xf32>
    %99 = vector.extract_strided_slice %98 {offsets = [0, 0], sizes = [8, 128], strides = [1, 1]} : vector<8x512xf32> to vector<8x128xf32>
    %100 = math.tanh %99 : vector<8x128xf32>
    %101 = vector.extract_strided_slice %98 {offsets = [0, 128], sizes = [8, 128], strides = [1, 1]} : vector<8x512xf32> to vector<8x128xf32>
    %102 = math.tanh %101 : vector<8x128xf32>
    %103 = vector.extract_strided_slice %98 {offsets = [0, 256], sizes = [8, 128], strides = [1, 1]} : vector<8x512xf32> to vector<8x128xf32>
    %104 = vector.extract_strided_slice %98 {offsets = [0, 384], sizes = [8, 128], strides = [1, 1]} : vector<8x512xf32> to vector<8x128xf32>
    %105 = arith.addf %103, %104 : vector<8x128xf32>
    %106 = arith.negf %105 : vector<8x128xf32>
    %107 = math.exp %106 : vector<8x128xf32>
    %cst_31 = arith.constant 1.000000e+00 : f32
    %108 = vector.broadcast %cst_31 : f32 to vector<8x128xf32>
    %109 = arith.addf %108, %107 : vector<8x128xf32>
    %110 = arith.divf %108, %109 : vector<8x128xf32>
    %cst_32 = arith.constant 1.000000e+00 : f32
    %111 = vector.broadcast %cst_32 : f32 to vector<8x128xf32>
    %112 = arith.subf %111, %110 : vector<8x128xf32>
    %113 = arith.mulf %100, %112 : vector<8x128xf32>
    %114 = arith.mulf %110, %102 : vector<8x128xf32>
    %115 = arith.addf %113, %114 : vector<8x128xf32>
    %116 = arith.addf %115, %57 : vector<8x128xf32>
    %117 = arith.addf %116, %4 : vector<8x128xf32>
    %118 = arith.truncf %117 : vector<8x128xf32> to vector<8x128xbf16>
    %c1_33 = arith.constant 1 : index
    %c0_34 = arith.constant 0 : index
    %c0_35 = arith.constant 0 : index
    %119 = vector.load %arg1[%c1_33, %c0_34, %c0_35] : memref<3x128x512xbf16, #tpu.memory_space<vmem>>, vector<1x128x512xbf16>
    %120 = vector.shape_cast %119 : vector<1x128x512xbf16> to vector<128x512xbf16>
    %cst_36 = arith.constant dense<0.000000e+00> : vector<8x512xf32>
    %121 = tpu.matmul %118, %120, %cst_36 {dimension_numbers = #tpu.dot_dimension_numbers<[1], [0], [0], [1], [0, 0, 1, 1], [], []>} : vector<8x128xbf16>, vector<128x512xbf16>, vector<8x512xf32> -> vector<8x512xf32>
    %122 = vector.extract_strided_slice %121 {offsets = [0, 0], sizes = [8, 128], strides = [1, 1]} : vector<8x512xf32> to vector<8x128xf32>
    %123 = math.tanh %122 : vector<8x128xf32>
    %124 = vector.extract_strided_slice %121 {offsets = [0, 128], sizes = [8, 128], strides = [1, 1]} : vector<8x512xf32> to vector<8x128xf32>
    %125 = math.tanh %124 : vector<8x128xf32>
    %126 = vector.extract_strided_slice %121 {offsets = [0, 256], sizes = [8, 128], strides = [1, 1]} : vector<8x512xf32> to vector<8x128xf32>
    %127 = vector.extract_strided_slice %121 {offsets = [0, 384], sizes = [8, 128], strides = [1, 1]} : vector<8x512xf32> to vector<8x128xf32>
    %128 = arith.addf %126, %127 : vector<8x128xf32>
    %129 = arith.negf %128 : vector<8x128xf32>
    %130 = math.exp %129 : vector<8x128xf32>
    %cst_37 = arith.constant 1.000000e+00 : f32
    %131 = vector.broadcast %cst_37 : f32 to vector<8x128xf32>
    %132 = arith.addf %131, %130 : vector<8x128xf32>
    %133 = arith.divf %131, %132 : vector<8x128xf32>
    %cst_38 = arith.constant 1.000000e+00 : f32
    %134 = vector.broadcast %cst_38 : f32 to vector<8x128xf32>
    %135 = arith.subf %134, %133 : vector<8x128xf32>
    %136 = arith.mulf %123, %135 : vector<8x128xf32>
    %137 = arith.mulf %133, %125 : vector<8x128xf32>
    %138 = arith.addf %136, %137 : vector<8x128xf32>
    %139 = arith.addf %138, %80 : vector<8x128xf32>
    %140 = arith.addf %139, %4 : vector<8x128xf32>
    %141 = arith.truncf %140 : vector<8x128xf32> to vector<8x128xbf16>
    %c2_39 = arith.constant 2 : index
    %c0_40 = arith.constant 0 : index
    %c0_41 = arith.constant 0 : index
    %142 = vector.load %arg1[%c2_39, %c0_40, %c0_41] : memref<3x128x512xbf16, #tpu.memory_space<vmem>>, vector<1x128x512xbf16>
    %143 = vector.shape_cast %142 : vector<1x128x512xbf16> to vector<128x512xbf16>
    %cst_42 = arith.constant dense<0.000000e+00> : vector<8x512xf32>
    %144 = tpu.matmul %141, %143, %cst_42 {dimension_numbers = #tpu.dot_dimension_numbers<[1], [0], [0], [1], [0, 0, 1, 1], [], []>} : vector<8x128xbf16>, vector<128x512xbf16>, vector<8x512xf32> -> vector<8x512xf32>
    %145 = vector.extract_strided_slice %144 {offsets = [0, 0], sizes = [8, 128], strides = [1, 1]} : vector<8x512xf32> to vector<8x128xf32>
    %146 = math.tanh %145 : vector<8x128xf32>
    %147 = vector.extract_strided_slice %144 {offsets = [0, 128], sizes = [8, 128], strides = [1, 1]} : vector<8x512xf32> to vector<8x128xf32>
    %148 = math.tanh %147 : vector<8x128xf32>
    %149 = vector.extract_strided_slice %144 {offsets = [0, 256], sizes = [8, 128], strides = [1, 1]} : vector<8x512xf32> to vector<8x128xf32>
    %150 = vector.extract_strided_slice %144 {offsets = [0, 384], sizes = [8, 128], strides = [1, 1]} : vector<8x512xf32> to vector<8x128xf32>
    %151 = arith.addf %149, %150 : vector<8x128xf32>
    %152 = arith.negf %151 : vector<8x128xf32>
    %153 = math.exp %152 : vector<8x128xf32>
    %cst_43 = arith.constant 1.000000e+00 : f32
    %154 = vector.broadcast %cst_43 : f32 to vector<8x128xf32>
    %155 = arith.addf %154, %153 : vector<8x128xf32>
    %156 = arith.divf %154, %155 : vector<8x128xf32>
    %cst_44 = arith.constant 1.000000e+00 : f32
    %157 = vector.broadcast %cst_44 : f32 to vector<8x128xf32>
    %158 = arith.subf %157, %156 : vector<8x128xf32>
    %159 = arith.mulf %146, %158 : vector<8x128xf32>
    %160 = arith.mulf %156, %148 : vector<8x128xf32>
    %161 = arith.addf %159, %160 : vector<8x128xf32>
    %162 = math.tanh %161 : vector<8x128xf32>
    %163 = arith.negf %161 : vector<8x128xf32>
    %164 = math.exp %163 : vector<8x128xf32>
    %cst_45 = arith.constant 1.000000e+00 : f32
    %165 = vector.broadcast %cst_45 : f32 to vector<8x128xf32>
    %166 = arith.addf %165, %164 : vector<8x128xf32>
    %167 = arith.divf %165, %166 : vector<8x128xf32>
    %168 = arith.select %6, %162, %167 : vector<8x128xi1>, vector<8x128xf32>
    %c1_46 = arith.constant 1 : index
    %c0_47 = arith.constant 0 : index
    %c0_48 = arith.constant 0 : index
    %169 = vector.load %arg2[%c1_46, %c0_47, %c0_48] : memref<8x8x128xf32, #tpu.memory_space<vmem>>, vector<1x8x128xf32>
    %170 = vector.shape_cast %169 : vector<1x8x128xf32> to vector<8x128xf32>
    %171 = vector.shape_cast %168 : vector<8x128xf32> to vector<1x8x128xf32>
    tpu.vector_store %arg2[%c1_46, %c0_47, %c0_48], %171 {strides = array<i32>} : memref<8x8x128xf32, #tpu.memory_space<vmem>>, vector<1x8x128xf32>,
    %c2_49 = arith.constant 2 : index
    %c0_50 = arith.constant 0 : index
    %c0_51 = arith.constant 0 : index
    %172 = vector.load %arg0[%c2_49, %c0_50, %c0_51] : memref<8x8x128xf32, #tpu.memory_space<vmem>>, vector<1x8x128xf32>
    %173 = vector.shape_cast %172 : vector<1x8x128xf32> to vector<8x128xf32>
    %174 = arith.addf %173, %115 : vector<8x128xf32>
    %175 = arith.addf %174, %4 : vector<8x128xf32>
    %176 = arith.truncf %175 : vector<8x128xf32> to vector<8x128xbf16>
    %c0_52 = arith.constant 0 : index
    %c0_53 = arith.constant 0 : index
    %c0_54 = arith.constant 0 : index
    %177 = vector.load %arg1[%c0_52, %c0_53, %c0_54] : memref<3x128x512xbf16, #tpu.memory_space<vmem>>, vector<1x128x512xbf16>
    %178 = vector.shape_cast %177 : vector<1x128x512xbf16> to vector<128x512xbf16>
    %cst_55 = arith.constant dense<0.000000e+00> : vector<8x512xf32>
    %179 = tpu.matmul %176, %178, %cst_55 {dimension_numbers = #tpu.dot_dimension_numbers<[1], [0], [0], [1], [0, 0, 1, 1], [], []>} : vector<8x128xbf16>, vector<128x512xbf16>, vector<8x512xf32> -> vector<8x512xf32>
    %180 = vector.extract_strided_slice %179 {offsets = [0, 0], sizes = [8, 128], strides = [1, 1]} : vector<8x512xf32> to vector<8x128xf32>
    %181 = math.tanh %180 : vector<8x128xf32>
    %182 = vector.extract_strided_slice %179 {offsets = [0, 128], sizes = [8, 128], strides = [1, 1]} : vector<8x512xf32> to vector<8x128xf32>
    %183 = math.tanh %182 : vector<8x128xf32>
    %184 = vector.extract_strided_slice %179 {offsets = [0, 256], sizes = [8, 128], strides = [1, 1]} : vector<8x512xf32> to vector<8x128xf32>
    %185 = vector.extract_strided_slice %179 {offsets = [0, 384], sizes = [8, 128], strides = [1, 1]} : vector<8x512xf32> to vector<8x128xf32>
    %186 = arith.addf %184, %185 : vector<8x128xf32>
    %187 = arith.negf %186 : vector<8x128xf32>
    %188 = math.exp %187 : vector<8x128xf32>
    %cst_56 = arith.constant 1.000000e+00 : f32
    %189 = vector.broadcast %cst_56 : f32 to vector<8x128xf32>
    %190 = arith.addf %189, %188 : vector<8x128xf32>
    %191 = arith.divf %189, %190 : vector<8x128xf32>
    %cst_57 = arith.constant 1.000000e+00 : f32
    %192 = vector.broadcast %cst_57 : f32 to vector<8x128xf32>
    %193 = arith.subf %192, %191 : vector<8x128xf32>
    %194 = arith.mulf %181, %193 : vector<8x128xf32>
    %195 = arith.mulf %191, %183 : vector<8x128xf32>
    %196 = arith.addf %194, %195 : vector<8x128xf32>
    %197 = arith.addf %196, %138 : vector<8x128xf32>
    %198 = arith.addf %197, %4 : vector<8x128xf32>
    %199 = arith.truncf %198 : vector<8x128xf32> to vector<8x128xbf16>
    %c1_58 = arith.constant 1 : index
    %c0_59 = arith.constant 0 : index
    %c0_60 = arith.constant 0 : index
    %200 = vector.load %arg1[%c1_58, %c0_59, %c0_60] : memref<3x128x512xbf16, #tpu.memory_space<vmem>>, vector<1x128x512xbf16>
    %201 = vector.shape_cast %200 : vector<1x128x512xbf16> to vector<128x512xbf16>
    %cst_61 = arith.constant dense<0.000000e+00> : vector<8x512xf32>
    %202 = tpu.matmul %199, %201, %cst_61 {dimension_numbers = #tpu.dot_dimension_numbers<[1], [0], [0], [1], [0, 0, 1, 1], [], []>} : vector<8x128xbf16>, vector<128x512xbf16>, vector<8x512xf32> -> vector<8x512xf32>
    %203 = vector.extract_strided_slice %202 {offsets = [0, 0], sizes = [8, 128], strides = [1, 1]} : vector<8x512xf32> to vector<8x128xf32>
    %204 = math.tanh %203 : vector<8x128xf32>
    %205 = vector.extract_strided_slice %202 {offsets = [0, 128], sizes = [8, 128], strides = [1, 1]} : vector<8x512xf32> to vector<8x128xf32>
    %206 = math.tanh %205 : vector<8x128xf32>
    %207 = vector.extract_strided_slice %202 {offsets = [0, 256], sizes = [8, 128], strides = [1, 1]} : vector<8x512xf32> to vector<8x128xf32>
    %208 = vector.extract_strided_slice %202 {offsets = [0, 384], sizes = [8, 128], strides = [1, 1]} : vector<8x512xf32> to vector<8x128xf32>
    %209 = arith.addf %207, %208 : vector<8x128xf32>
    %210 = arith.negf %209 : vector<8x128xf32>
    %211 = math.exp %210 : vector<8x128xf32>
    %cst_62 = arith.constant 1.000000e+00 : f32
    %212 = vector.broadcast %cst_62 : f32 to vector<8x128xf32>
    %213 = arith.addf %212, %211 : vector<8x128xf32>
    %214 = arith.divf %212, %213 : vector<8x128xf32>
    %cst_63 = arith.constant 1.000000e+00 : f32
    %215 = vector.broadcast %cst_63 : f32 to vector<8x128xf32>
    %216 = arith.subf %215, %214 : vector<8x128xf32>
    %217 = arith.mulf %204, %216 : vector<8x128xf32>
    %218 = arith.mulf %214, %206 : vector<8x128xf32>
    %219 = arith.addf %217, %218 : vector<8x128xf32>
    %220 = arith.addf %219, %161 : vector<8x128xf32>
    %221 = arith.addf %220, %4 : vector<8x128xf32>
    %222 = arith.truncf %221 : vector<8x128xf32> to vector<8x128xbf16>
    %c2_64 = arith.constant 2 : index
    %c0_65 = arith.constant 0 : index
    %c0_66 = arith.constant 0 : index
    %223 = vector.load %arg1[%c2_64, %c0_65, %c0_66] : memref<3x128x512xbf16, #tpu.memory_space<vmem>>, vector<1x128x512xbf16>
    %224 = vector.shape_cast %223 : vector<1x128x512xbf16> to vector<128x512xbf16>
    %cst_67 = arith.constant dense<0.000000e+00> : vector<8x512xf32>
    %225 = tpu.matmul %222, %224, %cst_67 {dimension_numbers = #tpu.dot_dimension_numbers<[1], [0], [0], [1], [0, 0, 1, 1], [], []>} : vector<8x128xbf16>, vector<128x512xbf16>, vector<8x512xf32> -> vector<8x512xf32>
    %226 = vector.extract_strided_slice %225 {offsets = [0, 0], sizes = [8, 128], strides = [1, 1]} : vector<8x512xf32> to vector<8x128xf32>
    %227 = math.tanh %226 : vector<8x128xf32>
    %228 = vector.extract_strided_slice %225 {offsets = [0, 128], sizes = [8, 128], strides = [1, 1]} : vector<8x512xf32> to vector<8x128xf32>
    %229 = math.tanh %228 : vector<8x128xf32>
    %230 = vector.extract_strided_slice %225 {offsets = [0, 256], sizes = [8, 128], strides = [1, 1]} : vector<8x512xf32> to vector<8x128xf32>
    %231 = vector.extract_strided_slice %225 {offsets = [0, 384], sizes = [8, 128], strides = [1, 1]} : vector<8x512xf32> to vector<8x128xf32>
    %232 = arith.addf %230, %231 : vector<8x128xf32>
    %233 = arith.negf %232 : vector<8x128xf32>
    %234 = math.exp %233 : vector<8x128xf32>
    %cst_68 = arith.constant 1.000000e+00 : f32
    %235 = vector.broadcast %cst_68 : f32 to vector<8x128xf32>
    %236 = arith.addf %235, %234 : vector<8x128xf32>
    %237 = arith.divf %235, %236 : vector<8x128xf32>
    %cst_69 = arith.constant 1.000000e+00 : f32
    %238 = vector.broadcast %cst_69 : f32 to vector<8x128xf32>
    %239 = arith.subf %238, %237 : vector<8x128xf32>
    %240 = arith.mulf %227, %239 : vector<8x128xf32>
    %241 = arith.mulf %237, %229 : vector<8x128xf32>
    %242 = arith.addf %240, %241 : vector<8x128xf32>
    %243 = math.tanh %242 : vector<8x128xf32>
    %244 = arith.negf %242 : vector<8x128xf32>
    %245 = math.exp %244 : vector<8x128xf32>
    %cst_70 = arith.constant 1.000000e+00 : f32
    %246 = vector.broadcast %cst_70 : f32 to vector<8x128xf32>
    %247 = arith.addf %246, %245 : vector<8x128xf32>
    %248 = arith.divf %246, %247 : vector<8x128xf32>
    %249 = arith.select %6, %243, %248 : vector<8x128xi1>, vector<8x128xf32>
    %c2_71 = arith.constant 2 : index
    %c0_72 = arith.constant 0 : index
    %c0_73 = arith.constant 0 : index
    %250 = vector.load %arg2[%c2_71, %c0_72, %c0_73] : memref<8x8x128xf32, #tpu.memory_space<vmem>>, vector<1x8x128xf32>
    %251 = vector.shape_cast %250 : vector<1x8x128xf32> to vector<8x128xf32>
    %252 = vector.shape_cast %249 : vector<8x128xf32> to vector<1x8x128xf32>
    tpu.vector_store %arg2[%c2_71, %c0_72, %c0_73], %252 {strides = array<i32>} : memref<8x8x128xf32, #tpu.memory_space<vmem>>, vector<1x8x128xf32>,
    %c3 = arith.constant 3 : index
    %c0_74 = arith.constant 0 : index
    %c0_75 = arith.constant 0 : index
    %253 = vector.load %arg0[%c3, %c0_74, %c0_75] : memref<8x8x128xf32, #tpu.memory_space<vmem>>, vector<1x8x128xf32>
    %254 = vector.shape_cast %253 : vector<1x8x128xf32> to vector<8x128xf32>
    %255 = arith.addf %254, %196 : vector<8x128xf32>
    %256 = arith.addf %255, %4 : vector<8x128xf32>
    %257 = arith.truncf %256 : vector<8x128xf32> to vector<8x128xbf16>
    %c0_76 = arith.constant 0 : index
    %c0_77 = arith.constant 0 : index
    %c0_78 = arith.constant 0 : index
    %258 = vector.load %arg1[%c0_76, %c0_77, %c0_78] : memref<3x128x512xbf16, #tpu.memory_space<vmem>>, vector<1x128x512xbf16>
    %259 = vector.shape_cast %258 : vector<1x128x512xbf16> to vector<128x512xbf16>
    %cst_79 = arith.constant dense<0.000000e+00> : vector<8x512xf32>
    %260 = tpu.matmul %257, %259, %cst_79 {dimension_numbers = #tpu.dot_dimension_numbers<[1], [0], [0], [1], [0, 0, 1, 1], [], []>} : vector<8x128xbf16>, vector<128x512xbf16>, vector<8x512xf32> -> vector<8x512xf32>
    %261 = vector.extract_strided_slice %260 {offsets = [0, 0], sizes = [8, 128], strides = [1, 1]} : vector<8x512xf32> to vector<8x128xf32>
    %262 = math.tanh %261 : vector<8x128xf32>
    %263 = vector.extract_strided_slice %260 {offsets = [0, 128], sizes = [8, 128], strides = [1, 1]} : vector<8x512xf32> to vector<8x128xf32>
    %264 = math.tanh %263 : vector<8x128xf32>
    %265 = vector.extract_strided_slice %260 {offsets = [0, 256], sizes = [8, 128], strides = [1, 1]} : vector<8x512xf32> to vector<8x128xf32>
    %266 = vector.extract_strided_slice %260 {offsets = [0, 384], sizes = [8, 128], strides = [1, 1]} : vector<8x512xf32> to vector<8x128xf32>
    %267 = arith.addf %265, %266 : vector<8x128xf32>
    %268 = arith.negf %267 : vector<8x128xf32>
    %269 = math.exp %268 : vector<8x128xf32>
    %cst_80 = arith.constant 1.000000e+00 : f32
    %270 = vector.broadcast %cst_80 : f32 to vector<8x128xf32>
    %271 = arith.addf %270, %269 : vector<8x128xf32>
    %272 = arith.divf %270, %271 : vector<8x128xf32>
    %cst_81 = arith.constant 1.000000e+00 : f32
    %273 = vector.broadcast %cst_81 : f32 to vector<8x128xf32>
    %274 = arith.subf %273, %272 : vector<8x128xf32>
    %275 = arith.mulf %262, %274 : vector<8x128xf32>
    %276 = arith.mulf %272, %264 : vector<8x128xf32>
    %277 = arith.addf %275, %276 : vector<8x128xf32>
    %278 = arith.addf %277, %219 : vector<8x128xf32>
    %279 = arith.addf %278, %4 : vector<8x128xf32>
    %280 = arith.truncf %279 : vector<8x128xf32> to vector<8x128xbf16>
    %c1_82 = arith.constant 1 : index
    %c0_83 = arith.constant 0 : index
    %c0_84 = arith.constant 0 : index
    %281 = vector.load %arg1[%c1_82, %c0_83, %c0_84] : memref<3x128x512xbf16, #tpu.memory_space<vmem>>, vector<1x128x512xbf16>
    %282 = vector.shape_cast %281 : vector<1x128x512xbf16> to vector<128x512xbf16>
    %cst_85 = arith.constant dense<0.000000e+00> : vector<8x512xf32>
    %283 = tpu.matmul %280, %282, %cst_85 {dimension_numbers = #tpu.dot_dimension_numbers<[1], [0], [0], [1], [0, 0, 1, 1], [], []>} : vector<8x128xbf16>, vector<128x512xbf16>, vector<8x512xf32> -> vector<8x512xf32>
    %284 = vector.extract_strided_slice %283 {offsets = [0, 0], sizes = [8, 128], strides = [1, 1]} : vector<8x512xf32> to vector<8x128xf32>
    %285 = math.tanh %284 : vector<8x128xf32>
    %286 = vector.extract_strided_slice %283 {offsets = [0, 128], sizes = [8, 128], strides = [1, 1]} : vector<8x512xf32> to vector<8x128xf32>
    %287 = math.tanh %286 : vector<8x128xf32>
    %288 = vector.extract_strided_slice %283 {offsets = [0, 256], sizes = [8, 128], strides = [1, 1]} : vector<8x512xf32> to vector<8x128xf32>
    %289 = vector.extract_strided_slice %283 {offsets = [0, 384], sizes = [8, 128], strides = [1, 1]} : vector<8x512xf32> to vector<8x128xf32>
    %290 = arith.addf %288, %289 : vector<8x128xf32>
    %291 = arith.negf %290 : vector<8x128xf32>
    %292 = math.exp %291 : vector<8x128xf32>
    %cst_86 = arith.constant 1.000000e+00 : f32
    %293 = vector.broadcast %cst_86 : f32 to vector<8x128xf32>
    %294 = arith.addf %293, %292 : vector<8x128xf32>
    %295 = arith.divf %293, %294 : vector<8x128xf32>
    %cst_87 = arith.constant 1.000000e+00 : f32
    %296 = vector.broadcast %cst_87 : f32 to vector<8x128xf32>
    %297 = arith.subf %296, %295 : vector<8x128xf32>
    %298 = arith.mulf %285, %297 : vector<8x128xf32>
    %299 = arith.mulf %295, %287 : vector<8x128xf32>
    %300 = arith.addf %298, %299 : vector<8x128xf32>
    %301 = arith.addf %300, %242 : vector<8x128xf32>
    %302 = arith.addf %301, %4 : vector<8x128xf32>
    %303 = arith.truncf %302 : vector<8x128xf32> to vector<8x128xbf16>
    %c2_88 = arith.constant 2 : index
    %c0_89 = arith.constant 0 : index
    %c0_90 = arith.constant 0 : index
    %304 = vector.load %arg1[%c2_88, %c0_89, %c0_90] : memref<3x128x512xbf16, #tpu.memory_space<vmem>>, vector<1x128x512xbf16>
    %305 = vector.shape_cast %304 : vector<1x128x512xbf16> to vector<128x512xbf16>
    %cst_91 = arith.constant dense<0.000000e+00> : vector<8x512xf32>
    %306 = tpu.matmul %303, %305, %cst_91 {dimension_numbers = #tpu.dot_dimension_numbers<[1], [0], [0], [1], [0, 0, 1, 1], [], []>} : vector<8x128xbf16>, vector<128x512xbf16>, vector<8x512xf32> -> vector<8x512xf32>
    %307 = vector.extract_strided_slice %306 {offsets = [0, 0], sizes = [8, 128], strides = [1, 1]} : vector<8x512xf32> to vector<8x128xf32>
    %308 = math.tanh %307 : vector<8x128xf32>
    %309 = vector.extract_strided_slice %306 {offsets = [0, 128], sizes = [8, 128], strides = [1, 1]} : vector<8x512xf32> to vector<8x128xf32>
    %310 = math.tanh %309 : vector<8x128xf32>
    %311 = vector.extract_strided_slice %306 {offsets = [0, 256], sizes = [8, 128], strides = [1, 1]} : vector<8x512xf32> to vector<8x128xf32>
    %312 = vector.extract_strided_slice %306 {offsets = [0, 384], sizes = [8, 128], strides = [1, 1]} : vector<8x512xf32> to vector<8x128xf32>
    %313 = arith.addf %311, %312 : vector<8x128xf32>
    %314 = arith.negf %313 : vector<8x128xf32>
    %315 = math.exp %314 : vector<8x128xf32>
    %cst_92 = arith.constant 1.000000e+00 : f32
    %316 = vector.broadcast %cst_92 : f32 to vector<8x128xf32>
    %317 = arith.addf %316, %315 : vector<8x128xf32>
    %318 = arith.divf %316, %317 : vector<8x128xf32>
    %cst_93 = arith.constant 1.000000e+00 : f32
    %319 = vector.broadcast %cst_93 : f32 to vector<8x128xf32>
    %320 = arith.subf %319, %318 : vector<8x128xf32>
    %321 = arith.mulf %308, %320 : vector<8x128xf32>
    %322 = arith.mulf %318, %310 : vector<8x128xf32>
    %323 = arith.addf %321, %322 : vector<8x128xf32>
    %324 = math.tanh %323 : vector<8x128xf32>
    %325 = arith.negf %323 : vector<8x128xf32>
    %326 = math.exp %325 : vector<8x128xf32>
    %cst_94 = arith.constant 1.000000e+00 : f32
    %327 = vector.broadcast %cst_94 : f32 to vector<8x128xf32>
    %328 = arith.addf %327, %326 : vector<8x128xf32>
    %329 = arith.divf %327, %328 : vector<8x128xf32>
    %330 = arith.select %6, %324, %329 : vector<8x128xi1>, vector<8x128xf32>
    %c3_95 = arith.constant 3 : index
    %c0_96 = arith.constant 0 : index
    %c0_97 = arith.constant 0 : index
    %331 = vector.load %arg2[%c3_95, %c0_96, %c0_97] : memref<8x8x128xf32, #tpu.memory_space<vmem>>, vector<1x8x128xf32>
    %332 = vector.shape_cast %331 : vector<1x8x128xf32> to vector<8x128xf32>
    %333 = vector.shape_cast %330 : vector<8x128xf32> to vector<1x8x128xf32>
    tpu.vector_store %arg2[%c3_95, %c0_96, %c0_97], %333 {strides = array<i32>} : memref<8x8x128xf32, #tpu.memory_space<vmem>>, vector<1x8x128xf32>,
    %c4 = arith.constant 4 : index
    %c0_98 = arith.constant 0 : index
    %c0_99 = arith.constant 0 : index
    %334 = vector.load %arg0[%c4, %c0_98, %c0_99] : memref<8x8x128xf32, #tpu.memory_space<vmem>>, vector<1x8x128xf32>
    %335 = vector.shape_cast %334 : vector<1x8x128xf32> to vector<8x128xf32>
    %336 = arith.addf %335, %277 : vector<8x128xf32>
    %337 = arith.addf %336, %4 : vector<8x128xf32>
    %338 = arith.truncf %337 : vector<8x128xf32> to vector<8x128xbf16>
    %c0_100 = arith.constant 0 : index
    %c0_101 = arith.constant 0 : index
    %c0_102 = arith.constant 0 : index
    %339 = vector.load %arg1[%c0_100, %c0_101, %c0_102] : memref<3x128x512xbf16, #tpu.memory_space<vmem>>, vector<1x128x512xbf16>
    %340 = vector.shape_cast %339 : vector<1x128x512xbf16> to vector<128x512xbf16>
    %cst_103 = arith.constant dense<0.000000e+00> : vector<8x512xf32>
    %341 = tpu.matmul %338, %340, %cst_103 {dimension_numbers = #tpu.dot_dimension_numbers<[1], [0], [0], [1], [0, 0, 1, 1], [], []>} : vector<8x128xbf16>, vector<128x512xbf16>, vector<8x512xf32> -> vector<8x512xf32>
    %342 = vector.extract_strided_slice %341 {offsets = [0, 0], sizes = [8, 128], strides = [1, 1]} : vector<8x512xf32> to vector<8x128xf32>
    %343 = math.tanh %342 : vector<8x128xf32>
    %344 = vector.extract_strided_slice %341 {offsets = [0, 128], sizes = [8, 128], strides = [1, 1]} : vector<8x512xf32> to vector<8x128xf32>
    %345 = math.tanh %344 : vector<8x128xf32>
    %346 = vector.extract_strided_slice %341 {offsets = [0, 256], sizes = [8, 128], strides = [1, 1]} : vector<8x512xf32> to vector<8x128xf32>
    %347 = vector.extract_strided_slice %341 {offsets = [0, 384], sizes = [8, 128], strides = [1, 1]} : vector<8x512xf32> to vector<8x128xf32>
    %348 = arith.addf %346, %347 : vector<8x128xf32>
    %349 = arith.negf %348 : vector<8x128xf32>
    %350 = math.exp %349 : vector<8x128xf32>
    %cst_104 = arith.constant 1.000000e+00 : f32
    %351 = vector.broadcast %cst_104 : f32 to vector<8x128xf32>
    %352 = arith.addf %351, %350 : vector<8x128xf32>
    %353 = arith.divf %351, %352 : vector<8x128xf32>
    %cst_105 = arith.constant 1.000000e+00 : f32
    %354 = vector.broadcast %cst_105 : f32 to vector<8x128xf32>
    %355 = arith.subf %354, %353 : vector<8x128xf32>
    %356 = arith.mulf %343, %355 : vector<8x128xf32>
    %357 = arith.mulf %353, %345 : vector<8x128xf32>
    %358 = arith.addf %356, %357 : vector<8x128xf32>
    %359 = arith.addf %358, %300 : vector<8x128xf32>
    %360 = arith.addf %359, %4 : vector<8x128xf32>
    %361 = arith.truncf %360 : vector<8x128xf32> to vector<8x128xbf16>
    %c1_106 = arith.constant 1 : index
    %c0_107 = arith.constant 0 : index
    %c0_108 = arith.constant 0 : index
    %362 = vector.load %arg1[%c1_106, %c0_107, %c0_108] : memref<3x128x512xbf16, #tpu.memory_space<vmem>>, vector<1x128x512xbf16>
    %363 = vector.shape_cast %362 : vector<1x128x512xbf16> to vector<128x512xbf16>
    %cst_109 = arith.constant dense<0.000000e+00> : vector<8x512xf32>
    %364 = tpu.matmul %361, %363, %cst_109 {dimension_numbers = #tpu.dot_dimension_numbers<[1], [0], [0], [1], [0, 0, 1, 1], [], []>} : vector<8x128xbf16>, vector<128x512xbf16>, vector<8x512xf32> -> vector<8x512xf32>
    %365 = vector.extract_strided_slice %364 {offsets = [0, 0], sizes = [8, 128], strides = [1, 1]} : vector<8x512xf32> to vector<8x128xf32>
    %366 = math.tanh %365 : vector<8x128xf32>
    %367 = vector.extract_strided_slice %364 {offsets = [0, 128], sizes = [8, 128], strides = [1, 1]} : vector<8x512xf32> to vector<8x128xf32>
    %368 = math.tanh %367 : vector<8x128xf32>
    %369 = vector.extract_strided_slice %364 {offsets = [0, 256], sizes = [8, 128], strides = [1, 1]} : vector<8x512xf32> to vector<8x128xf32>
    %370 = vector.extract_strided_slice %364 {offsets = [0, 384], sizes = [8, 128], strides = [1, 1]} : vector<8x512xf32> to vector<8x128xf32>
    %371 = arith.addf %369, %370 : vector<8x128xf32>
    %372 = arith.negf %371 : vector<8x128xf32>
    %373 = math.exp %372 : vector<8x128xf32>
    %cst_110 = arith.constant 1.000000e+00 : f32
    %374 = vector.broadcast %cst_110 : f32 to vector<8x128xf32>
    %375 = arith.addf %374, %373 : vector<8x128xf32>
    %376 = arith.divf %374, %375 : vector<8x128xf32>
    %cst_111 = arith.constant 1.000000e+00 : f32
    %377 = vector.broadcast %cst_111 : f32 to vector<8x128xf32>
    %378 = arith.subf %377, %376 : vector<8x128xf32>
    %379 = arith.mulf %366, %378 : vector<8x128xf32>
    %380 = arith.mulf %376, %368 : vector<8x128xf32>
    %381 = arith.addf %379, %380 : vector<8x128xf32>
    %382 = arith.addf %381, %323 : vector<8x128xf32>
    %383 = arith.addf %382, %4 : vector<8x128xf32>
    %384 = arith.truncf %383 : vector<8x128xf32> to vector<8x128xbf16>
    %c2_112 = arith.constant 2 : index
    %c0_113 = arith.constant 0 : index
    %c0_114 = arith.constant 0 : index
    %385 = vector.load %arg1[%c2_112, %c0_113, %c0_114] : memref<3x128x512xbf16, #tpu.memory_space<vmem>>, vector<1x128x512xbf16>
    %386 = vector.shape_cast %385 : vector<1x128x512xbf16> to vector<128x512xbf16>
    %cst_115 = arith.constant dense<0.000000e+00> : vector<8x512xf32>
    %387 = tpu.matmul %384, %386, %cst_115 {dimension_numbers = #tpu.dot_dimension_numbers<[1], [0], [0], [1], [0, 0, 1, 1], [], []>} : vector<8x128xbf16>, vector<128x512xbf16>, vector<8x512xf32> -> vector<8x512xf32>
    %388 = vector.extract_strided_slice %387 {offsets = [0, 0], sizes = [8, 128], strides = [1, 1]} : vector<8x512xf32> to vector<8x128xf32>
    %389 = math.tanh %388 : vector<8x128xf32>
    %390 = vector.extract_strided_slice %387 {offsets = [0, 128], sizes = [8, 128], strides = [1, 1]} : vector<8x512xf32> to vector<8x128xf32>
    %391 = math.tanh %390 : vector<8x128xf32>
    %392 = vector.extract_strided_slice %387 {offsets = [0, 256], sizes = [8, 128], strides = [1, 1]} : vector<8x512xf32> to vector<8x128xf32>
    %393 = vector.extract_strided_slice %387 {offsets = [0, 384], sizes = [8, 128], strides = [1, 1]} : vector<8x512xf32> to vector<8x128xf32>
    %394 = arith.addf %392, %393 : vector<8x128xf32>
    %395 = arith.negf %394 : vector<8x128xf32>
    %396 = math.exp %395 : vector<8x128xf32>
    %cst_116 = arith.constant 1.000000e+00 : f32
    %397 = vector.broadcast %cst_116 : f32 to vector<8x128xf32>
    %398 = arith.addf %397, %396 : vector<8x128xf32>
    %399 = arith.divf %397, %398 : vector<8x128xf32>
    %cst_117 = arith.constant 1.000000e+00 : f32
    %400 = vector.broadcast %cst_117 : f32 to vector<8x128xf32>
    %401 = arith.subf %400, %399 : vector<8x128xf32>
    %402 = arith.mulf %389, %401 : vector<8x128xf32>
    %403 = arith.mulf %399, %391 : vector<8x128xf32>
    %404 = arith.addf %402, %403 : vector<8x128xf32>
    %405 = math.tanh %404 : vector<8x128xf32>
    %406 = arith.negf %404 : vector<8x128xf32>
    %407 = math.exp %406 : vector<8x128xf32>
    %cst_118 = arith.constant 1.000000e+00 : f32
    %408 = vector.broadcast %cst_118 : f32 to vector<8x128xf32>
    %409 = arith.addf %408, %407 : vector<8x128xf32>
    %410 = arith.divf %408, %409 : vector<8x128xf32>
    %411 = arith.select %6, %405, %410 : vector<8x128xi1>, vector<8x128xf32>
    %c4_119 = arith.constant 4 : index
    %c0_120 = arith.constant 0 : index
    %c0_121 = arith.constant 0 : index
    %412 = vector.load %arg2[%c4_119, %c0_120, %c0_121] : memref<8x8x128xf32, #tpu.memory_space<vmem>>, vector<1x8x128xf32>
    %413 = vector.shape_cast %412 : vector<1x8x128xf32> to vector<8x128xf32>
    %414 = vector.shape_cast %411 : vector<8x128xf32> to vector<1x8x128xf32>
    tpu.vector_store %arg2[%c4_119, %c0_120, %c0_121], %414 {strides = array<i32>} : memref<8x8x128xf32, #tpu.memory_space<vmem>>, vector<1x8x128xf32>,
    %c5 = arith.constant 5 : index
    %c0_122 = arith.constant 0 : index
    %c0_123 = arith.constant 0 : index
    %415 = vector.load %arg0[%c5, %c0_122, %c0_123] : memref<8x8x128xf32, #tpu.memory_space<vmem>>, vector<1x8x128xf32>
    %416 = vector.shape_cast %415 : vector<1x8x128xf32> to vector<8x128xf32>
    %417 = arith.addf %416, %358 : vector<8x128xf32>
    %418 = arith.addf %417, %4 : vector<8x128xf32>
    %419 = arith.truncf %418 : vector<8x128xf32> to vector<8x128xbf16>
    %c0_124 = arith.constant 0 : index
    %c0_125 = arith.constant 0 : index
    %c0_126 = arith.constant 0 : index
    %420 = vector.load %arg1[%c0_124, %c0_125, %c0_126] : memref<3x128x512xbf16, #tpu.memory_space<vmem>>, vector<1x128x512xbf16>
    %421 = vector.shape_cast %420 : vector<1x128x512xbf16> to vector<128x512xbf16>
    %cst_127 = arith.constant dense<0.000000e+00> : vector<8x512xf32>
    %422 = tpu.matmul %419, %421, %cst_127 {dimension_numbers = #tpu.dot_dimension_numbers<[1], [0], [0], [1], [0, 0, 1, 1], [], []>} : vector<8x128xbf16>, vector<128x512xbf16>, vector<8x512xf32> -> vector<8x512xf32>
    %423 = vector.extract_strided_slice %422 {offsets = [0, 0], sizes = [8, 128], strides = [1, 1]} : vector<8x512xf32> to vector<8x128xf32>
    %424 = math.tanh %423 : vector<8x128xf32>
    %425 = vector.extract_strided_slice %422 {offsets = [0, 128], sizes = [8, 128], strides = [1, 1]} : vector<8x512xf32> to vector<8x128xf32>
    %426 = math.tanh %425 : vector<8x128xf32>
    %427 = vector.extract_strided_slice %422 {offsets = [0, 256], sizes = [8, 128], strides = [1, 1]} : vector<8x512xf32> to vector<8x128xf32>
    %428 = vector.extract_strided_slice %422 {offsets = [0, 384], sizes = [8, 128], strides = [1, 1]} : vector<8x512xf32> to vector<8x128xf32>
    %429 = arith.addf %427, %428 : vector<8x128xf32>
    %430 = arith.negf %429 : vector<8x128xf32>
    %431 = math.exp %430 : vector<8x128xf32>
    %cst_128 = arith.constant 1.000000e+00 : f32
    %432 = vector.broadcast %cst_128 : f32 to vector<8x128xf32>
    %433 = arith.addf %432, %431 : vector<8x128xf32>
    %434 = arith.divf %432, %433 : vector<8x128xf32>
    %cst_129 = arith.constant 1.000000e+00 : f32
    %435 = vector.broadcast %cst_129 : f32 to vector<8x128xf32>
    %436 = arith.subf %435, %434 : vector<8x128xf32>
    %437 = arith.mulf %424, %436 : vector<8x128xf32>
    %438 = arith.mulf %434, %426 : vector<8x128xf32>
    %439 = arith.addf %437, %438 : vector<8x128xf32>
    %440 = arith.addf %439, %381 : vector<8x128xf32>
    %441 = arith.addf %440, %4 : vector<8x128xf32>
    %442 = arith.truncf %441 : vector<8x128xf32> to vector<8x128xbf16>
    %c1_130 = arith.constant 1 : index
    %c0_131 = arith.constant 0 : index
    %c0_132 = arith.constant 0 : index
    %443 = vector.load %arg1[%c1_130, %c0_131, %c0_132] : memref<3x128x512xbf16, #tpu.memory_space<vmem>>, vector<1x128x512xbf16>
    %444 = vector.shape_cast %443 : vector<1x128x512xbf16> to vector<128x512xbf16>
    %cst_133 = arith.constant dense<0.000000e+00> : vector<8x512xf32>
    %445 = tpu.matmul %442, %444, %cst_133 {dimension_numbers = #tpu.dot_dimension_numbers<[1], [0], [0], [1], [0, 0, 1, 1], [], []>} : vector<8x128xbf16>, vector<128x512xbf16>, vector<8x512xf32> -> vector<8x512xf32>
    %446 = vector.extract_strided_slice %445 {offsets = [0, 0], sizes = [8, 128], strides = [1, 1]} : vector<8x512xf32> to vector<8x128xf32>
    %447 = math.tanh %446 : vector<8x128xf32>
    %448 = vector.extract_strided_slice %445 {offsets = [0, 128], sizes = [8, 128], strides = [1, 1]} : vector<8x512xf32> to vector<8x128xf32>
    %449 = math.tanh %448 : vector<8x128xf32>
    %450 = vector.extract_strided_slice %445 {offsets = [0, 256], sizes = [8, 128], strides = [1, 1]} : vector<8x512xf32> to vector<8x128xf32>
    %451 = vector.extract_strided_slice %445 {offsets = [0, 384], sizes = [8, 128], strides = [1, 1]} : vector<8x512xf32> to vector<8x128xf32>
    %452 = arith.addf %450, %451 : vector<8x128xf32>
    %453 = arith.negf %452 : vector<8x128xf32>
    %454 = math.exp %453 : vector<8x128xf32>
    %cst_134 = arith.constant 1.000000e+00 : f32
    %455 = vector.broadcast %cst_134 : f32 to vector<8x128xf32>
    %456 = arith.addf %455, %454 : vector<8x128xf32>
    %457 = arith.divf %455, %456 : vector<8x128xf32>
    %cst_135 = arith.constant 1.000000e+00 : f32
    %458 = vector.broadcast %cst_135 : f32 to vector<8x128xf32>
    %459 = arith.subf %458, %457 : vector<8x128xf32>
    %460 = arith.mulf %447, %459 : vector<8x128xf32>
    %461 = arith.mulf %457, %449 : vector<8x128xf32>
    %462 = arith.addf %460, %461 : vector<8x128xf32>
    %463 = arith.addf %462, %404 : vector<8x128xf32>
    %464 = arith.addf %463, %4 : vector<8x128xf32>
    %465 = arith.truncf %464 : vector<8x128xf32> to vector<8x128xbf16>
    %c2_136 = arith.constant 2 : index
    %c0_137 = arith.constant 0 : index
    %c0_138 = arith.constant 0 : index
    %466 = vector.load %arg1[%c2_136, %c0_137, %c0_138] : memref<3x128x512xbf16, #tpu.memory_space<vmem>>, vector<1x128x512xbf16>
    %467 = vector.shape_cast %466 : vector<1x128x512xbf16> to vector<128x512xbf16>
    %cst_139 = arith.constant dense<0.000000e+00> : vector<8x512xf32>
    %468 = tpu.matmul %465, %467, %cst_139 {dimension_numbers = #tpu.dot_dimension_numbers<[1], [0], [0], [1], [0, 0, 1, 1], [], []>} : vector<8x128xbf16>, vector<128x512xbf16>, vector<8x512xf32> -> vector<8x512xf32>
    %469 = vector.extract_strided_slice %468 {offsets = [0, 0], sizes = [8, 128], strides = [1, 1]} : vector<8x512xf32> to vector<8x128xf32>
    %470 = math.tanh %469 : vector<8x128xf32>
    %471 = vector.extract_strided_slice %468 {offsets = [0, 128], sizes = [8, 128], strides = [1, 1]} : vector<8x512xf32> to vector<8x128xf32>
    %472 = math.tanh %471 : vector<8x128xf32>
    %473 = vector.extract_strided_slice %468 {offsets = [0, 256], sizes = [8, 128], strides = [1, 1]} : vector<8x512xf32> to vector<8x128xf32>
    %474 = vector.extract_strided_slice %468 {offsets = [0, 384], sizes = [8, 128], strides = [1, 1]} : vector<8x512xf32> to vector<8x128xf32>
    %475 = arith.addf %473, %474 : vector<8x128xf32>
    %476 = arith.negf %475 : vector<8x128xf32>
    %477 = math.exp %476 : vector<8x128xf32>
    %cst_140 = arith.constant 1.000000e+00 : f32
    %478 = vector.broadcast %cst_140 : f32 to vector<8x128xf32>
    %479 = arith.addf %478, %477 : vector<8x128xf32>
    %480 = arith.divf %478, %479 : vector<8x128xf32>
    %cst_141 = arith.constant 1.000000e+00 : f32
    %481 = vector.broadcast %cst_141 : f32 to vector<8x128xf32>
    %482 = arith.subf %481, %480 : vector<8x128xf32>
    %483 = arith.mulf %470, %482 : vector<8x128xf32>
    %484 = arith.mulf %480, %472 : vector<8x128xf32>
    %485 = arith.addf %483, %484 : vector<8x128xf32>
    %486 = math.tanh %485 : vector<8x128xf32>
    %487 = arith.negf %485 : vector<8x128xf32>
    %488 = math.exp %487 : vector<8x128xf32>
    %cst_142 = arith.constant 1.000000e+00 : f32
    %489 = vector.broadcast %cst_142 : f32 to vector<8x128xf32>
    %490 = arith.addf %489, %488 : vector<8x128xf32>
    %491 = arith.divf %489, %490 : vector<8x128xf32>
    %492 = arith.select %6, %486, %491 : vector<8x128xi1>, vector<8x128xf32>
    %c5_143 = arith.constant 5 : index
    %c0_144 = arith.constant 0 : index
    %c0_145 = arith.constant 0 : index
    %493 = vector.load %arg2[%c5_143, %c0_144, %c0_145] : memref<8x8x128xf32, #tpu.memory_space<vmem>>, vector<1x8x128xf32>
    %494 = vector.shape_cast %493 : vector<1x8x128xf32> to vector<8x128xf32>
    %495 = vector.shape_cast %492 : vector<8x128xf32> to vector<1x8x128xf32>
    tpu.vector_store %arg2[%c5_143, %c0_144, %c0_145], %495 {strides = array<i32>} : memref<8x8x128xf32, #tpu.memory_space<vmem>>, vector<1x8x128xf32>,
    %c6 = arith.constant 6 : index
    %c0_146 = arith.constant 0 : index
    %c0_147 = arith.constant 0 : index
    %496 = vector.load %arg0[%c6, %c0_146, %c0_147] : memref<8x8x128xf32, #tpu.memory_space<vmem>>, vector<1x8x128xf32>
    %497 = vector.shape_cast %496 : vector<1x8x128xf32> to vector<8x128xf32>
    %498 = arith.addf %497, %439 : vector<8x128xf32>
    %499 = arith.addf %498, %4 : vector<8x128xf32>
    %500 = arith.truncf %499 : vector<8x128xf32> to vector<8x128xbf16>
    %c0_148 = arith.constant 0 : index
    %c0_149 = arith.constant 0 : index
    %c0_150 = arith.constant 0 : index
    %501 = vector.load %arg1[%c0_148, %c0_149, %c0_150] : memref<3x128x512xbf16, #tpu.memory_space<vmem>>, vector<1x128x512xbf16>
    %502 = vector.shape_cast %501 : vector<1x128x512xbf16> to vector<128x512xbf16>
    %cst_151 = arith.constant dense<0.000000e+00> : vector<8x512xf32>
    %503 = tpu.matmul %500, %502, %cst_151 {dimension_numbers = #tpu.dot_dimension_numbers<[1], [0], [0], [1], [0, 0, 1, 1], [], []>} : vector<8x128xbf16>, vector<128x512xbf16>, vector<8x512xf32> -> vector<8x512xf32>
    %504 = vector.extract_strided_slice %503 {offsets = [0, 0], sizes = [8, 128], strides = [1, 1]} : vector<8x512xf32> to vector<8x128xf32>
    %505 = math.tanh %504 : vector<8x128xf32>
    %506 = vector.extract_strided_slice %503 {offsets = [0, 128], sizes = [8, 128], strides = [1, 1]} : vector<8x512xf32> to vector<8x128xf32>
    %507 = math.tanh %506 : vector<8x128xf32>
    %508 = vector.extract_strided_slice %503 {offsets = [0, 256], sizes = [8, 128], strides = [1, 1]} : vector<8x512xf32> to vector<8x128xf32>
    %509 = vector.extract_strided_slice %503 {offsets = [0, 384], sizes = [8, 128], strides = [1, 1]} : vector<8x512xf32> to vector<8x128xf32>
    %510 = arith.addf %508, %509 : vector<8x128xf32>
    %511 = arith.negf %510 : vector<8x128xf32>
    %512 = math.exp %511 : vector<8x128xf32>
    %cst_152 = arith.constant 1.000000e+00 : f32
    %513 = vector.broadcast %cst_152 : f32 to vector<8x128xf32>
    %514 = arith.addf %513, %512 : vector<8x128xf32>
    %515 = arith.divf %513, %514 : vector<8x128xf32>
    %cst_153 = arith.constant 1.000000e+00 : f32
    %516 = vector.broadcast %cst_153 : f32 to vector<8x128xf32>
    %517 = arith.subf %516, %515 : vector<8x128xf32>
    %518 = arith.mulf %505, %517 : vector<8x128xf32>
    %519 = arith.mulf %515, %507 : vector<8x128xf32>
    %520 = arith.addf %518, %519 : vector<8x128xf32>
    %521 = arith.addf %520, %462 : vector<8x128xf32>
    %522 = arith.addf %521, %4 : vector<8x128xf32>
    %523 = arith.truncf %522 : vector<8x128xf32> to vector<8x128xbf16>
    %c1_154 = arith.constant 1 : index
    %c0_155 = arith.constant 0 : index
    %c0_156 = arith.constant 0 : index
    %524 = vector.load %arg1[%c1_154, %c0_155, %c0_156] : memref<3x128x512xbf16, #tpu.memory_space<vmem>>, vector<1x128x512xbf16>
    %525 = vector.shape_cast %524 : vector<1x128x512xbf16> to vector<128x512xbf16>
    %cst_157 = arith.constant dense<0.000000e+00> : vector<8x512xf32>
    %526 = tpu.matmul %523, %525, %cst_157 {dimension_numbers = #tpu.dot_dimension_numbers<[1], [0], [0], [1], [0, 0, 1, 1], [], []>} : vector<8x128xbf16>, vector<128x512xbf16>, vector<8x512xf32> -> vector<8x512xf32>
    %527 = vector.extract_strided_slice %526 {offsets = [0, 0], sizes = [8, 128], strides = [1, 1]} : vector<8x512xf32> to vector<8x128xf32>
    %528 = math.tanh %527 : vector<8x128xf32>
    %529 = vector.extract_strided_slice %526 {offsets = [0, 128], sizes = [8, 128], strides = [1, 1]} : vector<8x512xf32> to vector<8x128xf32>
    %530 = math.tanh %529 : vector<8x128xf32>
    %531 = vector.extract_strided_slice %526 {offsets = [0, 256], sizes = [8, 128], strides = [1, 1]} : vector<8x512xf32> to vector<8x128xf32>
    %532 = vector.extract_strided_slice %526 {offsets = [0, 384], sizes = [8, 128], strides = [1, 1]} : vector<8x512xf32> to vector<8x128xf32>
    %533 = arith.addf %531, %532 : vector<8x128xf32>
    %534 = arith.negf %533 : vector<8x128xf32>
    %535 = math.exp %534 : vector<8x128xf32>
    %cst_158 = arith.constant 1.000000e+00 : f32
    %536 = vector.broadcast %cst_158 : f32 to vector<8x128xf32>
    %537 = arith.addf %536, %535 : vector<8x128xf32>
    %538 = arith.divf %536, %537 : vector<8x128xf32>
    %cst_159 = arith.constant 1.000000e+00 : f32
    %539 = vector.broadcast %cst_159 : f32 to vector<8x128xf32>
    %540 = arith.subf %539, %538 : vector<8x128xf32>
    %541 = arith.mulf %528, %540 : vector<8x128xf32>
    %542 = arith.mulf %538, %530 : vector<8x128xf32>
    %543 = arith.addf %541, %542 : vector<8x128xf32>
    %544 = arith.addf %543, %485 : vector<8x128xf32>
    %545 = arith.addf %544, %4 : vector<8x128xf32>
    %546 = arith.truncf %545 : vector<8x128xf32> to vector<8x128xbf16>
    %c2_160 = arith.constant 2 : index
    %c0_161 = arith.constant 0 : index
    %c0_162 = arith.constant 0 : index
    %547 = vector.load %arg1[%c2_160, %c0_161, %c0_162] : memref<3x128x512xbf16, #tpu.memory_space<vmem>>, vector<1x128x512xbf16>
    %548 = vector.shape_cast %547 : vector<1x128x512xbf16> to vector<128x512xbf16>
    %cst_163 = arith.constant dense<0.000000e+00> : vector<8x512xf32>
    %549 = tpu.matmul %546, %548, %cst_163 {dimension_numbers = #tpu.dot_dimension_numbers<[1], [0], [0], [1], [0, 0, 1, 1], [], []>} : vector<8x128xbf16>, vector<128x512xbf16>, vector<8x512xf32> -> vector<8x512xf32>
    %550 = vector.extract_strided_slice %549 {offsets = [0, 0], sizes = [8, 128], strides = [1, 1]} : vector<8x512xf32> to vector<8x128xf32>
    %551 = math.tanh %550 : vector<8x128xf32>
    %552 = vector.extract_strided_slice %549 {offsets = [0, 128], sizes = [8, 128], strides = [1, 1]} : vector<8x512xf32> to vector<8x128xf32>
    %553 = math.tanh %552 : vector<8x128xf32>
    %554 = vector.extract_strided_slice %549 {offsets = [0, 256], sizes = [8, 128], strides = [1, 1]} : vector<8x512xf32> to vector<8x128xf32>
    %555 = vector.extract_strided_slice %549 {offsets = [0, 384], sizes = [8, 128], strides = [1, 1]} : vector<8x512xf32> to vector<8x128xf32>
    %556 = arith.addf %554, %555 : vector<8x128xf32>
    %557 = arith.negf %556 : vector<8x128xf32>
    %558 = math.exp %557 : vector<8x128xf32>
    %cst_164 = arith.constant 1.000000e+00 : f32
    %559 = vector.broadcast %cst_164 : f32 to vector<8x128xf32>
    %560 = arith.addf %559, %558 : vector<8x128xf32>
    %561 = arith.divf %559, %560 : vector<8x128xf32>
    %cst_165 = arith.constant 1.000000e+00 : f32
    %562 = vector.broadcast %cst_165 : f32 to vector<8x128xf32>
    %563 = arith.subf %562, %561 : vector<8x128xf32>
    %564 = arith.mulf %551, %563 : vector<8x128xf32>
    %565 = arith.mulf %561, %553 : vector<8x128xf32>
    %566 = arith.addf %564, %565 : vector<8x128xf32>
    %567 = math.tanh %566 : vector<8x128xf32>
    %568 = arith.negf %566 : vector<8x128xf32>
    %569 = math.exp %568 : vector<8x128xf32>
    %cst_166 = arith.constant 1.000000e+00 : f32
    %570 = vector.broadcast %cst_166 : f32 to vector<8x128xf32>
    %571 = arith.addf %570, %569 : vector<8x128xf32>
    %572 = arith.divf %570, %571 : vector<8x128xf32>
    %573 = arith.select %6, %567, %572 : vector<8x128xi1>, vector<8x128xf32>
    %c6_167 = arith.constant 6 : index
    %c0_168 = arith.constant 0 : index
    %c0_169 = arith.constant 0 : index
    %574 = vector.load %arg2[%c6_167, %c0_168, %c0_169] : memref<8x8x128xf32, #tpu.memory_space<vmem>>, vector<1x8x128xf32>
    %575 = vector.shape_cast %574 : vector<1x8x128xf32> to vector<8x128xf32>
    %576 = vector.shape_cast %573 : vector<8x128xf32> to vector<1x8x128xf32>
    tpu.vector_store %arg2[%c6_167, %c0_168, %c0_169], %576 {strides = array<i32>} : memref<8x8x128xf32, #tpu.memory_space<vmem>>, vector<1x8x128xf32>,
    %c7 = arith.constant 7 : index
    %c0_170 = arith.constant 0 : index
    %c0_171 = arith.constant 0 : index
    %577 = vector.load %arg0[%c7, %c0_170, %c0_171] : memref<8x8x128xf32, #tpu.memory_space<vmem>>, vector<1x8x128xf32>
    %578 = vector.shape_cast %577 : vector<1x8x128xf32> to vector<8x128xf32>
    %579 = arith.addf %578, %520 : vector<8x128xf32>
    %580 = arith.addf %579, %4 : vector<8x128xf32>
    %581 = arith.truncf %580 : vector<8x128xf32> to vector<8x128xbf16>
    %c0_172 = arith.constant 0 : index
    %c0_173 = arith.constant 0 : index
    %c0_174 = arith.constant 0 : index
    %582 = vector.load %arg1[%c0_172, %c0_173, %c0_174] : memref<3x128x512xbf16, #tpu.memory_space<vmem>>, vector<1x128x512xbf16>
    %583 = vector.shape_cast %582 : vector<1x128x512xbf16> to vector<128x512xbf16>
    %cst_175 = arith.constant dense<0.000000e+00> : vector<8x512xf32>
    %584 = tpu.matmul %581, %583, %cst_175 {dimension_numbers = #tpu.dot_dimension_numbers<[1], [0], [0], [1], [0, 0, 1, 1], [], []>} : vector<8x128xbf16>, vector<128x512xbf16>, vector<8x512xf32> -> vector<8x512xf32>
    %585 = vector.extract_strided_slice %584 {offsets = [0, 0], sizes = [8, 128], strides = [1, 1]} : vector<8x512xf32> to vector<8x128xf32>
    %586 = math.tanh %585 : vector<8x128xf32>
    %587 = vector.extract_strided_slice %584 {offsets = [0, 128], sizes = [8, 128], strides = [1, 1]} : vector<8x512xf32> to vector<8x128xf32>
    %588 = math.tanh %587 : vector<8x128xf32>
    %589 = vector.extract_strided_slice %584 {offsets = [0, 256], sizes = [8, 128], strides = [1, 1]} : vector<8x512xf32> to vector<8x128xf32>
    %590 = vector.extract_strided_slice %584 {offsets = [0, 384], sizes = [8, 128], strides = [1, 1]} : vector<8x512xf32> to vector<8x128xf32>
    %591 = arith.addf %589, %590 : vector<8x128xf32>
    %592 = arith.negf %591 : vector<8x128xf32>
    %593 = math.exp %592 : vector<8x128xf32>
    %cst_176 = arith.constant 1.000000e+00 : f32
    %594 = vector.broadcast %cst_176 : f32 to vector<8x128xf32>
    %595 = arith.addf %594, %593 : vector<8x128xf32>
    %596 = arith.divf %594, %595 : vector<8x128xf32>
    %cst_177 = arith.constant 1.000000e+00 : f32
    %597 = vector.broadcast %cst_177 : f32 to vector<8x128xf32>
    %598 = arith.subf %597, %596 : vector<8x128xf32>
    %599 = arith.mulf %586, %598 : vector<8x128xf32>
    %600 = arith.mulf %596, %588 : vector<8x128xf32>
    %601 = arith.addf %599, %600 : vector<8x128xf32>
    %602 = arith.addf %601, %543 : vector<8x128xf32>
    %603 = arith.addf %602, %4 : vector<8x128xf32>
    %604 = arith.truncf %603 : vector<8x128xf32> to vector<8x128xbf16>
    %c1_178 = arith.constant 1 : index
    %c0_179 = arith.constant 0 : index
    %c0_180 = arith.constant 0 : index
    %605 = vector.load %arg1[%c1_178, %c0_179, %c0_180] : memref<3x128x512xbf16, #tpu.memory_space<vmem>>, vector<1x128x512xbf16>
    %606 = vector.shape_cast %605 : vector<1x128x512xbf16> to vector<128x512xbf16>
    %cst_181 = arith.constant dense<0.000000e+00> : vector<8x512xf32>
    %607 = tpu.matmul %604, %606, %cst_181 {dimension_numbers = #tpu.dot_dimension_numbers<[1], [0], [0], [1], [0, 0, 1, 1], [], []>} : vector<8x128xbf16>, vector<128x512xbf16>, vector<8x512xf32> -> vector<8x512xf32>
    %608 = vector.extract_strided_slice %607 {offsets = [0, 0], sizes = [8, 128], strides = [1, 1]} : vector<8x512xf32> to vector<8x128xf32>
    %609 = math.tanh %608 : vector<8x128xf32>
    %610 = vector.extract_strided_slice %607 {offsets = [0, 128], sizes = [8, 128], strides = [1, 1]} : vector<8x512xf32> to vector<8x128xf32>
    %611 = math.tanh %610 : vector<8x128xf32>
    %612 = vector.extract_strided_slice %607 {offsets = [0, 256], sizes = [8, 128], strides = [1, 1]} : vector<8x512xf32> to vector<8x128xf32>
    %613 = vector.extract_strided_slice %607 {offsets = [0, 384], sizes = [8, 128], strides = [1, 1]} : vector<8x512xf32> to vector<8x128xf32>
    %614 = arith.addf %612, %613 : vector<8x128xf32>
    %615 = arith.negf %614 : vector<8x128xf32>
    %616 = math.exp %615 : vector<8x128xf32>
    %cst_182 = arith.constant 1.000000e+00 : f32
    %617 = vector.broadcast %cst_182 : f32 to vector<8x128xf32>
    %618 = arith.addf %617, %616 : vector<8x128xf32>
    %619 = arith.divf %617, %618 : vector<8x128xf32>
    %cst_183 = arith.constant 1.000000e+00 : f32
    %620 = vector.broadcast %cst_183 : f32 to vector<8x128xf32>
    %621 = arith.subf %620, %619 : vector<8x128xf32>
    %622 = arith.mulf %609, %621 : vector<8x128xf32>
    %623 = arith.mulf %619, %611 : vector<8x128xf32>
    %624 = arith.addf %622, %623 : vector<8x128xf32>
    %625 = arith.addf %624, %566 : vector<8x128xf32>
    %626 = arith.addf %625, %4 : vector<8x128xf32>
    %627 = arith.truncf %626 : vector<8x128xf32> to vector<8x128xbf16>
    %c2_184 = arith.constant 2 : index
    %c0_185 = arith.constant 0 : index
    %c0_186 = arith.constant 0 : index
    %628 = vector.load %arg1[%c2_184, %c0_185, %c0_186] : memref<3x128x512xbf16, #tpu.memory_space<vmem>>, vector<1x128x512xbf16>
    %629 = vector.shape_cast %628 : vector<1x128x512xbf16> to vector<128x512xbf16>
    %cst_187 = arith.constant dense<0.000000e+00> : vector<8x512xf32>
    %630 = tpu.matmul %627, %629, %cst_187 {dimension_numbers = #tpu.dot_dimension_numbers<[1], [0], [0], [1], [0, 0, 1, 1], [], []>} : vector<8x128xbf16>, vector<128x512xbf16>, vector<8x512xf32> -> vector<8x512xf32>
    %631 = vector.extract_strided_slice %630 {offsets = [0, 0], sizes = [8, 128], strides = [1, 1]} : vector<8x512xf32> to vector<8x128xf32>
    %632 = math.tanh %631 : vector<8x128xf32>
    %633 = vector.extract_strided_slice %630 {offsets = [0, 128], sizes = [8, 128], strides = [1, 1]} : vector<8x512xf32> to vector<8x128xf32>
    %634 = math.tanh %633 : vector<8x128xf32>
    %635 = vector.extract_strided_slice %630 {offsets = [0, 256], sizes = [8, 128], strides = [1, 1]} : vector<8x512xf32> to vector<8x128xf32>
    %636 = vector.extract_strided_slice %630 {offsets = [0, 384], sizes = [8, 128], strides = [1, 1]} : vector<8x512xf32> to vector<8x128xf32>
    %637 = arith.addf %635, %636 : vector<8x128xf32>
    %638 = arith.negf %637 : vector<8x128xf32>
    %639 = math.exp %638 : vector<8x128xf32>
    %cst_188 = arith.constant 1.000000e+00 : f32
    %640 = vector.broadcast %cst_188 : f32 to vector<8x128xf32>
    %641 = arith.addf %640, %639 : vector<8x128xf32>
    %642 = arith.divf %640, %641 : vector<8x128xf32>
    %cst_189 = arith.constant 1.000000e+00 : f32
    %643 = vector.broadcast %cst_189 : f32 to vector<8x128xf32>
    %644 = arith.subf %643, %642 : vector<8x128xf32>
    %645 = arith.mulf %632, %644 : vector<8x128xf32>
    %646 = arith.mulf %642, %634 : vector<8x128xf32>
    %647 = arith.addf %645, %646 : vector<8x128xf32>
    %648 = math.tanh %647 : vector<8x128xf32>
    %649 = arith.negf %647 : vector<8x128xf32>
    %650 = math.exp %649 : vector<8x128xf32>
    %cst_190 = arith.constant 1.000000e+00 : f32
    %651 = vector.broadcast %cst_190 : f32 to vector<8x128xf32>
    %652 = arith.addf %651, %650 : vector<8x128xf32>
    %653 = arith.divf %651, %652 : vector<8x128xf32>
    %654 = arith.select %6, %648, %653 : vector<8x128xi1>, vector<8x128xf32>
    %c7_191 = arith.constant 7 : index
    %c0_192 = arith.constant 0 : index
    %c0_193 = arith.constant 0 : index
    %655 = vector.load %arg2[%c7_191, %c0_192, %c0_193] : memref<8x8x128xf32, #tpu.memory_space<vmem>>, vector<1x8x128xf32>
    %656 = vector.shape_cast %655 : vector<1x8x128xf32> to vector<8x128xf32>
    %657 = vector.shape_cast %654 : vector<8x128xf32> to vector<1x8x128xf32>
    tpu.vector_store %arg2[%c7_191, %c0_192, %c0_193], %657 {strides = array<i32>} : memref<8x8x128xf32, #tpu.memory_space<vmem>>, vector<1x8x128xf32>,
    %c0_194 = arith.constant 0 : index
    %c0_195 = arith.constant 0 : index
    %c0_196 = arith.constant 0 : index
    %658 = vector.load %arg3[%c0_194, %c0_195, %c0_196] : memref<3x8x128xf32, #tpu.memory_space<vmem>>, vector<1x8x128xf32>
    %659 = vector.shape_cast %658 : vector<1x8x128xf32> to vector<8x128xf32>
    %660 = vector.shape_cast %601 : vector<8x128xf32> to vector<1x8x128xf32>
    tpu.vector_store %arg3[%c0_194, %c0_195, %c0_196], %660 {strides = array<i32>} : memref<3x8x128xf32, #tpu.memory_space<vmem>>, vector<1x8x128xf32>,
    %c1_197 = arith.constant 1 : index
    %c0_198 = arith.constant 0 : index
    %c0_199 = arith.constant 0 : index
    %661 = vector.load %arg3[%c1_197, %c0_198, %c0_199] : memref<3x8x128xf32, #tpu.memory_space<vmem>>, vector<1x8x128xf32>
    %662 = vector.shape_cast %661 : vector<1x8x128xf32> to vector<8x128xf32>
    %663 = vector.shape_cast %624 : vector<8x128xf32> to vector<1x8x128xf32>
    tpu.vector_store %arg3[%c1_197, %c0_198, %c0_199], %663 {strides = array<i32>} : memref<3x8x128xf32, #tpu.memory_space<vmem>>, vector<1x8x128xf32>,
    %c2_200 = arith.constant 2 : index
    %c0_201 = arith.constant 0 : index
    %c0_202 = arith.constant 0 : index
    %664 = vector.load %arg3[%c2_200, %c0_201, %c0_202] : memref<3x8x128xf32, #tpu.memory_space<vmem>>, vector<1x8x128xf32>
    %665 = vector.shape_cast %664 : vector<1x8x128xf32> to vector<8x128xf32>
    %666 = vector.shape_cast %647 : vector<8x128xf32> to vector<1x8x128xf32>
    tpu.vector_store %arg3[%c2_200, %c0_201, %c0_202], %666 {strides = array<i32>} : memref<3x8x128xf32, #tpu.memory_space<vmem>>, vector<1x8x128xf32>,
    return
  }
}

</mosaic_0001>

<llo_original>
// kernel: tpu_custom_call.1
$region0: #{tpu_custom_call.1}
  #allocation0 [shape = 'u32[]', space=smem, size = 0x4, offset = 0x4, fixed_abs, tag = 'smem constant byte address 0x4 - core index']
  #allocation1 [shape = 'u32[144,128]{1,0:T(1,128)}', space=vmem, size = 0x12000, scoped, tag = 'internal scratch']
  %s0 = inlined_call_operand.hbm [shape: f32[8,8,128], index: 0, kind: input, shape index: {}]
  %s1 = inlined_call_operand.hbm [shape: bf16[3,128,512], index: 1, kind: input, shape index: {}]
  %s2 = inlined_call_operand.hbm [shape: f32[8,8,128], index: 2, kind: output, shape index: {0}]
  %s3 = inlined_call_operand.hbm [shape: f32[3,8,128], index: 3, kind: output, shape index: {1}]
  %4 = xla_tuple %s2, %s3
  %s5 = sld [smem:[#allocation0]]
  $region34: #{tpu_custom_call.1} parent=0
    _
  %s7 = ssub.s32 1, %s5
  %s8 = scalar_select 0, %s7, %s5
  $region1: #{tpu_custom_call.1} parent=0
    #allocation2 [shape = 'u8[32768]{0}', space=vmem, size = 0x8000, scoped, tag = 'input window, operand 0, single buffered']
    #allocation3 [shape = 's32[1]{0}', space=sflag, size = 0x4, scoped, tag = 'scoped memory for tpu_custom_call.1']
    #allocation4 [shape = 's32[1]{0}', space=sflag, size = 0x4, scoped, tag = 'scoped memory for tpu_custom_call.1']
    #allocation5 [shape = 'u8[393216]{0}', space=vmem, size = 0x60000, scoped, tag = 'input window, operand 1, single buffered']
    #allocation6 [shape = 's32[1]{0}', space=sflag, size = 0x4, scoped, tag = 'scoped memory for tpu_custom_call.1']
    #allocation7 [shape = 'u8[32768]{0}', space=vmem, size = 0x8000, scoped, tag = 'output window, operand 0, single buffered']
    #allocation8 [shape = 'u8[12288]{0}', space=vmem, size = 0x3000, scoped, tag = 'output window, operand 1, single buffered']
    #allocation9 [shape = 's32[1]{0}', space=sflag, size = 0x4, scoped, tag = 'scoped memory for tpu_custom_call.1']
    %9 = vsyncpa [#allocation3], 0
    %10 = vsyncpa [#allocation6], 0
    %11 = vsyncpa [#allocation4], 0
    %12 = vsyncpa [#allocation9], 0
    // Predicated region
    $region2: #{tpu_custom_call.1} parent=1 // pred_check
      _
    $region3: #{tpu_custom_call.1} parent=1 // pred_check_branch
      %14 = sbr.rel (0) target = $region5
    $region4: #{tpu_custom_call.1} parent=1 // pred_region
      %s16 = ssub.s32 1024, 1024
      %17 = vsyncadd [#allocation3], %s16
      %s18 = sshll.u32 [#allocation2], 4
      %s19 = int_to_ptr.vmem [resolvable:$true] %s18
      %24 = dma.hbm_to_vmem [thread:$0]  %s0, 1024, %s19, [#allocation3], 128, 128, 8
    $region5: #{tpu_custom_call.1} parent=1 // pred_fallthru
      _
    // Predicated region
    $region6: #{tpu_custom_call.1} parent=1 // pred_check
      _
    $region7: #{tpu_custom_call.1} parent=1 // pred_check_branch
      %26 = sbr.rel (0) target = $region9
    $region8: #{tpu_custom_call.1} parent=1 // pred_region
      %s28 = ssub.s32 12288, 12288
      %29 = vsyncadd [#allocation6], %s28
      %s30 = sshll.u32 [#allocation5], 4
      %s31 = int_to_ptr.vmem [resolvable:$true] %s30
      %36 = dma.hbm_to_vmem [thread:$0]  %s1, 12288, %s31, [#allocation6], 256, 256, 16
    $region9: #{tpu_custom_call.1} parent=1 // pred_fallthru
      _
    // Predicated region
    $region10: #{tpu_custom_call.1} parent=1 // pred_check
      _
    $region11: #{tpu_custom_call.1} parent=1 // pred_check_branch
      %38 = sbr.rel (0) target = $region13
    $region12: #{tpu_custom_call.1} parent=1 // pred_region
      %39 = dma.done [#allocation3], 1024
    $region13: #{tpu_custom_call.1} parent=1 // pred_fallthru
      _
    // Predicated region
    $region14: #{tpu_custom_call.1} parent=1 // pred_check
      _
    $region15: #{tpu_custom_call.1} parent=1 // pred_check_branch
      %41 = sbr.rel (0) target = $region17
    $region16: #{tpu_custom_call.1} parent=1 // pred_region
      %42 = dma.done [#allocation6], 12288
    $region17: #{tpu_custom_call.1} parent=1 // pred_fallthru
      _
    %v44 = vlaneseq
    %v45 = vand.u32 %v44, 127
    %vm46 = vcmp.eq.s32.totalorder %v45, 127
    %v47 = vsel %vm46, 1, 0
    %v48 = vcvt.s32.f32 %v47
    %vm49 = vcmp.eq.s32.totalorder %v45, 0
    %v50 = vld [vmem:[#allocation2] sm:$0xff]
    %v51 = vadd.f32 %v50, 0.0
    %v52 = vadd.f32 %v51, %v48
    %v53 = vpack.c.bf16 %v52, %v52
    %v54 = vld [vmem:[#allocation5] sm:$0xff]
    %v55 = vld [vmem:[#allocation5 + $0x8] sm:$0xff]
    %v56 = vld [vmem:[#allocation5 + $0x10] sm:$0xff]
    %v57 = vld [vmem:[#allocation5 + $0x18] sm:$0xff]
    %v58 = vld [vmem:[#allocation5 + $0x20] sm:$0xff]
    %v59 = vld [vmem:[#allocation5 + $0x28] sm:$0xff]
    %v60 = vld [vmem:[#allocation5 + $0x30] sm:$0xff]
    %v61 = vld [vmem:[#allocation5 + $0x38] sm:$0xff]
    %v62 = vld [vmem:[#allocation5 + $0x40] sm:$0xff]
    %v63 = vld [vmem:[#allocation5 + $0x48] sm:$0xff]
    %v64 = vld [vmem:[#allocation5 + $0x50] sm:$0xff]
    %v65 = vld [vmem:[#allocation5 + $0x58] sm:$0xff]
    %v66 = vld [vmem:[#allocation5 + $0x60] sm:$0xff]
    %v67 = vld [vmem:[#allocation5 + $0x68] sm:$0xff]
    %v68 = vld [vmem:[#allocation5 + $0x70] sm:$0xff]
    %v69 = vld [vmem:[#allocation5 + $0x78] sm:$0xff]
    %v70 = vld [vmem:[#allocation5 + $0x80] sm:$0xff]
    %v71 = vld [vmem:[#allocation5 + $0x88] sm:$0xff]
    %v72 = vld [vmem:[#allocation5 + $0x90] sm:$0xff]
    %v73 = vld [vmem:[#allocation5 + $0x98] sm:$0xff]
    %v74 = vld [vmem:[#allocation5 + $0xa0] sm:$0xff]
    %v75 = vld [vmem:[#allocation5 + $0xa8] sm:$0xff]
    %v76 = vld [vmem:[#allocation5 + $0xb0] sm:$0xff]
    %v77 = vld [vmem:[#allocation5 + $0xb8] sm:$0xff]
    %v78 = vld [vmem:[#allocation5 + $0xc0] sm:$0xff]
    %v79 = vld [vmem:[#allocation5 + $0xc8] sm:$0xff]
    %v80 = vld [vmem:[#allocation5 + $0xd0] sm:$0xff]
    %v81 = vld [vmem:[#allocation5 + $0xd8] sm:$0xff]
    %v82 = vld [vmem:[#allocation5 + $0xe0] sm:$0xff]
    %v83 = vld [vmem:[#allocation5 + $0xe8] sm:$0xff]
    %v84 = vld [vmem:[#allocation5 + $0xf0] sm:$0xff]
    %v85 = vld [vmem:[#allocation5 + $0xf8] sm:$0xff]
    %v118 = vunpack.c.l.b16 %v54
    %v119 = vunpack.c.h.b16 %v54
    %v120 = vunpack.c.l.b16 %v55
    %v121 = vunpack.c.h.b16 %v55
    %v122 = vunpack.c.l.b16 %v56
    %v123 = vunpack.c.h.b16 %v56
    %v124 = vunpack.c.l.b16 %v57
    %v125 = vunpack.c.h.b16 %v57
    %v126 = vunpack.c.l.b16 %v58
    %v127 = vunpack.c.h.b16 %v58
    %v128 = vunpack.c.l.b16 %v59
    %v129 = vunpack.c.h.b16 %v59
    %v130 = vunpack.c.l.b16 %v60
    %v131 = vunpack.c.h.b16 %v60
    %v132 = vunpack.c.l.b16 %v61
    %v133 = vunpack.c.h.b16 %v61
    %v134 = vunpack.c.l.b16 %v62
    %v135 = vunpack.c.h.b16 %v62
    %v136 = vunpack.c.l.b16 %v63
    %v137 = vunpack.c.h.b16 %v63
    %v138 = vunpack.c.l.b16 %v64
    %v139 = vunpack.c.h.b16 %v64
    %v140 = vunpack.c.l.b16 %v65
    %v141 = vunpack.c.h.b16 %v65
    %v142 = vunpack.c.l.b16 %v66
    %v143 = vunpack.c.h.b16 %v66
    %v144 = vunpack.c.l.b16 %v67
    %v145 = vunpack.c.h.b16 %v67
    %v146 = vunpack.c.l.b16 %v68
    %v147 = vunpack.c.h.b16 %v68
    %v148 = vunpack.c.l.b16 %v69
    %v149 = vunpack.c.h.b16 %v69
    %v150 = vunpack.c.l.b16 %v70
    %v151 = vunpack.c.h.b16 %v70
    %v152 = vunpack.c.l.b16 %v71
    %v153 = vunpack.c.h.b16 %v71
    %v154 = vunpack.c.l.b16 %v72
    %v155 = vunpack.c.h.b16 %v72
    %v156 = vunpack.c.l.b16 %v73
    %v157 = vunpack.c.h.b16 %v73
    %v158 = vunpack.c.l.b16 %v74
    %v159 = vunpack.c.h.b16 %v74
    %v160 = vunpack.c.l.b16 %v75
    %v161 = vunpack.c.h.b16 %v75
    %v162 = vunpack.c.l.b16 %v76
    %v163 = vunpack.c.h.b16 %v76
    %v164 = vunpack.c.l.b16 %v77
    %v165 = vunpack.c.h.b16 %v77
    %v166 = vunpack.c.l.b16 %v78
    %v167 = vunpack.c.h.b16 %v78
    %v168 = vunpack.c.l.b16 %v79
    %v169 = vunpack.c.h.b16 %v79
    %v170 = vunpack.c.l.b16 %v80
    %v171 = vunpack.c.h.b16 %v80
    %v172 = vunpack.c.l.b16 %v81
    %v173 = vunpack.c.h.b16 %v81
    %v174 = vunpack.c.l.b16 %v82
    %v175 = vunpack.c.h.b16 %v82
    %v176 = vunpack.c.l.b16 %v83
    %v177 = vunpack.c.h.b16 %v83
    %v178 = vunpack.c.l.b16 %v84
    %v179 = vunpack.c.h.b16 %v84
    %v180 = vunpack.c.l.b16 %v85
    %v181 = vunpack.c.h.b16 %v85
    %v182 = vpack.c.b16 %v122, %v118
    %v183 = vpack.c.b16 %v123, %v119
    %v184 = vpack.c.b16 %v124, %v120
    %v185 = vpack.c.b16 %v125, %v121
    %v186 = vpack.c.b16 %v130, %v126
    %v187 = vpack.c.b16 %v131, %v127
    %v188 = vpack.c.b16 %v132, %v128
    %v189 = vpack.c.b16 %v133, %v129
    %v190 = vpack.c.b16 %v138, %v134
    %v191 = vpack.c.b16 %v139, %v135
    %v192 = vpack.c.b16 %v140, %v136
    %v193 = vpack.c.b16 %v141, %v137
    %v194 = vpack.c.b16 %v146, %v142
    %v195 = vpack.c.b16 %v147, %v143
    %v196 = vpack.c.b16 %v148, %v144
    %v197 = vpack.c.b16 %v149, %v145
    %v198 = vpack.c.b16 %v154, %v150
    %v199 = vpack.c.b16 %v155, %v151
    %v200 = vpack.c.b16 %v156, %v152
    %v201 = vpack.c.b16 %v157, %v153
    %v202 = vpack.c.b16 %v162, %v158
    %v203 = vpack.c.b16 %v163, %v159
    %v204 = vpack.c.b16 %v164, %v160
    %v205 = vpack.c.b16 %v165, %v161
    %v206 = vpack.c.b16 %v170, %v166
    %v207 = vpack.c.b16 %v171, %v167
    %v208 = vpack.c.b16 %v172, %v168
    %v209 = vpack.c.b16 %v173, %v169
    %v210 = vpack.c.b16 %v178, %v174
    %v211 = vpack.c.b16 %v179, %v175
    %v212 = vpack.c.b16 %v180, %v176
    %v213 = vpack.c.b16 %v181, %v177
    %246 = vmatprep.subr.bf16.mxu0 %v211
    %247 = vmatpush1.bf16.msra.mxu0 %v210
    %248 = vmatprep.subr.bf16.mxu0 %v207
    %249 = vmatpush1.bf16.msra.mxu0 %v206
    %250 = vmatprep.subr.bf16.mxu0 %v203
    %251 = vmatpush1.bf16.msra.mxu0 %v202
    %252 = vmatprep.subr.bf16.mxu0 %v199
    %253 = vmatpush1.bf16.msra.mxu0 %v198
    %254 = vmatprep.subr.bf16.mxu0 %v195
    %255 = vmatpush1.bf16.msra.mxu0 %v194
    %256 = vmatprep.subr.bf16.mxu0 %v191
    %257 = vmatpush1.bf16.msra.mxu0 %v190
    %258 = vmatprep.subr.bf16.mxu0 %v187
    %259 = vmatpush1.bf16.msra.mxu0 %v186
    %260 = vmatprep.subr.bf16.mxu0 %v183
    %261 = vmatpush1.bf16.msra.mxu0 %v182
    %262 = vmatprep.subr.bf16.mxu0 0
    %263 = vmatpush2.bf16.msra.mxu0 0
    %264 = vmatprep.subr.bf16.mxu0 0
    %265 = vmatpush2.bf16.msra.mxu0 0
    %266 = vmatprep.subr.bf16.mxu0 0
    %267 = vmatpush2.bf16.msra.mxu0 0
    %268 = vmatprep.subr.bf16.mxu0 0
    %269 = vmatpush2.bf16.msra.mxu0 0
    %270 = vmatprep.subr.bf16.mxu0 0
    %271 = vmatpush2.bf16.msra.mxu0 0
    %272 = vmatprep.subr.bf16.mxu0 0
    %273 = vmatpush2.bf16.msra.mxu0 0
    %274 = vmatprep.subr.bf16.mxu0 0
    %275 = vmatpush2.bf16.msra.mxu0 0
    %276 = vmatprep.subr.bf16.mxu0 0
    %277 = vmatpush2.bf16.msra.mxu0 0
    %278 = vmatprep.mubr.bf16.mxu0 0
    %279 = vmatmul.mubr.bf16.gmra.mxu0 %v53
    %v280 = vpop.f32.mrf.mxu0
    %v281 = vadd.f32 0.0, %v280
    %v282 = vpop.f32.mrf.mxu0
    %v283 = vadd.f32 0.0, %v282
    %v284 = vpop.f32.mrf.mxu0
    %v285 = vpop.f32.mrf.mxu0
    %286 = vdwg.mxu0
    %287 = vmatprep.subr.bf16.mxu0 %v213
    %288 = vmatpush1.bf16.msra.mxu0 %v212
    %289 = vmatprep.subr.bf16.mxu0 %v209
    %290 = vmatpush1.bf16.msra.mxu0 %v208
    %291 = vmatprep.subr.bf16.mxu0 %v205
    %292 = vmatpush1.bf16.msra.mxu0 %v204
    %293 = vmatprep.subr.bf16.mxu0 %v201
    %294 = vmatpush1.bf16.msra.mxu0 %v200
    %295 = vmatprep.subr.bf16.mxu0 %v197
    %296 = vmatpush1.bf16.msra.mxu0 %v196
    %297 = vmatprep.subr.bf16.mxu0 %v193
    %298 = vmatpush1.bf16.msra.mxu0 %v192
    %299 = vmatprep.subr.bf16.mxu0 %v189
    %300 = vmatpush1.bf16.msra.mxu0 %v188
    %301 = vmatprep.subr.bf16.mxu0 %v185
    %302 = vmatpush1.bf16.msra.mxu0 %v184
    %303 = vmatprep.subr.bf16.mxu0 0
    %304 = vmatpush2.bf16.msra.mxu0 0
    %305 = vmatprep.subr.bf16.mxu0 0
    %306 = vmatpush2.bf16.msra.mxu0 0
    %307 = vmatprep.subr.bf16.mxu0 0
    %308 = vmatpush2.bf16.msra.mxu0 0
    %309 = vmatprep.subr.bf16.mxu0 0
    %310 = vmatpush2.bf16.msra.mxu0 0
    %311 = vmatprep.subr.bf16.mxu0 0
    %312 = vmatpush2.bf16.msra.mxu0 0
    %313 = vmatprep.subr.bf16.mxu0 0
    %314 = vmatpush2.bf16.msra.mxu0 0
    %315 = vmatprep.subr.bf16.mxu0 0
    %316 = vmatpush2.bf16.msra.mxu0 0
    %317 = vmatprep.subr.bf16.mxu0 0
    %318 = vmatpush2.bf16.msra.mxu0 0
    %319 = vmatprep.mubr.bf16.mxu0 0
    %320 = vmatmul.mubr.bf16.gmra.mxu0 %v53
    %v321 = vpop.f32.mrf.mxu0
    %v322 = vadd.f32 0.0, %v321
    %v323 = vpop.f32.mrf.mxu0
    %v324 = vadd.f32 0.0, %v323
    %v325 = vpop.f32.mrf.mxu0
    %v326 = vpop.f32.mrf.mxu0
    %327 = vdwg.mxu0
    %v328 = vtanh.pop %v281
    %v329 = vtanh.pop %v283
    %v330 = vadd.f32 %v322, %v324
    %v331 = vxor.u32 %v330, 2147483648
    %v332 = vmul.f32 %v331, 1.442695
    %v333 = vpow.pop %v332
    %v334 = vadd.f32 %v333, 1.0
    %v335 = vrcp.pop %v334
    %v336 = vmul.f32 1.0, %v335
    %v337 = vsub.f32 1.0, %v336
    %v338 = vmul.f32 %v328, %v337
    %v339 = vmul.f32 %v336, %v329
    %v340 = vadd.f32 %v338, %v339
    %v341 = vadd.f32 %v340, 0.0
    %v342 = vadd.f32 %v341, %v48
    %v343 = vpack.c.bf16 %v342, %v342
    %s344 = scalar_lea.vmem [#allocation5], 256
    %v345 = vld [vmem:[%s344] sm:$0xff]
    %v346 = vld [vmem:[%s344 + $0x8] sm:$0xff]
    %v347 = vld [vmem:[%s344 + $0x10] sm:$0xff]
    %v348 = vld [vmem:[%s344 + $0x18] sm:$0xff]
    %v349 = vld [vmem:[%s344 + $0x20] sm:$0xff]
    %v350 = vld [vmem:[%s344 + $0x28] sm:$0xff]
    %v351 = vld [vmem:[%s344 + $0x30] sm:$0xff]
    %v352 = vld [vmem:[%s344 + $0x38] sm:$0xff]
    %v353 = vld [vmem:[%s344 + $0x40] sm:$0xff]
    %v354 = vld [vmem:[%s344 + $0x48] sm:$0xff]
    %v355 = vld [vmem:[%s344 + $0x50] sm:$0xff]
    %v356 = vld [vmem:[%s344 + $0x58] sm:$0xff]
    %v357 = vld [vmem:[%s344 + $0x60] sm:$0xff]
    %v358 = vld [vmem:[%s344 + $0x68] sm:$0xff]
    %v359 = vld [vmem:[%s344 + $0x70] sm:$0xff]
    %v360 = vld [vmem:[%s344 + $0x78] sm:$0xff]
    %v361 = vld [vmem:[%s344 + $0x80] sm:$0xff]
    %v362 = vld [vmem:[%s344 + $0x88] sm:$0xff]
    %v363 = vld [vmem:[%s344 + $0x90] sm:$0xff]
    %v364 = vld [vmem:[%s344 + $0x98] sm:$0xff]
    %v365 = vld [vmem:[%s344 + $0xa0] sm:$0xff]
    %v366 = vld [vmem:[%s344 + $0xa8] sm:$0xff]
    %v367 = vld [vmem:[%s344 + $0xb0] sm:$0xff]
    %v368 = vld [vmem:[%s344 + $0xb8] sm:$0xff]
    %v369 = vld [vmem:[%s344 + $0xc0] sm:$0xff]
    %v370 = vld [vmem:[%s344 + $0xc8] sm:$0xff]
    %v371 = vld [vmem:[%s344 + $0xd0] sm:$0xff]
    %v372 = vld [vmem:[%s344 + $0xd8] sm:$0xff]
    %v373 = vld [vmem:[%s344 + $0xe0] sm:$0xff]
    %v374 = vld [vmem:[%s344 + $0xe8] sm:$0xff]
    %v375 = vld [vmem:[%s344 + $0xf0] sm:$0xff]
    %v376 = vld [vmem:[%s344 + $0xf8] sm:$0xff]
    %v409 = vunpack.c.l.b16 %v345
    %v410 = vunpack.c.h.b16 %v345
    %v411 = vunpack.c.l.b16 %v346
    %v412 = vunpack.c.h.b16 %v346
    %v413 = vunpack.c.l.b16 %v347
    %v414 = vunpack.c.h.b16 %v347
    %v415 = vunpack.c.l.b16 %v348
    %v416 = vunpack.c.h.b16 %v348
    %v417 = vunpack.c.l.b16 %v349
    %v418 = vunpack.c.h.b16 %v349
    %v419 = vunpack.c.l.b16 %v350
    %v420 = vunpack.c.h.b16 %v350
    %v421 = vunpack.c.l.b16 %v351
    %v422 = vunpack.c.h.b16 %v351
    %v423 = vunpack.c.l.b16 %v352
    %v424 = vunpack.c.h.b16 %v352
    %v425 = vunpack.c.l.b16 %v353
    %v426 = vunpack.c.h.b16 %v353
    %v427 = vunpack.c.l.b16 %v354
    %v428 = vunpack.c.h.b16 %v354
    %v429 = vunpack.c.l.b16 %v355
    %v430 = vunpack.c.h.b16 %v355
    %v431 = vunpack.c.l.b16 %v356
    %v432 = vunpack.c.h.b16 %v356
    %v433 = vunpack.c.l.b16 %v357
    %v434 = vunpack.c.h.b16 %v357
    %v435 = vunpack.c.l.b16 %v358
    %v436 = vunpack.c.h.b16 %v358
    %v437 = vunpack.c.l.b16 %v359
    %v438 = vunpack.c.h.b16 %v359
    %v439 = vunpack.c.l.b16 %v360
    %v440 = vunpack.c.h.b16 %v360
    %v441 = vunpack.c.l.b16 %v361
    %v442 = vunpack.c.h.b16 %v361
    %v443 = vunpack.c.l.b16 %v362
    %v444 = vunpack.c.h.b16 %v362
    %v445 = vunpack.c.l.b16 %v363
    %v446 = vunpack.c.h.b16 %v363
    %v447 = vunpack.c.l.b16 %v364
    %v448 = vunpack.c.h.b16 %v364
    %v449 = vunpack.c.l.b16 %v365
    %v450 = vunpack.c.h.b16 %v365
    %v451 = vunpack.c.l.b16 %v366
    %v452 = vunpack.c.h.b16 %v366
    %v453 = vunpack.c.l.b16 %v367
    %v454 = vunpack.c.h.b16 %v367
    %v455 = vunpack.c.l.b16 %v368
    %v456 = vunpack.c.h.b16 %v368
    %v457 = vunpack.c.l.b16 %v369
    %v458 = vunpack.c.h.b16 %v369
    %v459 = vunpack.c.l.b16 %v370
    %v460 = vunpack.c.h.b16 %v370
    %v461 = vunpack.c.l.b16 %v371
    %v462 = vunpack.c.h.b16 %v371
    %v463 = vunpack.c.l.b16 %v372
    %v464 = vunpack.c.h.b16 %v372
    %v465 = vunpack.c.l.b16 %v373
    %v466 = vunpack.c.h.b16 %v373
    %v467 = vunpack.c.l.b16 %v374
    %v468 = vunpack.c.h.b16 %v374
    %v469 = vunpack.c.l.b16 %v375
    %v470 = vunpack.c.h.b16 %v375
    %v471 = vunpack.c.l.b16 %v376
    %v472 = vunpack.c.h.b16 %v376
    %v473 = vpack.c.b16 %v413, %v409
    %v474 = vpack.c.b16 %v414, %v410
    %v475 = vpack.c.b16 %v415, %v411
    %v476 = vpack.c.b16 %v416, %v412
    %v477 = vpack.c.b16 %v421, %v417
    %v478 = vpack.c.b16 %v422, %v418
    %v479 = vpack.c.b16 %v423, %v419
    %v480 = vpack.c.b16 %v424, %v420
    %v481 = vpack.c.b16 %v429, %v425
    %v482 = vpack.c.b16 %v430, %v426
    %v483 = vpack.c.b16 %v431, %v427
    %v484 = vpack.c.b16 %v432, %v428
    %v485 = vpack.c.b16 %v437, %v433
    %v486 = vpack.c.b16 %v438, %v434
    %v487 = vpack.c.b16 %v439, %v435
    %v488 = vpack.c.b16 %v440, %v436
    %v489 = vpack.c.b16 %v445, %v441
    %v490 = vpack.c.b16 %v446, %v442
    %v491 = vpack.c.b16 %v447, %v443
    %v492 = vpack.c.b16 %v448, %v444
    %v493 = vpack.c.b16 %v453, %v449
    %v494 = vpack.c.b16 %v454, %v450
    %v495 = vpack.c.b16 %v455, %v451
    %v496 = vpack.c.b16 %v456, %v452
    %v497 = vpack.c.b16 %v461, %v457
    %v498 = vpack.c.b16 %v462, %v458
    %v499 = vpack.c.b16 %v463, %v459
    %v500 = vpack.c.b16 %v464, %v460
    %v501 = vpack.c.b16 %v469, %v465
    %v502 = vpack.c.b16 %v470, %v466
    %v503 = vpack.c.b16 %v471, %v467
    %v504 = vpack.c.b16 %v472, %v468
    %537 = vmatprep.subr.bf16.mxu0 %v502
    %538 = vmatpush1.bf16.msra.mxu0 %v501
    %539 = vmatprep.subr.bf16.mxu0 %v498
    %540 = vmatpush1.bf16.msra.mxu0 %v497
    %541 = vmatprep.subr.bf16.mxu0 %v494
    %542 = vmatpush1.bf16.msra.mxu0 %v493
    %543 = vmatprep.subr.bf16.mxu0 %v490
    %544 = vmatpush1.bf16.msra.mxu0 %v489
    %545 = vmatprep.subr.bf16.mxu0 %v486
    %546 = vmatpush1.bf16.msra.mxu0 %v485
    %547 = vmatprep.subr.bf16.mxu0 %v482
    %548 = vmatpush1.bf16.msra.mxu0 %v481
    %549 = vmatprep.subr.bf16.mxu0 %v478
    %550 = vmatpush1.bf16.msra.mxu0 %v477
    %551 = vmatprep.subr.bf16.mxu0 %v474
    %552 = vmatpush1.bf16.msra.mxu0 %v473
    %553 = vmatprep.subr.bf16.mxu0 0
    %554 = vmatpush2.bf16.msra.mxu0 0
    %555 = vmatprep.subr.bf16.mxu0 0
    %556 = vmatpush2.bf16.msra.mxu0 0
    %557 = vmatprep.subr.bf16.mxu0 0
    %558 = vmatpush2.bf16.msra.mxu0 0
    %559 = vmatprep.subr.bf16.mxu0 0
    %560 = vmatpush2.bf16.msra.mxu0 0
    %561 = vmatprep.subr.bf16.mxu0 0
    %562 = vmatpush2.bf16.msra.mxu0 0
    %563 = vmatprep.subr.bf16.mxu0 0
    %564 = vmatpush2.bf16.msra.mxu0 0
    %565 = vmatprep.subr.bf16.mxu0 0
    %566 = vmatpush2.bf16.msra.mxu0 0
    %567 = vmatprep.subr.bf16.mxu0 0
    %568 = vmatpush2.bf16.msra.mxu0 0
    %569 = vmatprep.mubr.bf16.mxu0 0
    %570 = vmatmul.mubr.bf16.gmra.mxu0 %v343
    %v571 = vpop.f32.mrf.mxu0
    %v572 = vadd.f32 0.0, %v571
    %v573 = vpop.f32.mrf.mxu0
    %v574 = vadd.f32 0.0, %v573
    %v575 = vpop.f32.mrf.mxu0
    %v576 = vpop.f32.mrf.mxu0
    %577 = vdwg.mxu0
    %578 = vmatprep.subr.bf16.mxu0 %v504
    %579 = vmatpush1.bf16.msra.mxu0 %v503
    %580 = vmatprep.subr.bf16.mxu0 %v500
    %581 = vmatpush1.bf16.msra.mxu0 %v499
    %582 = vmatprep.subr.bf16.mxu0 %v496
    %583 = vmatpush1.bf16.msra.mxu0 %v495
    %584 = vmatprep.subr.bf16.mxu0 %v492
    %585 = vmatpush1.bf16.msra.mxu0 %v491
    %586 = vmatprep.subr.bf16.mxu0 %v488
    %587 = vmatpush1.bf16.msra.mxu0 %v487
    %588 = vmatprep.subr.bf16.mxu0 %v484
    %589 = vmatpush1.bf16.msra.mxu0 %v483
    %590 = vmatprep.subr.bf16.mxu0 %v480
    %591 = vmatpush1.bf16.msra.mxu0 %v479
    %592 = vmatprep.subr.bf16.mxu0 %v476
    %593 = vmatpush1.bf16.msra.mxu0 %v475
    %594 = vmatprep.subr.bf16.mxu0 0
    %595 = vmatpush2.bf16.msra.mxu0 0
    %596 = vmatprep.subr.bf16.mxu0 0
    %597 = vmatpush2.bf16.msra.mxu0 0
    %598 = vmatprep.subr.bf16.mxu0 0
    %599 = vmatpush2.bf16.msra.mxu0 0
    %600 = vmatprep.subr.bf16.mxu0 0
    %601 = vmatpush2.bf16.msra.mxu0 0
    %602 = vmatprep.subr.bf16.mxu0 0
    %603 = vmatpush2.bf16.msra.mxu0 0
    %604 = vmatprep.subr.bf16.mxu0 0
    %605 = vmatpush2.bf16.msra.mxu0 0
    %606 = vmatprep.subr.bf16.mxu0 0
    %607 = vmatpush2.bf16.msra.mxu0 0
    %608 = vmatprep.subr.bf16.mxu0 0
    %609 = vmatpush2.bf16.msra.mxu0 0
    %610 = vmatprep.mubr.bf16.mxu0 0
    %611 = vmatmul.mubr.bf16.gmra.mxu0 %v343
    %v612 = vpop.f32.mrf.mxu0
    %v613 = vadd.f32 0.0, %v612
    %v614 = vpop.f32.mrf.mxu0
    %v615 = vadd.f32 0.0, %v614
    %v616 = vpop.f32.mrf.mxu0
    %v617 = vpop.f32.mrf.mxu0
    %618 = vdwg.mxu0
    %v619 = vtanh.pop %v572
    %v620 = vtanh.pop %v574
    %v621 = vadd.f32 %v613, %v615
    %v622 = vxor.u32 %v621, 2147483648
    %v623 = vmul.f32 %v622, 1.442695
    %v624 = vpow.pop %v623
    %v625 = vadd.f32 %v624, 1.0
    %v626 = vrcp.pop %v625
    %v627 = vmul.f32 1.0, %v626
    %v628 = vsub.f32 1.0, %v627
    %v629 = vmul.f32 %v619, %v628
    %v630 = vmul.f32 %v627, %v620
    %v631 = vadd.f32 %v629, %v630
    %v632 = vadd.f32 %v631, 0.0
    %v633 = vadd.f32 %v632, %v48
    %v634 = vpack.c.bf16 %v633, %v633
    %s635 = scalar_lea.vmem [#allocation5], 512
    %v636 = vld [vmem:[%s635] sm:$0xff]
    %v637 = vld [vmem:[%s635 + $0x8] sm:$0xff]
    %v638 = vld [vmem:[%s635 + $0x10] sm:$0xff]
    %v639 = vld [vmem:[%s635 + $0x18] sm:$0xff]
    %v640 = vld [vmem:[%s635 + $0x20] sm:$0xff]
    %v641 = vld [vmem:[%s635 + $0x28] sm:$0xff]
    %v642 = vld [vmem:[%s635 + $0x30] sm:$0xff]
    %v643 = vld [vmem:[%s635 + $0x38] sm:$0xff]
    %v644 = vld [vmem:[%s635 + $0x40] sm:$0xff]
    %v645 = vld [vmem:[%s635 + $0x48] sm:$0xff]
    %v646 = vld [vmem:[%s635 + $0x50] sm:$0xff]
    %v647 = vld [vmem:[%s635 + $0x58] sm:$0xff]
    %v648 = vld [vmem:[%s635 + $0x60] sm:$0xff]
    %v649 = vld [vmem:[%s635 + $0x68] sm:$0xff]
    %v650 = vld [vmem:[%s635 + $0x70] sm:$0xff]
    %v651 = vld [vmem:[%s635 + $0x78] sm:$0xff]
    %v652 = vld [vmem:[%s635 + $0x80] sm:$0xff]
    %v653 = vld [vmem:[%s635 + $0x88] sm:$0xff]
    %v654 = vld [vmem:[%s635 + $0x90] sm:$0xff]
    %v655 = vld [vmem:[%s635 + $0x98] sm:$0xff]
    %v656 = vld [vmem:[%s635 + $0xa0] sm:$0xff]
    %v657 = vld [vmem:[%s635 + $0xa8] sm:$0xff]
    %v658 = vld [vmem:[%s635 + $0xb0] sm:$0xff]
    %v659 = vld [vmem:[%s635 + $0xb8] sm:$0xff]
    %v660 = vld [vmem:[%s635 + $0xc0] sm:$0xff]
    %v661 = vld [vmem:[%s635 + $0xc8] sm:$0xff]
    %v662 = vld [vmem:[%s635 + $0xd0] sm:$0xff]
    %v663 = vld [vmem:[%s635 + $0xd8] sm:$0xff]
    %v664 = vld [vmem:[%s635 + $0xe0] sm:$0xff]
    %v665 = vld [vmem:[%s635 + $0xe8] sm:$0xff]
    %v666 = vld [vmem:[%s635 + $0xf0] sm:$0xff]
    %v667 = vld [vmem:[%s635 + $0xf8] sm:$0xff]
    %v700 = vunpack.c.l.b16 %v636
    %v701 = vunpack.c.h.b16 %v636
    %v702 = vunpack.c.l.b16 %v637
    %v703 = vunpack.c.h.b16 %v637
    %v704 = vunpack.c.l.b16 %v638
    %v705 = vunpack.c.h.b16 %v638
    %v706 = vunpack.c.l.b16 %v639
    %v707 = vunpack.c.h.b16 %v639
    %v708 = vunpack.c.l.b16 %v640
    %v709 = vunpack.c.h.b16 %v640
    %v710 = vunpack.c.l.b16 %v641
    %v711 = vunpack.c.h.b16 %v641
    %v712 = vunpack.c.l.b16 %v642
    %v713 = vunpack.c.h.b16 %v642
    %v714 = vunpack.c.l.b16 %v643
    %v715 = vunpack.c.h.b16 %v643
    %v716 = vunpack.c.l.b16 %v644
    %v717 = vunpack.c.h.b16 %v644
    %v718 = vunpack.c.l.b16 %v645
    %v719 = vunpack.c.h.b16 %v645
    %v720 = vunpack.c.l.b16 %v646
    %v721 = vunpack.c.h.b16 %v646
    %v722 = vunpack.c.l.b16 %v647
    %v723 = vunpack.c.h.b16 %v647
    %v724 = vunpack.c.l.b16 %v648
    %v725 = vunpack.c.h.b16 %v648
    %v726 = vunpack.c.l.b16 %v649
    %v727 = vunpack.c.h.b16 %v649
    %v728 = vunpack.c.l.b16 %v650
    %v729 = vunpack.c.h.b16 %v650
    %v730 = vunpack.c.l.b16 %v651
    %v731 = vunpack.c.h.b16 %v651
    %v732 = vunpack.c.l.b16 %v652
    %v733 = vunpack.c.h.b16 %v652
    %v734 = vunpack.c.l.b16 %v653
    %v735 = vunpack.c.h.b16 %v653
    %v736 = vunpack.c.l.b16 %v654
    %v737 = vunpack.c.h.b16 %v654
    %v738 = vunpack.c.l.b16 %v655
    %v739 = vunpack.c.h.b16 %v655
    %v740 = vunpack.c.l.b16 %v656
    %v741 = vunpack.c.h.b16 %v656
    %v742 = vunpack.c.l.b16 %v657
    %v743 = vunpack.c.h.b16 %v657
    %v744 = vunpack.c.l.b16 %v658
    %v745 = vunpack.c.h.b16 %v658
    %v746 = vunpack.c.l.b16 %v659
    %v747 = vunpack.c.h.b16 %v659
    %v748 = vunpack.c.l.b16 %v660
    %v749 = vunpack.c.h.b16 %v660
    %v750 = vunpack.c.l.b16 %v661
    %v751 = vunpack.c.h.b16 %v661
    %v752 = vunpack.c.l.b16 %v662
    %v753 = vunpack.c.h.b16 %v662
    %v754 = vunpack.c.l.b16 %v663
    %v755 = vunpack.c.h.b16 %v663
    %v756 = vunpack.c.l.b16 %v664
    %v757 = vunpack.c.h.b16 %v664
    %v758 = vunpack.c.l.b16 %v665
    %v759 = vunpack.c.h.b16 %v665
    %v760 = vunpack.c.l.b16 %v666
    %v761 = vunpack.c.h.b16 %v666
    %v762 = vunpack.c.l.b16 %v667
    %v763 = vunpack.c.h.b16 %v667
    %v764 = vpack.c.b16 %v704, %v700
    %v765 = vpack.c.b16 %v705, %v701
    %v766 = vpack.c.b16 %v706, %v702
    %v767 = vpack.c.b16 %v707, %v703
    %v768 = vpack.c.b16 %v712, %v708
    %v769 = vpack.c.b16 %v713, %v709
    %v770 = vpack.c.b16 %v714, %v710
    %v771 = vpack.c.b16 %v715, %v711
    %v772 = vpack.c.b16 %v720, %v716
    %v773 = vpack.c.b16 %v721, %v717
    %v774 = vpack.c.b16 %v722, %v718
    %v775 = vpack.c.b16 %v723, %v719
    %v776 = vpack.c.b16 %v728, %v724
    %v777 = vpack.c.b16 %v729, %v725
    %v778 = vpack.c.b16 %v730, %v726
    %v779 = vpack.c.b16 %v731, %v727
    %v780 = vpack.c.b16 %v736, %v732
    %v781 = vpack.c.b16 %v737, %v733
    %v782 = vpack.c.b16 %v738, %v734
    %v783 = vpack.c.b16 %v739, %v735
    %v784 = vpack.c.b16 %v744, %v740
    %v785 = vpack.c.b16 %v745, %v741
    %v786 = vpack.c.b16 %v746, %v742
    %v787 = vpack.c.b16 %v747, %v743
    %v788 = vpack.c.b16 %v752, %v748
    %v789 = vpack.c.b16 %v753, %v749
    %v790 = vpack.c.b16 %v754, %v750
    %v791 = vpack.c.b16 %v755, %v751
    %v792 = vpack.c.b16 %v760, %v756
    %v793 = vpack.c.b16 %v761, %v757
    %v794 = vpack.c.b16 %v762, %v758
    %v795 = vpack.c.b16 %v763, %v759
    %828 = vmatprep.subr.bf16.mxu0 %v793
    %829 = vmatpush1.bf16.msra.mxu0 %v792
    %830 = vmatprep.subr.bf16.mxu0 %v789
    %831 = vmatpush1.bf16.msra.mxu0 %v788
    %832 = vmatprep.subr.bf16.mxu0 %v785
    %833 = vmatpush1.bf16.msra.mxu0 %v784
    %834 = vmatprep.subr.bf16.mxu0 %v781
    %835 = vmatpush1.bf16.msra.mxu0 %v780
    %836 = vmatprep.subr.bf16.mxu0 %v777
    %837 = vmatpush1.bf16.msra.mxu0 %v776
    %838 = vmatprep.subr.bf16.mxu0 %v773
    %839 = vmatpush1.bf16.msra.mxu0 %v772
    %840 = vmatprep.subr.bf16.mxu0 %v769
    %841 = vmatpush1.bf16.msra.mxu0 %v768
    %842 = vmatprep.subr.bf16.mxu0 %v765
    %843 = vmatpush1.bf16.msra.mxu0 %v764
    %844 = vmatprep.subr.bf16.mxu0 0
    %845 = vmatpush2.bf16.msra.mxu0 0
    %846 = vmatprep.subr.bf16.mxu0 0
    %847 = vmatpush2.bf16.msra.mxu0 0
    %848 = vmatprep.subr.bf16.mxu0 0
    %849 = vmatpush2.bf16.msra.mxu0 0
    %850 = vmatprep.subr.bf16.mxu0 0
    %851 = vmatpush2.bf16.msra.mxu0 0
    %852 = vmatprep.subr.bf16.mxu0 0
    %853 = vmatpush2.bf16.msra.mxu0 0
    %854 = vmatprep.subr.bf16.mxu0 0
    %855 = vmatpush2.bf16.msra.mxu0 0
    %856 = vmatprep.subr.bf16.mxu0 0
    %857 = vmatpush2.bf16.msra.mxu0 0
    %858 = vmatprep.subr.bf16.mxu0 0
    %859 = vmatpush2.bf16.msra.mxu0 0
    %860 = vmatprep.mubr.bf16.mxu0 0
    %861 = vmatmul.mubr.bf16.gmra.mxu0 %v634
    %v862 = vpop.f32.mrf.mxu0
    %v863 = vadd.f32 0.0, %v862
    %v864 = vpop.f32.mrf.mxu0
    %v865 = vadd.f32 0.0, %v864
    %v866 = vpop.f32.mrf.mxu0
    %v867 = vpop.f32.mrf.mxu0
    %868 = vdwg.mxu0
    %869 = vmatprep.subr.bf16.mxu0 %v795
    %870 = vmatpush1.bf16.msra.mxu0 %v794
    %871 = vmatprep.subr.bf16.mxu0 %v791
    %872 = vmatpush1.bf16.msra.mxu0 %v790
    %873 = vmatprep.subr.bf16.mxu0 %v787
    %874 = vmatpush1.bf16.msra.mxu0 %v786
    %875 = vmatprep.subr.bf16.mxu0 %v783
    %876 = vmatpush1.bf16.msra.mxu0 %v782
    %877 = vmatprep.subr.bf16.mxu0 %v779
    %878 = vmatpush1.bf16.msra.mxu0 %v778
    %879 = vmatprep.subr.bf16.mxu0 %v775
    %880 = vmatpush1.bf16.msra.mxu0 %v774
    %881 = vmatprep.subr.bf16.mxu0 %v771
    %882 = vmatpush1.bf16.msra.mxu0 %v770
    %883 = vmatprep.subr.bf16.mxu0 %v767
    %884 = vmatpush1.bf16.msra.mxu0 %v766
    %885 = vmatprep.subr.bf16.mxu0 0
    %886 = vmatpush2.bf16.msra.mxu0 0
    %887 = vmatprep.subr.bf16.mxu0 0
    %888 = vmatpush2.bf16.msra.mxu0 0
    %889 = vmatprep.subr.bf16.mxu0 0
    %890 = vmatpush2.bf16.msra.mxu0 0
    %891 = vmatprep.subr.bf16.mxu0 0
    %892 = vmatpush2.bf16.msra.mxu0 0
    %893 = vmatprep.subr.bf16.mxu0 0
    %894 = vmatpush2.bf16.msra.mxu0 0
    %895 = vmatprep.subr.bf16.mxu0 0
    %896 = vmatpush2.bf16.msra.mxu0 0
    %897 = vmatprep.subr.bf16.mxu0 0
    %898 = vmatpush2.bf16.msra.mxu0 0
    %899 = vmatprep.subr.bf16.mxu0 0
    %900 = vmatpush2.bf16.msra.mxu0 0
    %901 = vmatprep.mubr.bf16.mxu0 0
    %902 = vmatmul.mubr.bf16.gmra.mxu0 %v634
    %v903 = vpop.f32.mrf.mxu0
    %v904 = vadd.f32 0.0, %v903
    %v905 = vpop.f32.mrf.mxu0
    %v906 = vadd.f32 0.0, %v905
    %v907 = vpop.f32.mrf.mxu0
    %v908 = vpop.f32.mrf.mxu0
    %909 = vdwg.mxu0
    %v910 = vtanh.pop %v863
    %v911 = vtanh.pop %v865
    %v912 = vadd.f32 %v904, %v906
    %v913 = vxor.u32 %v912, 2147483648
    %v914 = vmul.f32 %v913, 1.442695
    %v915 = vpow.pop %v914
    %v916 = vadd.f32 %v915, 1.0
    %v917 = vrcp.pop %v916
    %v918 = vmul.f32 1.0, %v917
    %v919 = vsub.f32 1.0, %v918
    %v920 = vmul.f32 %v910, %v919
    %v921 = vmul.f32 %v918, %v911
    %v922 = vadd.f32 %v920, %v921
    %v923 = vtanh.pop %v922
    %v924 = vxor.u32 %v922, 2147483648
    %v925 = vmul.f32 %v924, 1.442695
    %v926 = vpow.pop %v925
    %v927 = vadd.f32 %v926, 1.0
    %v928 = vrcp.pop %v927
    %v929 = vmul.f32 1.0, %v928
    %v930 = vsel %vm49, %v923, %v929
    %931 = vst [vmem:[#allocation7] sm:$0xff] %v930
    %s932 = scalar_lea.vmem [#allocation2], 8
    %v933 = vld [vmem:[%s932] sm:$0xff]
    %v934 = vadd.f32 %v933, %v340
    %v935 = vadd.f32 %v934, %v48
    %v936 = vpack.c.bf16 %v935, %v935
    %v937 = vld [vmem:[#allocation5] sm:$0xff]
    %v938 = vld [vmem:[#allocation5 + $0x8] sm:$0xff]
    %v939 = vld [vmem:[#allocation5 + $0x10] sm:$0xff]
    %v940 = vld [vmem:[#allocation5 + $0x18] sm:$0xff]
    %v941 = vld [vmem:[#allocation5 + $0x20] sm:$0xff]
    %v942 = vld [vmem:[#allocation5 + $0x28] sm:$0xff]
    %v943 = vld [vmem:[#allocation5 + $0x30] sm:$0xff]
    %v944 = vld [vmem:[#allocation5 + $0x38] sm:$0xff]
    %v945 = vld [vmem:[#allocation5 + $0x40] sm:$0xff]
    %v946 = vld [vmem:[#allocation5 + $0x48] sm:$0xff]
    %v947 = vld [vmem:[#allocation5 + $0x50] sm:$0xff]
    %v948 = vld [vmem:[#allocation5 + $0x58] sm:$0xff]
    %v949 = vld [vmem:[#allocation5 + $0x60] sm:$0xff]
    %v950 = vld [vmem:[#allocation5 + $0x68] sm:$0xff]
    %v951 = vld [vmem:[#allocation5 + $0x70] sm:$0xff]
    %v952 = vld [vmem:[#allocation5 + $0x78] sm:$0xff]
    %v953 = vld [vmem:[#allocation5 + $0x80] sm:$0xff]
    %v954 = vld [vmem:[#allocation5 + $0x88] sm:$0xff]
    %v955 = vld [vmem:[#allocation5 + $0x90] sm:$0xff]
    %v956 = vld [vmem:[#allocation5 + $0x98] sm:$0xff]
    %v957 = vld [vmem:[#allocation5 + $0xa0] sm:$0xff]
    %v958 = vld [vmem:[#allocation5 + $0xa8] sm:$0xff]
    %v959 = vld [vmem:[#allocation5 + $0xb0] sm:$0xff]
    %v960 = vld [vmem:[#allocation5 + $0xb8] sm:$0xff]
    %v961 = vld [vmem:[#allocation5 + $0xc0] sm:$0xff]
    %v962 = vld [vmem:[#allocation5 + $0xc8] sm:$0xff]
    %v963 = vld [vmem:[#allocation5 + $0xd0] sm:$0xff]
    %v964 = vld [vmem:[#allocation5 + $0xd8] sm:$0xff]
    %v965 = vld [vmem:[#allocation5 + $0xe0] sm:$0xff]
    %v966 = vld [vmem:[#allocation5 + $0xe8] sm:$0xff]
    %v967 = vld [vmem:[#allocation5 + $0xf0] sm:$0xff]
    %v968 = vld [vmem:[#allocation5 + $0xf8] sm:$0xff]
    %v1001 = vunpack.c.l.b16 %v937
    %v1002 = vunpack.c.h.b16 %v937
    %v1003 = vunpack.c.l.b16 %v938
    %v1004 = vunpack.c.h.b16 %v938
    %v1005 = vunpack.c.l.b16 %v939
    %v1006 = vunpack.c.h.b16 %v939
    %v1007 = vunpack.c.l.b16 %v940
    %v1008 = vunpack.c.h.b16 %v940
    %v1009 = vunpack.c.l.b16 %v941
    %v1010 = vunpack.c.h.b16 %v941
    %v1011 = vunpack.c.l.b16 %v942
    %v1012 = vunpack.c.h.b16 %v942
    %v1013 = vunpack.c.l.b16 %v943
    %v1014 = vunpack.c.h.b16 %v943
    %v1015 = vunpack.c.l.b16 %v944
    %v1016 = vunpack.c.h.b16 %v944
    %v1017 = vunpack.c.l.b16 %v945
    %v1018 = vunpack.c.h.b16 %v945
    %v1019 = vunpack.c.l.b16 %v946
    %v1020 = vunpack.c.h.b16 %v946
    %v1021 = vunpack.c.l.b16 %v947
    %v1022 = vunpack.c.h.b16 %v947
    %v1023 = vunpack.c.l.b16 %v948
    %v1024 = vunpack.c.h.b16 %v948
    %v1025 = vunpack.c.l.b16 %v949
    %v1026 = vunpack.c.h.b16 %v949
    %v1027 = vunpack.c.l.b16 %v950
    %v1028 = vunpack.c.h.b16 %v950
    %v1029 = vunpack.c.l.b16 %v951
    %v1030 = vunpack.c.h.b16 %v951
    %v1031 = vunpack.c.l.b16 %v952
    %v1032 = vunpack.c.h.b16 %v952
    %v1033 = vunpack.c.l.b16 %v953
    %v1034 = vunpack.c.h.b16 %v953
    %v1035 = vunpack.c.l.b16 %v954
    %v1036 = vunpack.c.h.b16 %v954
    %v1037 = vunpack.c.l.b16 %v955
    %v1038 = vunpack.c.h.b16 %v955
    %v1039 = vunpack.c.l.b16 %v956
    %v1040 = vunpack.c.h.b16 %v956
    %v1041 = vunpack.c.l.b16 %v957
    %v1042 = vunpack.c.h.b16 %v957
    %v1043 = vunpack.c.l.b16 %v958
    %v1044 = vunpack.c.h.b16 %v958
    %v1045 = vunpack.c.l.b16 %v959
    %v1046 = vunpack.c.h.b16 %v959
    %v1047 = vunpack.c.l.b16 %v960
    %v1048 = vunpack.c.h.b16 %v960
    %v1049 = vunpack.c.l.b16 %v961
    %v1050 = vunpack.c.h.b16 %v961
    %v1051 = vunpack.c.l.b16 %v962
    %v1052 = vunpack.c.h.b16 %v962
    %v1053 = vunpack.c.l.b16 %v963
    %v1054 = vunpack.c.h.b16 %v963
    %v1055 = vunpack.c.l.b16 %v964
    %v1056 = vunpack.c.h.b16 %v964
    %v1057 = vunpack.c.l.b16 %v965
    %v1058 = vunpack.c.h.b16 %v965
    %v1059 = vunpack.c.l.b16 %v966
    %v1060 = vunpack.c.h.b16 %v966
    %v1061 = vunpack.c.l.b16 %v967
    %v1062 = vunpack.c.h.b16 %v967
    %v1063 = vunpack.c.l.b16 %v968
    %v1064 = vunpack.c.h.b16 %v968
    %v1065 = vpack.c.b16 %v1005, %v1001
    %v1066 = vpack.c.b16 %v1006, %v1002
    %v1067 = vpack.c.b16 %v1007, %v1003
    %v1068 = vpack.c.b16 %v1008, %v1004
    %v1069 = vpack.c.b16 %v1013, %v1009
    %v1070 = vpack.c.b16 %v1014, %v1010
    %v1071 = vpack.c.b16 %v1015, %v1011
    %v1072 = vpack.c.b16 %v1016, %v1012
    %v1073 = vpack.c.b16 %v1021, %v1017
    %v1074 = vpack.c.b16 %v1022, %v1018
    %v1075 = vpack.c.b16 %v1023, %v1019
    %v1076 = vpack.c.b16 %v1024, %v1020
    %v1077 = vpack.c.b16 %v1029, %v1025
    %v1078 = vpack.c.b16 %v1030, %v1026
    %v1079 = vpack.c.b16 %v1031, %v1027
    %v1080 = vpack.c.b16 %v1032, %v1028
    %v1081 = vpack.c.b16 %v1037, %v1033
    %v1082 = vpack.c.b16 %v1038, %v1034
    %v1083 = vpack.c.b16 %v1039, %v1035
    %v1084 = vpack.c.b16 %v1040, %v1036
    %v1085 = vpack.c.b16 %v1045, %v1041
    %v1086 = vpack.c.b16 %v1046, %v1042
    %v1087 = vpack.c.b16 %v1047, %v1043
    %v1088 = vpack.c.b16 %v1048, %v1044
    %v1089 = vpack.c.b16 %v1053, %v1049
    %v1090 = vpack.c.b16 %v1054, %v1050
    %v1091 = vpack.c.b16 %v1055, %v1051
    %v1092 = vpack.c.b16 %v1056, %v1052
    %v1093 = vpack.c.b16 %v1061, %v1057
    %v1094 = vpack.c.b16 %v1062, %v1058
    %v1095 = vpack.c.b16 %v1063, %v1059
    %v1096 = vpack.c.b16 %v1064, %v1060
    %1129 = vmatprep.subr.bf16.mxu0 %v1094
    %1130 = vmatpush1.bf16.msra.mxu0 %v1093
    %1131 = vmatprep.subr.bf16.mxu0 %v1090
    %1132 = vmatpush1.bf16.msra.mxu0 %v1089
    %1133 = vmatprep.subr.bf16.mxu0 %v1086
    %1134 = vmatpush1.bf16.msra.mxu0 %v1085
    %1135 = vmatprep.subr.bf16.mxu0 %v1082
    %1136 = vmatpush1.bf16.msra.mxu0 %v1081
    %1137 = vmatprep.subr.bf16.mxu0 %v1078
    %1138 = vmatpush1.bf16.msra.mxu0 %v1077
    %1139 = vmatprep.subr.bf16.mxu0 %v1074
    %1140 = vmatpush1.bf16.msra.mxu0 %v1073
    %1141 = vmatprep.subr.bf16.mxu0 %v1070
    %1142 = vmatpush1.bf16.msra.mxu0 %v1069
    %1143 = vmatprep.subr.bf16.mxu0 %v1066
    %1144 = vmatpush1.bf16.msra.mxu0 %v1065
    %1145 = vmatprep.subr.bf16.mxu0 0
    %1146 = vmatpush2.bf16.msra.mxu0 0
    %1147 = vmatprep.subr.bf16.mxu0 0
    %1148 = vmatpush2.bf16.msra.mxu0 0
    %1149 = vmatprep.subr.bf16.mxu0 0
    %1150 = vmatpush2.bf16.msra.mxu0 0
    %1151 = vmatprep.subr.bf16.mxu0 0
    %1152 = vmatpush2.bf16.msra.mxu0 0
    %1153 = vmatprep.subr.bf16.mxu0 0
    %1154 = vmatpush2.bf16.msra.mxu0 0
    %1155 = vmatprep.subr.bf16.mxu0 0
    %1156 = vmatpush2.bf16.msra.mxu0 0
    %1157 = vmatprep.subr.bf16.mxu0 0
    %1158 = vmatpush2.bf16.msra.mxu0 0
    %1159 = vmatprep.subr.bf16.mxu0 0
    %1160 = vmatpush2.bf16.msra.mxu0 0
    %1161 = vmatprep.mubr.bf16.mxu0 0
    %1162 = vmatmul.mubr.bf16.gmra.mxu0 %v936
    %v1163 = vpop.f32.mrf.mxu0
    %v1164 = vadd.f32 0.0, %v1163
    %v1165 = vpop.f32.mrf.mxu0
    %v1166 = vadd.f32 0.0, %v1165
    %v1167 = vpop.f32.mrf.mxu0
    %v1168 = vpop.f32.mrf.mxu0
    %1169 = vdwg.mxu0
    %1170 = vmatprep.subr.bf16.mxu0 %v1096
    %1171 = vmatpush1.bf16.msra.mxu0 %v1095
    %1172 = vmatprep.subr.bf16.mxu0 %v1092
    %1173 = vmatpush1.bf16.msra.mxu0 %v1091
    %1174 = vmatprep.subr.bf16.mxu0 %v1088
    %1175 = vmatpush1.bf16.msra.mxu0 %v1087
    %1176 = vmatprep.subr.bf16.mxu0 %v1084
    %1177 = vmatpush1.bf16.msra.mxu0 %v1083
    %1178 = vmatprep.subr.bf16.mxu0 %v1080
    %1179 = vmatpush1.bf16.msra.mxu0 %v1079
    %1180 = vmatprep.subr.bf16.mxu0 %v1076
    %1181 = vmatpush1.bf16.msra.mxu0 %v1075
    %1182 = vmatprep.subr.bf16.mxu0 %v1072
    %1183 = vmatpush1.bf16.msra.mxu0 %v1071
    %1184 = vmatprep.subr.bf16.mxu0 %v1068
    %1185 = vmatpush1.bf16.msra.mxu0 %v1067
    %1186 = vmatprep.subr.bf16.mxu0 0
    %1187 = vmatpush2.bf16.msra.mxu0 0
    %1188 = vmatprep.subr.bf16.mxu0 0
    %1189 = vmatpush2.bf16.msra.mxu0 0
    %1190 = vmatprep.subr.bf16.mxu0 0
    %1191 = vmatpush2.bf16.msra.mxu0 0
    %1192 = vmatprep.subr.bf16.mxu0 0
    %1193 = vmatpush2.bf16.msra.mxu0 0
    %1194 = vmatprep.subr.bf16.mxu0 0
    %1195 = vmatpush2.bf16.msra.mxu0 0
    %1196 = vmatprep.subr.bf16.mxu0 0
    %1197 = vmatpush2.bf16.msra.mxu0 0
    %1198 = vmatprep.subr.bf16.mxu0 0
    %1199 = vmatpush2.bf16.msra.mxu0 0
    %1200 = vmatprep.subr.bf16.mxu0 0
    %1201 = vmatpush2.bf16.msra.mxu0 0
    %1202 = vmatprep.mubr.bf16.mxu0 0
    %1203 = vmatmul.mubr.bf16.gmra.mxu0 %v936
    %v1204 = vpop.f32.mrf.mxu0
    %v1205 = vadd.f32 0.0, %v1204
    %v1206 = vpop.f32.mrf.mxu0
    %v1207 = vadd.f32 0.0, %v1206
    %v1208 = vpop.f32.mrf.mxu0
    %v1209 = vpop.f32.mrf.mxu0
    %1210 = vdwg.mxu0
    %v1211 = vtanh.pop %v1164
    %v1212 = vtanh.pop %v1166
    %v1213 = vadd.f32 %v1205, %v1207
    %v1214 = vxor.u32 %v1213, 2147483648
    %v1215 = vmul.f32 %v1214, 1.442695
    %v1216 = vpow.pop %v1215
    %v1217 = vadd.f32 %v1216, 1.0
    %v1218 = vrcp.pop %v1217
    %v1219 = vmul.f32 1.0, %v1218
    %v1220 = vsub.f32 1.0, %v1219
    %v1221 = vmul.f32 %v1211, %v1220
    %v1222 = vmul.f32 %v1219, %v1212
    %v1223 = vadd.f32 %v1221, %v1222
    %v1224 = vadd.f32 %v1223, %v631
    %v1225 = vadd.f32 %v1224, %v48
    %v1226 = vpack.c.bf16 %v1225, %v1225
    %v1227 = vld [vmem:[%s344] sm:$0xff]
    %v1228 = vld [vmem:[%s344 + $0x8] sm:$0xff]
    %v1229 = vld [vmem:[%s344 + $0x10] sm:$0xff]
    %v1230 = vld [vmem:[%s344 + $0x18] sm:$0xff]
    %v1231 = vld [vmem:[%s344 + $0x20] sm:$0xff]
    %v1232 = vld [vmem:[%s344 + $0x28] sm:$0xff]
    %v1233 = vld [vmem:[%s344 + $0x30] sm:$0xff]
    %v1234 = vld [vmem:[%s344 + $0x38] sm:$0xff]
    %v1235 = vld [vmem:[%s344 + $0x40] sm:$0xff]
    %v1236 = vld [vmem:[%s344 + $0x48] sm:$0xff]
    %v1237 = vld [vmem:[%s344 + $0x50] sm:$0xff]
    %v1238 = vld [vmem:[%s344 + $0x58] sm:$0xff]
    %v1239 = vld [vmem:[%s344 + $0x60] sm:$0xff]
    %v1240 = vld [vmem:[%s344 + $0x68] sm:$0xff]
    %v1241 = vld [vmem:[%s344 + $0x70] sm:$0xff]
    %v1242 = vld [vmem:[%s344 + $0x78] sm:$0xff]
    %v1243 = vld [vmem:[%s344 + $0x80] sm:$0xff]
    %v1244 = vld [vmem:[%s344 + $0x88] sm:$0xff]
    %v1245 = vld [vmem:[%s344 + $0x90] sm:$0xff]
    %v1246 = vld [vmem:[%s344 + $0x98] sm:$0xff]
    %v1247 = vld [vmem:[%s344 + $0xa0] sm:$0xff]
    %v1248 = vld [vmem:[%s344 + $0xa8] sm:$0xff]
    %v1249 = vld [vmem:[%s344 + $0xb0] sm:$0xff]
    %v1250 = vld [vmem:[%s344 + $0xb8] sm:$0xff]
    %v1251 = vld [vmem:[%s344 + $0xc0] sm:$0xff]
    %v1252 = vld [vmem:[%s344 + $0xc8] sm:$0xff]
    %v1253 = vld [vmem:[%s344 + $0xd0] sm:$0xff]
    %v1254 = vld [vmem:[%s344 + $0xd8] sm:$0xff]
    %v1255 = vld [vmem:[%s344 + $0xe0] sm:$0xff]
    %v1256 = vld [vmem:[%s344 + $0xe8] sm:$0xff]
    %v1257 = vld [vmem:[%s344 + $0xf0] sm:$0xff]
    %v1258 = vld [vmem:[%s344 + $0xf8] sm:$0xff]
    %v1291 = vunpack.c.l.b16 %v1227
    %v1292 = vunpack.c.h.b16 %v1227
    %v1293 = vunpack.c.l.b16 %v1228
    %v1294 = vunpack.c.h.b16 %v1228
    %v1295 = vunpack.c.l.b16 %v1229
    %v1296 = vunpack.c.h.b16 %v1229
    %v1297 = vunpack.c.l.b16 %v1230
    %v1298 = vunpack.c.h.b16 %v1230
    %v1299 = vunpack.c.l.b16 %v1231
    %v1300 = vunpack.c.h.b16 %v1231
    %v1301 = vunpack.c.l.b16 %v1232
    %v1302 = vunpack.c.h.b16 %v1232
    %v1303 = vunpack.c.l.b16 %v1233
    %v1304 = vunpack.c.h.b16 %v1233
    %v1305 = vunpack.c.l.b16 %v1234
    %v1306 = vunpack.c.h.b16 %v1234
    %v1307 = vunpack.c.l.b16 %v1235
    %v1308 = vunpack.c.h.b16 %v1235
    %v1309 = vunpack.c.l.b16 %v1236
    %v1310 = vunpack.c.h.b16 %v1236
    %v1311 = vunpack.c.l.b16 %v1237
    %v1312 = vunpack.c.h.b16 %v1237
    %v1313 = vunpack.c.l.b16 %v1238
    %v1314 = vunpack.c.h.b16 %v1238
    %v1315 = vunpack.c.l.b16 %v1239
    %v1316 = vunpack.c.h.b16 %v1239
    %v1317 = vunpack.c.l.b16 %v1240
    %v1318 = vunpack.c.h.b16 %v1240
    %v1319 = vunpack.c.l.b16 %v1241
    %v1320 = vunpack.c.h.b16 %v1241
    %v1321 = vunpack.c.l.b16 %v1242
    %v1322 = vunpack.c.h.b16 %v1242
    %v1323 = vunpack.c.l.b16 %v1243
    %v1324 = vunpack.c.h.b16 %v1243
    %v1325 = vunpack.c.l.b16 %v1244
    %v1326 = vunpack.c.h.b16 %v1244
    %v1327 = vunpack.c.l.b16 %v1245
    %v1328 = vunpack.c.h.b16 %v1245
    %v1329 = vunpack.c.l.b16 %v1246
    %v1330 = vunpack.c.h.b16 %v1246
    %v1331 = vunpack.c.l.b16 %v1247
    %v1332 = vunpack.c.h.b16 %v1247
    %v1333 = vunpack.c.l.b16 %v1248
    %v1334 = vunpack.c.h.b16 %v1248
    %v1335 = vunpack.c.l.b16 %v1249
    %v1336 = vunpack.c.h.b16 %v1249
    %v1337 = vunpack.c.l.b16 %v1250
    %v1338 = vunpack.c.h.b16 %v1250
    %v1339 = vunpack.c.l.b16 %v1251
    %v1340 = vunpack.c.h.b16 %v1251
    %v1341 = vunpack.c.l.b16 %v1252
    %v1342 = vunpack.c.h.b16 %v1252
    %v1343 = vunpack.c.l.b16 %v1253
    %v1344 = vunpack.c.h.b16 %v1253
    %v1345 = vunpack.c.l.b16 %v1254
    %v1346 = vunpack.c.h.b16 %v1254
    %v1347 = vunpack.c.l.b16 %v1255
    %v1348 = vunpack.c.h.b16 %v1255
    %v1349 = vunpack.c.l.b16 %v1256
    %v1350 = vunpack.c.h.b16 %v1256
    %v1351 = vunpack.c.l.b16 %v1257
    %v1352 = vunpack.c.h.b16 %v1257
    %v1353 = vunpack.c.l.b16 %v1258
    %v1354 = vunpack.c.h.b16 %v1258
    %v1355 = vpack.c.b16 %v1295, %v1291
    %v1356 = vpack.c.b16 %v1296, %v1292
    %v1357 = vpack.c.b16 %v1297, %v1293
    %v1358 = vpack.c.b16 %v1298, %v1294
    %v1359 = vpack.c.b16 %v1303, %v1299
    %v1360 = vpack.c.b16 %v1304, %v1300
    %v1361 = vpack.c.b16 %v1305, %v1301
    %v1362 = vpack.c.b16 %v1306, %v1302
    %v1363 = vpack.c.b16 %v1311, %v1307
    %v1364 = vpack.c.b16 %v1312, %v1308
    %v1365 = vpack.c.b16 %v1313, %v1309
    %v1366 = vpack.c.b16 %v1314, %v1310
    %v1367 = vpack.c.b16 %v1319, %v1315
    %v1368 = vpack.c.b16 %v1320, %v1316
    %v1369 = vpack.c.b16 %v1321, %v1317
    %v1370 = vpack.c.b16 %v1322, %v1318
    %v1371 = vpack.c.b16 %v1327, %v1323
    %v1372 = vpack.c.b16 %v1328, %v1324
    %v1373 = vpack.c.b16 %v1329, %v1325
    %v1374 = vpack.c.b16 %v1330, %v1326
    %v1375 = vpack.c.b16 %v1335, %v1331
    %v1376 = vpack.c.b16 %v1336, %v1332
    %v1377 = vpack.c.b16 %v1337, %v1333
    %v1378 = vpack.c.b16 %v1338, %v1334
    %v1379 = vpack.c.b16 %v1343, %v1339
    %v1380 = vpack.c.b16 %v1344, %v1340
    %v1381 = vpack.c.b16 %v1345, %v1341
    %v1382 = vpack.c.b16 %v1346, %v1342
    %v1383 = vpack.c.b16 %v1351, %v1347
    %v1384 = vpack.c.b16 %v1352, %v1348
    %v1385 = vpack.c.b16 %v1353, %v1349
    %v1386 = vpack.c.b16 %v1354, %v1350
    %1419 = vmatprep.subr.bf16.mxu0 %v1384
    %1420 = vmatpush1.bf16.msra.mxu0 %v1383
    %1421 = vmatprep.subr.bf16.mxu0 %v1380
    %1422 = vmatpush1.bf16.msra.mxu0 %v1379
    %1423 = vmatprep.subr.bf16.mxu0 %v1376
    %1424 = vmatpush1.bf16.msra.mxu0 %v1375
    %1425 = vmatprep.subr.bf16.mxu0 %v1372
    %1426 = vmatpush1.bf16.msra.mxu0 %v1371
    %1427 = vmatprep.subr.bf16.mxu0 %v1368
    %1428 = vmatpush1.bf16.msra.mxu0 %v1367
    %1429 = vmatprep.subr.bf16.mxu0 %v1364
    %1430 = vmatpush1.bf16.msra.mxu0 %v1363
    %1431 = vmatprep.subr.bf16.mxu0 %v1360
    %1432 = vmatpush1.bf16.msra.mxu0 %v1359
    %1433 = vmatprep.subr.bf16.mxu0 %v1356
    %1434 = vmatpush1.bf16.msra.mxu0 %v1355
    %1435 = vmatprep.subr.bf16.mxu0 0
    %1436 = vmatpush2.bf16.msra.mxu0 0
    %1437 = vmatprep.subr.bf16.mxu0 0
    %1438 = vmatpush2.bf16.msra.mxu0 0
    %1439 = vmatprep.subr.bf16.mxu0 0
    %1440 = vmatpush2.bf16.msra.mxu0 0
    %1441 = vmatprep.subr.bf16.mxu0 0
    %1442 = vmatpush2.bf16.msra.mxu0 0
    %1443 = vmatprep.subr.bf16.mxu0 0
    %1444 = vmatpush2.bf16.msra.mxu0 0
    %1445 = vmatprep.subr.bf16.mxu0 0
    %1446 = vmatpush2.bf16.msra.mxu0 0
    %1447 = vmatprep.subr.bf16.mxu0 0
    %1448 = vmatpush2.bf16.msra.mxu0 0
    %1449 = vmatprep.subr.bf16.mxu0 0
    %1450 = vmatpush2.bf16.msra.mxu0 0
    %1451 = vmatprep.mubr.bf16.mxu0 0
    %1452 = vmatmul.mubr.bf16.gmra.mxu0 %v1226
    %v1453 = vpop.f32.mrf.mxu0
    %v1454 = vadd.f32 0.0, %v1453
    %v1455 = vpop.f32.mrf.mxu0
    %v1456 = vadd.f32 0.0, %v1455
    %v1457 = vpop.f32.mrf.mxu0
    %v1458 = vpop.f32.mrf.mxu0
    %1459 = vdwg.mxu0
    %1460 = vmatprep.subr.bf16.mxu0 %v1386
    %1461 = vmatpush1.bf16.msra.mxu0 %v1385
    %1462 = vmatprep.subr.bf16.mxu0 %v1382
    %1463 = vmatpush1.bf16.msra.mxu0 %v1381
    %1464 = vmatprep.subr.bf16.mxu0 %v1378
    %1465 = vmatpush1.bf16.msra.mxu0 %v1377
    %1466 = vmatprep.subr.bf16.mxu0 %v1374
    %1467 = vmatpush1.bf16.msra.mxu0 %v1373
    %1468 = vmatprep.subr.bf16.mxu0 %v1370
    %1469 = vmatpush1.bf16.msra.mxu0 %v1369
    %1470 = vmatprep.subr.bf16.mxu0 %v1366
    %1471 = vmatpush1.bf16.msra.mxu0 %v1365
    %1472 = vmatprep.subr.bf16.mxu0 %v1362
    %1473 = vmatpush1.bf16.msra.mxu0 %v1361
    %1474 = vmatprep.subr.bf16.mxu0 %v1358
    %1475 = vmatpush1.bf16.msra.mxu0 %v1357
    %1476 = vmatprep.subr.bf16.mxu0 0
    %1477 = vmatpush2.bf16.msra.mxu0 0
    %1478 = vmatprep.subr.bf16.mxu0 0
    %1479 = vmatpush2.bf16.msra.mxu0 0
    %1480 = vmatprep.subr.bf16.mxu0 0
    %1481 = vmatpush2.bf16.msra.mxu0 0
    %1482 = vmatprep.subr.bf16.mxu0 0
    %1483 = vmatpush2.bf16.msra.mxu0 0
    %1484 = vmatprep.subr.bf16.mxu0 0
    %1485 = vmatpush2.bf16.msra.mxu0 0
    %1486 = vmatprep.subr.bf16.mxu0 0
    %1487 = vmatpush2.bf16.msra.mxu0 0
    %1488 = vmatprep.subr.bf16.mxu0 0
    %1489 = vmatpush2.bf16.msra.mxu0 0
    %1490 = vmatprep.subr.bf16.mxu0 0
    %1491 = vmatpush2.bf16.msra.mxu0 0
    %1492 = vmatprep.mubr.bf16.mxu0 0
    %1493 = vmatmul.mubr.bf16.gmra.mxu0 %v1226
    %v1494 = vpop.f32.mrf.mxu0
    %v1495 = vadd.f32 0.0, %v1494
    %v1496 = vpop.f32.mrf.mxu0
    %v1497 = vadd.f32 0.0, %v1496
    %v1498 = vpop.f32.mrf.mxu0
    %v1499 = vpop.f32.mrf.mxu0
    %1500 = vdwg.mxu0
    %v1501 = vtanh.pop %v1454
    %v1502 = vtanh.pop %v1456
    %v1503 = vadd.f32 %v1495, %v1497
    %v1504 = vxor.u32 %v1503, 2147483648
    %v1505 = vmul.f32 %v1504, 1.442695
    %v1506 = vpow.pop %v1505
    %v1507 = vadd.f32 %v1506, 1.0
    %v1508 = vrcp.pop %v1507
    %v1509 = vmul.f32 1.0, %v1508
    %v1510 = vsub.f32 1.0, %v1509
    %v1511 = vmul.f32 %v1501, %v1510
    %v1512 = vmul.f32 %v1509, %v1502
    %v1513 = vadd.f32 %v1511, %v1512
    %v1514 = vadd.f32 %v1513, %v922
    %v1515 = vadd.f32 %v1514, %v48
    %v1516 = vpack.c.bf16 %v1515, %v1515
    %v1517 = vld [vmem:[%s635] sm:$0xff]
    %v1518 = vld [vmem:[%s635 + $0x8] sm:$0xff]
    %v1519 = vld [vmem:[%s635 + $0x10] sm:$0xff]
    %v1520 = vld [vmem:[%s635 + $0x18] sm:$0xff]
    %v1521 = vld [vmem:[%s635 + $0x20] sm:$0xff]
    %v1522 = vld [vmem:[%s635 + $0x28] sm:$0xff]
    %v1523 = vld [vmem:[%s635 + $0x30] sm:$0xff]
    %v1524 = vld [vmem:[%s635 + $0x38] sm:$0xff]
    %v1525 = vld [vmem:[%s635 + $0x40] sm:$0xff]
    %v1526 = vld [vmem:[%s635 + $0x48] sm:$0xff]
    %v1527 = vld [vmem:[%s635 + $0x50] sm:$0xff]
    %v1528 = vld [vmem:[%s635 + $0x58] sm:$0xff]
    %v1529 = vld [vmem:[%s635 + $0x60] sm:$0xff]
    %v1530 = vld [vmem:[%s635 + $0x68] sm:$0xff]
    %v1531 = vld [vmem:[%s635 + $0x70] sm:$0xff]
    %v1532 = vld [vmem:[%s635 + $0x78] sm:$0xff]
    %v1533 = vld [vmem:[%s635 + $0x80] sm:$0xff]
    %v1534 = vld [vmem:[%s635 + $0x88] sm:$0xff]
    %v1535 = vld [vmem:[%s635 + $0x90] sm:$0xff]
    %v1536 = vld [vmem:[%s635 + $0x98] sm:$0xff]
    %v1537 = vld [vmem:[%s635 + $0xa0] sm:$0xff]
    %v1538 = vld [vmem:[%s635 + $0xa8] sm:$0xff]
    %v1539 = vld [vmem:[%s635 + $0xb0] sm:$0xff]
    %v1540 = vld [vmem:[%s635 + $0xb8] sm:$0xff]
    %v1541 = vld [vmem:[%s635 + $0xc0] sm:$0xff]
    %v1542 = vld [vmem:[%s635 + $0xc8] sm:$0xff]
    %v1543 = vld [vmem:[%s635 + $0xd0] sm:$0xff]
    %v1544 = vld [vmem:[%s635 + $0xd8] sm:$0xff]
    %v1545 = vld [vmem:[%s635 + $0xe0] sm:$0xff]
    %v1546 = vld [vmem:[%s635 + $0xe8] sm:$0xff]
    %v1547 = vld [vmem:[%s635 + $0xf0] sm:$0xff]
    %v1548 = vld [vmem:[%s635 + $0xf8] sm:$0xff]
    %v1581 = vunpack.c.l.b16 %v1517
    %v1582 = vunpack.c.h.b16 %v1517
    %v1583 = vunpack.c.l.b16 %v1518
    %v1584 = vunpack.c.h.b16 %v1518
    %v1585 = vunpack.c.l.b16 %v1519
    %v1586 = vunpack.c.h.b16 %v1519
    %v1587 = vunpack.c.l.b16 %v1520
    %v1588 = vunpack.c.h.b16 %v1520
    %v1589 = vunpack.c.l.b16 %v1521
    %v1590 = vunpack.c.h.b16 %v1521
    %v1591 = vunpack.c.l.b16 %v1522
    %v1592 = vunpack.c.h.b16 %v1522
    %v1593 = vunpack.c.l.b16 %v1523
    %v1594 = vunpack.c.h.b16 %v1523
    %v1595 = vunpack.c.l.b16 %v1524
    %v1596 = vunpack.c.h.b16 %v1524
    %v1597 = vunpack.c.l.b16 %v1525
    %v1598 = vunpack.c.h.b16 %v1525
    %v1599 = vunpack.c.l.b16 %v1526
    %v1600 = vunpack.c.h.b16 %v1526
    %v1601 = vunpack.c.l.b16 %v1527
    %v1602 = vunpack.c.h.b16 %v1527
    %v1603 = vunpack.c.l.b16 %v1528
    %v1604 = vunpack.c.h.b16 %v1528
    %v1605 = vunpack.c.l.b16 %v1529
    %v1606 = vunpack.c.h.b16 %v1529
    %v1607 = vunpack.c.l.b16 %v1530
    %v1608 = vunpack.c.h.b16 %v1530
    %v1609 = vunpack.c.l.b16 %v1531
    %v1610 = vunpack.c.h.b16 %v1531
    %v1611 = vunpack.c.l.b16 %v1532
    %v1612 = vunpack.c.h.b16 %v1532
    %v1613 = vunpack.c.l.b16 %v1533
    %v1614 = vunpack.c.h.b16 %v1533
    %v1615 = vunpack.c.l.b16 %v1534
    %v1616 = vunpack.c.h.b16 %v1534
    %v1617 = vunpack.c.l.b16 %v1535
    %v1618 = vunpack.c.h.b16 %v1535
    %v1619 = vunpack.c.l.b16 %v1536
    %v1620 = vunpack.c.h.b16 %v1536
    %v1621 = vunpack.c.l.b16 %v1537
    %v1622 = vunpack.c.h.b16 %v1537
    %v1623 = vunpack.c.l.b16 %v1538
    %v1624 = vunpack.c.h.b16 %v1538
    %v1625 = vunpack.c.l.b16 %v1539
    %v1626 = vunpack.c.h.b16 %v1539
    %v1627 = vunpack.c.l.b16 %v1540
    %v1628 = vunpack.c.h.b16 %v1540
    %v1629 = vunpack.c.l.b16 %v1541
    %v1630 = vunpack.c.h.b16 %v1541
    %v1631 = vunpack.c.l.b16 %v1542
    %v1632 = vunpack.c.h.b16 %v1542
    %v1633 = vunpack.c.l.b16 %v1543
    %v1634 = vunpack.c.h.b16 %v1543
    %v1635 = vunpack.c.l.b16 %v1544
    %v1636 = vunpack.c.h.b16 %v1544
    %v1637 = vunpack.c.l.b16 %v1545
    %v1638 = vunpack.c.h.b16 %v1545
    %v1639 = vunpack.c.l.b16 %v1546
    %v1640 = vunpack.c.h.b16 %v1546
    %v1641 = vunpack.c.l.b16 %v1547
    %v1642 = vunpack.c.h.b16 %v1547
    %v1643 = vunpack.c.l.b16 %v1548
    %v1644 = vunpack.c.h.b16 %v1548
    %v1645 = vpack.c.b16 %v1585, %v1581
    %v1646 = vpack.c.b16 %v1586, %v1582
    %v1647 = vpack.c.b16 %v1587, %v1583
    %v1648 = vpack.c.b16 %v1588, %v1584
    %v1649 = vpack.c.b16 %v1593, %v1589
    %v1650 = vpack.c.b16 %v1594, %v1590
    %v1651 = vpack.c.b16 %v1595, %v1591
    %v1652 = vpack.c.b16 %v1596, %v1592
    %v1653 = vpack.c.b16 %v1601, %v1597
    %v1654 = vpack.c.b16 %v1602, %v1598
    %v1655 = vpack.c.b16 %v1603, %v1599
    %v1656 = vpack.c.b16 %v1604, %v1600
    %v1657 = vpack.c.b16 %v1609, %v1605
    %v1658 = vpack.c.b16 %v1610, %v1606
    %v1659 = vpack.c.b16 %v1611, %v1607
    %v1660 = vpack.c.b16 %v1612, %v1608
    %v1661 = vpack.c.b16 %v1617, %v1613
    %v1662 = vpack.c.b16 %v1618, %v1614
    %v1663 = vpack.c.b16 %v1619, %v1615
    %v1664 = vpack.c.b16 %v1620, %v1616
    %v1665 = vpack.c.b16 %v1625, %v1621
    %v1666 = vpack.c.b16 %v1626, %v1622
    %v1667 = vpack.c.b16 %v1627, %v1623
    %v1668 = vpack.c.b16 %v1628, %v1624
    %v1669 = vpack.c.b16 %v1633, %v1629
    %v1670 = vpack.c.b16 %v1634, %v1630
    %v1671 = vpack.c.b16 %v1635, %v1631
    %v1672 = vpack.c.b16 %v1636, %v1632
    %v1673 = vpack.c.b16 %v1641, %v1637
    %v1674 = vpack.c.b16 %v1642, %v1638
    %v1675 = vpack.c.b16 %v1643, %v1639
    %v1676 = vpack.c.b16 %v1644, %v1640
    %1709 = vmatprep.subr.bf16.mxu0 %v1674
    %1710 = vmatpush1.bf16.msra.mxu0 %v1673
    %1711 = vmatprep.subr.bf16.mxu0 %v1670
    %1712 = vmatpush1.bf16.msra.mxu0 %v1669
    %1713 = vmatprep.subr.bf16.mxu0 %v1666
    %1714 = vmatpush1.bf16.msra.mxu0 %v1665
    %1715 = vmatprep.subr.bf16.mxu0 %v1662
    %1716 = vmatpush1.bf16.msra.mxu0 %v1661
    %1717 = vmatprep.subr.bf16.mxu0 %v1658
    %1718 = vmatpush1.bf16.msra.mxu0 %v1657
    %1719 = vmatprep.subr.bf16.mxu0 %v1654
    %1720 = vmatpush1.bf16.msra.mxu0 %v1653
    %1721 = vmatprep.subr.bf16.mxu0 %v1650
    %1722 = vmatpush1.bf16.msra.mxu0 %v1649
    %1723 = vmatprep.subr.bf16.mxu0 %v1646
    %1724 = vmatpush1.bf16.msra.mxu0 %v1645
    %1725 = vmatprep.subr.bf16.mxu0 0
    %1726 = vmatpush2.bf16.msra.mxu0 0
    %1727 = vmatprep.subr.bf16.mxu0 0
    %1728 = vmatpush2.bf16.msra.mxu0 0
    %1729 = vmatprep.subr.bf16.mxu0 0
    %1730 = vmatpush2.bf16.msra.mxu0 0
    %1731 = vmatprep.subr.bf16.mxu0 0
    %1732 = vmatpush2.bf16.msra.mxu0 0
    %1733 = vmatprep.subr.bf16.mxu0 0
    %1734 = vmatpush2.bf16.msra.mxu0 0
    %1735 = vmatprep.subr.bf16.mxu0 0
    %1736 = vmatpush2.bf16.msra.mxu0 0
    %1737 = vmatprep.subr.bf16.mxu0 0
    %1738 = vmatpush2.bf16.msra.mxu0 0
    %1739 = vmatprep.subr.bf16.mxu0 0
    %1740 = vmatpush2.bf16.msra.mxu0 0
    %1741 = vmatprep.mubr.bf16.mxu0 0
    %1742 = vmatmul.mubr.bf16.gmra.mxu0 %v1516
    %v1743 = vpop.f32.mrf.mxu0
    %v1744 = vadd.f32 0.0, %v1743
    %v1745 = vpop.f32.mrf.mxu0
    %v1746 = vadd.f32 0.0, %v1745
    %v1747 = vpop.f32.mrf.mxu0
    %v1748 = vpop.f32.mrf.mxu0
    %1749 = vdwg.mxu0
    %1750 = vmatprep.subr.bf16.mxu0 %v1676
    %1751 = vmatpush1.bf16.msra.mxu0 %v1675
    %1752 = vmatprep.subr.bf16.mxu0 %v1672
    %1753 = vmatpush1.bf16.msra.mxu0 %v1671
    %1754 = vmatprep.subr.bf16.mxu0 %v1668
    %1755 = vmatpush1.bf16.msra.mxu0 %v1667
    %1756 = vmatprep.subr.bf16.mxu0 %v1664
    %1757 = vmatpush1.bf16.msra.mxu0 %v1663
    %1758 = vmatprep.subr.bf16.mxu0 %v1660
    %1759 = vmatpush1.bf16.msra.mxu0 %v1659
    %1760 = vmatprep.subr.bf16.mxu0 %v1656
    %1761 = vmatpush1.bf16.msra.mxu0 %v1655
    %1762 = vmatprep.subr.bf16.mxu0 %v1652
    %1763 = vmatpush1.bf16.msra.mxu0 %v1651
    %1764 = vmatprep.subr.bf16.mxu0 %v1648
    %1765 = vmatpush1.bf16.msra.mxu0 %v1647
    %1766 = vmatprep.subr.bf16.mxu0 0
    %1767 = vmatpush2.bf16.msra.mxu0 0
    %1768 = vmatprep.subr.bf16.mxu0 0
    %1769 = vmatpush2.bf16.msra.mxu0 0
    %1770 = vmatprep.subr.bf16.mxu0 0
    %1771 = vmatpush2.bf16.msra.mxu0 0
    %1772 = vmatprep.subr.bf16.mxu0 0
    %1773 = vmatpush2.bf16.msra.mxu0 0
    %1774 = vmatprep.subr.bf16.mxu0 0
    %1775 = vmatpush2.bf16.msra.mxu0 0
    %1776 = vmatprep.subr.bf16.mxu0 0
    %1777 = vmatpush2.bf16.msra.mxu0 0
    %1778 = vmatprep.subr.bf16.mxu0 0
    %1779 = vmatpush2.bf16.msra.mxu0 0
    %1780 = vmatprep.subr.bf16.mxu0 0
    %1781 = vmatpush2.bf16.msra.mxu0 0
    %1782 = vmatprep.mubr.bf16.mxu0 0
    %1783 = vmatmul.mubr.bf16.gmra.mxu0 %v1516
    %v1784 = vpop.f32.mrf.mxu0
    %v1785 = vadd.f32 0.0, %v1784
    %v1786 = vpop.f32.mrf.mxu0
    %v1787 = vadd.f32 0.0, %v1786
    %v1788 = vpop.f32.mrf.mxu0
    %v1789 = vpop.f32.mrf.mxu0
    %1790 = vdwg.mxu0
    %v1791 = vtanh.pop %v1744
    %v1792 = vtanh.pop %v1746
    %v1793 = vadd.f32 %v1785, %v1787
    %v1794 = vxor.u32 %v1793, 2147483648
    %v1795 = vmul.f32 %v1794, 1.442695
    %v1796 = vpow.pop %v1795
    %v1797 = vadd.f32 %v1796, 1.0
    %v1798 = vrcp.pop %v1797
    %v1799 = vmul.f32 1.0, %v1798
    %v1800 = vsub.f32 1.0, %v1799
    %v1801 = vmul.f32 %v1791, %v1800
    %v1802 = vmul.f32 %v1799, %v1792
    %v1803 = vadd.f32 %v1801, %v1802
    %v1804 = vtanh.pop %v1803
    %v1805 = vxor.u32 %v1803, 2147483648
    %v1806 = vmul.f32 %v1805, 1.442695
    %v1807 = vpow.pop %v1806
    %v1808 = vadd.f32 %v1807, 1.0
    %v1809 = vrcp.pop %v1808
    %v1810 = vmul.f32 1.0, %v1809
    %v1811 = vsel %vm49, %v1804, %v1810
    %s1812 = scalar_lea.vmem [#allocation7], 8
    %1813 = vst [vmem:[%s1812] sm:$0xff] %v1811
    %s1814 = scalar_lea.vmem [#allocation2], 16
    %v1815 = vld [vmem:[%s1814] sm:$0xff]
    %v1816 = vadd.f32 %v1815, %v1223
    %v1817 = vadd.f32 %v1816, %v48
    %v1818 = vpack.c.bf16 %v1817, %v1817
    %v1819 = vld [vmem:[#allocation5] sm:$0xff]
    %v1820 = vld [vmem:[#allocation5 + $0x8] sm:$0xff]
    %v1821 = vld [vmem:[#allocation5 + $0x10] sm:$0xff]
    %v1822 = vld [vmem:[#allocation5 + $0x18] sm:$0xff]
    %v1823 = vld [vmem:[#allocation5 + $0x20] sm:$0xff]
    %v1824 = vld [vmem:[#allocation5 + $0x28] sm:$0xff]
    %v1825 = vld [vmem:[#allocation5 + $0x30] sm:$0xff]
    %v1826 = vld [vmem:[#allocation5 + $0x38] sm:$0xff]
    %v1827 = vld [vmem:[#allocation5 + $0x40] sm:$0xff]
    %v1828 = vld [vmem:[#allocation5 + $0x48] sm:$0xff]
    %v1829 = vld [vmem:[#allocation5 + $0x50] sm:$0xff]
    %v1830 = vld [vmem:[#allocation5 + $0x58] sm:$0xff]
    %v1831 = vld [vmem:[#allocation5 + $0x60] sm:$0xff]
    %v1832 = vld [vmem:[#allocation5 + $0x68] sm:$0xff]
    %v1833 = vld [vmem:[#allocation5 + $0x70] sm:$0xff]
    %v1834 = vld [vmem:[#allocation5 + $0x78] sm:$0xff]
    %v1835 = vld [vmem:[#allocation5 + $0x80] sm:$0xff]
    %v1836 = vld [vmem:[#allocation5 + $0x88] sm:$0xff]
    %v1837 = vld [vmem:[#allocation5 + $0x90] sm:$0xff]
    %v1838 = vld [vmem:[#allocation5 + $0x98] sm:$0xff]
    %v1839 = vld [vmem:[#allocation5 + $0xa0] sm:$0xff]
    %v1840 = vld [vmem:[#allocation5 + $0xa8] sm:$0xff]
    %v1841 = vld [vmem:[#allocation5 + $0xb0] sm:$0xff]
    %v1842 = vld [vmem:[#allocation5 + $0xb8] sm:$0xff]
    %v1843 = vld [vmem:[#allocation5 + $0xc0] sm:$0xff]
    %v1844 = vld [vmem:[#allocation5 + $0xc8] sm:$0xff]
    %v1845 = vld [vmem:[#allocation5 + $0xd0] sm:$0xff]
    %v1846 = vld [vmem:[#allocation5 + $0xd8] sm:$0xff]
    %v1847 = vld [vmem:[#allocation5 + $0xe0] sm:$0xff]
    %v1848 = vld [vmem:[#allocation5 + $0xe8] sm:$0xff]
    %v1849 = vld [vmem:[#allocation5 + $0xf0] sm:$0xff]
    %v1850 = vld [vmem:[#allocation5 + $0xf8] sm:$0xff]
    %v1883 = vunpack.c.l.b16 %v1819
    %v1884 = vunpack.c.h.b16 %v1819
    %v1885 = vunpack.c.l.b16 %v1820
    %v1886 = vunpack.c.h.b16 %v1820
    %v1887 = vunpack.c.l.b16 %v1821
    %v1888 = vunpack.c.h.b16 %v1821
    %v1889 = vunpack.c.l.b16 %v1822
    %v1890 = vunpack.c.h.b16 %v1822
    %v1891 = vunpack.c.l.b16 %v1823
    %v1892 = vunpack.c.h.b16 %v1823
    %v1893 = vunpack.c.l.b16 %v1824
    %v1894 = vunpack.c.h.b16 %v1824
    %v1895 = vunpack.c.l.b16 %v1825
    %v1896 = vunpack.c.h.b16 %v1825
    %v1897 = vunpack.c.l.b16 %v1826
    %v1898 = vunpack.c.h.b16 %v1826
    %v1899 = vunpack.c.l.b16 %v1827
    %v1900 = vunpack.c.h.b16 %v1827
    %v1901 = vunpack.c.l.b16 %v1828
    %v1902 = vunpack.c.h.b16 %v1828
    %v1903 = vunpack.c.l.b16 %v1829
    %v1904 = vunpack.c.h.b16 %v1829
    %v1905 = vunpack.c.l.b16 %v1830
    %v1906 = vunpack.c.h.b16 %v1830
    %v1907 = vunpack.c.l.b16 %v1831
    %v1908 = vunpack.c.h.b16 %v1831
    %v1909 = vunpack.c.l.b16 %v1832
    %v1910 = vunpack.c.h.b16 %v1832
    %v1911 = vunpack.c.l.b16 %v1833
    %v1912 = vunpack.c.h.b16 %v1833
    %v1913 = vunpack.c.l.b16 %v1834
    %v1914 = vunpack.c.h.b16 %v1834
    %v1915 = vunpack.c.l.b16 %v1835
    %v1916 = vunpack.c.h.b16 %v1835
    %v1917 = vunpack.c.l.b16 %v1836
    %v1918 = vunpack.c.h.b16 %v1836
    %v1919 = vunpack.c.l.b16 %v1837
    %v1920 = vunpack.c.h.b16 %v1837
    %v1921 = vunpack.c.l.b16 %v1838
    %v1922 = vunpack.c.h.b16 %v1838
    %v1923 = vunpack.c.l.b16 %v1839
    %v1924 = vunpack.c.h.b16 %v1839
    %v1925 = vunpack.c.l.b16 %v1840
    %v1926 = vunpack.c.h.b16 %v1840
    %v1927 = vunpack.c.l.b16 %v1841
    %v1928 = vunpack.c.h.b16 %v1841
    %v1929 = vunpack.c.l.b16 %v1842
    %v1930 = vunpack.c.h.b16 %v1842
    %v1931 = vunpack.c.l.b16 %v1843
    %v1932 = vunpack.c.h.b16 %v1843
    %v1933 = vunpack.c.l.b16 %v1844
    %v1934 = vunpack.c.h.b16 %v1844
    %v1935 = vunpack.c.l.b16 %v1845
    %v1936 = vunpack.c.h.b16 %v1845
    %v1937 = vunpack.c.l.b16 %v1846
    %v1938 = vunpack.c.h.b16 %v1846
    %v1939 = vunpack.c.l.b16 %v1847
    %v1940 = vunpack.c.h.b16 %v1847
    %v1941 = vunpack.c.l.b16 %v1848
    %v1942 = vunpack.c.h.b16 %v1848
    %v1943 = vunpack.c.l.b16 %v1849
    %v1944 = vunpack.c.h.b16 %v1849
    %v1945 = vunpack.c.l.b16 %v1850
    %v1946 = vunpack.c.h.b16 %v1850
    %v1947 = vpack.c.b16 %v1887, %v1883
    %v1948 = vpack.c.b16 %v1888, %v1884
    %v1949 = vpack.c.b16 %v1889, %v1885
    %v1950 = vpack.c.b16 %v1890, %v1886
    %v1951 = vpack.c.b16 %v1895, %v1891
    %v1952 = vpack.c.b16 %v1896, %v1892
    %v1953 = vpack.c.b16 %v1897, %v1893
    %v1954 = vpack.c.b16 %v1898, %v1894
    %v1955 = vpack.c.b16 %v1903, %v1899
    %v1956 = vpack.c.b16 %v1904, %v1900
    %v1957 = vpack.c.b16 %v1905, %v1901
    %v1958 = vpack.c.b16 %v1906, %v1902
    %v1959 = vpack.c.b16 %v1911, %v1907
    %v1960 = vpack.c.b16 %v1912, %v1908
    %v1961 = vpack.c.b16 %v1913, %v1909
    %v1962 = vpack.c.b16 %v1914, %v1910
    %v1963 = vpack.c.b16 %v1919, %v1915
    %v1964 = vpack.c.b16 %v1920, %v1916
    %v1965 = vpack.c.b16 %v1921, %v1917
    %v1966 = vpack.c.b16 %v1922, %v1918
    %v1967 = vpack.c.b16 %v1927, %v1923
    %v1968 = vpack.c.b16 %v1928, %v1924
    %v1969 = vpack.c.b16 %v1929, %v1925
    %v1970 = vpack.c.b16 %v1930, %v1926
    %v1971 = vpack.c.b16 %v1935, %v1931
    %v1972 = vpack.c.b16 %v1936, %v1932
    %v1973 = vpack.c.b16 %v1937, %v1933
    %v1974 = vpack.c.b16 %v1938, %v1934
    %v1975 = vpack.c.b16 %v1943, %v1939
    %v1976 = vpack.c.b16 %v1944, %v1940
    %v1977 = vpack.c.b16 %v1945, %v1941
    %v1978 = vpack.c.b16 %v1946, %v1942
    %2011 = vmatprep.subr.bf16.mxu0 %v1976
    %2012 = vmatpush1.bf16.msra.mxu0 %v1975
    %2013 = vmatprep.subr.bf16.mxu0 %v1972
    %2014 = vmatpush1.bf16.msra.mxu0 %v1971
    %2015 = vmatprep.subr.bf16.mxu0 %v1968
    %2016 = vmatpush1.bf16.msra.mxu0 %v1967
    %2017 = vmatprep.subr.bf16.mxu0 %v1964
    %2018 = vmatpush1.bf16.msra.mxu0 %v1963
    %2019 = vmatprep.subr.bf16.mxu0 %v1960
    %2020 = vmatpush1.bf16.msra.mxu0 %v1959
    %2021 = vmatprep.subr.bf16.mxu0 %v1956
    %2022 = vmatpush1.bf16.msra.mxu0 %v1955
    %2023 = vmatprep.subr.bf16.mxu0 %v1952
    %2024 = vmatpush1.bf16.msra.mxu0 %v1951
    %2025 = vmatprep.subr.bf16.mxu0 %v1948
    %2026 = vmatpush1.bf16.msra.mxu0 %v1947
    %2027 = vmatprep.subr.bf16.mxu0 0
    %2028 = vmatpush2.bf16.msra.mxu0 0
    %2029 = vmatprep.subr.bf16.mxu0 0
    %2030 = vmatpush2.bf16.msra.mxu0 0
    %2031 = vmatprep.subr.bf16.mxu0 0
    %2032 = vmatpush2.bf16.msra.mxu0 0
    %2033 = vmatprep.subr.bf16.mxu0 0
    %2034 = vmatpush2.bf16.msra.mxu0 0
    %2035 = vmatprep.subr.bf16.mxu0 0
    %2036 = vmatpush2.bf16.msra.mxu0 0
    %2037 = vmatprep.subr.bf16.mxu0 0
    %2038 = vmatpush2.bf16.msra.mxu0 0
    %2039 = vmatprep.subr.bf16.mxu0 0
    %2040 = vmatpush2.bf16.msra.mxu0 0
    %2041 = vmatprep.subr.bf16.mxu0 0
    %2042 = vmatpush2.bf16.msra.mxu0 0
    %2043 = vmatprep.mubr.bf16.mxu0 0
    %2044 = vmatmul.mubr.bf16.gmra.mxu0 %v1818
    %v2045 = vpop.f32.mrf.mxu0
    %v2046 = vadd.f32 0.0, %v2045
    %v2047 = vpop.f32.mrf.mxu0
    %v2048 = vadd.f32 0.0, %v2047
    %v2049 = vpop.f32.mrf.mxu0
    %v2050 = vpop.f32.mrf.mxu0
    %2051 = vdwg.mxu0
    %2052 = vmatprep.subr.bf16.mxu0 %v1978
    %2053 = vmatpush1.bf16.msra.mxu0 %v1977
    %2054 = vmatprep.subr.bf16.mxu0 %v1974
    %2055 = vmatpush1.bf16.msra.mxu0 %v1973
    %2056 = vmatprep.subr.bf16.mxu0 %v1970
    %2057 = vmatpush1.bf16.msra.mxu0 %v1969
    %2058 = vmatprep.subr.bf16.mxu0 %v1966
    %2059 = vmatpush1.bf16.msra.mxu0 %v1965
    %2060 = vmatprep.subr.bf16.mxu0 %v1962
    %2061 = vmatpush1.bf16.msra.mxu0 %v1961
    %2062 = vmatprep.subr.bf16.mxu0 %v1958
    %2063 = vmatpush1.bf16.msra.mxu0 %v1957
    %2064 = vmatprep.subr.bf16.mxu0 %v1954
    %2065 = vmatpush1.bf16.msra.mxu0 %v1953
    %2066 = vmatprep.subr.bf16.mxu0 %v1950
    %2067 = vmatpush1.bf16.msra.mxu0 %v1949
    %2068 = vmatprep.subr.bf16.mxu0 0
    %2069 = vmatpush2.bf16.msra.mxu0 0
    %2070 = vmatprep.subr.bf16.mxu0 0
    %2071 = vmatpush2.bf16.msra.mxu0 0
    %2072 = vmatprep.subr.bf16.mxu0 0
    %2073 = vmatpush2.bf16.msra.mxu0 0
    %2074 = vmatprep.subr.bf16.mxu0 0
    %2075 = vmatpush2.bf16.msra.mxu0 0
    %2076 = vmatprep.subr.bf16.mxu0 0
    %2077 = vmatpush2.bf16.msra.mxu0 0
    %2078 = vmatprep.subr.bf16.mxu0 0
    %2079 = vmatpush2.bf16.msra.mxu0 0
    %2080 = vmatprep.subr.bf16.mxu0 0
    %2081 = vmatpush2.bf16.msra.mxu0 0
    %2082 = vmatprep.subr.bf16.mxu0 0
    %2083 = vmatpush2.bf16.msra.mxu0 0
    %2084 = vmatprep.mubr.bf16.mxu0 0
    %2085 = vmatmul.mubr.bf16.gmra.mxu0 %v1818
    %v2086 = vpop.f32.mrf.mxu0
    %v2087 = vadd.f32 0.0, %v2086
    %v2088 = vpop.f32.mrf.mxu0
    %v2089 = vadd.f32 0.0, %v2088
    %v2090 = vpop.f32.mrf.mxu0
    %v2091 = vpop.f32.mrf.mxu0
    %2092 = vdwg.mxu0
    %v2093 = vtanh.pop %v2046
    %v2094 = vtanh.pop %v2048
    %v2095 = vadd.f32 %v2087, %v2089
    %v2096 = vxor.u32 %v2095, 2147483648
    %v2097 = vmul.f32 %v2096, 1.442695
    %v2098 = vpow.pop %v2097
    %v2099 = vadd.f32 %v2098, 1.0
    %v2100 = vrcp.pop %v2099
    %v2101 = vmul.f32 1.0, %v2100
    %v2102 = vsub.f32 1.0, %v2101
    %v2103 = vmul.f32 %v2093, %v2102
    %v2104 = vmul.f32 %v2101, %v2094
    %v2105 = vadd.f32 %v2103, %v2104
    %v2106 = vadd.f32 %v2105, %v1513
    %v2107 = vadd.f32 %v2106, %v48
    %v2108 = vpack.c.bf16 %v2107, %v2107
    %v2109 = vld [vmem:[%s344] sm:$0xff]
    %v2110 = vld [vmem:[%s344 + $0x8] sm:$0xff]
    %v2111 = vld [vmem:[%s344 + $0x10] sm:$0xff]
    %v2112 = vld [vmem:[%s344 + $0x18] sm:$0xff]
    %v2113 = vld [vmem:[%s344 + $0x20] sm:$0xff]
    %v2114 = vld [vmem:[%s344 + $0x28] sm:$0xff]
    %v2115 = vld [vmem:[%s344 + $0x30] sm:$0xff]
    %v2116 = vld [vmem:[%s344 + $0x38] sm:$0xff]
    %v2117 = vld [vmem:[%s344 + $0x40] sm:$0xff]
    %v2118 = vld [vmem:[%s344 + $0x48] sm:$0xff]
    %v2119 = vld [vmem:[%s344 + $0x50] sm:$0xff]
    %v2120 = vld [vmem:[%s344 + $0x58] sm:$0xff]
    %v2121 = vld [vmem:[%s344 + $0x60] sm:$0xff]
    %v2122 = vld [vmem:[%s344 + $0x68] sm:$0xff]
    %v2123 = vld [vmem:[%s344 + $0x70] sm:$0xff]
    %v2124 = vld [vmem:[%s344 + $0x78] sm:$0xff]
    %v2125 = vld [vmem:[%s344 + $0x80] sm:$0xff]
    %v2126 = vld [vmem:[%s344 + $0x88] sm:$0xff]
    %v2127 = vld [vmem:[%s344 + $0x90] sm:$0xff]
    %v2128 = vld [vmem:[%s344 + $0x98] sm:$0xff]
    %v2129 = vld [vmem:[%s344 + $0xa0] sm:$0xff]
    %v2130 = vld [vmem:[%s344 + $0xa8] sm:$0xff]
    %v2131 = vld [vmem:[%s344 + $0xb0] sm:$0xff]
    %v2132 = vld [vmem:[%s344 + $0xb8] sm:$0xff]
    %v2133 = vld [vmem:[%s344 + $0xc0] sm:$0xff]
    %v2134 = vld [vmem:[%s344 + $0xc8] sm:$0xff]
    %v2135 = vld [vmem:[%s344 + $0xd0] sm:$0xff]
    %v2136 = vld [vmem:[%s344 + $0xd8] sm:$0xff]
    %v2137 = vld [vmem:[%s344 + $0xe0] sm:$0xff]
    %v2138 = vld [vmem:[%s344 + $0xe8] sm:$0xff]
    %v2139 = vld [vmem:[%s344 + $0xf0] sm:$0xff]
    %v2140 = vld [vmem:[%s344 + $0xf8] sm:$0xff]
    %v2173 = vunpack.c.l.b16 %v2109
    %v2174 = vunpack.c.h.b16 %v2109
    %v2175 = vunpack.c.l.b16 %v2110
    %v2176 = vunpack.c.h.b16 %v2110
    %v2177 = vunpack.c.l.b16 %v2111
    %v2178 = vunpack.c.h.b16 %v2111
    %v2179 = vunpack.c.l.b16 %v2112
    %v2180 = vunpack.c.h.b16 %v2112
    %v2181 = vunpack.c.l.b16 %v2113
    %v2182 = vunpack.c.h.b16 %v2113
    %v2183 = vunpack.c.l.b16 %v2114
    %v2184 = vunpack.c.h.b16 %v2114
    %v2185 = vunpack.c.l.b16 %v2115
    %v2186 = vunpack.c.h.b16 %v2115
    %v2187 = vunpack.c.l.b16 %v2116
    %v2188 = vunpack.c.h.b16 %v2116
    %v2189 = vunpack.c.l.b16 %v2117
    %v2190 = vunpack.c.h.b16 %v2117
    %v2191 = vunpack.c.l.b16 %v2118
    %v2192 = vunpack.c.h.b16 %v2118
    %v2193 = vunpack.c.l.b16 %v2119
    %v2194 = vunpack.c.h.b16 %v2119
    %v2195 = vunpack.c.l.b16 %v2120
    %v2196 = vunpack.c.h.b16 %v2120
    %v2197 = vunpack.c.l.b16 %v2121
    %v2198 = vunpack.c.h.b16 %v2121
    %v2199 = vunpack.c.l.b16 %v2122
    %v2200 = vunpack.c.h.b16 %v2122
    %v2201 = vunpack.c.l.b16 %v2123
    %v2202 = vunpack.c.h.b16 %v2123
    %v2203 = vunpack.c.l.b16 %v2124
    %v2204 = vunpack.c.h.b16 %v2124
    %v2205 = vunpack.c.l.b16 %v2125
    %v2206 = vunpack.c.h.b16 %v2125
    %v2207 = vunpack.c.l.b16 %v2126
    %v2208 = vunpack.c.h.b16 %v2126
    %v2209 = vunpack.c.l.b16 %v2127
    %v2210 = vunpack.c.h.b16 %v2127
    %v2211 = vunpack.c.l.b16 %v2128
    %v2212 = vunpack.c.h.b16 %v2128
    %v2213 = vunpack.c.l.b16 %v2129
    %v2214 = vunpack.c.h.b16 %v2129
    %v2215 = vunpack.c.l.b16 %v2130
    %v2216 = vunpack.c.h.b16 %v2130
    %v2217 = vunpack.c.l.b16 %v2131
    %v2218 = vunpack.c.h.b16 %v2131
    %v2219 = vunpack.c.l.b16 %v2132
    %v2220 = vunpack.c.h.b16 %v2132
    %v2221 = vunpack.c.l.b16 %v2133
    %v2222 = vunpack.c.h.b16 %v2133
    %v2223 = vunpack.c.l.b16 %v2134
    %v2224 = vunpack.c.h.b16 %v2134
    %v2225 = vunpack.c.l.b16 %v2135
    %v2226 = vunpack.c.h.b16 %v2135
    %v2227 = vunpack.c.l.b16 %v2136
    %v2228 = vunpack.c.h.b16 %v2136
    %v2229 = vunpack.c.l.b16 %v2137
    %v2230 = vunpack.c.h.b16 %v2137
    %v2231 = vunpack.c.l.b16 %v2138
    %v2232 = vunpack.c.h.b16 %v2138
    %v2233 = vunpack.c.l.b16 %v2139
    %v2234 = vunpack.c.h.b16 %v2139
    %v2235 = vunpack.c.l.b16 %v2140
    %v2236 = vunpack.c.h.b16 %v2140
    %v2237 = vpack.c.b16 %v2177, %v2173
    %v2238 = vpack.c.b16 %v2178, %v2174
    %v2239 = vpack.c.b16 %v2179, %v2175
    %v2240 = vpack.c.b16 %v2180, %v2176
    %v2241 = vpack.c.b16 %v2185, %v2181
    %v2242 = vpack.c.b16 %v2186, %v2182
    %v2243 = vpack.c.b16 %v2187, %v2183
    %v2244 = vpack.c.b16 %v2188, %v2184
    %v2245 = vpack.c.b16 %v2193, %v2189
    %v2246 = vpack.c.b16 %v2194, %v2190
    %v2247 = vpack.c.b16 %v2195, %v2191
    %v2248 = vpack.c.b16 %v2196, %v2192
    %v2249 = vpack.c.b16 %v2201, %v2197
    %v2250 = vpack.c.b16 %v2202, %v2198
    %v2251 = vpack.c.b16 %v2203, %v2199
    %v2252 = vpack.c.b16 %v2204, %v2200
    %v2253 = vpack.c.b16 %v2209, %v2205
    %v2254 = vpack.c.b16 %v2210, %v2206
    %v2255 = vpack.c.b16 %v2211, %v2207
    %v2256 = vpack.c.b16 %v2212, %v2208
    %v2257 = vpack.c.b16 %v2217, %v2213
    %v2258 = vpack.c.b16 %v2218, %v2214
    %v2259 = vpack.c.b16 %v2219, %v2215
    %v2260 = vpack.c.b16 %v2220, %v2216
    %v2261 = vpack.c.b16 %v2225, %v2221
    %v2262 = vpack.c.b16 %v2226, %v2222
    %v2263 = vpack.c.b16 %v2227, %v2223
    %v2264 = vpack.c.b16 %v2228, %v2224
    %v2265 = vpack.c.b16 %v2233, %v2229
    %v2266 = vpack.c.b16 %v2234, %v2230
    %v2267 = vpack.c.b16 %v2235, %v2231
    %v2268 = vpack.c.b16 %v2236, %v2232
    %2301 = vmatprep.subr.bf16.mxu0 %v2266
    %2302 = vmatpush1.bf16.msra.mxu0 %v2265
    %2303 = vmatprep.subr.bf16.mxu0 %v2262
    %2304 = vmatpush1.bf16.msra.mxu0 %v2261
    %2305 = vmatprep.subr.bf16.mxu0 %v2258
    %2306 = vmatpush1.bf16.msra.mxu0 %v2257
    %2307 = vmatprep.subr.bf16.mxu0 %v2254
    %2308 = vmatpush1.bf16.msra.mxu0 %v2253
    %2309 = vmatprep.subr.bf16.mxu0 %v2250
    %2310 = vmatpush1.bf16.msra.mxu0 %v2249
    %2311 = vmatprep.subr.bf16.mxu0 %v2246
    %2312 = vmatpush1.bf16.msra.mxu0 %v2245
    %2313 = vmatprep.subr.bf16.mxu0 %v2242
    %2314 = vmatpush1.bf16.msra.mxu0 %v2241
    %2315 = vmatprep.subr.bf16.mxu0 %v2238
    %2316 = vmatpush1.bf16.msra.mxu0 %v2237
    %2317 = vmatprep.subr.bf16.mxu0 0
    %2318 = vmatpush2.bf16.msra.mxu0 0
    %2319 = vmatprep.subr.bf16.mxu0 0
    %2320 = vmatpush2.bf16.msra.mxu0 0
    %2321 = vmatprep.subr.bf16.mxu0 0
    %2322 = vmatpush2.bf16.msra.mxu0 0
    %2323 = vmatprep.subr.bf16.mxu0 0
    %2324 = vmatpush2.bf16.msra.mxu0 0
    %2325 = vmatprep.subr.bf16.mxu0 0
    %2326 = vmatpush2.bf16.msra.mxu0 0
    %2327 = vmatprep.subr.bf16.mxu0 0
    %2328 = vmatpush2.bf16.msra.mxu0 0
    %2329 = vmatprep.subr.bf16.mxu0 0
    %2330 = vmatpush2.bf16.msra.mxu0 0
    %2331 = vmatprep.subr.bf16.mxu0 0
    %2332 = vmatpush2.bf16.msra.mxu0 0
    %2333 = vmatprep.mubr.bf16.mxu0 0
    %2334 = vmatmul.mubr.bf16.gmra.mxu0 %v2108
    %v2335 = vpop.f32.mrf.mxu0
    %v2336 = vadd.f32 0.0, %v2335
    %v2337 = vpop.f32.mrf.mxu0
    %v2338 = vadd.f32 0.0, %v2337
    %v2339 = vpop.f32.mrf.mxu0
    %v2340 = vpop.f32.mrf.mxu0
    %2341 = vdwg.mxu0
    %2342 = vmatprep.subr.bf16.mxu0 %v2268
    %2343 = vmatpush1.bf16.msra.mxu0 %v2267
    %2344 = vmatprep.subr.bf16.mxu0 %v2264
    %2345 = vmatpush1.bf16.msra.mxu0 %v2263
    %2346 = vmatprep.subr.bf16.mxu0 %v2260
    %2347 = vmatpush1.bf16.msra.mxu0 %v2259
    %2348 = vmatprep.subr.bf16.mxu0 %v2256
    %2349 = vmatpush1.bf16.msra.mxu0 %v2255
    %2350 = vmatprep.subr.bf16.mxu0 %v2252
    %2351 = vmatpush1.bf16.msra.mxu0 %v2251
    %2352 = vmatprep.subr.bf16.mxu0 %v2248
    %2353 = vmatpush1.bf16.msra.mxu0 %v2247
    %2354 = vmatprep.subr.bf16.mxu0 %v2244
    %2355 = vmatpush1.bf16.msra.mxu0 %v2243
    %2356 = vmatprep.subr.bf16.mxu0 %v2240
    %2357 = vmatpush1.bf16.msra.mxu0 %v2239
    %2358 = vmatprep.subr.bf16.mxu0 0
    %2359 = vmatpush2.bf16.msra.mxu0 0
    %2360 = vmatprep.subr.bf16.mxu0 0
    %2361 = vmatpush2.bf16.msra.mxu0 0
    %2362 = vmatprep.subr.bf16.mxu0 0
    %2363 = vmatpush2.bf16.msra.mxu0 0
    %2364 = vmatprep.subr.bf16.mxu0 0
    %2365 = vmatpush2.bf16.msra.mxu0 0
    %2366 = vmatprep.subr.bf16.mxu0 0
    %2367 = vmatpush2.bf16.msra.mxu0 0
    %2368 = vmatprep.subr.bf16.mxu0 0
    %2369 = vmatpush2.bf16.msra.mxu0 0
    %2370 = vmatprep.subr.bf16.mxu0 0
    %2371 = vmatpush2.bf16.msra.mxu0 0
    %2372 = vmatprep.subr.bf16.mxu0 0
    %2373 = vmatpush2.bf16.msra.mxu0 0
    %2374 = vmatprep.mubr.bf16.mxu0 0
    %2375 = vmatmul.mubr.bf16.gmra.mxu0 %v2108
    %v2376 = vpop.f32.mrf.mxu0
    %v2377 = vadd.f32 0.0, %v2376
    %v2378 = vpop.f32.mrf.mxu0
    %v2379 = vadd.f32 0.0, %v2378
    %v2380 = vpop.f32.mrf.mxu0
    %v2381 = vpop.f32.mrf.mxu0
    %2382 = vdwg.mxu0
    %v2383 = vtanh.pop %v2336
    %v2384 = vtanh.pop %v2338
    %v2385 = vadd.f32 %v2377, %v2379
    %v2386 = vxor.u32 %v2385, 2147483648
    %v2387 = vmul.f32 %v2386, 1.442695
    %v2388 = vpow.pop %v2387
    %v2389 = vadd.f32 %v2388, 1.0
    %v2390 = vrcp.pop %v2389
    %v2391 = vmul.f32 1.0, %v2390
    %v2392 = vsub.f32 1.0, %v2391
    %v2393 = vmul.f32 %v2383, %v2392
    %v2394 = vmul.f32 %v2391, %v2384
    %v2395 = vadd.f32 %v2393, %v2394
    %v2396 = vadd.f32 %v2395, %v1803
    %v2397 = vadd.f32 %v2396, %v48
    %v2398 = vpack.c.bf16 %v2397, %v2397
    %v2399 = vld [vmem:[%s635] sm:$0xff]
    %v2400 = vld [vmem:[%s635 + $0x8] sm:$0xff]
    %v2401 = vld [vmem:[%s635 + $0x10] sm:$0xff]
    %v2402 = vld [vmem:[%s635 + $0x18] sm:$0xff]
    %v2403 = vld [vmem:[%s635 + $0x20] sm:$0xff]
    %v2404 = vld [vmem:[%s635 + $0x28] sm:$0xff]
    %v2405 = vld [vmem:[%s635 + $0x30] sm:$0xff]
    %v2406 = vld [vmem:[%s635 + $0x38] sm:$0xff]
    %v2407 = vld [vmem:[%s635 + $0x40] sm:$0xff]
    %v2408 = vld [vmem:[%s635 + $0x48] sm:$0xff]
    %v2409 = vld [vmem:[%s635 + $0x50] sm:$0xff]
    %v2410 = vld [vmem:[%s635 + $0x58] sm:$0xff]
    %v2411 = vld [vmem:[%s635 + $0x60] sm:$0xff]
    %v2412 = vld [vmem:[%s635 + $0x68] sm:$0xff]
    %v2413 = vld [vmem:[%s635 + $0x70] sm:$0xff]
    %v2414 = vld [vmem:[%s635 + $0x78] sm:$0xff]
    %v2415 = vld [vmem:[%s635 + $0x80] sm:$0xff]
    %v2416 = vld [vmem:[%s635 + $0x88] sm:$0xff]
    %v2417 = vld [vmem:[%s635 + $0x90] sm:$0xff]
    %v2418 = vld [vmem:[%s635 + $0x98] sm:$0xff]
    %v2419 = vld [vmem:[%s635 + $0xa0] sm:$0xff]
    %v2420 = vld [vmem:[%s635 + $0xa8] sm:$0xff]
    %v2421 = vld [vmem:[%s635 + $0xb0] sm:$0xff]
    %v2422 = vld [vmem:[%s635 + $0xb8] sm:$0xff]
    %v2423 = vld [vmem:[%s635 + $0xc0] sm:$0xff]
    %v2424 = vld [vmem:[%s635 + $0xc8] sm:$0xff]
    %v2425 = vld [vmem:[%s635 + $0xd0] sm:$0xff]
    %v2426 = vld [vmem:[%s635 + $0xd8] sm:$0xff]
    %v2427 = vld [vmem:[%s635 + $0xe0] sm:$0xff]
    %v2428 = vld [vmem:[%s635 + $0xe8] sm:$0xff]
    %v2429 = vld [vmem:[%s635 + $0xf0] sm:$0xff]
    %v2430 = vld [vmem:[%s635 + $0xf8] sm:$0xff]
    %v2463 = vunpack.c.l.b16 %v2399
    %v2464 = vunpack.c.h.b16 %v2399
    %v2465 = vunpack.c.l.b16 %v2400
    %v2466 = vunpack.c.h.b16 %v2400
    %v2467 = vunpack.c.l.b16 %v2401
    %v2468 = vunpack.c.h.b16 %v2401
    %v2469 = vunpack.c.l.b16 %v2402
    %v2470 = vunpack.c.h.b16 %v2402
    %v2471 = vunpack.c.l.b16 %v2403
    %v2472 = vunpack.c.h.b16 %v2403
    %v2473 = vunpack.c.l.b16 %v2404
    %v2474 = vunpack.c.h.b16 %v2404
    %v2475 = vunpack.c.l.b16 %v2405
    %v2476 = vunpack.c.h.b16 %v2405
    %v2477 = vunpack.c.l.b16 %v2406
    %v2478 = vunpack.c.h.b16 %v2406
    %v2479 = vunpack.c.l.b16 %v2407
    %v2480 = vunpack.c.h.b16 %v2407
    %v2481 = vunpack.c.l.b16 %v2408
    %v2482 = vunpack.c.h.b16 %v2408
    %v2483 = vunpack.c.l.b16 %v2409
    %v2484 = vunpack.c.h.b16 %v2409
    %v2485 = vunpack.c.l.b16 %v2410
    %v2486 = vunpack.c.h.b16 %v2410
    %v2487 = vunpack.c.l.b16 %v2411
    %v2488 = vunpack.c.h.b16 %v2411
    %v2489 = vunpack.c.l.b16 %v2412
    %v2490 = vunpack.c.h.b16 %v2412
    %v2491 = vunpack.c.l.b16 %v2413
    %v2492 = vunpack.c.h.b16 %v2413
    %v2493 = vunpack.c.l.b16 %v2414
    %v2494 = vunpack.c.h.b16 %v2414
    %v2495 = vunpack.c.l.b16 %v2415
    %v2496 = vunpack.c.h.b16 %v2415
    %v2497 = vunpack.c.l.b16 %v2416
    %v2498 = vunpack.c.h.b16 %v2416
    %v2499 = vunpack.c.l.b16 %v2417
    %v2500 = vunpack.c.h.b16 %v2417
    %v2501 = vunpack.c.l.b16 %v2418
    %v2502 = vunpack.c.h.b16 %v2418
    %v2503 = vunpack.c.l.b16 %v2419
    %v2504 = vunpack.c.h.b16 %v2419
    %v2505 = vunpack.c.l.b16 %v2420
    %v2506 = vunpack.c.h.b16 %v2420
    %v2507 = vunpack.c.l.b16 %v2421
    %v2508 = vunpack.c.h.b16 %v2421
    %v2509 = vunpack.c.l.b16 %v2422
    %v2510 = vunpack.c.h.b16 %v2422
    %v2511 = vunpack.c.l.b16 %v2423
    %v2512 = vunpack.c.h.b16 %v2423
    %v2513 = vunpack.c.l.b16 %v2424
    %v2514 = vunpack.c.h.b16 %v2424
    %v2515 = vunpack.c.l.b16 %v2425
    %v2516 = vunpack.c.h.b16 %v2425
    %v2517 = vunpack.c.l.b16 %v2426
    %v2518 = vunpack.c.h.b16 %v2426
    %v2519 = vunpack.c.l.b16 %v2427
    %v2520 = vunpack.c.h.b16 %v2427
    %v2521 = vunpack.c.l.b16 %v2428
    %v2522 = vunpack.c.h.b16 %v2428
    %v2523 = vunpack.c.l.b16 %v2429
    %v2524 = vunpack.c.h.b16 %v2429
    %v2525 = vunpack.c.l.b16 %v2430
    %v2526 = vunpack.c.h.b16 %v2430
    %v2527 = vpack.c.b16 %v2467, %v2463
    %v2528 = vpack.c.b16 %v2468, %v2464
    %v2529 = vpack.c.b16 %v2469, %v2465
    %v2530 = vpack.c.b16 %v2470, %v2466
    %v2531 = vpack.c.b16 %v2475, %v2471
    %v2532 = vpack.c.b16 %v2476, %v2472
    %v2533 = vpack.c.b16 %v2477, %v2473
    %v2534 = vpack.c.b16 %v2478, %v2474
    %v2535 = vpack.c.b16 %v2483, %v2479
    %v2536 = vpack.c.b16 %v2484, %v2480
    %v2537 = vpack.c.b16 %v2485, %v2481
    %v2538 = vpack.c.b16 %v2486, %v2482
    %v2539 = vpack.c.b16 %v2491, %v2487
    %v2540 = vpack.c.b16 %v2492, %v2488
    %v2541 = vpack.c.b16 %v2493, %v2489
    %v2542 = vpack.c.b16 %v2494, %v2490
    %v2543 = vpack.c.b16 %v2499, %v2495
    %v2544 = vpack.c.b16 %v2500, %v2496
    %v2545 = vpack.c.b16 %v2501, %v2497
    %v2546 = vpack.c.b16 %v2502, %v2498
    %v2547 = vpack.c.b16 %v2507, %v2503
    %v2548 = vpack.c.b16 %v2508, %v2504
    %v2549 = vpack.c.b16 %v2509, %v2505
    %v2550 = vpack.c.b16 %v2510, %v2506
    %v2551 = vpack.c.b16 %v2515, %v2511
    %v2552 = vpack.c.b16 %v2516, %v2512
    %v2553 = vpack.c.b16 %v2517, %v2513
    %v2554 = vpack.c.b16 %v2518, %v2514
    %v2555 = vpack.c.b16 %v2523, %v2519
    %v2556 = vpack.c.b16 %v2524, %v2520
    %v2557 = vpack.c.b16 %v2525, %v2521
    %v2558 = vpack.c.b16 %v2526, %v2522
    %2591 = vmatprep.subr.bf16.mxu0 %v2556
    %2592 = vmatpush1.bf16.msra.mxu0 %v2555
    %2593 = vmatprep.subr.bf16.mxu0 %v2552
    %2594 = vmatpush1.bf16.msra.mxu0 %v2551
    %2595 = vmatprep.subr.bf16.mxu0 %v2548
    %2596 = vmatpush1.bf16.msra.mxu0 %v2547
    %2597 = vmatprep.subr.bf16.mxu0 %v2544
    %2598 = vmatpush1.bf16.msra.mxu0 %v2543
    %2599 = vmatprep.subr.bf16.mxu0 %v2540
    %2600 = vmatpush1.bf16.msra.mxu0 %v2539
    %2601 = vmatprep.subr.bf16.mxu0 %v2536
    %2602 = vmatpush1.bf16.msra.mxu0 %v2535
    %2603 = vmatprep.subr.bf16.mxu0 %v2532
    %2604 = vmatpush1.bf16.msra.mxu0 %v2531
    %2605 = vmatprep.subr.bf16.mxu0 %v2528
    %2606 = vmatpush1.bf16.msra.mxu0 %v2527
    %2607 = vmatprep.subr.bf16.mxu0 0
    %2608 = vmatpush2.bf16.msra.mxu0 0
    %2609 = vmatprep.subr.bf16.mxu0 0
    %2610 = vmatpush2.bf16.msra.mxu0 0
    %2611 = vmatprep.subr.bf16.mxu0 0
    %2612 = vmatpush2.bf16.msra.mxu0 0
    %2613 = vmatprep.subr.bf16.mxu0 0
    %2614 = vmatpush2.bf16.msra.mxu0 0
    %2615 = vmatprep.subr.bf16.mxu0 0
    %2616 = vmatpush2.bf16.msra.mxu0 0
    %2617 = vmatprep.subr.bf16.mxu0 0
    %2618 = vmatpush2.bf16.msra.mxu0 0
    %2619 = vmatprep.subr.bf16.mxu0 0
    %2620 = vmatpush2.bf16.msra.mxu0 0
    %2621 = vmatprep.subr.bf16.mxu0 0
    %2622 = vmatpush2.bf16.msra.mxu0 0
    %2623 = vmatprep.mubr.bf16.mxu0 0
    %2624 = vmatmul.mubr.bf16.gmra.mxu0 %v2398
    %v2625 = vpop.f32.mrf.mxu0
    %v2626 = vadd.f32 0.0, %v2625
    %v2627 = vpop.f32.mrf.mxu0
    %v2628 = vadd.f32 0.0, %v2627
    %v2629 = vpop.f32.mrf.mxu0
    %v2630 = vpop.f32.mrf.mxu0
    %2631 = vdwg.mxu0
    %2632 = vmatprep.subr.bf16.mxu0 %v2558
    %2633 = vmatpush1.bf16.msra.mxu0 %v2557
    %2634 = vmatprep.subr.bf16.mxu0 %v2554
    %2635 = vmatpush1.bf16.msra.mxu0 %v2553
    %2636 = vmatprep.subr.bf16.mxu0 %v2550
    %2637 = vmatpush1.bf16.msra.mxu0 %v2549
    %2638 = vmatprep.subr.bf16.mxu0 %v2546
    %2639 = vmatpush1.bf16.msra.mxu0 %v2545
    %2640 = vmatprep.subr.bf16.mxu0 %v2542
    %2641 = vmatpush1.bf16.msra.mxu0 %v2541
    %2642 = vmatprep.subr.bf16.mxu0 %v2538
    %2643 = vmatpush1.bf16.msra.mxu0 %v2537
    %2644 = vmatprep.subr.bf16.mxu0 %v2534
    %2645 = vmatpush1.bf16.msra.mxu0 %v2533
    %2646 = vmatprep.subr.bf16.mxu0 %v2530
    %2647 = vmatpush1.bf16.msra.mxu0 %v2529
    %2648 = vmatprep.subr.bf16.mxu0 0
    %2649 = vmatpush2.bf16.msra.mxu0 0
    %2650 = vmatprep.subr.bf16.mxu0 0
    %2651 = vmatpush2.bf16.msra.mxu0 0
    %2652 = vmatprep.subr.bf16.mxu0 0
    %2653 = vmatpush2.bf16.msra.mxu0 0
    %2654 = vmatprep.subr.bf16.mxu0 0
    %2655 = vmatpush2.bf16.msra.mxu0 0
    %2656 = vmatprep.subr.bf16.mxu0 0
    %2657 = vmatpush2.bf16.msra.mxu0 0
    %2658 = vmatprep.subr.bf16.mxu0 0
    %2659 = vmatpush2.bf16.msra.mxu0 0
    %2660 = vmatprep.subr.bf16.mxu0 0
    %2661 = vmatpush2.bf16.msra.mxu0 0
    %2662 = vmatprep.subr.bf16.mxu0 0
    %2663 = vmatpush2.bf16.msra.mxu0 0
    %2664 = vmatprep.mubr.bf16.mxu0 0
    %2665 = vmatmul.mubr.bf16.gmra.mxu0 %v2398
    %v2666 = vpop.f32.mrf.mxu0
    %v2667 = vadd.f32 0.0, %v2666
    %v2668 = vpop.f32.mrf.mxu0
    %v2669 = vadd.f32 0.0, %v2668
    %v2670 = vpop.f32.mrf.mxu0
    %v2671 = vpop.f32.mrf.mxu0
    %2672 = vdwg.mxu0
    %v2673 = vtanh.pop %v2626
    %v2674 = vtanh.pop %v2628
    %v2675 = vadd.f32 %v2667, %v2669
    %v2676 = vxor.u32 %v2675, 2147483648
    %v2677 = vmul.f32 %v2676, 1.442695
    %v2678 = vpow.pop %v2677
    %v2679 = vadd.f32 %v2678, 1.0
    %v2680 = vrcp.pop %v2679
    %v2681 = vmul.f32 1.0, %v2680
    %v2682 = vsub.f32 1.0, %v2681
    %v2683 = vmul.f32 %v2673, %v2682
    %v2684 = vmul.f32 %v2681, %v2674
    %v2685 = vadd.f32 %v2683, %v2684
    %v2686 = vtanh.pop %v2685
    %v2687 = vxor.u32 %v2685, 2147483648
    %v2688 = vmul.f32 %v2687, 1.442695
    %v2689 = vpow.pop %v2688
    %v2690 = vadd.f32 %v2689, 1.0
    %v2691 = vrcp.pop %v2690
    %v2692 = vmul.f32 1.0, %v2691
    %v2693 = vsel %vm49, %v2686, %v2692
    %s2694 = scalar_lea.vmem [#allocation7], 16
    %2695 = vst [vmem:[%s2694] sm:$0xff] %v2693
    %s2696 = scalar_lea.vmem [#allocation2], 24
    %v2697 = vld [vmem:[%s2696] sm:$0xff]
    %v2698 = vadd.f32 %v2697, %v2105
    %v2699 = vadd.f32 %v2698, %v48
    %v2700 = vpack.c.bf16 %v2699, %v2699
    %v2701 = vld [vmem:[#allocation5] sm:$0xff]
    %v2702 = vld [vmem:[#allocation5 + $0x8] sm:$0xff]
    %v2703 = vld [vmem:[#allocation5 + $0x10] sm:$0xff]
    %v2704 = vld [vmem:[#allocation5 + $0x18] sm:$0xff]
    %v2705 = vld [vmem:[#allocation5 + $0x20] sm:$0xff]
    %v2706 = vld [vmem:[#allocation5 + $0x28] sm:$0xff]
    %v2707 = vld [vmem:[#allocation5 + $0x30] sm:$0xff]
    %v2708 = vld [vmem:[#allocation5 + $0x38] sm:$0xff]
    %v2709 = vld [vmem:[#allocation5 + $0x40] sm:$0xff]
    %v2710 = vld [vmem:[#allocation5 + $0x48] sm:$0xff]
    %v2711 = vld [vmem:[#allocation5 + $0x50] sm:$0xff]
    %v2712 = vld [vmem:[#allocation5 + $0x58] sm:$0xff]
    %v2713 = vld [vmem:[#allocation5 + $0x60] sm:$0xff]
    %v2714 = vld [vmem:[#allocation5 + $0x68] sm:$0xff]
    %v2715 = vld [vmem:[#allocation5 + $0x70] sm:$0xff]
    %v2716 = vld [vmem:[#allocation5 + $0x78] sm:$0xff]
    %v2717 = vld [vmem:[#allocation5 + $0x80] sm:$0xff]
    %v2718 = vld [vmem:[#allocation5 + $0x88] sm:$0xff]
    %v2719 = vld [vmem:[#allocation5 + $0x90] sm:$0xff]
    %v2720 = vld [vmem:[#allocation5 + $0x98] sm:$0xff]
    %v2721 = vld [vmem:[#allocation5 + $0xa0] sm:$0xff]
    %v2722 = vld [vmem:[#allocation5 + $0xa8] sm:$0xff]
    %v2723 = vld [vmem:[#allocation5 + $0xb0] sm:$0xff]
    %v2724 = vld [vmem:[#allocation5 + $0xb8] sm:$0xff]
    %v2725 = vld [vmem:[#allocation5 + $0xc0] sm:$0xff]
    %v2726 = vld [vmem:[#allocation5 + $0xc8] sm:$0xff]
    %v2727 = vld [vmem:[#allocation5 + $0xd0] sm:$0xff]
    %v2728 = vld [vmem:[#allocation5 + $0xd8] sm:$0xff]
    %v2729 = vld [vmem:[#allocation5 + $0xe0] sm:$0xff]
    %v2730 = vld [vmem:[#allocation5 + $0xe8] sm:$0xff]
    %v2731 = vld [vmem:[#allocation5 + $0xf0] sm:$0xff]
    %v2732 = vld [vmem:[#allocation5 + $0xf8] sm:$0xff]
    %v2765 = vunpack.c.l.b16 %v2701
    %v2766 = vunpack.c.h.b16 %v2701
    %v2767 = vunpack.c.l.b16 %v2702
    %v2768 = vunpack.c.h.b16 %v2702
    %v2769 = vunpack.c.l.b16 %v2703
    %v2770 = vunpack.c.h.b16 %v2703
    %v2771 = vunpack.c.l.b16 %v2704
    %v2772 = vunpack.c.h.b16 %v2704
    %v2773 = vunpack.c.l.b16 %v2705
    %v2774 = vunpack.c.h.b16 %v2705
    %v2775 = vunpack.c.l.b16 %v2706
    %v2776 = vunpack.c.h.b16 %v2706
    %v2777 = vunpack.c.l.b16 %v2707
    %v2778 = vunpack.c.h.b16 %v2707
    %v2779 = vunpack.c.l.b16 %v2708
    %v2780 = vunpack.c.h.b16 %v2708
    %v2781 = vunpack.c.l.b16 %v2709
    %v2782 = vunpack.c.h.b16 %v2709
    %v2783 = vunpack.c.l.b16 %v2710
    %v2784 = vunpack.c.h.b16 %v2710
    %v2785 = vunpack.c.l.b16 %v2711
    %v2786 = vunpack.c.h.b16 %v2711
    %v2787 = vunpack.c.l.b16 %v2712
    %v2788 = vunpack.c.h.b16 %v2712
    %v2789 = vunpack.c.l.b16 %v2713
    %v2790 = vunpack.c.h.b16 %v2713
    %v2791 = vunpack.c.l.b16 %v2714
    %v2792 = vunpack.c.h.b16 %v2714
    %v2793 = vunpack.c.l.b16 %v2715
    %v2794 = vunpack.c.h.b16 %v2715
    %v2795 = vunpack.c.l.b16 %v2716
    %v2796 = vunpack.c.h.b16 %v2716
    %v2797 = vunpack.c.l.b16 %v2717
    %v2798 = vunpack.c.h.b16 %v2717
    %v2799 = vunpack.c.l.b16 %v2718
    %v2800 = vunpack.c.h.b16 %v2718
    %v2801 = vunpack.c.l.b16 %v2719
    %v2802 = vunpack.c.h.b16 %v2719
    %v2803 = vunpack.c.l.b16 %v2720
    %v2804 = vunpack.c.h.b16 %v2720
    %v2805 = vunpack.c.l.b16 %v2721
    %v2806 = vunpack.c.h.b16 %v2721
    %v2807 = vunpack.c.l.b16 %v2722
    %v2808 = vunpack.c.h.b16 %v2722
    %v2809 = vunpack.c.l.b16 %v2723
    %v2810 = vunpack.c.h.b16 %v2723
    %v2811 = vunpack.c.l.b16 %v2724
    %v2812 = vunpack.c.h.b16 %v2724
    %v2813 = vunpack.c.l.b16 %v2725
    %v2814 = vunpack.c.h.b16 %v2725
    %v2815 = vunpack.c.l.b16 %v2726
    %v2816 = vunpack.c.h.b16 %v2726
    %v2817 = vunpack.c.l.b16 %v2727
    %v2818 = vunpack.c.h.b16 %v2727
    %v2819 = vunpack.c.l.b16 %v2728
    %v2820 = vunpack.c.h.b16 %v2728
    %v2821 = vunpack.c.l.b16 %v2729
    %v2822 = vunpack.c.h.b16 %v2729
    %v2823 = vunpack.c.l.b16 %v2730
    %v2824 = vunpack.c.h.b16 %v2730
    %v2825 = vunpack.c.l.b16 %v2731
    %v2826 = vunpack.c.h.b16 %v2731
    %v2827 = vunpack.c.l.b16 %v2732
    %v2828 = vunpack.c.h.b16 %v2732
    %v2829 = vpack.c.b16 %v2769, %v2765
    %v2830 = vpack.c.b16 %v2770, %v2766
    %v2831 = vpack.c.b16 %v2771, %v2767
    %v2832 = vpack.c.b16 %v2772, %v2768
    %v2833 = vpack.c.b16 %v2777, %v2773
    %v2834 = vpack.c.b16 %v2778, %v2774
    %v2835 = vpack.c.b16 %v2779, %v2775
    %v2836 = vpack.c.b16 %v2780, %v2776
    %v2837 = vpack.c.b16 %v2785, %v2781
    %v2838 = vpack.c.b16 %v2786, %v2782
    %v2839 = vpack.c.b16 %v2787, %v2783
    %v2840 = vpack.c.b16 %v2788, %v2784
    %v2841 = vpack.c.b16 %v2793, %v2789
    %v2842 = vpack.c.b16 %v2794, %v2790
    %v2843 = vpack.c.b16 %v2795, %v2791
    %v2844 = vpack.c.b16 %v2796, %v2792
    %v2845 = vpack.c.b16 %v2801, %v2797
    %v2846 = vpack.c.b16 %v2802, %v2798
    %v2847 = vpack.c.b16 %v2803, %v2799
    %v2848 = vpack.c.b16 %v2804, %v2800
    %v2849 = vpack.c.b16 %v2809, %v2805
    %v2850 = vpack.c.b16 %v2810, %v2806
    %v2851 = vpack.c.b16 %v2811, %v2807
    %v2852 = vpack.c.b16 %v2812, %v2808
    %v2853 = vpack.c.b16 %v2817, %v2813
    %v2854 = vpack.c.b16 %v2818, %v2814
    %v2855 = vpack.c.b16 %v2819, %v2815
    %v2856 = vpack.c.b16 %v2820, %v2816
    %v2857 = vpack.c.b16 %v2825, %v2821
    %v2858 = vpack.c.b16 %v2826, %v2822
    %v2859 = vpack.c.b16 %v2827, %v2823
    %v2860 = vpack.c.b16 %v2828, %v2824
    %2893 = vmatprep.subr.bf16.mxu0 %v2858
    %2894 = vmatpush1.bf16.msra.mxu0 %v2857
    %2895 = vmatprep.subr.bf16.mxu0 %v2854
    %2896 = vmatpush1.bf16.msra.mxu0 %v2853
    %2897 = vmatprep.subr.bf16.mxu0 %v2850
    %2898 = vmatpush1.bf16.msra.mxu0 %v2849
    %2899 = vmatprep.subr.bf16.mxu0 %v2846
    %2900 = vmatpush1.bf16.msra.mxu0 %v2845
    %2901 = vmatprep.subr.bf16.mxu0 %v2842
    %2902 = vmatpush1.bf16.msra.mxu0 %v2841
    %2903 = vmatprep.subr.bf16.mxu0 %v2838
    %2904 = vmatpush1.bf16.msra.mxu0 %v2837
    %2905 = vmatprep.subr.bf16.mxu0 %v2834
    %2906 = vmatpush1.bf16.msra.mxu0 %v2833
    %2907 = vmatprep.subr.bf16.mxu0 %v2830
    %2908 = vmatpush1.bf16.msra.mxu0 %v2829
    %2909 = vmatprep.subr.bf16.mxu0 0
    %2910 = vmatpush2.bf16.msra.mxu0 0
    %2911 = vmatprep.subr.bf16.mxu0 0
    %2912 = vmatpush2.bf16.msra.mxu0 0
    %2913 = vmatprep.subr.bf16.mxu0 0
    %2914 = vmatpush2.bf16.msra.mxu0 0
    %2915 = vmatprep.subr.bf16.mxu0 0
    %2916 = vmatpush2.bf16.msra.mxu0 0
    %2917 = vmatprep.subr.bf16.mxu0 0
    %2918 = vmatpush2.bf16.msra.mxu0 0
    %2919 = vmatprep.subr.bf16.mxu0 0
    %2920 = vmatpush2.bf16.msra.mxu0 0
    %2921 = vmatprep.subr.bf16.mxu0 0
    %2922 = vmatpush2.bf16.msra.mxu0 0
    %2923 = vmatprep.subr.bf16.mxu0 0
    %2924 = vmatpush2.bf16.msra.mxu0 0
    %2925 = vmatprep.mubr.bf16.mxu0 0
    %2926 = vmatmul.mubr.bf16.gmra.mxu0 %v2700
    %v2927 = vpop.f32.mrf.mxu0
    %v2928 = vadd.f32 0.0, %v2927
    %v2929 = vpop.f32.mrf.mxu0
    %v2930 = vadd.f32 0.0, %v2929
    %v2931 = vpop.f32.mrf.mxu0
    %v2932 = vpop.f32.mrf.mxu0
    %2933 = vdwg.mxu0
    %2934 = vmatprep.subr.bf16.mxu0 %v2860
    %2935 = vmatpush1.bf16.msra.mxu0 %v2859
    %2936 = vmatprep.subr.bf16.mxu0 %v2856
    %2937 = vmatpush1.bf16.msra.mxu0 %v2855
    %2938 = vmatprep.subr.bf16.mxu0 %v2852
    %2939 = vmatpush1.bf16.msra.mxu0 %v2851
    %2940 = vmatprep.subr.bf16.mxu0 %v2848
    %2941 = vmatpush1.bf16.msra.mxu0 %v2847
    %2942 = vmatprep.subr.bf16.mxu0 %v2844
    %2943 = vmatpush1.bf16.msra.mxu0 %v2843
    %2944 = vmatprep.subr.bf16.mxu0 %v2840
    %2945 = vmatpush1.bf16.msra.mxu0 %v2839
    %2946 = vmatprep.subr.bf16.mxu0 %v2836
    %2947 = vmatpush1.bf16.msra.mxu0 %v2835
    %2948 = vmatprep.subr.bf16.mxu0 %v2832
    %2949 = vmatpush1.bf16.msra.mxu0 %v2831
    %2950 = vmatprep.subr.bf16.mxu0 0
    %2951 = vmatpush2.bf16.msra.mxu0 0
    %2952 = vmatprep.subr.bf16.mxu0 0
    %2953 = vmatpush2.bf16.msra.mxu0 0
    %2954 = vmatprep.subr.bf16.mxu0 0
    %2955 = vmatpush2.bf16.msra.mxu0 0
    %2956 = vmatprep.subr.bf16.mxu0 0
    %2957 = vmatpush2.bf16.msra.mxu0 0
    %2958 = vmatprep.subr.bf16.mxu0 0
    %2959 = vmatpush2.bf16.msra.mxu0 0
    %2960 = vmatprep.subr.bf16.mxu0 0
    %2961 = vmatpush2.bf16.msra.mxu0 0
    %2962 = vmatprep.subr.bf16.mxu0 0
    %2963 = vmatpush2.bf16.msra.mxu0 0
    %2964 = vmatprep.subr.bf16.mxu0 0
    %2965 = vmatpush2.bf16.msra.mxu0 0
    %2966 = vmatprep.mubr.bf16.mxu0 0
    %2967 = vmatmul.mubr.bf16.gmra.mxu0 %v2700
    %v2968 = vpop.f32.mrf.mxu0
    %v2969 = vadd.f32 0.0, %v2968
    %v2970 = vpop.f32.mrf.mxu0
    %v2971 = vadd.f32 0.0, %v2970
    %v2972 = vpop.f32.mrf.mxu0
    %v2973 = vpop.f32.mrf.mxu0
    %2974 = vdwg.mxu0
    %v2975 = vtanh.pop %v2928
    %v2976 = vtanh.pop %v2930
    %v2977 = vadd.f32 %v2969, %v2971
    %v2978 = vxor.u32 %v2977, 2147483648
    %v2979 = vmul.f32 %v2978, 1.442695
    %v2980 = vpow.pop %v2979
    %v2981 = vadd.f32 %v2980, 1.0
    %v2982 = vrcp.pop %v2981
    %v2983 = vmul.f32 1.0, %v2982
    %v2984 = vsub.f32 1.0, %v2983
    %v2985 = vmul.f32 %v2975, %v2984
    %v2986 = vmul.f32 %v2983, %v2976
    %v2987 = vadd.f32 %v2985, %v2986
    %v2988 = vadd.f32 %v2987, %v2395
    %v2989 = vadd.f32 %v2988, %v48
    %v2990 = vpack.c.bf16 %v2989, %v2989
    %v2991 = vld [vmem:[%s344] sm:$0xff]
    %v2992 = vld [vmem:[%s344 + $0x8] sm:$0xff]
    %v2993 = vld [vmem:[%s344 + $0x10] sm:$0xff]
    %v2994 = vld [vmem:[%s344 + $0x18] sm:$0xff]
    %v2995 = vld [vmem:[%s344 + $0x20] sm:$0xff]
    %v2996 = vld [vmem:[%s344 + $0x28] sm:$0xff]
    %v2997 = vld [vmem:[%s344 + $0x30] sm:$0xff]
    %v2998 = vld [vmem:[%s344 + $0x38] sm:$0xff]
    %v2999 = vld [vmem:[%s344 + $0x40] sm:$0xff]
    %v3000 = vld [vmem:[%s344 + $0x48] sm:$0xff]
    %v3001 = vld [vmem:[%s344 + $0x50] sm:$0xff]
    %v3002 = vld [vmem:[%s344 + $0x58] sm:$0xff]
    %v3003 = vld [vmem:[%s344 + $0x60] sm:$0xff]
    %v3004 = vld [vmem:[%s344 + $0x68] sm:$0xff]
    %v3005 = vld [vmem:[%s344 + $0x70] sm:$0xff]
    %v3006 = vld [vmem:[%s344 + $0x78] sm:$0xff]
    %v3007 = vld [vmem:[%s344 + $0x80] sm:$0xff]
    %v3008 = vld [vmem:[%s344 + $0x88] sm:$0xff]
    %v3009 = vld [vmem:[%s344 + $0x90] sm:$0xff]
    %v3010 = vld [vmem:[%s344 + $0x98] sm:$0xff]
    %v3011 = vld [vmem:[%s344 + $0xa0] sm:$0xff]
    %v3012 = vld [vmem:[%s344 + $0xa8] sm:$0xff]
    %v3013 = vld [vmem:[%s344 + $0xb0] sm:$0xff]
    %v3014 = vld [vmem:[%s344 + $0xb8] sm:$0xff]
    %v3015 = vld [vmem:[%s344 + $0xc0] sm:$0xff]
    %v3016 = vld [vmem:[%s344 + $0xc8] sm:$0xff]
    %v3017 = vld [vmem:[%s344 + $0xd0] sm:$0xff]
    %v3018 = vld [vmem:[%s344 + $0xd8] sm:$0xff]
    %v3019 = vld [vmem:[%s344 + $0xe0] sm:$0xff]
    %v3020 = vld [vmem:[%s344 + $0xe8] sm:$0xff]
    %v3021 = vld [vmem:[%s344 + $0xf0] sm:$0xff]
    %v3022 = vld [vmem:[%s344 + $0xf8] sm:$0xff]
    %v3055 = vunpack.c.l.b16 %v2991
    %v3056 = vunpack.c.h.b16 %v2991
    %v3057 = vunpack.c.l.b16 %v2992
    %v3058 = vunpack.c.h.b16 %v2992
    %v3059 = vunpack.c.l.b16 %v2993
    %v3060 = vunpack.c.h.b16 %v2993
    %v3061 = vunpack.c.l.b16 %v2994
    %v3062 = vunpack.c.h.b16 %v2994
    %v3063 = vunpack.c.l.b16 %v2995
    %v3064 = vunpack.c.h.b16 %v2995
    %v3065 = vunpack.c.l.b16 %v2996
    %v3066 = vunpack.c.h.b16 %v2996
    %v3067 = vunpack.c.l.b16 %v2997
    %v3068 = vunpack.c.h.b16 %v2997
    %v3069 = vunpack.c.l.b16 %v2998
    %v3070 = vunpack.c.h.b16 %v2998
    %v3071 = vunpack.c.l.b16 %v2999
    %v3072 = vunpack.c.h.b16 %v2999
    %v3073 = vunpack.c.l.b16 %v3000
    %v3074 = vunpack.c.h.b16 %v3000
    %v3075 = vunpack.c.l.b16 %v3001
    %v3076 = vunpack.c.h.b16 %v3001
    %v3077 = vunpack.c.l.b16 %v3002
    %v3078 = vunpack.c.h.b16 %v3002
    %v3079 = vunpack.c.l.b16 %v3003
    %v3080 = vunpack.c.h.b16 %v3003
    %v3081 = vunpack.c.l.b16 %v3004
    %v3082 = vunpack.c.h.b16 %v3004
    %v3083 = vunpack.c.l.b16 %v3005
    %v3084 = vunpack.c.h.b16 %v3005
    %v3085 = vunpack.c.l.b16 %v3006
    %v3086 = vunpack.c.h.b16 %v3006
    %v3087 = vunpack.c.l.b16 %v3007
    %v3088 = vunpack.c.h.b16 %v3007
    %v3089 = vunpack.c.l.b16 %v3008
    %v3090 = vunpack.c.h.b16 %v3008
    %v3091 = vunpack.c.l.b16 %v3009
    %v3092 = vunpack.c.h.b16 %v3009
    %v3093 = vunpack.c.l.b16 %v3010
    %v3094 = vunpack.c.h.b16 %v3010
    %v3095 = vunpack.c.l.b16 %v3011
    %v3096 = vunpack.c.h.b16 %v3011
    %v3097 = vunpack.c.l.b16 %v3012
    %v3098 = vunpack.c.h.b16 %v3012
    %v3099 = vunpack.c.l.b16 %v3013
    %v3100 = vunpack.c.h.b16 %v3013
    %v3101 = vunpack.c.l.b16 %v3014
    %v3102 = vunpack.c.h.b16 %v3014
    %v3103 = vunpack.c.l.b16 %v3015
    %v3104 = vunpack.c.h.b16 %v3015
    %v3105 = vunpack.c.l.b16 %v3016
    %v3106 = vunpack.c.h.b16 %v3016
    %v3107 = vunpack.c.l.b16 %v3017
    %v3108 = vunpack.c.h.b16 %v3017
    %v3109 = vunpack.c.l.b16 %v3018
    %v3110 = vunpack.c.h.b16 %v3018
    %v3111 = vunpack.c.l.b16 %v3019
    %v3112 = vunpack.c.h.b16 %v3019
    %v3113 = vunpack.c.l.b16 %v3020
    %v3114 = vunpack.c.h.b16 %v3020
    %v3115 = vunpack.c.l.b16 %v3021
    %v3116 = vunpack.c.h.b16 %v3021
    %v3117 = vunpack.c.l.b16 %v3022
    %v3118 = vunpack.c.h.b16 %v3022
    %v3119 = vpack.c.b16 %v3059, %v3055
    %v3120 = vpack.c.b16 %v3060, %v3056
    %v3121 = vpack.c.b16 %v3061, %v3057
    %v3122 = vpack.c.b16 %v3062, %v3058
    %v3123 = vpack.c.b16 %v3067, %v3063
    %v3124 = vpack.c.b16 %v3068, %v3064
    %v3125 = vpack.c.b16 %v3069, %v3065
    %v3126 = vpack.c.b16 %v3070, %v3066
    %v3127 = vpack.c.b16 %v3075, %v3071
    %v3128 = vpack.c.b16 %v3076, %v3072
    %v3129 = vpack.c.b16 %v3077, %v3073
    %v3130 = vpack.c.b16 %v3078, %v3074
    %v3131 = vpack.c.b16 %v3083, %v3079
    %v3132 = vpack.c.b16 %v3084, %v3080
    %v3133 = vpack.c.b16 %v3085, %v3081
    %v3134 = vpack.c.b16 %v3086, %v3082
    %v3135 = vpack.c.b16 %v3091, %v3087
    %v3136 = vpack.c.b16 %v3092, %v3088
    %v3137 = vpack.c.b16 %v3093, %v3089
    %v3138 = vpack.c.b16 %v3094, %v3090
    %v3139 = vpack.c.b16 %v3099, %v3095
    %v3140 = vpack.c.b16 %v3100, %v3096
    %v3141 = vpack.c.b16 %v3101, %v3097
    %v3142 = vpack.c.b16 %v3102, %v3098
    %v3143 = vpack.c.b16 %v3107, %v3103
    %v3144 = vpack.c.b16 %v3108, %v3104
    %v3145 = vpack.c.b16 %v3109, %v3105
    %v3146 = vpack.c.b16 %v3110, %v3106
    %v3147 = vpack.c.b16 %v3115, %v3111
    %v3148 = vpack.c.b16 %v3116, %v3112
    %v3149 = vpack.c.b16 %v3117, %v3113
    %v3150 = vpack.c.b16 %v3118, %v3114
    %3183 = vmatprep.subr.bf16.mxu0 %v3148
    %3184 = vmatpush1.bf16.msra.mxu0 %v3147
    %3185 = vmatprep.subr.bf16.mxu0 %v3144
    %3186 = vmatpush1.bf16.msra.mxu0 %v3143
    %3187 = vmatprep.subr.bf16.mxu0 %v3140
    %3188 = vmatpush1.bf16.msra.mxu0 %v3139
    %3189 = vmatprep.subr.bf16.mxu0 %v3136
    %3190 = vmatpush1.bf16.msra.mxu0 %v3135
    %3191 = vmatprep.subr.bf16.mxu0 %v3132
    %3192 = vmatpush1.bf16.msra.mxu0 %v3131
    %3193 = vmatprep.subr.bf16.mxu0 %v3128
    %3194 = vmatpush1.bf16.msra.mxu0 %v3127
    %3195 = vmatprep.subr.bf16.mxu0 %v3124
    %3196 = vmatpush1.bf16.msra.mxu0 %v3123
    %3197 = vmatprep.subr.bf16.mxu0 %v3120
    %3198 = vmatpush1.bf16.msra.mxu0 %v3119
    %3199 = vmatprep.subr.bf16.mxu0 0
    %3200 = vmatpush2.bf16.msra.mxu0 0
    %3201 = vmatprep.subr.bf16.mxu0 0
    %3202 = vmatpush2.bf16.msra.mxu0 0
    %3203 = vmatprep.subr.bf16.mxu0 0
    %3204 = vmatpush2.bf16.msra.mxu0 0
    %3205 = vmatprep.subr.bf16.mxu0 0
    %3206 = vmatpush2.bf16.msra.mxu0 0
    %3207 = vmatprep.subr.bf16.mxu0 0
    %3208 = vmatpush2.bf16.msra.mxu0 0
    %3209 = vmatprep.subr.bf16.mxu0 0
    %3210 = vmatpush2.bf16.msra.mxu0 0
    %3211 = vmatprep.subr.bf16.mxu0 0
    %3212 = vmatpush2.bf16.msra.mxu0 0
    %3213 = vmatprep.subr.bf16.mxu0 0
    %3214 = vmatpush2.bf16.msra.mxu0 0
    %3215 = vmatprep.mubr.bf16.mxu0 0
    %3216 = vmatmul.mubr.bf16.gmra.mxu0 %v2990
    %v3217 = vpop.f32.mrf.mxu0
    %v3218 = vadd.f32 0.0, %v3217
    %v3219 = vpop.f32.mrf.mxu0
    %v3220 = vadd.f32 0.0, %v3219
    %v3221 = vpop.f32.mrf.mxu0
    %v3222 = vpop.f32.mrf.mxu0
    %3223 = vdwg.mxu0
    %3224 = vmatprep.subr.bf16.mxu0 %v3150
    %3225 = vmatpush1.bf16.msra.mxu0 %v3149
    %3226 = vmatprep.subr.bf16.mxu0 %v3146
    %3227 = vmatpush1.bf16.msra.mxu0 %v3145
    %3228 = vmatprep.subr.bf16.mxu0 %v3142
    %3229 = vmatpush1.bf16.msra.mxu0 %v3141
    %3230 = vmatprep.subr.bf16.mxu0 %v3138
    %3231 = vmatpush1.bf16.msra.mxu0 %v3137
    %3232 = vmatprep.subr.bf16.mxu0 %v3134
    %3233 = vmatpush1.bf16.msra.mxu0 %v3133
    %3234 = vmatprep.subr.bf16.mxu0 %v3130
    %3235 = vmatpush1.bf16.msra.mxu0 %v3129
    %3236 = vmatprep.subr.bf16.mxu0 %v3126
    %3237 = vmatpush1.bf16.msra.mxu0 %v3125
    %3238 = vmatprep.subr.bf16.mxu0 %v3122
    %3239 = vmatpush1.bf16.msra.mxu0 %v3121
    %3240 = vmatprep.subr.bf16.mxu0 0
    %3241 = vmatpush2.bf16.msra.mxu0 0
    %3242 = vmatprep.subr.bf16.mxu0 0
    %3243 = vmatpush2.bf16.msra.mxu0 0
    %3244 = vmatprep.subr.bf16.mxu0 0
    %3245 = vmatpush2.bf16.msra.mxu0 0
    %3246 = vmatprep.subr.bf16.mxu0 0
    %3247 = vmatpush2.bf16.msra.mxu0 0
    %3248 = vmatprep.subr.bf16.mxu0 0
    %3249 = vmatpush2.bf16.msra.mxu0 0
    %3250 = vmatprep.subr.bf16.mxu0 0
    %3251 = vmatpush2.bf16.msra.mxu0 0
    %3252 = vmatprep.subr.bf16.mxu0 0
    %3253 = vmatpush2.bf16.msra.mxu0 0
    %3254 = vmatprep.subr.bf16.mxu0 0
    %3255 = vmatpush2.bf16.msra.mxu0 0
    %3256 = vmatprep.mubr.bf16.mxu0 0
    %3257 = vmatmul.mubr.bf16.gmra.mxu0 %v2990
    %v3258 = vpop.f32.mrf.mxu0
    %v3259 = vadd.f32 0.0, %v3258
    %v3260 = vpop.f32.mrf.mxu0
    %v3261 = vadd.f32 0.0, %v3260
    %v3262 = vpop.f32.mrf.mxu0
    %v3263 = vpop.f32.mrf.mxu0
    %3264 = vdwg.mxu0
    %v3265 = vtanh.pop %v3218
    %v3266 = vtanh.pop %v3220
    %v3267 = vadd.f32 %v3259, %v3261
    %v3268 = vxor.u32 %v3267, 2147483648
    %v3269 = vmul.f32 %v3268, 1.442695
    %v3270 = vpow.pop %v3269
    %v3271 = vadd.f32 %v3270, 1.0
    %v3272 = vrcp.pop %v3271
    %v3273 = vmul.f32 1.0, %v3272
    %v3274 = vsub.f32 1.0, %v3273
    %v3275 = vmul.f32 %v3265, %v3274
    %v3276 = vmul.f32 %v3273, %v3266
    %v3277 = vadd.f32 %v3275, %v3276
    %v3278 = vadd.f32 %v3277, %v2685
    %v3279 = vadd.f32 %v3278, %v48
    %v3280 = vpack.c.bf16 %v3279, %v3279
    %v3281 = vld [vmem:[%s635] sm:$0xff]
    %v3282 = vld [vmem:[%s635 + $0x8] sm:$0xff]
    %v3283 = vld [vmem:[%s635 + $0x10] sm:$0xff]
    %v3284 = vld [vmem:[%s635 + $0x18] sm:$0xff]
    %v3285 = vld [vmem:[%s635 + $0x20] sm:$0xff]
    %v3286 = vld [vmem:[%s635 + $0x28] sm:$0xff]
    %v3287 = vld [vmem:[%s635 + $0x30] sm:$0xff]
    %v3288 = vld [vmem:[%s635 + $0x38] sm:$0xff]
    %v3289 = vld [vmem:[%s635 + $0x40] sm:$0xff]
    %v3290 = vld [vmem:[%s635 + $0x48] sm:$0xff]
    %v3291 = vld [vmem:[%s635 + $0x50] sm:$0xff]
    %v3292 = vld [vmem:[%s635 + $0x58] sm:$0xff]
    %v3293 = vld [vmem:[%s635 + $0x60] sm:$0xff]
    %v3294 = vld [vmem:[%s635 + $0x68] sm:$0xff]
    %v3295 = vld [vmem:[%s635 + $0x70] sm:$0xff]
    %v3296 = vld [vmem:[%s635 + $0x78] sm:$0xff]
    %v3297 = vld [vmem:[%s635 + $0x80] sm:$0xff]
    %v3298 = vld [vmem:[%s635 + $0x88] sm:$0xff]
    %v3299 = vld [vmem:[%s635 + $0x90] sm:$0xff]
    %v3300 = vld [vmem:[%s635 + $0x98] sm:$0xff]
    %v3301 = vld [vmem:[%s635 + $0xa0] sm:$0xff]
    %v3302 = vld [vmem:[%s635 + $0xa8] sm:$0xff]
    %v3303 = vld [vmem:[%s635 + $0xb0] sm:$0xff]
    %v3304 = vld [vmem:[%s635 + $0xb8] sm:$0xff]
    %v3305 = vld [vmem:[%s635 + $0xc0] sm:$0xff]
    %v3306 = vld [vmem:[%s635 + $0xc8] sm:$0xff]
    %v3307 = vld [vmem:[%s635 + $0xd0] sm:$0xff]
    %v3308 = vld [vmem:[%s635 + $0xd8] sm:$0xff]
    %v3309 = vld [vmem:[%s635 + $0xe0] sm:$0xff]
    %v3310 = vld [vmem:[%s635 + $0xe8] sm:$0xff]
    %v3311 = vld [vmem:[%s635 + $0xf0] sm:$0xff]
    %v3312 = vld [vmem:[%s635 + $0xf8] sm:$0xff]
    %v3345 = vunpack.c.l.b16 %v3281
    %v3346 = vunpack.c.h.b16 %v3281
    %v3347 = vunpack.c.l.b16 %v3282
    %v3348 = vunpack.c.h.b16 %v3282
    %v3349 = vunpack.c.l.b16 %v3283
    %v3350 = vunpack.c.h.b16 %v3283
    %v3351 = vunpack.c.l.b16 %v3284
    %v3352 = vunpack.c.h.b16 %v3284
    %v3353 = vunpack.c.l.b16 %v3285
    %v3354 = vunpack.c.h.b16 %v3285
    %v3355 = vunpack.c.l.b16 %v3286
    %v3356 = vunpack.c.h.b16 %v3286
    %v3357 = vunpack.c.l.b16 %v3287
    %v3358 = vunpack.c.h.b16 %v3287
    %v3359 = vunpack.c.l.b16 %v3288
    %v3360 = vunpack.c.h.b16 %v3288
    %v3361 = vunpack.c.l.b16 %v3289
    %v3362 = vunpack.c.h.b16 %v3289
    %v3363 = vunpack.c.l.b16 %v3290
    %v3364 = vunpack.c.h.b16 %v3290
    %v3365 = vunpack.c.l.b16 %v3291
    %v3366 = vunpack.c.h.b16 %v3291
    %v3367 = vunpack.c.l.b16 %v3292
    %v3368 = vunpack.c.h.b16 %v3292
    %v3369 = vunpack.c.l.b16 %v3293
    %v3370 = vunpack.c.h.b16 %v3293
    %v3371 = vunpack.c.l.b16 %v3294
    %v3372 = vunpack.c.h.b16 %v3294
    %v3373 = vunpack.c.l.b16 %v3295
    %v3374 = vunpack.c.h.b16 %v3295
    %v3375 = vunpack.c.l.b16 %v3296
    %v3376 = vunpack.c.h.b16 %v3296
    %v3377 = vunpack.c.l.b16 %v3297
    %v3378 = vunpack.c.h.b16 %v3297
    %v3379 = vunpack.c.l.b16 %v3298
    %v3380 = vunpack.c.h.b16 %v3298
    %v3381 = vunpack.c.l.b16 %v3299
    %v3382 = vunpack.c.h.b16 %v3299
    %v3383 = vunpack.c.l.b16 %v3300
    %v3384 = vunpack.c.h.b16 %v3300
    %v3385 = vunpack.c.l.b16 %v3301
    %v3386 = vunpack.c.h.b16 %v3301
    %v3387 = vunpack.c.l.b16 %v3302
    %v3388 = vunpack.c.h.b16 %v3302
    %v3389 = vunpack.c.l.b16 %v3303
    %v3390 = vunpack.c.h.b16 %v3303
    %v3391 = vunpack.c.l.b16 %v3304
    %v3392 = vunpack.c.h.b16 %v3304
    %v3393 = vunpack.c.l.b16 %v3305
    %v3394 = vunpack.c.h.b16 %v3305
    %v3395 = vunpack.c.l.b16 %v3306
    %v3396 = vunpack.c.h.b16 %v3306
    %v3397 = vunpack.c.l.b16 %v3307
    %v3398 = vunpack.c.h.b16 %v3307
    %v3399 = vunpack.c.l.b16 %v3308
    %v3400 = vunpack.c.h.b16 %v3308
    %v3401 = vunpack.c.l.b16 %v3309
    %v3402 = vunpack.c.h.b16 %v3309
    %v3403 = vunpack.c.l.b16 %v3310
    %v3404 = vunpack.c.h.b16 %v3310
    %v3405 = vunpack.c.l.b16 %v3311
    %v3406 = vunpack.c.h.b16 %v3311
    %v3407 = vunpack.c.l.b16 %v3312
    %v3408 = vunpack.c.h.b16 %v3312
    %v3409 = vpack.c.b16 %v3349, %v3345
    %v3410 = vpack.c.b16 %v3350, %v3346
    %v3411 = vpack.c.b16 %v3351, %v3347
    %v3412 = vpack.c.b16 %v3352, %v3348
    %v3413 = vpack.c.b16 %v3357, %v3353
    %v3414 = vpack.c.b16 %v3358, %v3354
    %v3415 = vpack.c.b16 %v3359, %v3355
    %v3416 = vpack.c.b16 %v3360, %v3356
    %v3417 = vpack.c.b16 %v3365, %v3361
    %v3418 = vpack.c.b16 %v3366, %v3362
    %v3419 = vpack.c.b16 %v3367, %v3363
    %v3420 = vpack.c.b16 %v3368, %v3364
    %v3421 = vpack.c.b16 %v3373, %v3369
    %v3422 = vpack.c.b16 %v3374, %v3370
    %v3423 = vpack.c.b16 %v3375, %v3371
    %v3424 = vpack.c.b16 %v3376, %v3372
    %v3425 = vpack.c.b16 %v3381, %v3377
    %v3426 = vpack.c.b16 %v3382, %v3378
    %v3427 = vpack.c.b16 %v3383, %v3379
    %v3428 = vpack.c.b16 %v3384, %v3380
    %v3429 = vpack.c.b16 %v3389, %v3385
    %v3430 = vpack.c.b16 %v3390, %v3386
    %v3431 = vpack.c.b16 %v3391, %v3387
    %v3432 = vpack.c.b16 %v3392, %v3388
    %v3433 = vpack.c.b16 %v3397, %v3393
    %v3434 = vpack.c.b16 %v3398, %v3394
    %v3435 = vpack.c.b16 %v3399, %v3395
    %v3436 = vpack.c.b16 %v3400, %v3396
    %v3437 = vpack.c.b16 %v3405, %v3401
    %v3438 = vpack.c.b16 %v3406, %v3402
    %v3439 = vpack.c.b16 %v3407, %v3403
    %v3440 = vpack.c.b16 %v3408, %v3404
    %3473 = vmatprep.subr.bf16.mxu0 %v3438
    %3474 = vmatpush1.bf16.msra.mxu0 %v3437
    %3475 = vmatprep.subr.bf16.mxu0 %v3434
    %3476 = vmatpush1.bf16.msra.mxu0 %v3433
    %3477 = vmatprep.subr.bf16.mxu0 %v3430
    %3478 = vmatpush1.bf16.msra.mxu0 %v3429
    %3479 = vmatprep.subr.bf16.mxu0 %v3426
    %3480 = vmatpush1.bf16.msra.mxu0 %v3425
    %3481 = vmatprep.subr.bf16.mxu0 %v3422
    %3482 = vmatpush1.bf16.msra.mxu0 %v3421
    %3483 = vmatprep.subr.bf16.mxu0 %v3418
    %3484 = vmatpush1.bf16.msra.mxu0 %v3417
    %3485 = vmatprep.subr.bf16.mxu0 %v3414
    %3486 = vmatpush1.bf16.msra.mxu0 %v3413
    %3487 = vmatprep.subr.bf16.mxu0 %v3410
    %3488 = vmatpush1.bf16.msra.mxu0 %v3409
    %3489 = vmatprep.subr.bf16.mxu0 0
    %3490 = vmatpush2.bf16.msra.mxu0 0
    %3491 = vmatprep.subr.bf16.mxu0 0
    %3492 = vmatpush2.bf16.msra.mxu0 0
    %3493 = vmatprep.subr.bf16.mxu0 0
    %3494 = vmatpush2.bf16.msra.mxu0 0
    %3495 = vmatprep.subr.bf16.mxu0 0
    %3496 = vmatpush2.bf16.msra.mxu0 0
    %3497 = vmatprep.subr.bf16.mxu0 0
    %3498 = vmatpush2.bf16.msra.mxu0 0
    %3499 = vmatprep.subr.bf16.mxu0 0
    %3500 = vmatpush2.bf16.msra.mxu0 0
    %3501 = vmatprep.subr.bf16.mxu0 0
    %3502 = vmatpush2.bf16.msra.mxu0 0
    %3503 = vmatprep.subr.bf16.mxu0 0
    %3504 = vmatpush2.bf16.msra.mxu0 0
    %3505 = vmatprep.mubr.bf16.mxu0 0
    %3506 = vmatmul.mubr.bf16.gmra.mxu0 %v3280
    %v3507 = vpop.f32.mrf.mxu0
    %v3508 = vadd.f32 0.0, %v3507
    %v3509 = vpop.f32.mrf.mxu0
    %v3510 = vadd.f32 0.0, %v3509
    %v3511 = vpop.f32.mrf.mxu0
    %v3512 = vpop.f32.mrf.mxu0
    %3513 = vdwg.mxu0
    %3514 = vmatprep.subr.bf16.mxu0 %v3440
    %3515 = vmatpush1.bf16.msra.mxu0 %v3439
    %3516 = vmatprep.subr.bf16.mxu0 %v3436
    %3517 = vmatpush1.bf16.msra.mxu0 %v3435
    %3518 = vmatprep.subr.bf16.mxu0 %v3432
    %3519 = vmatpush1.bf16.msra.mxu0 %v3431
    %3520 = vmatprep.subr.bf16.mxu0 %v3428
    %3521 = vmatpush1.bf16.msra.mxu0 %v3427
    %3522 = vmatprep.subr.bf16.mxu0 %v3424
    %3523 = vmatpush1.bf16.msra.mxu0 %v3423
    %3524 = vmatprep.subr.bf16.mxu0 %v3420
    %3525 = vmatpush1.bf16.msra.mxu0 %v3419
    %3526 = vmatprep.subr.bf16.mxu0 %v3416
    %3527 = vmatpush1.bf16.msra.mxu0 %v3415
    %3528 = vmatprep.subr.bf16.mxu0 %v3412
    %3529 = vmatpush1.bf16.msra.mxu0 %v3411
    %3530 = vmatprep.subr.bf16.mxu0 0
    %3531 = vmatpush2.bf16.msra.mxu0 0
    %3532 = vmatprep.subr.bf16.mxu0 0
    %3533 = vmatpush2.bf16.msra.mxu0 0
    %3534 = vmatprep.subr.bf16.mxu0 0
    %3535 = vmatpush2.bf16.msra.mxu0 0
    %3536 = vmatprep.subr.bf16.mxu0 0
    %3537 = vmatpush2.bf16.msra.mxu0 0
    %3538 = vmatprep.subr.bf16.mxu0 0
    %3539 = vmatpush2.bf16.msra.mxu0 0
    %3540 = vmatprep.subr.bf16.mxu0 0
    %3541 = vmatpush2.bf16.msra.mxu0 0
    %3542 = vmatprep.subr.bf16.mxu0 0
    %3543 = vmatpush2.bf16.msra.mxu0 0
    %3544 = vmatprep.subr.bf16.mxu0 0
    %3545 = vmatpush2.bf16.msra.mxu0 0
    %3546 = vmatprep.mubr.bf16.mxu0 0
    %3547 = vmatmul.mubr.bf16.gmra.mxu0 %v3280
    %v3548 = vpop.f32.mrf.mxu0
    %v3549 = vadd.f32 0.0, %v3548
    %v3550 = vpop.f32.mrf.mxu0
    %v3551 = vadd.f32 0.0, %v3550
    %v3552 = vpop.f32.mrf.mxu0
    %v3553 = vpop.f32.mrf.mxu0
    %3554 = vdwg.mxu0
    %v3555 = vtanh.pop %v3508
    %v3556 = vtanh.pop %v3510
    %v3557 = vadd.f32 %v3549, %v3551
    %v3558 = vxor.u32 %v3557, 2147483648
    %v3559 = vmul.f32 %v3558, 1.442695
    %v3560 = vpow.pop %v3559
    %v3561 = vadd.f32 %v3560, 1.0
    %v3562 = vrcp.pop %v3561
    %v3563 = vmul.f32 1.0, %v3562
    %v3564 = vsub.f32 1.0, %v3563
    %v3565 = vmul.f32 %v3555, %v3564
    %v3566 = vmul.f32 %v3563, %v3556
    %v3567 = vadd.f32 %v3565, %v3566
    %v3568 = vtanh.pop %v3567
    %v3569 = vxor.u32 %v3567, 2147483648
    %v3570 = vmul.f32 %v3569, 1.442695
    %v3571 = vpow.pop %v3570
    %v3572 = vadd.f32 %v3571, 1.0
    %v3573 = vrcp.pop %v3572
    %v3574 = vmul.f32 1.0, %v3573
    %v3575 = vsel %vm49, %v3568, %v3574
    %s3576 = scalar_lea.vmem [#allocation7], 24
    %3577 = vst [vmem:[%s3576] sm:$0xff] %v3575
    %s3578 = scalar_lea.vmem [#allocation2], 32
    %v3579 = vld [vmem:[%s3578] sm:$0xff]
    %v3580 = vadd.f32 %v3579, %v2987
    %v3581 = vadd.f32 %v3580, %v48
    %v3582 = vpack.c.bf16 %v3581, %v3581
    %v3583 = vld [vmem:[#allocation5] sm:$0xff]
    %v3584 = vld [vmem:[#allocation5 + $0x8] sm:$0xff]
    %v3585 = vld [vmem:[#allocation5 + $0x10] sm:$0xff]
    %v3586 = vld [vmem:[#allocation5 + $0x18] sm:$0xff]
    %v3587 = vld [vmem:[#allocation5 + $0x20] sm:$0xff]
    %v3588 = vld [vmem:[#allocation5 + $0x28] sm:$0xff]
    %v3589 = vld [vmem:[#allocation5 + $0x30] sm:$0xff]
    %v3590 = vld [vmem:[#allocation5 + $0x38] sm:$0xff]
    %v3591 = vld [vmem:[#allocation5 + $0x40] sm:$0xff]
    %v3592 = vld [vmem:[#allocation5 + $0x48] sm:$0xff]
    %v3593 = vld [vmem:[#allocation5 + $0x50] sm:$0xff]
    %v3594 = vld [vmem:[#allocation5 + $0x58] sm:$0xff]
    %v3595 = vld [vmem:[#allocation5 + $0x60] sm:$0xff]
    %v3596 = vld [vmem:[#allocation5 + $0x68] sm:$0xff]
    %v3597 = vld [vmem:[#allocation5 + $0x70] sm:$0xff]
    %v3598 = vld [vmem:[#allocation5 + $0x78] sm:$0xff]
    %v3599 = vld [vmem:[#allocation5 + $0x80] sm:$0xff]
    %v3600 = vld [vmem:[#allocation5 + $0x88] sm:$0xff]
    %v3601 = vld [vmem:[#allocation5 + $0x90] sm:$0xff]
    %v3602 = vld [vmem:[#allocation5 + $0x98] sm:$0xff]
    %v3603 = vld [vmem:[#allocation5 + $0xa0] sm:$0xff]
    %v3604 = vld [vmem:[#allocation5 + $0xa8] sm:$0xff]
    %v3605 = vld [vmem:[#allocation5 + $0xb0] sm:$0xff]
    %v3606 = vld [vmem:[#allocation5 + $0xb8] sm:$0xff]
    %v3607 = vld [vmem:[#allocation5 + $0xc0] sm:$0xff]
    %v3608 = vld [vmem:[#allocation5 + $0xc8] sm:$0xff]
    %v3609 = vld [vmem:[#allocation5 + $0xd0] sm:$0xff]
    %v3610 = vld [vmem:[#allocation5 + $0xd8] sm:$0xff]
    %v3611 = vld [vmem:[#allocation5 + $0xe0] sm:$0xff]
    %v3612 = vld [vmem:[#allocation5 + $0xe8] sm:$0xff]
    %v3613 = vld [vmem:[#allocation5 + $0xf0] sm:$0xff]
    %v3614 = vld [vmem:[#allocation5 + $0xf8] sm:$0xff]
    %v3647 = vunpack.c.l.b16 %v3583
    %v3648 = vunpack.c.h.b16 %v3583
    %v3649 = vunpack.c.l.b16 %v3584
    %v3650 = vunpack.c.h.b16 %v3584
    %v3651 = vunpack.c.l.b16 %v3585
    %v3652 = vunpack.c.h.b16 %v3585
    %v3653 = vunpack.c.l.b16 %v3586
    %v3654 = vunpack.c.h.b16 %v3586
    %v3655 = vunpack.c.l.b16 %v3587
    %v3656 = vunpack.c.h.b16 %v3587
    %v3657 = vunpack.c.l.b16 %v3588
    %v3658 = vunpack.c.h.b16 %v3588
    %v3659 = vunpack.c.l.b16 %v3589
    %v3660 = vunpack.c.h.b16 %v3589
    %v3661 = vunpack.c.l.b16 %v3590
    %v3662 = vunpack.c.h.b16 %v3590
    %v3663 = vunpack.c.l.b16 %v3591
    %v3664 = vunpack.c.h.b16 %v3591
    %v3665 = vunpack.c.l.b16 %v3592
    %v3666 = vunpack.c.h.b16 %v3592
    %v3667 = vunpack.c.l.b16 %v3593
    %v3668 = vunpack.c.h.b16 %v3593
    %v3669 = vunpack.c.l.b16 %v3594
    %v3670 = vunpack.c.h.b16 %v3594
    %v3671 = vunpack.c.l.b16 %v3595
    %v3672 = vunpack.c.h.b16 %v3595
    %v3673 = vunpack.c.l.b16 %v3596
    %v3674 = vunpack.c.h.b16 %v3596
    %v3675 = vunpack.c.l.b16 %v3597
    %v3676 = vunpack.c.h.b16 %v3597
    %v3677 = vunpack.c.l.b16 %v3598
    %v3678 = vunpack.c.h.b16 %v3598
    %v3679 = vunpack.c.l.b16 %v3599
    %v3680 = vunpack.c.h.b16 %v3599
    %v3681 = vunpack.c.l.b16 %v3600
    %v3682 = vunpack.c.h.b16 %v3600
    %v3683 = vunpack.c.l.b16 %v3601
    %v3684 = vunpack.c.h.b16 %v3601
    %v3685 = vunpack.c.l.b16 %v3602
    %v3686 = vunpack.c.h.b16 %v3602
    %v3687 = vunpack.c.l.b16 %v3603
    %v3688 = vunpack.c.h.b16 %v3603
    %v3689 = vunpack.c.l.b16 %v3604
    %v3690 = vunpack.c.h.b16 %v3604
    %v3691 = vunpack.c.l.b16 %v3605
    %v3692 = vunpack.c.h.b16 %v3605
    %v3693 = vunpack.c.l.b16 %v3606
    %v3694 = vunpack.c.h.b16 %v3606
    %v3695 = vunpack.c.l.b16 %v3607
    %v3696 = vunpack.c.h.b16 %v3607
    %v3697 = vunpack.c.l.b16 %v3608
    %v3698 = vunpack.c.h.b16 %v3608
    %v3699 = vunpack.c.l.b16 %v3609
    %v3700 = vunpack.c.h.b16 %v3609
    %v3701 = vunpack.c.l.b16 %v3610
    %v3702 = vunpack.c.h.b16 %v3610
    %v3703 = vunpack.c.l.b16 %v3611
    %v3704 = vunpack.c.h.b16 %v3611
    %v3705 = vunpack.c.l.b16 %v3612
    %v3706 = vunpack.c.h.b16 %v3612
    %v3707 = vunpack.c.l.b16 %v3613
    %v3708 = vunpack.c.h.b16 %v3613
    %v3709 = vunpack.c.l.b16 %v3614
    %v3710 = vunpack.c.h.b16 %v3614
    %v3711 = vpack.c.b16 %v3651, %v3647
    %v3712 = vpack.c.b16 %v3652, %v3648
    %v3713 = vpack.c.b16 %v3653, %v3649
    %v3714 = vpack.c.b16 %v3654, %v3650
    %v3715 = vpack.c.b16 %v3659, %v3655
    %v3716 = vpack.c.b16 %v3660, %v3656
    %v3717 = vpack.c.b16 %v3661, %v3657
    %v3718 = vpack.c.b16 %v3662, %v3658
    %v3719 = vpack.c.b16 %v3667, %v3663
    %v3720 = vpack.c.b16 %v3668, %v3664
    %v3721 = vpack.c.b16 %v3669, %v3665
    %v3722 = vpack.c.b16 %v3670, %v3666
    %v3723 = vpack.c.b16 %v3675, %v3671
    %v3724 = vpack.c.b16 %v3676, %v3672
    %v3725 = vpack.c.b16 %v3677, %v3673
    %v3726 = vpack.c.b16 %v3678, %v3674
    %v3727 = vpack.c.b16 %v3683, %v3679
    %v3728 = vpack.c.b16 %v3684, %v3680
    %v3729 = vpack.c.b16 %v3685, %v3681
    %v3730 = vpack.c.b16 %v3686, %v3682
    %v3731 = vpack.c.b16 %v3691, %v3687
    %v3732 = vpack.c.b16 %v3692, %v3688
    %v3733 = vpack.c.b16 %v3693, %v3689
    %v3734 = vpack.c.b16 %v3694, %v3690
    %v3735 = vpack.c.b16 %v3699, %v3695
    %v3736 = vpack.c.b16 %v3700, %v3696
    %v3737 = vpack.c.b16 %v3701, %v3697
    %v3738 = vpack.c.b16 %v3702, %v3698
    %v3739 = vpack.c.b16 %v3707, %v3703
    %v3740 = vpack.c.b16 %v3708, %v3704
    %v3741 = vpack.c.b16 %v3709, %v3705
    %v3742 = vpack.c.b16 %v3710, %v3706
    %3775 = vmatprep.subr.bf16.mxu0 %v3740
    %3776 = vmatpush1.bf16.msra.mxu0 %v3739
    %3777 = vmatprep.subr.bf16.mxu0 %v3736
    %3778 = vmatpush1.bf16.msra.mxu0 %v3735
    %3779 = vmatprep.subr.bf16.mxu0 %v3732
    %3780 = vmatpush1.bf16.msra.mxu0 %v3731
    %3781 = vmatprep.subr.bf16.mxu0 %v3728
    %3782 = vmatpush1.bf16.msra.mxu0 %v3727
    %3783 = vmatprep.subr.bf16.mxu0 %v3724
    %3784 = vmatpush1.bf16.msra.mxu0 %v3723
    %3785 = vmatprep.subr.bf16.mxu0 %v3720
    %3786 = vmatpush1.bf16.msra.mxu0 %v3719
    %3787 = vmatprep.subr.bf16.mxu0 %v3716
    %3788 = vmatpush1.bf16.msra.mxu0 %v3715
    %3789 = vmatprep.subr.bf16.mxu0 %v3712
    %3790 = vmatpush1.bf16.msra.mxu0 %v3711
    %3791 = vmatprep.subr.bf16.mxu0 0
    %3792 = vmatpush2.bf16.msra.mxu0 0
    %3793 = vmatprep.subr.bf16.mxu0 0
    %3794 = vmatpush2.bf16.msra.mxu0 0
    %3795 = vmatprep.subr.bf16.mxu0 0
    %3796 = vmatpush2.bf16.msra.mxu0 0
    %3797 = vmatprep.subr.bf16.mxu0 0
    %3798 = vmatpush2.bf16.msra.mxu0 0
    %3799 = vmatprep.subr.bf16.mxu0 0
    %3800 = vmatpush2.bf16.msra.mxu0 0
    %3801 = vmatprep.subr.bf16.mxu0 0
    %3802 = vmatpush2.bf16.msra.mxu0 0
    %3803 = vmatprep.subr.bf16.mxu0 0
    %3804 = vmatpush2.bf16.msra.mxu0 0
    %3805 = vmatprep.subr.bf16.mxu0 0
    %3806 = vmatpush2.bf16.msra.mxu0 0
    %3807 = vmatprep.mubr.bf16.mxu0 0
    %3808 = vmatmul.mubr.bf16.gmra.mxu0 %v3582
    %v3809 = vpop.f32.mrf.mxu0
    %v3810 = vadd.f32 0.0, %v3809
    %v3811 = vpop.f32.mrf.mxu0
    %v3812 = vadd.f32 0.0, %v3811
    %v3813 = vpop.f32.mrf.mxu0
    %v3814 = vpop.f32.mrf.mxu0
    %3815 = vdwg.mxu0
    %3816 = vmatprep.subr.bf16.mxu0 %v3742
    %3817 = vmatpush1.bf16.msra.mxu0 %v3741
    %3818 = vmatprep.subr.bf16.mxu0 %v3738
    %3819 = vmatpush1.bf16.msra.mxu0 %v3737
    %3820 = vmatprep.subr.bf16.mxu0 %v3734
    %3821 = vmatpush1.bf16.msra.mxu0 %v3733
    %3822 = vmatprep.subr.bf16.mxu0 %v3730
    %3823 = vmatpush1.bf16.msra.mxu0 %v3729
    %3824 = vmatprep.subr.bf16.mxu0 %v3726
    %3825 = vmatpush1.bf16.msra.mxu0 %v3725
    %3826 = vmatprep.subr.bf16.mxu0 %v3722
    %3827 = vmatpush1.bf16.msra.mxu0 %v3721
    %3828 = vmatprep.subr.bf16.mxu0 %v3718
    %3829 = vmatpush1.bf16.msra.mxu0 %v3717
    %3830 = vmatprep.subr.bf16.mxu0 %v3714
    %3831 = vmatpush1.bf16.msra.mxu0 %v3713
    %3832 = vmatprep.subr.bf16.mxu0 0
    %3833 = vmatpush2.bf16.msra.mxu0 0
    %3834 = vmatprep.subr.bf16.mxu0 0
    %3835 = vmatpush2.bf16.msra.mxu0 0
    %3836 = vmatprep.subr.bf16.mxu0 0
    %3837 = vmatpush2.bf16.msra.mxu0 0
    %3838 = vmatprep.subr.bf16.mxu0 0
    %3839 = vmatpush2.bf16.msra.mxu0 0
    %3840 = vmatprep.subr.bf16.mxu0 0
    %3841 = vmatpush2.bf16.msra.mxu0 0
    %3842 = vmatprep.subr.bf16.mxu0 0
    %3843 = vmatpush2.bf16.msra.mxu0 0
    %3844 = vmatprep.subr.bf16.mxu0 0
    %3845 = vmatpush2.bf16.msra.mxu0 0
    %3846 = vmatprep.subr.bf16.mxu0 0
    %3847 = vmatpush2.bf16.msra.mxu0 0
    %3848 = vmatprep.mubr.bf16.mxu0 0
    %3849 = vmatmul.mubr.bf16.gmra.mxu0 %v3582
    %v3850 = vpop.f32.mrf.mxu0
    %v3851 = vadd.f32 0.0, %v3850
    %v3852 = vpop.f32.mrf.mxu0
    %v3853 = vadd.f32 0.0, %v3852
    %v3854 = vpop.f32.mrf.mxu0
    %v3855 = vpop.f32.mrf.mxu0
    %3856 = vdwg.mxu0
    %v3857 = vtanh.pop %v3810
    %v3858 = vtanh.pop %v3812
    %v3859 = vadd.f32 %v3851, %v3853
    %v3860 = vxor.u32 %v3859, 2147483648
    %v3861 = vmul.f32 %v3860, 1.442695
    %v3862 = vpow.pop %v3861
    %v3863 = vadd.f32 %v3862, 1.0
    %v3864 = vrcp.pop %v3863
    %v3865 = vmul.f32 1.0, %v3864
    %v3866 = vsub.f32 1.0, %v3865
    %v3867 = vmul.f32 %v3857, %v3866
    %v3868 = vmul.f32 %v3865, %v3858
    %v3869 = vadd.f32 %v3867, %v3868
    %v3870 = vadd.f32 %v3869, %v3277
    %v3871 = vadd.f32 %v3870, %v48
    %v3872 = vpack.c.bf16 %v3871, %v3871
    %v3873 = vld [vmem:[%s344] sm:$0xff]
    %v3874 = vld [vmem:[%s344 + $0x8] sm:$0xff]
    %v3875 = vld [vmem:[%s344 + $0x10] sm:$0xff]
    %v3876 = vld [vmem:[%s344 + $0x18] sm:$0xff]
    %v3877 = vld [vmem:[%s344 + $0x20] sm:$0xff]
    %v3878 = vld [vmem:[%s344 + $0x28] sm:$0xff]
    %v3879 = vld [vmem:[%s344 + $0x30] sm:$0xff]
    %v3880 = vld [vmem:[%s344 + $0x38] sm:$0xff]
    %v3881 = vld [vmem:[%s344 + $0x40] sm:$0xff]
    %v3882 = vld [vmem:[%s344 + $0x48] sm:$0xff]
    %v3883 = vld [vmem:[%s344 + $0x50] sm:$0xff]
    %v3884 = vld [vmem:[%s344 + $0x58] sm:$0xff]
    %v3885 = vld [vmem:[%s344 + $0x60] sm:$0xff]
    %v3886 = vld [vmem:[%s344 + $0x68] sm:$0xff]
    %v3887 = vld [vmem:[%s344 + $0x70] sm:$0xff]
    %v3888 = vld [vmem:[%s344 + $0x78] sm:$0xff]
    %v3889 = vld [vmem:[%s344 + $0x80] sm:$0xff]
    %v3890 = vld [vmem:[%s344 + $0x88] sm:$0xff]
    %v3891 = vld [vmem:[%s344 + $0x90] sm:$0xff]
    %v3892 = vld [vmem:[%s344 + $0x98] sm:$0xff]
    %v3893 = vld [vmem:[%s344 + $0xa0] sm:$0xff]
    %v3894 = vld [vmem:[%s344 + $0xa8] sm:$0xff]
    %v3895 = vld [vmem:[%s344 + $0xb0] sm:$0xff]
    %v3896 = vld [vmem:[%s344 + $0xb8] sm:$0xff]
    %v3897 = vld [vmem:[%s344 + $0xc0] sm:$0xff]
    %v3898 = vld [vmem:[%s344 + $0xc8] sm:$0xff]
    %v3899 = vld [vmem:[%s344 + $0xd0] sm:$0xff]
    %v3900 = vld [vmem:[%s344 + $0xd8] sm:$0xff]
    %v3901 = vld [vmem:[%s344 + $0xe0] sm:$0xff]
    %v3902 = vld [vmem:[%s344 + $0xe8] sm:$0xff]
    %v3903 = vld [vmem:[%s344 + $0xf0] sm:$0xff]
    %v3904 = vld [vmem:[%s344 + $0xf8] sm:$0xff]
    %v3937 = vunpack.c.l.b16 %v3873
    %v3938 = vunpack.c.h.b16 %v3873
    %v3939 = vunpack.c.l.b16 %v3874
    %v3940 = vunpack.c.h.b16 %v3874
    %v3941 = vunpack.c.l.b16 %v3875
    %v3942 = vunpack.c.h.b16 %v3875
    %v3943 = vunpack.c.l.b16 %v3876
    %v3944 = vunpack.c.h.b16 %v3876
    %v3945 = vunpack.c.l.b16 %v3877
    %v3946 = vunpack.c.h.b16 %v3877
    %v3947 = vunpack.c.l.b16 %v3878
    %v3948 = vunpack.c.h.b16 %v3878
    %v3949 = vunpack.c.l.b16 %v3879
    %v3950 = vunpack.c.h.b16 %v3879
    %v3951 = vunpack.c.l.b16 %v3880
    %v3952 = vunpack.c.h.b16 %v3880
    %v3953 = vunpack.c.l.b16 %v3881
    %v3954 = vunpack.c.h.b16 %v3881
    %v3955 = vunpack.c.l.b16 %v3882
    %v3956 = vunpack.c.h.b16 %v3882
    %v3957 = vunpack.c.l.b16 %v3883
    %v3958 = vunpack.c.h.b16 %v3883
    %v3959 = vunpack.c.l.b16 %v3884
    %v3960 = vunpack.c.h.b16 %v3884
    %v3961 = vunpack.c.l.b16 %v3885
    %v3962 = vunpack.c.h.b16 %v3885
    %v3963 = vunpack.c.l.b16 %v3886
    %v3964 = vunpack.c.h.b16 %v3886
    %v3965 = vunpack.c.l.b16 %v3887
    %v3966 = vunpack.c.h.b16 %v3887
    %v3967 = vunpack.c.l.b16 %v3888
    %v3968 = vunpack.c.h.b16 %v3888
    %v3969 = vunpack.c.l.b16 %v3889
    %v3970 = vunpack.c.h.b16 %v3889
    %v3971 = vunpack.c.l.b16 %v3890
    %v3972 = vunpack.c.h.b16 %v3890
    %v3973 = vunpack.c.l.b16 %v3891
    %v3974 = vunpack.c.h.b16 %v3891
    %v3975 = vunpack.c.l.b16 %v3892
    %v3976 = vunpack.c.h.b16 %v3892
    %v3977 = vunpack.c.l.b16 %v3893
    %v3978 = vunpack.c.h.b16 %v3893
    %v3979 = vunpack.c.l.b16 %v3894
    %v3980 = vunpack.c.h.b16 %v3894
    %v3981 = vunpack.c.l.b16 %v3895
    %v3982 = vunpack.c.h.b16 %v3895
    %v3983 = vunpack.c.l.b16 %v3896
    %v3984 = vunpack.c.h.b16 %v3896
    %v3985 = vunpack.c.l.b16 %v3897
    %v3986 = vunpack.c.h.b16 %v3897
    %v3987 = vunpack.c.l.b16 %v3898
    %v3988 = vunpack.c.h.b16 %v3898
    %v3989 = vunpack.c.l.b16 %v3899
    %v3990 = vunpack.c.h.b16 %v3899
    %v3991 = vunpack.c.l.b16 %v3900
    %v3992 = vunpack.c.h.b16 %v3900
    %v3993 = vunpack.c.l.b16 %v3901
    %v3994 = vunpack.c.h.b16 %v3901
    %v3995 = vunpack.c.l.b16 %v3902
    %v3996 = vunpack.c.h.b16 %v3902
    %v3997 = vunpack.c.l.b16 %v3903
    %v3998 = vunpack.c.h.b16 %v3903
    %v3999 = vunpack.c.l.b16 %v3904
    %v4000 = vunpack.c.h.b16 %v3904
    %v4001 = vpack.c.b16 %v3941, %v3937
    %v4002 = vpack.c.b16 %v3942, %v3938
    %v4003 = vpack.c.b16 %v3943, %v3939
    %v4004 = vpack.c.b16 %v3944, %v3940
    %v4005 = vpack.c.b16 %v3949, %v3945
    %v4006 = vpack.c.b16 %v3950, %v3946
    %v4007 = vpack.c.b16 %v3951, %v3947
    %v4008 = vpack.c.b16 %v3952, %v3948
    %v4009 = vpack.c.b16 %v3957, %v3953
    %v4010 = vpack.c.b16 %v3958, %v3954
    %v4011 = vpack.c.b16 %v3959, %v3955
    %v4012 = vpack.c.b16 %v3960, %v3956
    %v4013 = vpack.c.b16 %v3965, %v3961
    %v4014 = vpack.c.b16 %v3966, %v3962
    %v4015 = vpack.c.b16 %v3967, %v3963
    %v4016 = vpack.c.b16 %v3968, %v3964
    %v4017 = vpack.c.b16 %v3973, %v3969
    %v4018 = vpack.c.b16 %v3974, %v3970
    %v4019 = vpack.c.b16 %v3975, %v3971
    %v4020 = vpack.c.b16 %v3976, %v3972
    %v4021 = vpack.c.b16 %v3981, %v3977
    %v4022 = vpack.c.b16 %v3982, %v3978
    %v4023 = vpack.c.b16 %v3983, %v3979
    %v4024 = vpack.c.b16 %v3984, %v3980
    %v4025 = vpack.c.b16 %v3989, %v3985
    %v4026 = vpack.c.b16 %v3990, %v3986
    %v4027 = vpack.c.b16 %v3991, %v3987
    %v4028 = vpack.c.b16 %v3992, %v3988
    %v4029 = vpack.c.b16 %v3997, %v3993
    %v4030 = vpack.c.b16 %v3998, %v3994
    %v4031 = vpack.c.b16 %v3999, %v3995
    %v4032 = vpack.c.b16 %v4000, %v3996
    %4065 = vmatprep.subr.bf16.mxu0 %v4030
    %4066 = vmatpush1.bf16.msra.mxu0 %v4029
    %4067 = vmatprep.subr.bf16.mxu0 %v4026
    %4068 = vmatpush1.bf16.msra.mxu0 %v4025
    %4069 = vmatprep.subr.bf16.mxu0 %v4022
    %4070 = vmatpush1.bf16.msra.mxu0 %v4021
    %4071 = vmatprep.subr.bf16.mxu0 %v4018
    %4072 = vmatpush1.bf16.msra.mxu0 %v4017
    %4073 = vmatprep.subr.bf16.mxu0 %v4014
    %4074 = vmatpush1.bf16.msra.mxu0 %v4013
    %4075 = vmatprep.subr.bf16.mxu0 %v4010
    %4076 = vmatpush1.bf16.msra.mxu0 %v4009
    %4077 = vmatprep.subr.bf16.mxu0 %v4006
    %4078 = vmatpush1.bf16.msra.mxu0 %v4005
    %4079 = vmatprep.subr.bf16.mxu0 %v4002
    %4080 = vmatpush1.bf16.msra.mxu0 %v4001
    %4081 = vmatprep.subr.bf16.mxu0 0
    %4082 = vmatpush2.bf16.msra.mxu0 0
    %4083 = vmatprep.subr.bf16.mxu0 0
    %4084 = vmatpush2.bf16.msra.mxu0 0
    %4085 = vmatprep.subr.bf16.mxu0 0
    %4086 = vmatpush2.bf16.msra.mxu0 0
    %4087 = vmatprep.subr.bf16.mxu0 0
    %4088 = vmatpush2.bf16.msra.mxu0 0
    %4089 = vmatprep.subr.bf16.mxu0 0
    %4090 = vmatpush2.bf16.msra.mxu0 0
    %4091 = vmatprep.subr.bf16.mxu0 0
    %4092 = vmatpush2.bf16.msra.mxu0 0
    %4093 = vmatprep.subr.bf16.mxu0 0
    %4094 = vmatpush2.bf16.msra.mxu0 0
    %4095 = vmatprep.subr.bf16.mxu0 0
    %4096 = vmatpush2.bf16.msra.mxu0 0
    %4097 = vmatprep.mubr.bf16.mxu0 0
    %4098 = vmatmul.mubr.bf16.gmra.mxu0 %v3872
    %v4099 = vpop.f32.mrf.mxu0
    %v4100 = vadd.f32 0.0, %v4099
    %v4101 = vpop.f32.mrf.mxu0
    %v4102 = vadd.f32 0.0, %v4101
    %v4103 = vpop.f32.mrf.mxu0
    %v4104 = vpop.f32.mrf.mxu0
    %4105 = vdwg.mxu0
    %4106 = vmatprep.subr.bf16.mxu0 %v4032
    %4107 = vmatpush1.bf16.msra.mxu0 %v4031
    %4108 = vmatprep.subr.bf16.mxu0 %v4028
    %4109 = vmatpush1.bf16.msra.mxu0 %v4027
    %4110 = vmatprep.subr.bf16.mxu0 %v4024
    %4111 = vmatpush1.bf16.msra.mxu0 %v4023
    %4112 = vmatprep.subr.bf16.mxu0 %v4020
    %4113 = vmatpush1.bf16.msra.mxu0 %v4019
    %4114 = vmatprep.subr.bf16.mxu0 %v4016
    %4115 = vmatpush1.bf16.msra.mxu0 %v4015
    %4116 = vmatprep.subr.bf16.mxu0 %v4012
    %4117 = vmatpush1.bf16.msra.mxu0 %v4011
    %4118 = vmatprep.subr.bf16.mxu0 %v4008
    %4119 = vmatpush1.bf16.msra.mxu0 %v4007
    %4120 = vmatprep.subr.bf16.mxu0 %v4004
    %4121 = vmatpush1.bf16.msra.mxu0 %v4003
    %4122 = vmatprep.subr.bf16.mxu0 0
    %4123 = vmatpush2.bf16.msra.mxu0 0
    %4124 = vmatprep.subr.bf16.mxu0 0
    %4125 = vmatpush2.bf16.msra.mxu0 0
    %4126 = vmatprep.subr.bf16.mxu0 0
    %4127 = vmatpush2.bf16.msra.mxu0 0
    %4128 = vmatprep.subr.bf16.mxu0 0
    %4129 = vmatpush2.bf16.msra.mxu0 0
    %4130 = vmatprep.subr.bf16.mxu0 0
    %4131 = vmatpush2.bf16.msra.mxu0 0
    %4132 = vmatprep.subr.bf16.mxu0 0
    %4133 = vmatpush2.bf16.msra.mxu0 0
    %4134 = vmatprep.subr.bf16.mxu0 0
    %4135 = vmatpush2.bf16.msra.mxu0 0
    %4136 = vmatprep.subr.bf16.mxu0 0
    %4137 = vmatpush2.bf16.msra.mxu0 0
    %4138 = vmatprep.mubr.bf16.mxu0 0
    %4139 = vmatmul.mubr.bf16.gmra.mxu0 %v3872
    %v4140 = vpop.f32.mrf.mxu0
    %v4141 = vadd.f32 0.0, %v4140
    %v4142 = vpop.f32.mrf.mxu0
    %v4143 = vadd.f32 0.0, %v4142
    %v4144 = vpop.f32.mrf.mxu0
    %v4145 = vpop.f32.mrf.mxu0
    %4146 = vdwg.mxu0
    %v4147 = vtanh.pop %v4100
    %v4148 = vtanh.pop %v4102
    %v4149 = vadd.f32 %v4141, %v4143
    %v4150 = vxor.u32 %v4149, 2147483648
    %v4151 = vmul.f32 %v4150, 1.442695
    %v4152 = vpow.pop %v4151
    %v4153 = vadd.f32 %v4152, 1.0
    %v4154 = vrcp.pop %v4153
    %v4155 = vmul.f32 1.0, %v4154
    %v4156 = vsub.f32 1.0, %v4155
    %v4157 = vmul.f32 %v4147, %v4156
    %v4158 = vmul.f32 %v4155, %v4148
    %v4159 = vadd.f32 %v4157, %v4158
    %v4160 = vadd.f32 %v4159, %v3567
    %v4161 = vadd.f32 %v4160, %v48
    %v4162 = vpack.c.bf16 %v4161, %v4161
    %v4163 = vld [vmem:[%s635] sm:$0xff]
    %v4164 = vld [vmem:[%s635 + $0x8] sm:$0xff]
    %v4165 = vld [vmem:[%s635 + $0x10] sm:$0xff]
    %v4166 = vld [vmem:[%s635 + $0x18] sm:$0xff]
    %v4167 = vld [vmem:[%s635 + $0x20] sm:$0xff]
    %v4168 = vld [vmem:[%s635 + $0x28] sm:$0xff]
    %v4169 = vld [vmem:[%s635 + $0x30] sm:$0xff]
    %v4170 = vld [vmem:[%s635 + $0x38] sm:$0xff]
    %v4171 = vld [vmem:[%s635 + $0x40] sm:$0xff]
    %v4172 = vld [vmem:[%s635 + $0x48] sm:$0xff]
    %v4173 = vld [vmem:[%s635 + $0x50] sm:$0xff]
    %v4174 = vld [vmem:[%s635 + $0x58] sm:$0xff]
    %v4175 = vld [vmem:[%s635 + $0x60] sm:$0xff]
    %v4176 = vld [vmem:[%s635 + $0x68] sm:$0xff]
    %v4177 = vld [vmem:[%s635 + $0x70] sm:$0xff]
    %v4178 = vld [vmem:[%s635 + $0x78] sm:$0xff]
    %v4179 = vld [vmem:[%s635 + $0x80] sm:$0xff]
    %v4180 = vld [vmem:[%s635 + $0x88] sm:$0xff]
    %v4181 = vld [vmem:[%s635 + $0x90] sm:$0xff]
    %v4182 = vld [vmem:[%s635 + $0x98] sm:$0xff]
    %v4183 = vld [vmem:[%s635 + $0xa0] sm:$0xff]
    %v4184 = vld [vmem:[%s635 + $0xa8] sm:$0xff]
    %v4185 = vld [vmem:[%s635 + $0xb0] sm:$0xff]
    %v4186 = vld [vmem:[%s635 + $0xb8] sm:$0xff]
    %v4187 = vld [vmem:[%s635 + $0xc0] sm:$0xff]
    %v4188 = vld [vmem:[%s635 + $0xc8] sm:$0xff]
    %v4189 = vld [vmem:[%s635 + $0xd0] sm:$0xff]
    %v4190 = vld [vmem:[%s635 + $0xd8] sm:$0xff]
    %v4191 = vld [vmem:[%s635 + $0xe0] sm:$0xff]
    %v4192 = vld [vmem:[%s635 + $0xe8] sm:$0xff]
    %v4193 = vld [vmem:[%s635 + $0xf0] sm:$0xff]
    %v4194 = vld [vmem:[%s635 + $0xf8] sm:$0xff]
    %v4227 = vunpack.c.l.b16 %v4163
    %v4228 = vunpack.c.h.b16 %v4163
    %v4229 = vunpack.c.l.b16 %v4164
    %v4230 = vunpack.c.h.b16 %v4164
    %v4231 = vunpack.c.l.b16 %v4165
    %v4232 = vunpack.c.h.b16 %v4165
    %v4233 = vunpack.c.l.b16 %v4166
    %v4234 = vunpack.c.h.b16 %v4166
    %v4235 = vunpack.c.l.b16 %v4167
    %v4236 = vunpack.c.h.b16 %v4167
    %v4237 = vunpack.c.l.b16 %v4168
    %v4238 = vunpack.c.h.b16 %v4168
    %v4239 = vunpack.c.l.b16 %v4169
    %v4240 = vunpack.c.h.b16 %v4169
    %v4241 = vunpack.c.l.b16 %v4170
    %v4242 = vunpack.c.h.b16 %v4170
    %v4243 = vunpack.c.l.b16 %v4171
    %v4244 = vunpack.c.h.b16 %v4171
    %v4245 = vunpack.c.l.b16 %v4172
    %v4246 = vunpack.c.h.b16 %v4172
    %v4247 = vunpack.c.l.b16 %v4173
    %v4248 = vunpack.c.h.b16 %v4173
    %v4249 = vunpack.c.l.b16 %v4174
    %v4250 = vunpack.c.h.b16 %v4174
    %v4251 = vunpack.c.l.b16 %v4175
    %v4252 = vunpack.c.h.b16 %v4175
    %v4253 = vunpack.c.l.b16 %v4176
    %v4254 = vunpack.c.h.b16 %v4176
    %v4255 = vunpack.c.l.b16 %v4177
    %v4256 = vunpack.c.h.b16 %v4177
    %v4257 = vunpack.c.l.b16 %v4178
    %v4258 = vunpack.c.h.b16 %v4178
    %v4259 = vunpack.c.l.b16 %v4179
    %v4260 = vunpack.c.h.b16 %v4179
    %v4261 = vunpack.c.l.b16 %v4180
    %v4262 = vunpack.c.h.b16 %v4180
    %v4263 = vunpack.c.l.b16 %v4181
    %v4264 = vunpack.c.h.b16 %v4181
    %v4265 = vunpack.c.l.b16 %v4182
    %v4266 = vunpack.c.h.b16 %v4182
    %v4267 = vunpack.c.l.b16 %v4183
    %v4268 = vunpack.c.h.b16 %v4183
    %v4269 = vunpack.c.l.b16 %v4184
    %v4270 = vunpack.c.h.b16 %v4184
    %v4271 = vunpack.c.l.b16 %v4185
    %v4272 = vunpack.c.h.b16 %v4185
    %v4273 = vunpack.c.l.b16 %v4186
    %v4274 = vunpack.c.h.b16 %v4186
    %v4275 = vunpack.c.l.b16 %v4187
    %v4276 = vunpack.c.h.b16 %v4187
    %v4277 = vunpack.c.l.b16 %v4188
    %v4278 = vunpack.c.h.b16 %v4188
    %v4279 = vunpack.c.l.b16 %v4189
    %v4280 = vunpack.c.h.b16 %v4189
    %v4281 = vunpack.c.l.b16 %v4190
    %v4282 = vunpack.c.h.b16 %v4190
    %v4283 = vunpack.c.l.b16 %v4191
    %v4284 = vunpack.c.h.b16 %v4191
    %v4285 = vunpack.c.l.b16 %v4192
    %v4286 = vunpack.c.h.b16 %v4192
    %v4287 = vunpack.c.l.b16 %v4193
    %v4288 = vunpack.c.h.b16 %v4193
    %v4289 = vunpack.c.l.b16 %v4194
    %v4290 = vunpack.c.h.b16 %v4194
    %v4291 = vpack.c.b16 %v4231, %v4227
    %v4292 = vpack.c.b16 %v4232, %v4228
    %v4293 = vpack.c.b16 %v4233, %v4229
    %v4294 = vpack.c.b16 %v4234, %v4230
    %v4295 = vpack.c.b16 %v4239, %v4235
    %v4296 = vpack.c.b16 %v4240, %v4236
    %v4297 = vpack.c.b16 %v4241, %v4237
    %v4298 = vpack.c.b16 %v4242, %v4238
    %v4299 = vpack.c.b16 %v4247, %v4243
    %v4300 = vpack.c.b16 %v4248, %v4244
    %v4301 = vpack.c.b16 %v4249, %v4245
    %v4302 = vpack.c.b16 %v4250, %v4246
    %v4303 = vpack.c.b16 %v4255, %v4251
    %v4304 = vpack.c.b16 %v4256, %v4252
    %v4305 = vpack.c.b16 %v4257, %v4253
    %v4306 = vpack.c.b16 %v4258, %v4254
    %v4307 = vpack.c.b16 %v4263, %v4259
    %v4308 = vpack.c.b16 %v4264, %v4260
    %v4309 = vpack.c.b16 %v4265, %v4261
    %v4310 = vpack.c.b16 %v4266, %v4262
    %v4311 = vpack.c.b16 %v4271, %v4267
    %v4312 = vpack.c.b16 %v4272, %v4268
    %v4313 = vpack.c.b16 %v4273, %v4269
    %v4314 = vpack.c.b16 %v4274, %v4270
    %v4315 = vpack.c.b16 %v4279, %v4275
    %v4316 = vpack.c.b16 %v4280, %v4276
    %v4317 = vpack.c.b16 %v4281, %v4277
    %v4318 = vpack.c.b16 %v4282, %v4278
    %v4319 = vpack.c.b16 %v4287, %v4283
    %v4320 = vpack.c.b16 %v4288, %v4284
    %v4321 = vpack.c.b16 %v4289, %v4285
    %v4322 = vpack.c.b16 %v4290, %v4286
    %4355 = vmatprep.subr.bf16.mxu0 %v4320
    %4356 = vmatpush1.bf16.msra.mxu0 %v4319
    %4357 = vmatprep.subr.bf16.mxu0 %v4316
    %4358 = vmatpush1.bf16.msra.mxu0 %v4315
    %4359 = vmatprep.subr.bf16.mxu0 %v4312
    %4360 = vmatpush1.bf16.msra.mxu0 %v4311
    %4361 = vmatprep.subr.bf16.mxu0 %v4308
    %4362 = vmatpush1.bf16.msra.mxu0 %v4307
    %4363 = vmatprep.subr.bf16.mxu0 %v4304
    %4364 = vmatpush1.bf16.msra.mxu0 %v4303
    %4365 = vmatprep.subr.bf16.mxu0 %v4300
    %4366 = vmatpush1.bf16.msra.mxu0 %v4299
    %4367 = vmatprep.subr.bf16.mxu0 %v4296
    %4368 = vmatpush1.bf16.msra.mxu0 %v4295
    %4369 = vmatprep.subr.bf16.mxu0 %v4292
    %4370 = vmatpush1.bf16.msra.mxu0 %v4291
    %4371 = vmatprep.subr.bf16.mxu0 0
    %4372 = vmatpush2.bf16.msra.mxu0 0
    %4373 = vmatprep.subr.bf16.mxu0 0
    %4374 = vmatpush2.bf16.msra.mxu0 0
    %4375 = vmatprep.subr.bf16.mxu0 0
    %4376 = vmatpush2.bf16.msra.mxu0 0
    %4377 = vmatprep.subr.bf16.mxu0 0
    %4378 = vmatpush2.bf16.msra.mxu0 0
    %4379 = vmatprep.subr.bf16.mxu0 0
    %4380 = vmatpush2.bf16.msra.mxu0 0
    %4381 = vmatprep.subr.bf16.mxu0 0
    %4382 = vmatpush2.bf16.msra.mxu0 0
    %4383 = vmatprep.subr.bf16.mxu0 0
    %4384 = vmatpush2.bf16.msra.mxu0 0
    %4385 = vmatprep.subr.bf16.mxu0 0
    %4386 = vmatpush2.bf16.msra.mxu0 0
    %4387 = vmatprep.mubr.bf16.mxu0 0
    %4388 = vmatmul.mubr.bf16.gmra.mxu0 %v4162
    %v4389 = vpop.f32.mrf.mxu0
    %v4390 = vadd.f32 0.0, %v4389
    %v4391 = vpop.f32.mrf.mxu0
    %v4392 = vadd.f32 0.0, %v4391
    %v4393 = vpop.f32.mrf.mxu0
    %v4394 = vpop.f32.mrf.mxu0
    %4395 = vdwg.mxu0
    %4396 = vmatprep.subr.bf16.mxu0 %v4322
    %4397 = vmatpush1.bf16.msra.mxu0 %v4321
    %4398 = vmatprep.subr.bf16.mxu0 %v4318
    %4399 = vmatpush1.bf16.msra.mxu0 %v4317
    %4400 = vmatprep.subr.bf16.mxu0 %v4314
    %4401 = vmatpush1.bf16.msra.mxu0 %v4313
    %4402 = vmatprep.subr.bf16.mxu0 %v4310
    %4403 = vmatpush1.bf16.msra.mxu0 %v4309
    %4404 = vmatprep.subr.bf16.mxu0 %v4306
    %4405 = vmatpush1.bf16.msra.mxu0 %v4305
    %4406 = vmatprep.subr.bf16.mxu0 %v4302
    %4407 = vmatpush1.bf16.msra.mxu0 %v4301
    %4408 = vmatprep.subr.bf16.mxu0 %v4298
    %4409 = vmatpush1.bf16.msra.mxu0 %v4297
    %4410 = vmatprep.subr.bf16.mxu0 %v4294
    %4411 = vmatpush1.bf16.msra.mxu0 %v4293
    %4412 = vmatprep.subr.bf16.mxu0 0
    %4413 = vmatpush2.bf16.msra.mxu0 0
    %4414 = vmatprep.subr.bf16.mxu0 0
    %4415 = vmatpush2.bf16.msra.mxu0 0
    %4416 = vmatprep.subr.bf16.mxu0 0
    %4417 = vmatpush2.bf16.msra.mxu0 0
    %4418 = vmatprep.subr.bf16.mxu0 0
    %4419 = vmatpush2.bf16.msra.mxu0 0
    %4420 = vmatprep.subr.bf16.mxu0 0
    %4421 = vmatpush2.bf16.msra.mxu0 0
    %4422 = vmatprep.subr.bf16.mxu0 0
    %4423 = vmatpush2.bf16.msra.mxu0 0
    %4424 = vmatprep.subr.bf16.mxu0 0
    %4425 = vmatpush2.bf16.msra.mxu0 0
    %4426 = vmatprep.subr.bf16.mxu0 0
    %4427 = vmatpush2.bf16.msra.mxu0 0
    %4428 = vmatprep.mubr.bf16.mxu0 0
    %4429 = vmatmul.mubr.bf16.gmra.mxu0 %v4162
    %v4430 = vpop.f32.mrf.mxu0
    %v4431 = vadd.f32 0.0, %v4430
    %v4432 = vpop.f32.mrf.mxu0
    %v4433 = vadd.f32 0.0, %v4432
    %v4434 = vpop.f32.mrf.mxu0
    %v4435 = vpop.f32.mrf.mxu0
    %4436 = vdwg.mxu0
    %v4437 = vtanh.pop %v4390
    %v4438 = vtanh.pop %v4392
    %v4439 = vadd.f32 %v4431, %v4433
    %v4440 = vxor.u32 %v4439, 2147483648
    %v4441 = vmul.f32 %v4440, 1.442695
    %v4442 = vpow.pop %v4441
    %v4443 = vadd.f32 %v4442, 1.0
    %v4444 = vrcp.pop %v4443
    %v4445 = vmul.f32 1.0, %v4444
    %v4446 = vsub.f32 1.0, %v4445
    %v4447 = vmul.f32 %v4437, %v4446
    %v4448 = vmul.f32 %v4445, %v4438
    %v4449 = vadd.f32 %v4447, %v4448
    %v4450 = vtanh.pop %v4449
    %v4451 = vxor.u32 %v4449, 2147483648
    %v4452 = vmul.f32 %v4451, 1.442695
    %v4453 = vpow.pop %v4452
    %v4454 = vadd.f32 %v4453, 1.0
    %v4455 = vrcp.pop %v4454
    %v4456 = vmul.f32 1.0, %v4455
    %v4457 = vsel %vm49, %v4450, %v4456
    %s4458 = scalar_lea.vmem [#allocation7], 32
    %4459 = vst [vmem:[%s4458] sm:$0xff] %v4457
    %s4460 = scalar_lea.vmem [#allocation2], 40
    %v4461 = vld [vmem:[%s4460] sm:$0xff]
    %v4462 = vadd.f32 %v4461, %v3869
    %v4463 = vadd.f32 %v4462, %v48
    %v4464 = vpack.c.bf16 %v4463, %v4463
    %v4465 = vld [vmem:[#allocation5] sm:$0xff]
    %v4466 = vld [vmem:[#allocation5 + $0x8] sm:$0xff]
    %v4467 = vld [vmem:[#allocation5 + $0x10] sm:$0xff]
    %v4468 = vld [vmem:[#allocation5 + $0x18] sm:$0xff]
    %v4469 = vld [vmem:[#allocation5 + $0x20] sm:$0xff]
    %v4470 = vld [vmem:[#allocation5 + $0x28] sm:$0xff]
    %v4471 = vld [vmem:[#allocation5 + $0x30] sm:$0xff]
    %v4472 = vld [vmem:[#allocation5 + $0x38] sm:$0xff]
    %v4473 = vld [vmem:[#allocation5 + $0x40] sm:$0xff]
    %v4474 = vld [vmem:[#allocation5 + $0x48] sm:$0xff]
    %v4475 = vld [vmem:[#allocation5 + $0x50] sm:$0xff]
    %v4476 = vld [vmem:[#allocation5 + $0x58] sm:$0xff]
    %v4477 = vld [vmem:[#allocation5 + $0x60] sm:$0xff]
    %v4478 = vld [vmem:[#allocation5 + $0x68] sm:$0xff]
    %v4479 = vld [vmem:[#allocation5 + $0x70] sm:$0xff]
    %v4480 = vld [vmem:[#allocation5 + $0x78] sm:$0xff]
    %v4481 = vld [vmem:[#allocation5 + $0x80] sm:$0xff]
    %v4482 = vld [vmem:[#allocation5 + $0x88] sm:$0xff]
    %v4483 = vld [vmem:[#allocation5 + $0x90] sm:$0xff]
    %v4484 = vld [vmem:[#allocation5 + $0x98] sm:$0xff]
    %v4485 = vld [vmem:[#allocation5 + $0xa0] sm:$0xff]
    %v4486 = vld [vmem:[#allocation5 + $0xa8] sm:$0xff]
    %v4487 = vld [vmem:[#allocation5 + $0xb0] sm:$0xff]
    %v4488 = vld [vmem:[#allocation5 + $0xb8] sm:$0xff]
    %v4489 = vld [vmem:[#allocation5 + $0xc0] sm:$0xff]
    %v4490 = vld [vmem:[#allocation5 + $0xc8] sm:$0xff]
    %v4491 = vld [vmem:[#allocation5 + $0xd0] sm:$0xff]
    %v4492 = vld [vmem:[#allocation5 + $0xd8] sm:$0xff]
    %v4493 = vld [vmem:[#allocation5 + $0xe0] sm:$0xff]
    %v4494 = vld [vmem:[#allocation5 + $0xe8] sm:$0xff]
    %v4495 = vld [vmem:[#allocation5 + $0xf0] sm:$0xff]
    %v4496 = vld [vmem:[#allocation5 + $0xf8] sm:$0xff]
    %v4529 = vunpack.c.l.b16 %v4465
    %v4530 = vunpack.c.h.b16 %v4465
    %v4531 = vunpack.c.l.b16 %v4466
    %v4532 = vunpack.c.h.b16 %v4466
    %v4533 = vunpack.c.l.b16 %v4467
    %v4534 = vunpack.c.h.b16 %v4467
    %v4535 = vunpack.c.l.b16 %v4468
    %v4536 = vunpack.c.h.b16 %v4468
    %v4537 = vunpack.c.l.b16 %v4469
    %v4538 = vunpack.c.h.b16 %v4469
    %v4539 = vunpack.c.l.b16 %v4470
    %v4540 = vunpack.c.h.b16 %v4470
    %v4541 = vunpack.c.l.b16 %v4471
    %v4542 = vunpack.c.h.b16 %v4471
    %v4543 = vunpack.c.l.b16 %v4472
    %v4544 = vunpack.c.h.b16 %v4472
    %v4545 = vunpack.c.l.b16 %v4473
    %v4546 = vunpack.c.h.b16 %v4473
    %v4547 = vunpack.c.l.b16 %v4474
    %v4548 = vunpack.c.h.b16 %v4474
    %v4549 = vunpack.c.l.b16 %v4475
    %v4550 = vunpack.c.h.b16 %v4475
    %v4551 = vunpack.c.l.b16 %v4476
    %v4552 = vunpack.c.h.b16 %v4476
    %v4553 = vunpack.c.l.b16 %v4477
    %v4554 = vunpack.c.h.b16 %v4477
    %v4555 = vunpack.c.l.b16 %v4478
    %v4556 = vunpack.c.h.b16 %v4478
    %v4557 = vunpack.c.l.b16 %v4479
    %v4558 = vunpack.c.h.b16 %v4479
    %v4559 = vunpack.c.l.b16 %v4480
    %v4560 = vunpack.c.h.b16 %v4480
    %v4561 = vunpack.c.l.b16 %v4481
    %v4562 = vunpack.c.h.b16 %v4481
    %v4563 = vunpack.c.l.b16 %v4482
    %v4564 = vunpack.c.h.b16 %v4482
    %v4565 = vunpack.c.l.b16 %v4483
    %v4566 = vunpack.c.h.b16 %v4483
    %v4567 = vunpack.c.l.b16 %v4484
    %v4568 = vunpack.c.h.b16 %v4484
    %v4569 = vunpack.c.l.b16 %v4485
    %v4570 = vunpack.c.h.b16 %v4485
    %v4571 = vunpack.c.l.b16 %v4486
    %v4572 = vunpack.c.h.b16 %v4486
    %v4573 = vunpack.c.l.b16 %v4487
    %v4574 = vunpack.c.h.b16 %v4487
    %v4575 = vunpack.c.l.b16 %v4488
    %v4576 = vunpack.c.h.b16 %v4488
    %v4577 = vunpack.c.l.b16 %v4489
    %v4578 = vunpack.c.h.b16 %v4489
    %v4579 = vunpack.c.l.b16 %v4490
    %v4580 = vunpack.c.h.b16 %v4490
    %v4581 = vunpack.c.l.b16 %v4491
    %v4582 = vunpack.c.h.b16 %v4491
    %v4583 = vunpack.c.l.b16 %v4492
    %v4584 = vunpack.c.h.b16 %v4492
    %v4585 = vunpack.c.l.b16 %v4493
    %v4586 = vunpack.c.h.b16 %v4493
    %v4587 = vunpack.c.l.b16 %v4494
    %v4588 = vunpack.c.h.b16 %v4494
    %v4589 = vunpack.c.l.b16 %v4495
    %v4590 = vunpack.c.h.b16 %v4495
    %v4591 = vunpack.c.l.b16 %v4496
    %v4592 = vunpack.c.h.b16 %v4496
    %v4593 = vpack.c.b16 %v4533, %v4529
    %v4594 = vpack.c.b16 %v4534, %v4530
    %v4595 = vpack.c.b16 %v4535, %v4531
    %v4596 = vpack.c.b16 %v4536, %v4532
    %v4597 = vpack.c.b16 %v4541, %v4537
    %v4598 = vpack.c.b16 %v4542, %v4538
    %v4599 = vpack.c.b16 %v4543, %v4539
    %v4600 = vpack.c.b16 %v4544, %v4540
    %v4601 = vpack.c.b16 %v4549, %v4545
    %v4602 = vpack.c.b16 %v4550, %v4546
    %v4603 = vpack.c.b16 %v4551, %v4547
    %v4604 = vpack.c.b16 %v4552, %v4548
    %v4605 = vpack.c.b16 %v4557, %v4553
    %v4606 = vpack.c.b16 %v4558, %v4554
    %v4607 = vpack.c.b16 %v4559, %v4555
    %v4608 = vpack.c.b16 %v4560, %v4556
    %v4609 = vpack.c.b16 %v4565, %v4561
    %v4610 = vpack.c.b16 %v4566, %v4562
    %v4611 = vpack.c.b16 %v4567, %v4563
    %v4612 = vpack.c.b16 %v4568, %v4564
    %v4613 = vpack.c.b16 %v4573, %v4569
    %v4614 = vpack.c.b16 %v4574, %v4570
    %v4615 = vpack.c.b16 %v4575, %v4571
    %v4616 = vpack.c.b16 %v4576, %v4572
    %v4617 = vpack.c.b16 %v4581, %v4577
    %v4618 = vpack.c.b16 %v4582, %v4578
    %v4619 = vpack.c.b16 %v4583, %v4579
    %v4620 = vpack.c.b16 %v4584, %v4580
    %v4621 = vpack.c.b16 %v4589, %v4585
    %v4622 = vpack.c.b16 %v4590, %v4586
    %v4623 = vpack.c.b16 %v4591, %v4587
    %v4624 = vpack.c.b16 %v4592, %v4588
    %4657 = vmatprep.subr.bf16.mxu0 %v4622
    %4658 = vmatpush1.bf16.msra.mxu0 %v4621
    %4659 = vmatprep.subr.bf16.mxu0 %v4618
    %4660 = vmatpush1.bf16.msra.mxu0 %v4617
    %4661 = vmatprep.subr.bf16.mxu0 %v4614
    %4662 = vmatpush1.bf16.msra.mxu0 %v4613
    %4663 = vmatprep.subr.bf16.mxu0 %v4610
    %4664 = vmatpush1.bf16.msra.mxu0 %v4609
    %4665 = vmatprep.subr.bf16.mxu0 %v4606
    %4666 = vmatpush1.bf16.msra.mxu0 %v4605
    %4667 = vmatprep.subr.bf16.mxu0 %v4602
    %4668 = vmatpush1.bf16.msra.mxu0 %v4601
    %4669 = vmatprep.subr.bf16.mxu0 %v4598
    %4670 = vmatpush1.bf16.msra.mxu0 %v4597
    %4671 = vmatprep.subr.bf16.mxu0 %v4594
    %4672 = vmatpush1.bf16.msra.mxu0 %v4593
    %4673 = vmatprep.subr.bf16.mxu0 0
    %4674 = vmatpush2.bf16.msra.mxu0 0
    %4675 = vmatprep.subr.bf16.mxu0 0
    %4676 = vmatpush2.bf16.msra.mxu0 0
    %4677 = vmatprep.subr.bf16.mxu0 0
    %4678 = vmatpush2.bf16.msra.mxu0 0
    %4679 = vmatprep.subr.bf16.mxu0 0
    %4680 = vmatpush2.bf16.msra.mxu0 0
    %4681 = vmatprep.subr.bf16.mxu0 0
    %4682 = vmatpush2.bf16.msra.mxu0 0
    %4683 = vmatprep.subr.bf16.mxu0 0
    %4684 = vmatpush2.bf16.msra.mxu0 0
    %4685 = vmatprep.subr.bf16.mxu0 0
    %4686 = vmatpush2.bf16.msra.mxu0 0
    %4687 = vmatprep.subr.bf16.mxu0 0
    %4688 = vmatpush2.bf16.msra.mxu0 0
    %4689 = vmatprep.mubr.bf16.mxu0 0
    %4690 = vmatmul.mubr.bf16.gmra.mxu0 %v4464
    %v4691 = vpop.f32.mrf.mxu0
    %v4692 = vadd.f32 0.0, %v4691
    %v4693 = vpop.f32.mrf.mxu0
    %v4694 = vadd.f32 0.0, %v4693
    %v4695 = vpop.f32.mrf.mxu0
    %v4696 = vpop.f32.mrf.mxu0
    %4697 = vdwg.mxu0
    %4698 = vmatprep.subr.bf16.mxu0 %v4624
    %4699 = vmatpush1.bf16.msra.mxu0 %v4623
    %4700 = vmatprep.subr.bf16.mxu0 %v4620
    %4701 = vmatpush1.bf16.msra.mxu0 %v4619
    %4702 = vmatprep.subr.bf16.mxu0 %v4616
    %4703 = vmatpush1.bf16.msra.mxu0 %v4615
    %4704 = vmatprep.subr.bf16.mxu0 %v4612
    %4705 = vmatpush1.bf16.msra.mxu0 %v4611
    %4706 = vmatprep.subr.bf16.mxu0 %v4608
    %4707 = vmatpush1.bf16.msra.mxu0 %v4607
    %4708 = vmatprep.subr.bf16.mxu0 %v4604
    %4709 = vmatpush1.bf16.msra.mxu0 %v4603
    %4710 = vmatprep.subr.bf16.mxu0 %v4600
    %4711 = vmatpush1.bf16.msra.mxu0 %v4599
    %4712 = vmatprep.subr.bf16.mxu0 %v4596
    %4713 = vmatpush1.bf16.msra.mxu0 %v4595
    %4714 = vmatprep.subr.bf16.mxu0 0
    %4715 = vmatpush2.bf16.msra.mxu0 0
    %4716 = vmatprep.subr.bf16.mxu0 0
    %4717 = vmatpush2.bf16.msra.mxu0 0
    %4718 = vmatprep.subr.bf16.mxu0 0
    %4719 = vmatpush2.bf16.msra.mxu0 0
    %4720 = vmatprep.subr.bf16.mxu0 0
    %4721 = vmatpush2.bf16.msra.mxu0 0
    %4722 = vmatprep.subr.bf16.mxu0 0
    %4723 = vmatpush2.bf16.msra.mxu0 0
    %4724 = vmatprep.subr.bf16.mxu0 0
    %4725 = vmatpush2.bf16.msra.mxu0 0
    %4726 = vmatprep.subr.bf16.mxu0 0
    %4727 = vmatpush2.bf16.msra.mxu0 0
    %4728 = vmatprep.subr.bf16.mxu0 0
    %4729 = vmatpush2.bf16.msra.mxu0 0
    %4730 = vmatprep.mubr.bf16.mxu0 0
    %4731 = vmatmul.mubr.bf16.gmra.mxu0 %v4464
    %v4732 = vpop.f32.mrf.mxu0
    %v4733 = vadd.f32 0.0, %v4732
    %v4734 = vpop.f32.mrf.mxu0
    %v4735 = vadd.f32 0.0, %v4734
    %v4736 = vpop.f32.mrf.mxu0
    %v4737 = vpop.f32.mrf.mxu0
    %4738 = vdwg.mxu0
    %v4739 = vtanh.pop %v4692
    %v4740 = vtanh.pop %v4694
    %v4741 = vadd.f32 %v4733, %v4735
    %v4742 = vxor.u32 %v4741, 2147483648
    %v4743 = vmul.f32 %v4742, 1.442695
    %v4744 = vpow.pop %v4743
    %v4745 = vadd.f32 %v4744, 1.0
    %v4746 = vrcp.pop %v4745
    %v4747 = vmul.f32 1.0, %v4746
    %v4748 = vsub.f32 1.0, %v4747
    %v4749 = vmul.f32 %v4739, %v4748
    %v4750 = vmul.f32 %v4747, %v4740
    %v4751 = vadd.f32 %v4749, %v4750
    %v4752 = vadd.f32 %v4751, %v4159
    %v4753 = vadd.f32 %v4752, %v48
    %v4754 = vpack.c.bf16 %v4753, %v4753
    %v4755 = vld [vmem:[%s344] sm:$0xff]
    %v4756 = vld [vmem:[%s344 + $0x8] sm:$0xff]
    %v4757 = vld [vmem:[%s344 + $0x10] sm:$0xff]
    %v4758 = vld [vmem:[%s344 + $0x18] sm:$0xff]
    %v4759 = vld [vmem:[%s344 + $0x20] sm:$0xff]
    %v4760 = vld [vmem:[%s344 + $0x28] sm:$0xff]
    %v4761 = vld [vmem:[%s344 + $0x30] sm:$0xff]
    %v4762 = vld [vmem:[%s344 + $0x38] sm:$0xff]
    %v4763 = vld [vmem:[%s344 + $0x40] sm:$0xff]
    %v4764 = vld [vmem:[%s344 + $0x48] sm:$0xff]
    %v4765 = vld [vmem:[%s344 + $0x50] sm:$0xff]
    %v4766 = vld [vmem:[%s344 + $0x58] sm:$0xff]
    %v4767 = vld [vmem:[%s344 + $0x60] sm:$0xff]
    %v4768 = vld [vmem:[%s344 + $0x68] sm:$0xff]
    %v4769 = vld [vmem:[%s344 + $0x70] sm:$0xff]
    %v4770 = vld [vmem:[%s344 + $0x78] sm:$0xff]
    %v4771 = vld [vmem:[%s344 + $0x80] sm:$0xff]
    %v4772 = vld [vmem:[%s344 + $0x88] sm:$0xff]
    %v4773 = vld [vmem:[%s344 + $0x90] sm:$0xff]
    %v4774 = vld [vmem:[%s344 + $0x98] sm:$0xff]
    %v4775 = vld [vmem:[%s344 + $0xa0] sm:$0xff]
    %v4776 = vld [vmem:[%s344 + $0xa8] sm:$0xff]
    %v4777 = vld [vmem:[%s344 + $0xb0] sm:$0xff]
    %v4778 = vld [vmem:[%s344 + $0xb8] sm:$0xff]
    %v4779 = vld [vmem:[%s344 + $0xc0] sm:$0xff]
    %v4780 = vld [vmem:[%s344 + $0xc8] sm:$0xff]
    %v4781 = vld [vmem:[%s344 + $0xd0] sm:$0xff]
    %v4782 = vld [vmem:[%s344 + $0xd8] sm:$0xff]
    %v4783 = vld [vmem:[%s344 + $0xe0] sm:$0xff]
    %v4784 = vld [vmem:[%s344 + $0xe8] sm:$0xff]
    %v4785 = vld [vmem:[%s344 + $0xf0] sm:$0xff]
    %v4786 = vld [vmem:[%s344 + $0xf8] sm:$0xff]
    %v4819 = vunpack.c.l.b16 %v4755
    %v4820 = vunpack.c.h.b16 %v4755
    %v4821 = vunpack.c.l.b16 %v4756
    %v4822 = vunpack.c.h.b16 %v4756
    %v4823 = vunpack.c.l.b16 %v4757
    %v4824 = vunpack.c.h.b16 %v4757
    %v4825 = vunpack.c.l.b16 %v4758
    %v4826 = vunpack.c.h.b16 %v4758
    %v4827 = vunpack.c.l.b16 %v4759
    %v4828 = vunpack.c.h.b16 %v4759
    %v4829 = vunpack.c.l.b16 %v4760
    %v4830 = vunpack.c.h.b16 %v4760
    %v4831 = vunpack.c.l.b16 %v4761
    %v4832 = vunpack.c.h.b16 %v4761
    %v4833 = vunpack.c.l.b16 %v4762
    %v4834 = vunpack.c.h.b16 %v4762
    %v4835 = vunpack.c.l.b16 %v4763
    %v4836 = vunpack.c.h.b16 %v4763
    %v4837 = vunpack.c.l.b16 %v4764
    %v4838 = vunpack.c.h.b16 %v4764
    %v4839 = vunpack.c.l.b16 %v4765
    %v4840 = vunpack.c.h.b16 %v4765
    %v4841 = vunpack.c.l.b16 %v4766
    %v4842 = vunpack.c.h.b16 %v4766
    %v4843 = vunpack.c.l.b16 %v4767
    %v4844 = vunpack.c.h.b16 %v4767
    %v4845 = vunpack.c.l.b16 %v4768
    %v4846 = vunpack.c.h.b16 %v4768
    %v4847 = vunpack.c.l.b16 %v4769
    %v4848 = vunpack.c.h.b16 %v4769
    %v4849 = vunpack.c.l.b16 %v4770
    %v4850 = vunpack.c.h.b16 %v4770
    %v4851 = vunpack.c.l.b16 %v4771
    %v4852 = vunpack.c.h.b16 %v4771
    %v4853 = vunpack.c.l.b16 %v4772
    %v4854 = vunpack.c.h.b16 %v4772
    %v4855 = vunpack.c.l.b16 %v4773
    %v4856 = vunpack.c.h.b16 %v4773
    %v4857 = vunpack.c.l.b16 %v4774
    %v4858 = vunpack.c.h.b16 %v4774
    %v4859 = vunpack.c.l.b16 %v4775
    %v4860 = vunpack.c.h.b16 %v4775
    %v4861 = vunpack.c.l.b16 %v4776
    %v4862 = vunpack.c.h.b16 %v4776
    %v4863 = vunpack.c.l.b16 %v4777
    %v4864 = vunpack.c.h.b16 %v4777
    %v4865 = vunpack.c.l.b16 %v4778
    %v4866 = vunpack.c.h.b16 %v4778
    %v4867 = vunpack.c.l.b16 %v4779
    %v4868 = vunpack.c.h.b16 %v4779
    %v4869 = vunpack.c.l.b16 %v4780
    %v4870 = vunpack.c.h.b16 %v4780
    %v4871 = vunpack.c.l.b16 %v4781
    %v4872 = vunpack.c.h.b16 %v4781
    %v4873 = vunpack.c.l.b16 %v4782
    %v4874 = vunpack.c.h.b16 %v4782
    %v4875 = vunpack.c.l.b16 %v4783
    %v4876 = vunpack.c.h.b16 %v4783
    %v4877 = vunpack.c.l.b16 %v4784
    %v4878 = vunpack.c.h.b16 %v4784
    %v4879 = vunpack.c.l.b16 %v4785
    %v4880 = vunpack.c.h.b16 %v4785
    %v4881 = vunpack.c.l.b16 %v4786
    %v4882 = vunpack.c.h.b16 %v4786
    %v4883 = vpack.c.b16 %v4823, %v4819
    %v4884 = vpack.c.b16 %v4824, %v4820
    %v4885 = vpack.c.b16 %v4825, %v4821
    %v4886 = vpack.c.b16 %v4826, %v4822
    %v4887 = vpack.c.b16 %v4831, %v4827
    %v4888 = vpack.c.b16 %v4832, %v4828
    %v4889 = vpack.c.b16 %v4833, %v4829
    %v4890 = vpack.c.b16 %v4834, %v4830
    %v4891 = vpack.c.b16 %v4839, %v4835
    %v4892 = vpack.c.b16 %v4840, %v4836
    %v4893 = vpack.c.b16 %v4841, %v4837
    %v4894 = vpack.c.b16 %v4842, %v4838
    %v4895 = vpack.c.b16 %v4847, %v4843
    %v4896 = vpack.c.b16 %v4848, %v4844
    %v4897 = vpack.c.b16 %v4849, %v4845
    %v4898 = vpack.c.b16 %v4850, %v4846
    %v4899 = vpack.c.b16 %v4855, %v4851
    %v4900 = vpack.c.b16 %v4856, %v4852
    %v4901 = vpack.c.b16 %v4857, %v4853
    %v4902 = vpack.c.b16 %v4858, %v4854
    %v4903 = vpack.c.b16 %v4863, %v4859
    %v4904 = vpack.c.b16 %v4864, %v4860
    %v4905 = vpack.c.b16 %v4865, %v4861
    %v4906 = vpack.c.b16 %v4866, %v4862
    %v4907 = vpack.c.b16 %v4871, %v4867
    %v4908 = vpack.c.b16 %v4872, %v4868
    %v4909 = vpack.c.b16 %v4873, %v4869
    %v4910 = vpack.c.b16 %v4874, %v4870
    %v4911 = vpack.c.b16 %v4879, %v4875
    %v4912 = vpack.c.b16 %v4880, %v4876
    %v4913 = vpack.c.b16 %v4881, %v4877
    %v4914 = vpack.c.b16 %v4882, %v4878
    %4947 = vmatprep.subr.bf16.mxu0 %v4912
    %4948 = vmatpush1.bf16.msra.mxu0 %v4911
    %4949 = vmatprep.subr.bf16.mxu0 %v4908
    %4950 = vmatpush1.bf16.msra.mxu0 %v4907
    %4951 = vmatprep.subr.bf16.mxu0 %v4904
    %4952 = vmatpush1.bf16.msra.mxu0 %v4903
    %4953 = vmatprep.subr.bf16.mxu0 %v4900
    %4954 = vmatpush1.bf16.msra.mxu0 %v4899
    %4955 = vmatprep.subr.bf16.mxu0 %v4896
    %4956 = vmatpush1.bf16.msra.mxu0 %v4895
    %4957 = vmatprep.subr.bf16.mxu0 %v4892
    %4958 = vmatpush1.bf16.msra.mxu0 %v4891
    %4959 = vmatprep.subr.bf16.mxu0 %v4888
    %4960 = vmatpush1.bf16.msra.mxu0 %v4887
    %4961 = vmatprep.subr.bf16.mxu0 %v4884
    %4962 = vmatpush1.bf16.msra.mxu0 %v4883
    %4963 = vmatprep.subr.bf16.mxu0 0
    %4964 = vmatpush2.bf16.msra.mxu0 0
    %4965 = vmatprep.subr.bf16.mxu0 0
    %4966 = vmatpush2.bf16.msra.mxu0 0
    %4967 = vmatprep.subr.bf16.mxu0 0
    %4968 = vmatpush2.bf16.msra.mxu0 0
    %4969 = vmatprep.subr.bf16.mxu0 0
    %4970 = vmatpush2.bf16.msra.mxu0 0
    %4971 = vmatprep.subr.bf16.mxu0 0
    %4972 = vmatpush2.bf16.msra.mxu0 0
    %4973 = vmatprep.subr.bf16.mxu0 0
    %4974 = vmatpush2.bf16.msra.mxu0 0
    %4975 = vmatprep.subr.bf16.mxu0 0
    %4976 = vmatpush2.bf16.msra.mxu0 0
    %4977 = vmatprep.subr.bf16.mxu0 0
    %4978 = vmatpush2.bf16.msra.mxu0 0
    %4979 = vmatprep.mubr.bf16.mxu0 0
    %4980 = vmatmul.mubr.bf16.gmra.mxu0 %v4754
    %v4981 = vpop.f32.mrf.mxu0
    %v4982 = vadd.f32 0.0, %v4981
    %v4983 = vpop.f32.mrf.mxu0
    %v4984 = vadd.f32 0.0, %v4983
    %v4985 = vpop.f32.mrf.mxu0
    %v4986 = vpop.f32.mrf.mxu0
    %4987 = vdwg.mxu0
    %4988 = vmatprep.subr.bf16.mxu0 %v4914
    %4989 = vmatpush1.bf16.msra.mxu0 %v4913
    %4990 = vmatprep.subr.bf16.mxu0 %v4910
    %4991 = vmatpush1.bf16.msra.mxu0 %v4909
    %4992 = vmatprep.subr.bf16.mxu0 %v4906
    %4993 = vmatpush1.bf16.msra.mxu0 %v4905
    %4994 = vmatprep.subr.bf16.mxu0 %v4902
    %4995 = vmatpush1.bf16.msra.mxu0 %v4901
    %4996 = vmatprep.subr.bf16.mxu0 %v4898
    %4997 = vmatpush1.bf16.msra.mxu0 %v4897
    %4998 = vmatprep.subr.bf16.mxu0 %v4894
    %4999 = vmatpush1.bf16.msra.mxu0 %v4893
    %5000 = vmatprep.subr.bf16.mxu0 %v4890
    %5001 = vmatpush1.bf16.msra.mxu0 %v4889
    %5002 = vmatprep.subr.bf16.mxu0 %v4886
    %5003 = vmatpush1.bf16.msra.mxu0 %v4885
    %5004 = vmatprep.subr.bf16.mxu0 0
    %5005 = vmatpush2.bf16.msra.mxu0 0
    %5006 = vmatprep.subr.bf16.mxu0 0
    %5007 = vmatpush2.bf16.msra.mxu0 0
    %5008 = vmatprep.subr.bf16.mxu0 0
    %5009 = vmatpush2.bf16.msra.mxu0 0
    %5010 = vmatprep.subr.bf16.mxu0 0
    %5011 = vmatpush2.bf16.msra.mxu0 0
    %5012 = vmatprep.subr.bf16.mxu0 0
    %5013 = vmatpush2.bf16.msra.mxu0 0
    %5014 = vmatprep.subr.bf16.mxu0 0
    %5015 = vmatpush2.bf16.msra.mxu0 0
    %5016 = vmatprep.subr.bf16.mxu0 0
    %5017 = vmatpush2.bf16.msra.mxu0 0
    %5018 = vmatprep.subr.bf16.mxu0 0
    %5019 = vmatpush2.bf16.msra.mxu0 0
    %5020 = vmatprep.mubr.bf16.mxu0 0
    %5021 = vmatmul.mubr.bf16.gmra.mxu0 %v4754
    %v5022 = vpop.f32.mrf.mxu0
    %v5023 = vadd.f32 0.0, %v5022
    %v5024 = vpop.f32.mrf.mxu0
    %v5025 = vadd.f32 0.0, %v5024
    %v5026 = vpop.f32.mrf.mxu0
    %v5027 = vpop.f32.mrf.mxu0
    %5028 = vdwg.mxu0
    %v5029 = vtanh.pop %v4982
    %v5030 = vtanh.pop %v4984
    %v5031 = vadd.f32 %v5023, %v5025
    %v5032 = vxor.u32 %v5031, 2147483648
    %v5033 = vmul.f32 %v5032, 1.442695
    %v5034 = vpow.pop %v5033
    %v5035 = vadd.f32 %v5034, 1.0
    %v5036 = vrcp.pop %v5035
    %v5037 = vmul.f32 1.0, %v5036
    %v5038 = vsub.f32 1.0, %v5037
    %v5039 = vmul.f32 %v5029, %v5038
    %v5040 = vmul.f32 %v5037, %v5030
    %v5041 = vadd.f32 %v5039, %v5040
    %v5042 = vadd.f32 %v5041, %v4449
    %v5043 = vadd.f32 %v5042, %v48
    %v5044 = vpack.c.bf16 %v5043, %v5043
    %v5045 = vld [vmem:[%s635] sm:$0xff]
    %v5046 = vld [vmem:[%s635 + $0x8] sm:$0xff]
    %v5047 = vld [vmem:[%s635 + $0x10] sm:$0xff]
    %v5048 = vld [vmem:[%s635 + $0x18] sm:$0xff]
    %v5049 = vld [vmem:[%s635 + $0x20] sm:$0xff]
    %v5050 = vld [vmem:[%s635 + $0x28] sm:$0xff]
    %v5051 = vld [vmem:[%s635 + $0x30] sm:$0xff]
    %v5052 = vld [vmem:[%s635 + $0x38] sm:$0xff]
    %v5053 = vld [vmem:[%s635 + $0x40] sm:$0xff]
    %v5054 = vld [vmem:[%s635 + $0x48] sm:$0xff]
    %v5055 = vld [vmem:[%s635 + $0x50] sm:$0xff]
    %v5056 = vld [vmem:[%s635 + $0x58] sm:$0xff]
    %v5057 = vld [vmem:[%s635 + $0x60] sm:$0xff]
    %v5058 = vld [vmem:[%s635 + $0x68] sm:$0xff]
    %v5059 = vld [vmem:[%s635 + $0x70] sm:$0xff]
    %v5060 = vld [vmem:[%s635 + $0x78] sm:$0xff]
    %v5061 = vld [vmem:[%s635 + $0x80] sm:$0xff]
    %v5062 = vld [vmem:[%s635 + $0x88] sm:$0xff]
    %v5063 = vld [vmem:[%s635 + $0x90] sm:$0xff]
    %v5064 = vld [vmem:[%s635 + $0x98] sm:$0xff]
    %v5065 = vld [vmem:[%s635 + $0xa0] sm:$0xff]
    %v5066 = vld [vmem:[%s635 + $0xa8] sm:$0xff]
    %v5067 = vld [vmem:[%s635 + $0xb0] sm:$0xff]
    %v5068 = vld [vmem:[%s635 + $0xb8] sm:$0xff]
    %v5069 = vld [vmem:[%s635 + $0xc0] sm:$0xff]
    %v5070 = vld [vmem:[%s635 + $0xc8] sm:$0xff]
    %v5071 = vld [vmem:[%s635 + $0xd0] sm:$0xff]
    %v5072 = vld [vmem:[%s635 + $0xd8] sm:$0xff]
    %v5073 = vld [vmem:[%s635 + $0xe0] sm:$0xff]
    %v5074 = vld [vmem:[%s635 + $0xe8] sm:$0xff]
    %v5075 = vld [vmem:[%s635 + $0xf0] sm:$0xff]
    %v5076 = vld [vmem:[%s635 + $0xf8] sm:$0xff]
    %v5109 = vunpack.c.l.b16 %v5045
    %v5110 = vunpack.c.h.b16 %v5045
    %v5111 = vunpack.c.l.b16 %v5046
    %v5112 = vunpack.c.h.b16 %v5046
    %v5113 = vunpack.c.l.b16 %v5047
    %v5114 = vunpack.c.h.b16 %v5047
    %v5115 = vunpack.c.l.b16 %v5048
    %v5116 = vunpack.c.h.b16 %v5048
    %v5117 = vunpack.c.l.b16 %v5049
    %v5118 = vunpack.c.h.b16 %v5049
    %v5119 = vunpack.c.l.b16 %v5050
    %v5120 = vunpack.c.h.b16 %v5050
    %v5121 = vunpack.c.l.b16 %v5051
    %v5122 = vunpack.c.h.b16 %v5051
    %v5123 = vunpack.c.l.b16 %v5052
    %v5124 = vunpack.c.h.b16 %v5052
    %v5125 = vunpack.c.l.b16 %v5053
    %v5126 = vunpack.c.h.b16 %v5053
    %v5127 = vunpack.c.l.b16 %v5054
    %v5128 = vunpack.c.h.b16 %v5054
    %v5129 = vunpack.c.l.b16 %v5055
    %v5130 = vunpack.c.h.b16 %v5055
    %v5131 = vunpack.c.l.b16 %v5056
    %v5132 = vunpack.c.h.b16 %v5056
    %v5133 = vunpack.c.l.b16 %v5057
    %v5134 = vunpack.c.h.b16 %v5057
    %v5135 = vunpack.c.l.b16 %v5058
    %v5136 = vunpack.c.h.b16 %v5058
    %v5137 = vunpack.c.l.b16 %v5059
    %v5138 = vunpack.c.h.b16 %v5059
    %v5139 = vunpack.c.l.b16 %v5060
    %v5140 = vunpack.c.h.b16 %v5060
    %v5141 = vunpack.c.l.b16 %v5061
    %v5142 = vunpack.c.h.b16 %v5061
    %v5143 = vunpack.c.l.b16 %v5062
    %v5144 = vunpack.c.h.b16 %v5062
    %v5145 = vunpack.c.l.b16 %v5063
    %v5146 = vunpack.c.h.b16 %v5063
    %v5147 = vunpack.c.l.b16 %v5064
    %v5148 = vunpack.c.h.b16 %v5064
    %v5149 = vunpack.c.l.b16 %v5065
    %v5150 = vunpack.c.h.b16 %v5065
    %v5151 = vunpack.c.l.b16 %v5066
    %v5152 = vunpack.c.h.b16 %v5066
    %v5153 = vunpack.c.l.b16 %v5067
    %v5154 = vunpack.c.h.b16 %v5067
    %v5155 = vunpack.c.l.b16 %v5068
    %v5156 = vunpack.c.h.b16 %v5068
    %v5157 = vunpack.c.l.b16 %v5069
    %v5158 = vunpack.c.h.b16 %v5069
    %v5159 = vunpack.c.l.b16 %v5070
    %v5160 = vunpack.c.h.b16 %v5070
    %v5161 = vunpack.c.l.b16 %v5071
    %v5162 = vunpack.c.h.b16 %v5071
    %v5163 = vunpack.c.l.b16 %v5072
    %v5164 = vunpack.c.h.b16 %v5072
    %v5165 = vunpack.c.l.b16 %v5073
    %v5166 = vunpack.c.h.b16 %v5073
    %v5167 = vunpack.c.l.b16 %v5074
    %v5168 = vunpack.c.h.b16 %v5074
    %v5169 = vunpack.c.l.b16 %v5075
    %v5170 = vunpack.c.h.b16 %v5075
    %v5171 = vunpack.c.l.b16 %v5076
    %v5172 = vunpack.c.h.b16 %v5076
    %v5173 = vpack.c.b16 %v5113, %v5109
    %v5174 = vpack.c.b16 %v5114, %v5110
    %v5175 = vpack.c.b16 %v5115, %v5111
    %v5176 = vpack.c.b16 %v5116, %v5112
    %v5177 = vpack.c.b16 %v5121, %v5117
    %v5178 = vpack.c.b16 %v5122, %v5118
    %v5179 = vpack.c.b16 %v5123, %v5119
    %v5180 = vpack.c.b16 %v5124, %v5120
    %v5181 = vpack.c.b16 %v5129, %v5125
    %v5182 = vpack.c.b16 %v5130, %v5126
    %v5183 = vpack.c.b16 %v5131, %v5127
    %v5184 = vpack.c.b16 %v5132, %v5128
    %v5185 = vpack.c.b16 %v5137, %v5133
    %v5186 = vpack.c.b16 %v5138, %v5134
    %v5187 = vpack.c.b16 %v5139, %v5135
    %v5188 = vpack.c.b16 %v5140, %v5136
    %v5189 = vpack.c.b16 %v5145, %v5141
    %v5190 = vpack.c.b16 %v5146, %v5142
    %v5191 = vpack.c.b16 %v5147, %v5143
    %v5192 = vpack.c.b16 %v5148, %v5144
    %v5193 = vpack.c.b16 %v5153, %v5149
    %v5194 = vpack.c.b16 %v5154, %v5150
    %v5195 = vpack.c.b16 %v5155, %v5151
    %v5196 = vpack.c.b16 %v5156, %v5152
    %v5197 = vpack.c.b16 %v5161, %v5157
    %v5198 = vpack.c.b16 %v5162, %v5158
    %v5199 = vpack.c.b16 %v5163, %v5159
    %v5200 = vpack.c.b16 %v5164, %v5160
    %v5201 = vpack.c.b16 %v5169, %v5165
    %v5202 = vpack.c.b16 %v5170, %v5166
    %v5203 = vpack.c.b16 %v5171, %v5167
    %v5204 = vpack.c.b16 %v5172, %v5168
    %5237 = vmatprep.subr.bf16.mxu0 %v5202
    %5238 = vmatpush1.bf16.msra.mxu0 %v5201
    %5239 = vmatprep.subr.bf16.mxu0 %v5198
    %5240 = vmatpush1.bf16.msra.mxu0 %v5197
    %5241 = vmatprep.subr.bf16.mxu0 %v5194
    %5242 = vmatpush1.bf16.msra.mxu0 %v5193
    %5243 = vmatprep.subr.bf16.mxu0 %v5190
    %5244 = vmatpush1.bf16.msra.mxu0 %v5189
    %5245 = vmatprep.subr.bf16.mxu0 %v5186
    %5246 = vmatpush1.bf16.msra.mxu0 %v5185
    %5247 = vmatprep.subr.bf16.mxu0 %v5182
    %5248 = vmatpush1.bf16.msra.mxu0 %v5181
    %5249 = vmatprep.subr.bf16.mxu0 %v5178
    %5250 = vmatpush1.bf16.msra.mxu0 %v5177
    %5251 = vmatprep.subr.bf16.mxu0 %v5174
    %5252 = vmatpush1.bf16.msra.mxu0 %v5173
    %5253 = vmatprep.subr.bf16.mxu0 0
    %5254 = vmatpush2.bf16.msra.mxu0 0
    %5255 = vmatprep.subr.bf16.mxu0 0
    %5256 = vmatpush2.bf16.msra.mxu0 0
    %5257 = vmatprep.subr.bf16.mxu0 0
    %5258 = vmatpush2.bf16.msra.mxu0 0
    %5259 = vmatprep.subr.bf16.mxu0 0
    %5260 = vmatpush2.bf16.msra.mxu0 0
    %5261 = vmatprep.subr.bf16.mxu0 0
    %5262 = vmatpush2.bf16.msra.mxu0 0
    %5263 = vmatprep.subr.bf16.mxu0 0
    %5264 = vmatpush2.bf16.msra.mxu0 0
    %5265 = vmatprep.subr.bf16.mxu0 0
    %5266 = vmatpush2.bf16.msra.mxu0 0
    %5267 = vmatprep.subr.bf16.mxu0 0
    %5268 = vmatpush2.bf16.msra.mxu0 0
    %5269 = vmatprep.mubr.bf16.mxu0 0
    %5270 = vmatmul.mubr.bf16.gmra.mxu0 %v5044
    %v5271 = vpop.f32.mrf.mxu0
    %v5272 = vadd.f32 0.0, %v5271
    %v5273 = vpop.f32.mrf.mxu0
    %v5274 = vadd.f32 0.0, %v5273
    %v5275 = vpop.f32.mrf.mxu0
    %v5276 = vpop.f32.mrf.mxu0
    %5277 = vdwg.mxu0
    %5278 = vmatprep.subr.bf16.mxu0 %v5204
    %5279 = vmatpush1.bf16.msra.mxu0 %v5203
    %5280 = vmatprep.subr.bf16.mxu0 %v5200
    %5281 = vmatpush1.bf16.msra.mxu0 %v5199
    %5282 = vmatprep.subr.bf16.mxu0 %v5196
    %5283 = vmatpush1.bf16.msra.mxu0 %v5195
    %5284 = vmatprep.subr.bf16.mxu0 %v5192
    %5285 = vmatpush1.bf16.msra.mxu0 %v5191
    %5286 = vmatprep.subr.bf16.mxu0 %v5188
    %5287 = vmatpush1.bf16.msra.mxu0 %v5187
    %5288 = vmatprep.subr.bf16.mxu0 %v5184
    %5289 = vmatpush1.bf16.msra.mxu0 %v5183
    %5290 = vmatprep.subr.bf16.mxu0 %v5180
    %5291 = vmatpush1.bf16.msra.mxu0 %v5179
    %5292 = vmatprep.subr.bf16.mxu0 %v5176
    %5293 = vmatpush1.bf16.msra.mxu0 %v5175
    %5294 = vmatprep.subr.bf16.mxu0 0
    %5295 = vmatpush2.bf16.msra.mxu0 0
    %5296 = vmatprep.subr.bf16.mxu0 0
    %5297 = vmatpush2.bf16.msra.mxu0 0
    %5298 = vmatprep.subr.bf16.mxu0 0
    %5299 = vmatpush2.bf16.msra.mxu0 0
    %5300 = vmatprep.subr.bf16.mxu0 0
    %5301 = vmatpush2.bf16.msra.mxu0 0
    %5302 = vmatprep.subr.bf16.mxu0 0
    %5303 = vmatpush2.bf16.msra.mxu0 0
    %5304 = vmatprep.subr.bf16.mxu0 0
    %5305 = vmatpush2.bf16.msra.mxu0 0
    %5306 = vmatprep.subr.bf16.mxu0 0
    %5307 = vmatpush2.bf16.msra.mxu0 0
    %5308 = vmatprep.subr.bf16.mxu0 0
    %5309 = vmatpush2.bf16.msra.mxu0 0
    %5310 = vmatprep.mubr.bf16.mxu0 0
    %5311 = vmatmul.mubr.bf16.gmra.mxu0 %v5044
    %v5312 = vpop.f32.mrf.mxu0
    %v5313 = vadd.f32 0.0, %v5312
    %v5314 = vpop.f32.mrf.mxu0
    %v5315 = vadd.f32 0.0, %v5314
    %v5316 = vpop.f32.mrf.mxu0
    %v5317 = vpop.f32.mrf.mxu0
    %5318 = vdwg.mxu0
    %v5319 = vtanh.pop %v5272
    %v5320 = vtanh.pop %v5274
    %v5321 = vadd.f32 %v5313, %v5315
    %v5322 = vxor.u32 %v5321, 2147483648
    %v5323 = vmul.f32 %v5322, 1.442695
    %v5324 = vpow.pop %v5323
    %v5325 = vadd.f32 %v5324, 1.0
    %v5326 = vrcp.pop %v5325
    %v5327 = vmul.f32 1.0, %v5326
    %v5328 = vsub.f32 1.0, %v5327
    %v5329 = vmul.f32 %v5319, %v5328
    %v5330 = vmul.f32 %v5327, %v5320
    %v5331 = vadd.f32 %v5329, %v5330
    %v5332 = vtanh.pop %v5331
    %v5333 = vxor.u32 %v5331, 2147483648
    %v5334 = vmul.f32 %v5333, 1.442695
    %v5335 = vpow.pop %v5334
    %v5336 = vadd.f32 %v5335, 1.0
    %v5337 = vrcp.pop %v5336
    %v5338 = vmul.f32 1.0, %v5337
    %v5339 = vsel %vm49, %v5332, %v5338
    %s5340 = scalar_lea.vmem [#allocation7], 40
    %5341 = vst [vmem:[%s5340] sm:$0xff] %v5339
    %s5342 = scalar_lea.vmem [#allocation2], 48
    %v5343 = vld [vmem:[%s5342] sm:$0xff]
    %v5344 = vadd.f32 %v5343, %v4751
    %v5345 = vadd.f32 %v5344, %v48
    %v5346 = vpack.c.bf16 %v5345, %v5345
    %v5347 = vld [vmem:[#allocation5] sm:$0xff]
    %v5348 = vld [vmem:[#allocation5 + $0x8] sm:$0xff]
    %v5349 = vld [vmem:[#allocation5 + $0x10] sm:$0xff]
    %v5350 = vld [vmem:[#allocation5 + $0x18] sm:$0xff]
    %v5351 = vld [vmem:[#allocation5 + $0x20] sm:$0xff]
    %v5352 = vld [vmem:[#allocation5 + $0x28] sm:$0xff]
    %v5353 = vld [vmem:[#allocation5 + $0x30] sm:$0xff]
    %v5354 = vld [vmem:[#allocation5 + $0x38] sm:$0xff]
    %v5355 = vld [vmem:[#allocation5 + $0x40] sm:$0xff]
    %v5356 = vld [vmem:[#allocation5 + $0x48] sm:$0xff]
    %v5357 = vld [vmem:[#allocation5 + $0x50] sm:$0xff]
    %v5358 = vld [vmem:[#allocation5 + $0x58] sm:$0xff]
    %v5359 = vld [vmem:[#allocation5 + $0x60] sm:$0xff]
    %v5360 = vld [vmem:[#allocation5 + $0x68] sm:$0xff]
    %v5361 = vld [vmem:[#allocation5 + $0x70] sm:$0xff]
    %v5362 = vld [vmem:[#allocation5 + $0x78] sm:$0xff]
    %v5363 = vld [vmem:[#allocation5 + $0x80] sm:$0xff]
    %v5364 = vld [vmem:[#allocation5 + $0x88] sm:$0xff]
    %v5365 = vld [vmem:[#allocation5 + $0x90] sm:$0xff]
    %v5366 = vld [vmem:[#allocation5 + $0x98] sm:$0xff]
    %v5367 = vld [vmem:[#allocation5 + $0xa0] sm:$0xff]
    %v5368 = vld [vmem:[#allocation5 + $0xa8] sm:$0xff]
    %v5369 = vld [vmem:[#allocation5 + $0xb0] sm:$0xff]
    %v5370 = vld [vmem:[#allocation5 + $0xb8] sm:$0xff]
    %v5371 = vld [vmem:[#allocation5 + $0xc0] sm:$0xff]
    %v5372 = vld [vmem:[#allocation5 + $0xc8] sm:$0xff]
    %v5373 = vld [vmem:[#allocation5 + $0xd0] sm:$0xff]
    %v5374 = vld [vmem:[#allocation5 + $0xd8] sm:$0xff]
    %v5375 = vld [vmem:[#allocation5 + $0xe0] sm:$0xff]
    %v5376 = vld [vmem:[#allocation5 + $0xe8] sm:$0xff]
    %v5377 = vld [vmem:[#allocation5 + $0xf0] sm:$0xff]
    %v5378 = vld [vmem:[#allocation5 + $0xf8] sm:$0xff]
    %v5411 = vunpack.c.l.b16 %v5347
    %v5412 = vunpack.c.h.b16 %v5347
    %v5413 = vunpack.c.l.b16 %v5348
    %v5414 = vunpack.c.h.b16 %v5348
    %v5415 = vunpack.c.l.b16 %v5349
    %v5416 = vunpack.c.h.b16 %v5349
    %v5417 = vunpack.c.l.b16 %v5350
    %v5418 = vunpack.c.h.b16 %v5350
    %v5419 = vunpack.c.l.b16 %v5351
    %v5420 = vunpack.c.h.b16 %v5351
    %v5421 = vunpack.c.l.b16 %v5352
    %v5422 = vunpack.c.h.b16 %v5352
    %v5423 = vunpack.c.l.b16 %v5353
    %v5424 = vunpack.c.h.b16 %v5353
    %v5425 = vunpack.c.l.b16 %v5354
    %v5426 = vunpack.c.h.b16 %v5354
    %v5427 = vunpack.c.l.b16 %v5355
    %v5428 = vunpack.c.h.b16 %v5355
    %v5429 = vunpack.c.l.b16 %v5356
    %v5430 = vunpack.c.h.b16 %v5356
    %v5431 = vunpack.c.l.b16 %v5357
    %v5432 = vunpack.c.h.b16 %v5357
    %v5433 = vunpack.c.l.b16 %v5358
    %v5434 = vunpack.c.h.b16 %v5358
    %v5435 = vunpack.c.l.b16 %v5359
    %v5436 = vunpack.c.h.b16 %v5359
    %v5437 = vunpack.c.l.b16 %v5360
    %v5438 = vunpack.c.h.b16 %v5360
    %v5439 = vunpack.c.l.b16 %v5361
    %v5440 = vunpack.c.h.b16 %v5361
    %v5441 = vunpack.c.l.b16 %v5362
    %v5442 = vunpack.c.h.b16 %v5362
    %v5443 = vunpack.c.l.b16 %v5363
    %v5444 = vunpack.c.h.b16 %v5363
    %v5445 = vunpack.c.l.b16 %v5364
    %v5446 = vunpack.c.h.b16 %v5364
    %v5447 = vunpack.c.l.b16 %v5365
    %v5448 = vunpack.c.h.b16 %v5365
    %v5449 = vunpack.c.l.b16 %v5366
    %v5450 = vunpack.c.h.b16 %v5366
    %v5451 = vunpack.c.l.b16 %v5367
    %v5452 = vunpack.c.h.b16 %v5367
    %v5453 = vunpack.c.l.b16 %v5368
    %v5454 = vunpack.c.h.b16 %v5368
    %v5455 = vunpack.c.l.b16 %v5369
    %v5456 = vunpack.c.h.b16 %v5369
    %v5457 = vunpack.c.l.b16 %v5370
    %v5458 = vunpack.c.h.b16 %v5370
    %v5459 = vunpack.c.l.b16 %v5371
    %v5460 = vunpack.c.h.b16 %v5371
    %v5461 = vunpack.c.l.b16 %v5372
    %v5462 = vunpack.c.h.b16 %v5372
    %v5463 = vunpack.c.l.b16 %v5373
    %v5464 = vunpack.c.h.b16 %v5373
    %v5465 = vunpack.c.l.b16 %v5374
    %v5466 = vunpack.c.h.b16 %v5374
    %v5467 = vunpack.c.l.b16 %v5375
    %v5468 = vunpack.c.h.b16 %v5375
    %v5469 = vunpack.c.l.b16 %v5376
    %v5470 = vunpack.c.h.b16 %v5376
    %v5471 = vunpack.c.l.b16 %v5377
    %v5472 = vunpack.c.h.b16 %v5377
    %v5473 = vunpack.c.l.b16 %v5378
    %v5474 = vunpack.c.h.b16 %v5378
    %v5475 = vpack.c.b16 %v5415, %v5411
    %v5476 = vpack.c.b16 %v5416, %v5412
    %v5477 = vpack.c.b16 %v5417, %v5413
    %v5478 = vpack.c.b16 %v5418, %v5414
    %v5479 = vpack.c.b16 %v5423, %v5419
    %v5480 = vpack.c.b16 %v5424, %v5420
    %v5481 = vpack.c.b16 %v5425, %v5421
    %v5482 = vpack.c.b16 %v5426, %v5422
    %v5483 = vpack.c.b16 %v5431, %v5427
    %v5484 = vpack.c.b16 %v5432, %v5428
    %v5485 = vpack.c.b16 %v5433, %v5429
    %v5486 = vpack.c.b16 %v5434, %v5430
    %v5487 = vpack.c.b16 %v5439, %v5435
    %v5488 = vpack.c.b16 %v5440, %v5436
    %v5489 = vpack.c.b16 %v5441, %v5437
    %v5490 = vpack.c.b16 %v5442, %v5438
    %v5491 = vpack.c.b16 %v5447, %v5443
    %v5492 = vpack.c.b16 %v5448, %v5444
    %v5493 = vpack.c.b16 %v5449, %v5445
    %v5494 = vpack.c.b16 %v5450, %v5446
    %v5495 = vpack.c.b16 %v5455, %v5451
    %v5496 = vpack.c.b16 %v5456, %v5452
    %v5497 = vpack.c.b16 %v5457, %v5453
    %v5498 = vpack.c.b16 %v5458, %v5454
    %v5499 = vpack.c.b16 %v5463, %v5459
    %v5500 = vpack.c.b16 %v5464, %v5460
    %v5501 = vpack.c.b16 %v5465, %v5461
    %v5502 = vpack.c.b16 %v5466, %v5462
    %v5503 = vpack.c.b16 %v5471, %v5467
    %v5504 = vpack.c.b16 %v5472, %v5468
    %v5505 = vpack.c.b16 %v5473, %v5469
    %v5506 = vpack.c.b16 %v5474, %v5470
    %5539 = vmatprep.subr.bf16.mxu0 %v5504
    %5540 = vmatpush1.bf16.msra.mxu0 %v5503
    %5541 = vmatprep.subr.bf16.mxu0 %v5500
    %5542 = vmatpush1.bf16.msra.mxu0 %v5499
    %5543 = vmatprep.subr.bf16.mxu0 %v5496
    %5544 = vmatpush1.bf16.msra.mxu0 %v5495
    %5545 = vmatprep.subr.bf16.mxu0 %v5492
    %5546 = vmatpush1.bf16.msra.mxu0 %v5491
    %5547 = vmatprep.subr.bf16.mxu0 %v5488
    %5548 = vmatpush1.bf16.msra.mxu0 %v5487
    %5549 = vmatprep.subr.bf16.mxu0 %v5484
    %5550 = vmatpush1.bf16.msra.mxu0 %v5483
    %5551 = vmatprep.subr.bf16.mxu0 %v5480
    %5552 = vmatpush1.bf16.msra.mxu0 %v5479
    %5553 = vmatprep.subr.bf16.mxu0 %v5476
    %5554 = vmatpush1.bf16.msra.mxu0 %v5475
    %5555 = vmatprep.subr.bf16.mxu0 0
    %5556 = vmatpush2.bf16.msra.mxu0 0
    %5557 = vmatprep.subr.bf16.mxu0 0
    %5558 = vmatpush2.bf16.msra.mxu0 0
    %5559 = vmatprep.subr.bf16.mxu0 0
    %5560 = vmatpush2.bf16.msra.mxu0 0
    %5561 = vmatprep.subr.bf16.mxu0 0
    %5562 = vmatpush2.bf16.msra.mxu0 0
    %5563 = vmatprep.subr.bf16.mxu0 0
    %5564 = vmatpush2.bf16.msra.mxu0 0
    %5565 = vmatprep.subr.bf16.mxu0 0
    %5566 = vmatpush2.bf16.msra.mxu0 0
    %5567 = vmatprep.subr.bf16.mxu0 0
    %5568 = vmatpush2.bf16.msra.mxu0 0
    %5569 = vmatprep.subr.bf16.mxu0 0
    %5570 = vmatpush2.bf16.msra.mxu0 0
    %5571 = vmatprep.mubr.bf16.mxu0 0
    %5572 = vmatmul.mubr.bf16.gmra.mxu0 %v5346
    %v5573 = vpop.f32.mrf.mxu0
    %v5574 = vadd.f32 0.0, %v5573
    %v5575 = vpop.f32.mrf.mxu0
    %v5576 = vadd.f32 0.0, %v5575
    %v5577 = vpop.f32.mrf.mxu0
    %v5578 = vpop.f32.mrf.mxu0
    %5579 = vdwg.mxu0
    %5580 = vmatprep.subr.bf16.mxu0 %v5506
    %5581 = vmatpush1.bf16.msra.mxu0 %v5505
    %5582 = vmatprep.subr.bf16.mxu0 %v5502
    %5583 = vmatpush1.bf16.msra.mxu0 %v5501
    %5584 = vmatprep.subr.bf16.mxu0 %v5498
    %5585 = vmatpush1.bf16.msra.mxu0 %v5497
    %5586 = vmatprep.subr.bf16.mxu0 %v5494
    %5587 = vmatpush1.bf16.msra.mxu0 %v5493
    %5588 = vmatprep.subr.bf16.mxu0 %v5490
    %5589 = vmatpush1.bf16.msra.mxu0 %v5489
    %5590 = vmatprep.subr.bf16.mxu0 %v5486
    %5591 = vmatpush1.bf16.msra.mxu0 %v5485
    %5592 = vmatprep.subr.bf16.mxu0 %v5482
    %5593 = vmatpush1.bf16.msra.mxu0 %v5481
    %5594 = vmatprep.subr.bf16.mxu0 %v5478
    %5595 = vmatpush1.bf16.msra.mxu0 %v5477
    %5596 = vmatprep.subr.bf16.mxu0 0
    %5597 = vmatpush2.bf16.msra.mxu0 0
    %5598 = vmatprep.subr.bf16.mxu0 0
    %5599 = vmatpush2.bf16.msra.mxu0 0
    %5600 = vmatprep.subr.bf16.mxu0 0
    %5601 = vmatpush2.bf16.msra.mxu0 0
    %5602 = vmatprep.subr.bf16.mxu0 0
    %5603 = vmatpush2.bf16.msra.mxu0 0
    %5604 = vmatprep.subr.bf16.mxu0 0
    %5605 = vmatpush2.bf16.msra.mxu0 0
    %5606 = vmatprep.subr.bf16.mxu0 0
    %5607 = vmatpush2.bf16.msra.mxu0 0
    %5608 = vmatprep.subr.bf16.mxu0 0
    %5609 = vmatpush2.bf16.msra.mxu0 0
    %5610 = vmatprep.subr.bf16.mxu0 0
    %5611 = vmatpush2.bf16.msra.mxu0 0
    %5612 = vmatprep.mubr.bf16.mxu0 0
    %5613 = vmatmul.mubr.bf16.gmra.mxu0 %v5346
    %v5614 = vpop.f32.mrf.mxu0
    %v5615 = vadd.f32 0.0, %v5614
    %v5616 = vpop.f32.mrf.mxu0
    %v5617 = vadd.f32 0.0, %v5616
    %v5618 = vpop.f32.mrf.mxu0
    %v5619 = vpop.f32.mrf.mxu0
    %5620 = vdwg.mxu0
    %v5621 = vtanh.pop %v5574
    %v5622 = vtanh.pop %v5576
    %v5623 = vadd.f32 %v5615, %v5617
    %v5624 = vxor.u32 %v5623, 2147483648
    %v5625 = vmul.f32 %v5624, 1.442695
    %v5626 = vpow.pop %v5625
    %v5627 = vadd.f32 %v5626, 1.0
    %v5628 = vrcp.pop %v5627
    %v5629 = vmul.f32 1.0, %v5628
    %v5630 = vsub.f32 1.0, %v5629
    %v5631 = vmul.f32 %v5621, %v5630
    %v5632 = vmul.f32 %v5629, %v5622
    %v5633 = vadd.f32 %v5631, %v5632
    %v5634 = vadd.f32 %v5633, %v5041
    %v5635 = vadd.f32 %v5634, %v48
    %v5636 = vpack.c.bf16 %v5635, %v5635
    %v5637 = vld [vmem:[%s344] sm:$0xff]
    %v5638 = vld [vmem:[%s344 + $0x8] sm:$0xff]
    %v5639 = vld [vmem:[%s344 + $0x10] sm:$0xff]
    %v5640 = vld [vmem:[%s344 + $0x18] sm:$0xff]
    %v5641 = vld [vmem:[%s344 + $0x20] sm:$0xff]
    %v5642 = vld [vmem:[%s344 + $0x28] sm:$0xff]
    %v5643 = vld [vmem:[%s344 + $0x30] sm:$0xff]
    %v5644 = vld [vmem:[%s344 + $0x38] sm:$0xff]
    %v5645 = vld [vmem:[%s344 + $0x40] sm:$0xff]
    %v5646 = vld [vmem:[%s344 + $0x48] sm:$0xff]
    %v5647 = vld [vmem:[%s344 + $0x50] sm:$0xff]
    %v5648 = vld [vmem:[%s344 + $0x58] sm:$0xff]
    %v5649 = vld [vmem:[%s344 + $0x60] sm:$0xff]
    %v5650 = vld [vmem:[%s344 + $0x68] sm:$0xff]
    %v5651 = vld [vmem:[%s344 + $0x70] sm:$0xff]
    %v5652 = vld [vmem:[%s344 + $0x78] sm:$0xff]
    %v5653 = vld [vmem:[%s344 + $0x80] sm:$0xff]
    %v5654 = vld [vmem:[%s344 + $0x88] sm:$0xff]
    %v5655 = vld [vmem:[%s344 + $0x90] sm:$0xff]
    %v5656 = vld [vmem:[%s344 + $0x98] sm:$0xff]
    %v5657 = vld [vmem:[%s344 + $0xa0] sm:$0xff]
    %v5658 = vld [vmem:[%s344 + $0xa8] sm:$0xff]
    %v5659 = vld [vmem:[%s344 + $0xb0] sm:$0xff]
    %v5660 = vld [vmem:[%s344 + $0xb8] sm:$0xff]
    %v5661 = vld [vmem:[%s344 + $0xc0] sm:$0xff]
    %v5662 = vld [vmem:[%s344 + $0xc8] sm:$0xff]
    %v5663 = vld [vmem:[%s344 + $0xd0] sm:$0xff]
    %v5664 = vld [vmem:[%s344 + $0xd8] sm:$0xff]
    %v5665 = vld [vmem:[%s344 + $0xe0] sm:$0xff]
    %v5666 = vld [vmem:[%s344 + $0xe8] sm:$0xff]
    %v5667 = vld [vmem:[%s344 + $0xf0] sm:$0xff]
    %v5668 = vld [vmem:[%s344 + $0xf8] sm:$0xff]
    %v5701 = vunpack.c.l.b16 %v5637
    %v5702 = vunpack.c.h.b16 %v5637
    %v5703 = vunpack.c.l.b16 %v5638
    %v5704 = vunpack.c.h.b16 %v5638
    %v5705 = vunpack.c.l.b16 %v5639
    %v5706 = vunpack.c.h.b16 %v5639
    %v5707 = vunpack.c.l.b16 %v5640
    %v5708 = vunpack.c.h.b16 %v5640
    %v5709 = vunpack.c.l.b16 %v5641
    %v5710 = vunpack.c.h.b16 %v5641
    %v5711 = vunpack.c.l.b16 %v5642
    %v5712 = vunpack.c.h.b16 %v5642
    %v5713 = vunpack.c.l.b16 %v5643
    %v5714 = vunpack.c.h.b16 %v5643
    %v5715 = vunpack.c.l.b16 %v5644
    %v5716 = vunpack.c.h.b16 %v5644
    %v5717 = vunpack.c.l.b16 %v5645
    %v5718 = vunpack.c.h.b16 %v5645
    %v5719 = vunpack.c.l.b16 %v5646
    %v5720 = vunpack.c.h.b16 %v5646
    %v5721 = vunpack.c.l.b16 %v5647
    %v5722 = vunpack.c.h.b16 %v5647
    %v5723 = vunpack.c.l.b16 %v5648
    %v5724 = vunpack.c.h.b16 %v5648
    %v5725 = vunpack.c.l.b16 %v5649
    %v5726 = vunpack.c.h.b16 %v5649
    %v5727 = vunpack.c.l.b16 %v5650
    %v5728 = vunpack.c.h.b16 %v5650
    %v5729 = vunpack.c.l.b16 %v5651
    %v5730 = vunpack.c.h.b16 %v5651
    %v5731 = vunpack.c.l.b16 %v5652
    %v5732 = vunpack.c.h.b16 %v5652
    %v5733 = vunpack.c.l.b16 %v5653
    %v5734 = vunpack.c.h.b16 %v5653
    %v5735 = vunpack.c.l.b16 %v5654
    %v5736 = vunpack.c.h.b16 %v5654
    %v5737 = vunpack.c.l.b16 %v5655
    %v5738 = vunpack.c.h.b16 %v5655
    %v5739 = vunpack.c.l.b16 %v5656
    %v5740 = vunpack.c.h.b16 %v5656
    %v5741 = vunpack.c.l.b16 %v5657
    %v5742 = vunpack.c.h.b16 %v5657
    %v5743 = vunpack.c.l.b16 %v5658
    %v5744 = vunpack.c.h.b16 %v5658
    %v5745 = vunpack.c.l.b16 %v5659
    %v5746 = vunpack.c.h.b16 %v5659
    %v5747 = vunpack.c.l.b16 %v5660
    %v5748 = vunpack.c.h.b16 %v5660
    %v5749 = vunpack.c.l.b16 %v5661
    %v5750 = vunpack.c.h.b16 %v5661
    %v5751 = vunpack.c.l.b16 %v5662
    %v5752 = vunpack.c.h.b16 %v5662
    %v5753 = vunpack.c.l.b16 %v5663
    %v5754 = vunpack.c.h.b16 %v5663
    %v5755 = vunpack.c.l.b16 %v5664
    %v5756 = vunpack.c.h.b16 %v5664
    %v5757 = vunpack.c.l.b16 %v5665
    %v5758 = vunpack.c.h.b16 %v5665
    %v5759 = vunpack.c.l.b16 %v5666
    %v5760 = vunpack.c.h.b16 %v5666
    %v5761 = vunpack.c.l.b16 %v5667
    %v5762 = vunpack.c.h.b16 %v5667
    %v5763 = vunpack.c.l.b16 %v5668
    %v5764 = vunpack.c.h.b16 %v5668
    %v5765 = vpack.c.b16 %v5705, %v5701
    %v5766 = vpack.c.b16 %v5706, %v5702
    %v5767 = vpack.c.b16 %v5707, %v5703
    %v5768 = vpack.c.b16 %v5708, %v5704
    %v5769 = vpack.c.b16 %v5713, %v5709
    %v5770 = vpack.c.b16 %v5714, %v5710
    %v5771 = vpack.c.b16 %v5715, %v5711
    %v5772 = vpack.c.b16 %v5716, %v5712
    %v5773 = vpack.c.b16 %v5721, %v5717
    %v5774 = vpack.c.b16 %v5722, %v5718
    %v5775 = vpack.c.b16 %v5723, %v5719
    %v5776 = vpack.c.b16 %v5724, %v5720
    %v5777 = vpack.c.b16 %v5729, %v5725
    %v5778 = vpack.c.b16 %v5730, %v5726
    %v5779 = vpack.c.b16 %v5731, %v5727
    %v5780 = vpack.c.b16 %v5732, %v5728
    %v5781 = vpack.c.b16 %v5737, %v5733
    %v5782 = vpack.c.b16 %v5738, %v5734
    %v5783 = vpack.c.b16 %v5739, %v5735
    %v5784 = vpack.c.b16 %v5740, %v5736
    %v5785 = vpack.c.b16 %v5745, %v5741
    %v5786 = vpack.c.b16 %v5746, %v5742
    %v5787 = vpack.c.b16 %v5747, %v5743
    %v5788 = vpack.c.b16 %v5748, %v5744
    %v5789 = vpack.c.b16 %v5753, %v5749
    %v5790 = vpack.c.b16 %v5754, %v5750
    %v5791 = vpack.c.b16 %v5755, %v5751
    %v5792 = vpack.c.b16 %v5756, %v5752
    %v5793 = vpack.c.b16 %v5761, %v5757
    %v5794 = vpack.c.b16 %v5762, %v5758
    %v5795 = vpack.c.b16 %v5763, %v5759
    %v5796 = vpack.c.b16 %v5764, %v5760
    %5829 = vmatprep.subr.bf16.mxu0 %v5794
    %5830 = vmatpush1.bf16.msra.mxu0 %v5793
    %5831 = vmatprep.subr.bf16.mxu0 %v5790
    %5832 = vmatpush1.bf16.msra.mxu0 %v5789
    %5833 = vmatprep.subr.bf16.mxu0 %v5786
    %5834 = vmatpush1.bf16.msra.mxu0 %v5785
    %5835 = vmatprep.subr.bf16.mxu0 %v5782
    %5836 = vmatpush1.bf16.msra.mxu0 %v5781
    %5837 = vmatprep.subr.bf16.mxu0 %v5778
    %5838 = vmatpush1.bf16.msra.mxu0 %v5777
    %5839 = vmatprep.subr.bf16.mxu0 %v5774
    %5840 = vmatpush1.bf16.msra.mxu0 %v5773
    %5841 = vmatprep.subr.bf16.mxu0 %v5770
    %5842 = vmatpush1.bf16.msra.mxu0 %v5769
    %5843 = vmatprep.subr.bf16.mxu0 %v5766
    %5844 = vmatpush1.bf16.msra.mxu0 %v5765
    %5845 = vmatprep.subr.bf16.mxu0 0
    %5846 = vmatpush2.bf16.msra.mxu0 0
    %5847 = vmatprep.subr.bf16.mxu0 0
    %5848 = vmatpush2.bf16.msra.mxu0 0
    %5849 = vmatprep.subr.bf16.mxu0 0
    %5850 = vmatpush2.bf16.msra.mxu0 0
    %5851 = vmatprep.subr.bf16.mxu0 0
    %5852 = vmatpush2.bf16.msra.mxu0 0
    %5853 = vmatprep.subr.bf16.mxu0 0
    %5854 = vmatpush2.bf16.msra.mxu0 0
    %5855 = vmatprep.subr.bf16.mxu0 0
    %5856 = vmatpush2.bf16.msra.mxu0 0
    %5857 = vmatprep.subr.bf16.mxu0 0
    %5858 = vmatpush2.bf16.msra.mxu0 0
    %5859 = vmatprep.subr.bf16.mxu0 0
    %5860 = vmatpush2.bf16.msra.mxu0 0
    %5861 = vmatprep.mubr.bf16.mxu0 0
    %5862 = vmatmul.mubr.bf16.gmra.mxu0 %v5636
    %v5863 = vpop.f32.mrf.mxu0
    %v5864 = vadd.f32 0.0, %v5863
    %v5865 = vpop.f32.mrf.mxu0
    %v5866 = vadd.f32 0.0, %v5865
    %v5867 = vpop.f32.mrf.mxu0
    %v5868 = vpop.f32.mrf.mxu0
    %5869 = vdwg.mxu0
    %5870 = vmatprep.subr.bf16.mxu0 %v5796
    %5871 = vmatpush1.bf16.msra.mxu0 %v5795
    %5872 = vmatprep.subr.bf16.mxu0 %v5792
    %5873 = vmatpush1.bf16.msra.mxu0 %v5791
    %5874 = vmatprep.subr.bf16.mxu0 %v5788
    %5875 = vmatpush1.bf16.msra.mxu0 %v5787
    %5876 = vmatprep.subr.bf16.mxu0 %v5784
    %5877 = vmatpush1.bf16.msra.mxu0 %v5783
    %5878 = vmatprep.subr.bf16.mxu0 %v5780
    %5879 = vmatpush1.bf16.msra.mxu0 %v5779
    %5880 = vmatprep.subr.bf16.mxu0 %v5776
    %5881 = vmatpush1.bf16.msra.mxu0 %v5775
    %5882 = vmatprep.subr.bf16.mxu0 %v5772
    %5883 = vmatpush1.bf16.msra.mxu0 %v5771
    %5884 = vmatprep.subr.bf16.mxu0 %v5768
    %5885 = vmatpush1.bf16.msra.mxu0 %v5767
    %5886 = vmatprep.subr.bf16.mxu0 0
    %5887 = vmatpush2.bf16.msra.mxu0 0
    %5888 = vmatprep.subr.bf16.mxu0 0
    %5889 = vmatpush2.bf16.msra.mxu0 0
    %5890 = vmatprep.subr.bf16.mxu0 0
    %5891 = vmatpush2.bf16.msra.mxu0 0
    %5892 = vmatprep.subr.bf16.mxu0 0
    %5893 = vmatpush2.bf16.msra.mxu0 0
    %5894 = vmatprep.subr.bf16.mxu0 0
    %5895 = vmatpush2.bf16.msra.mxu0 0
    %5896 = vmatprep.subr.bf16.mxu0 0
    %5897 = vmatpush2.bf16.msra.mxu0 0
    %5898 = vmatprep.subr.bf16.mxu0 0
    %5899 = vmatpush2.bf16.msra.mxu0 0
    %5900 = vmatprep.subr.bf16.mxu0 0
    %5901 = vmatpush2.bf16.msra.mxu0 0
    %5902 = vmatprep.mubr.bf16.mxu0 0
    %5903 = vmatmul.mubr.bf16.gmra.mxu0 %v5636
    %v5904 = vpop.f32.mrf.mxu0
    %v5905 = vadd.f32 0.0, %v5904
    %v5906 = vpop.f32.mrf.mxu0
    %v5907 = vadd.f32 0.0, %v5906
    %v5908 = vpop.f32.mrf.mxu0
    %v5909 = vpop.f32.mrf.mxu0
    %5910 = vdwg.mxu0
    %v5911 = vtanh.pop %v5864
    %v5912 = vtanh.pop %v5866
    %v5913 = vadd.f32 %v5905, %v5907
    %v5914 = vxor.u32 %v5913, 2147483648
    %v5915 = vmul.f32 %v5914, 1.442695
    %v5916 = vpow.pop %v5915
    %v5917 = vadd.f32 %v5916, 1.0
    %v5918 = vrcp.pop %v5917
    %v5919 = vmul.f32 1.0, %v5918
    %v5920 = vsub.f32 1.0, %v5919
    %v5921 = vmul.f32 %v5911, %v5920
    %v5922 = vmul.f32 %v5919, %v5912
    %v5923 = vadd.f32 %v5921, %v5922
    %v5924 = vadd.f32 %v5923, %v5331
    %v5925 = vadd.f32 %v5924, %v48
    %v5926 = vpack.c.bf16 %v5925, %v5925
    %v5927 = vld [vmem:[%s635] sm:$0xff]
    %v5928 = vld [vmem:[%s635 + $0x8] sm:$0xff]
    %v5929 = vld [vmem:[%s635 + $0x10] sm:$0xff]
    %v5930 = vld [vmem:[%s635 + $0x18] sm:$0xff]
    %v5931 = vld [vmem:[%s635 + $0x20] sm:$0xff]
    %v5932 = vld [vmem:[%s635 + $0x28] sm:$0xff]
    %v5933 = vld [vmem:[%s635 + $0x30] sm:$0xff]
    %v5934 = vld [vmem:[%s635 + $0x38] sm:$0xff]
    %v5935 = vld [vmem:[%s635 + $0x40] sm:$0xff]
    %v5936 = vld [vmem:[%s635 + $0x48] sm:$0xff]
    %v5937 = vld [vmem:[%s635 + $0x50] sm:$0xff]
    %v5938 = vld [vmem:[%s635 + $0x58] sm:$0xff]
    %v5939 = vld [vmem:[%s635 + $0x60] sm:$0xff]
    %v5940 = vld [vmem:[%s635 + $0x68] sm:$0xff]
    %v5941 = vld [vmem:[%s635 + $0x70] sm:$0xff]
    %v5942 = vld [vmem:[%s635 + $0x78] sm:$0xff]
    %v5943 = vld [vmem:[%s635 + $0x80] sm:$0xff]
    %v5944 = vld [vmem:[%s635 + $0x88] sm:$0xff]
    %v5945 = vld [vmem:[%s635 + $0x90] sm:$0xff]
    %v5946 = vld [vmem:[%s635 + $0x98] sm:$0xff]
    %v5947 = vld [vmem:[%s635 + $0xa0] sm:$0xff]
    %v5948 = vld [vmem:[%s635 + $0xa8] sm:$0xff]
    %v5949 = vld [vmem:[%s635 + $0xb0] sm:$0xff]
    %v5950 = vld [vmem:[%s635 + $0xb8] sm:$0xff]
    %v5951 = vld [vmem:[%s635 + $0xc0] sm:$0xff]
    %v5952 = vld [vmem:[%s635 + $0xc8] sm:$0xff]
    %v5953 = vld [vmem:[%s635 + $0xd0] sm:$0xff]
    %v5954 = vld [vmem:[%s635 + $0xd8] sm:$0xff]
    %v5955 = vld [vmem:[%s635 + $0xe0] sm:$0xff]
    %v5956 = vld [vmem:[%s635 + $0xe8] sm:$0xff]
    %v5957 = vld [vmem:[%s635 + $0xf0] sm:$0xff]
    %v5958 = vld [vmem:[%s635 + $0xf8] sm:$0xff]
    %v5991 = vunpack.c.l.b16 %v5927
    %v5992 = vunpack.c.h.b16 %v5927
    %v5993 = vunpack.c.l.b16 %v5928
    %v5994 = vunpack.c.h.b16 %v5928
    %v5995 = vunpack.c.l.b16 %v5929
    %v5996 = vunpack.c.h.b16 %v5929
    %v5997 = vunpack.c.l.b16 %v5930
    %v5998 = vunpack.c.h.b16 %v5930
    %v5999 = vunpack.c.l.b16 %v5931
    %v6000 = vunpack.c.h.b16 %v5931
    %v6001 = vunpack.c.l.b16 %v5932
    %v6002 = vunpack.c.h.b16 %v5932
    %v6003 = vunpack.c.l.b16 %v5933
    %v6004 = vunpack.c.h.b16 %v5933
    %v6005 = vunpack.c.l.b16 %v5934
    %v6006 = vunpack.c.h.b16 %v5934
    %v6007 = vunpack.c.l.b16 %v5935
    %v6008 = vunpack.c.h.b16 %v5935
    %v6009 = vunpack.c.l.b16 %v5936
    %v6010 = vunpack.c.h.b16 %v5936
    %v6011 = vunpack.c.l.b16 %v5937
    %v6012 = vunpack.c.h.b16 %v5937
    %v6013 = vunpack.c.l.b16 %v5938
    %v6014 = vunpack.c.h.b16 %v5938
    %v6015 = vunpack.c.l.b16 %v5939
    %v6016 = vunpack.c.h.b16 %v5939
    %v6017 = vunpack.c.l.b16 %v5940
    %v6018 = vunpack.c.h.b16 %v5940
    %v6019 = vunpack.c.l.b16 %v5941
    %v6020 = vunpack.c.h.b16 %v5941
    %v6021 = vunpack.c.l.b16 %v5942
    %v6022 = vunpack.c.h.b16 %v5942
    %v6023 = vunpack.c.l.b16 %v5943
    %v6024 = vunpack.c.h.b16 %v5943
    %v6025 = vunpack.c.l.b16 %v5944
    %v6026 = vunpack.c.h.b16 %v5944
    %v6027 = vunpack.c.l.b16 %v5945
    %v6028 = vunpack.c.h.b16 %v5945
    %v6029 = vunpack.c.l.b16 %v5946
    %v6030 = vunpack.c.h.b16 %v5946
    %v6031 = vunpack.c.l.b16 %v5947
    %v6032 = vunpack.c.h.b16 %v5947
    %v6033 = vunpack.c.l.b16 %v5948
    %v6034 = vunpack.c.h.b16 %v5948
    %v6035 = vunpack.c.l.b16 %v5949
    %v6036 = vunpack.c.h.b16 %v5949
    %v6037 = vunpack.c.l.b16 %v5950
    %v6038 = vunpack.c.h.b16 %v5950
    %v6039 = vunpack.c.l.b16 %v5951
    %v6040 = vunpack.c.h.b16 %v5951
    %v6041 = vunpack.c.l.b16 %v5952
    %v6042 = vunpack.c.h.b16 %v5952
    %v6043 = vunpack.c.l.b16 %v5953
    %v6044 = vunpack.c.h.b16 %v5953
    %v6045 = vunpack.c.l.b16 %v5954
    %v6046 = vunpack.c.h.b16 %v5954
    %v6047 = vunpack.c.l.b16 %v5955
    %v6048 = vunpack.c.h.b16 %v5955
    %v6049 = vunpack.c.l.b16 %v5956
    %v6050 = vunpack.c.h.b16 %v5956
    %v6051 = vunpack.c.l.b16 %v5957
    %v6052 = vunpack.c.h.b16 %v5957
    %v6053 = vunpack.c.l.b16 %v5958
    %v6054 = vunpack.c.h.b16 %v5958
    %v6055 = vpack.c.b16 %v5995, %v5991
    %v6056 = vpack.c.b16 %v5996, %v5992
    %v6057 = vpack.c.b16 %v5997, %v5993
    %v6058 = vpack.c.b16 %v5998, %v5994
    %v6059 = vpack.c.b16 %v6003, %v5999
    %v6060 = vpack.c.b16 %v6004, %v6000
    %v6061 = vpack.c.b16 %v6005, %v6001
    %v6062 = vpack.c.b16 %v6006, %v6002
    %v6063 = vpack.c.b16 %v6011, %v6007
    %v6064 = vpack.c.b16 %v6012, %v6008
    %v6065 = vpack.c.b16 %v6013, %v6009
    %v6066 = vpack.c.b16 %v6014, %v6010
    %v6067 = vpack.c.b16 %v6019, %v6015
    %v6068 = vpack.c.b16 %v6020, %v6016
    %v6069 = vpack.c.b16 %v6021, %v6017
    %v6070 = vpack.c.b16 %v6022, %v6018
    %v6071 = vpack.c.b16 %v6027, %v6023
    %v6072 = vpack.c.b16 %v6028, %v6024
    %v6073 = vpack.c.b16 %v6029, %v6025
    %v6074 = vpack.c.b16 %v6030, %v6026
    %v6075 = vpack.c.b16 %v6035, %v6031
    %v6076 = vpack.c.b16 %v6036, %v6032
    %v6077 = vpack.c.b16 %v6037, %v6033
    %v6078 = vpack.c.b16 %v6038, %v6034
    %v6079 = vpack.c.b16 %v6043, %v6039
    %v6080 = vpack.c.b16 %v6044, %v6040
    %v6081 = vpack.c.b16 %v6045, %v6041
    %v6082 = vpack.c.b16 %v6046, %v6042
    %v6083 = vpack.c.b16 %v6051, %v6047
    %v6084 = vpack.c.b16 %v6052, %v6048
    %v6085 = vpack.c.b16 %v6053, %v6049
    %v6086 = vpack.c.b16 %v6054, %v6050
    %6119 = vmatprep.subr.bf16.mxu0 %v6084
    %6120 = vmatpush1.bf16.msra.mxu0 %v6083
    %6121 = vmatprep.subr.bf16.mxu0 %v6080
    %6122 = vmatpush1.bf16.msra.mxu0 %v6079
    %6123 = vmatprep.subr.bf16.mxu0 %v6076
    %6124 = vmatpush1.bf16.msra.mxu0 %v6075
    %6125 = vmatprep.subr.bf16.mxu0 %v6072
    %6126 = vmatpush1.bf16.msra.mxu0 %v6071
    %6127 = vmatprep.subr.bf16.mxu0 %v6068
    %6128 = vmatpush1.bf16.msra.mxu0 %v6067
    %6129 = vmatprep.subr.bf16.mxu0 %v6064
    %6130 = vmatpush1.bf16.msra.mxu0 %v6063
    %6131 = vmatprep.subr.bf16.mxu0 %v6060
    %6132 = vmatpush1.bf16.msra.mxu0 %v6059
    %6133 = vmatprep.subr.bf16.mxu0 %v6056
    %6134 = vmatpush1.bf16.msra.mxu0 %v6055
    %6135 = vmatprep.subr.bf16.mxu0 0
    %6136 = vmatpush2.bf16.msra.mxu0 0
    %6137 = vmatprep.subr.bf16.mxu0 0
    %6138 = vmatpush2.bf16.msra.mxu0 0
    %6139 = vmatprep.subr.bf16.mxu0 0
    %6140 = vmatpush2.bf16.msra.mxu0 0
    %6141 = vmatprep.subr.bf16.mxu0 0
    %6142 = vmatpush2.bf16.msra.mxu0 0
    %6143 = vmatprep.subr.bf16.mxu0 0
    %6144 = vmatpush2.bf16.msra.mxu0 0
    %6145 = vmatprep.subr.bf16.mxu0 0
    %6146 = vmatpush2.bf16.msra.mxu0 0
    %6147 = vmatprep.subr.bf16.mxu0 0
    %6148 = vmatpush2.bf16.msra.mxu0 0
    %6149 = vmatprep.subr.bf16.mxu0 0
    %6150 = vmatpush2.bf16.msra.mxu0 0
    %6151 = vmatprep.mubr.bf16.mxu0 0
    %6152 = vmatmul.mubr.bf16.gmra.mxu0 %v5926
    %v6153 = vpop.f32.mrf.mxu0
    %v6154 = vadd.f32 0.0, %v6153
    %v6155 = vpop.f32.mrf.mxu0
    %v6156 = vadd.f32 0.0, %v6155
    %v6157 = vpop.f32.mrf.mxu0
    %v6158 = vpop.f32.mrf.mxu0
    %6159 = vdwg.mxu0
    %6160 = vmatprep.subr.bf16.mxu0 %v6086
    %6161 = vmatpush1.bf16.msra.mxu0 %v6085
    %6162 = vmatprep.subr.bf16.mxu0 %v6082
    %6163 = vmatpush1.bf16.msra.mxu0 %v6081
    %6164 = vmatprep.subr.bf16.mxu0 %v6078
    %6165 = vmatpush1.bf16.msra.mxu0 %v6077
    %6166 = vmatprep.subr.bf16.mxu0 %v6074
    %6167 = vmatpush1.bf16.msra.mxu0 %v6073
    %6168 = vmatprep.subr.bf16.mxu0 %v6070
    %6169 = vmatpush1.bf16.msra.mxu0 %v6069
    %6170 = vmatprep.subr.bf16.mxu0 %v6066
    %6171 = vmatpush1.bf16.msra.mxu0 %v6065
    %6172 = vmatprep.subr.bf16.mxu0 %v6062
    %6173 = vmatpush1.bf16.msra.mxu0 %v6061
    %6174 = vmatprep.subr.bf16.mxu0 %v6058
    %6175 = vmatpush1.bf16.msra.mxu0 %v6057
    %6176 = vmatprep.subr.bf16.mxu0 0
    %6177 = vmatpush2.bf16.msra.mxu0 0
    %6178 = vmatprep.subr.bf16.mxu0 0
    %6179 = vmatpush2.bf16.msra.mxu0 0
    %6180 = vmatprep.subr.bf16.mxu0 0
    %6181 = vmatpush2.bf16.msra.mxu0 0
    %6182 = vmatprep.subr.bf16.mxu0 0
    %6183 = vmatpush2.bf16.msra.mxu0 0
    %6184 = vmatprep.subr.bf16.mxu0 0
    %6185 = vmatpush2.bf16.msra.mxu0 0
    %6186 = vmatprep.subr.bf16.mxu0 0
    %6187 = vmatpush2.bf16.msra.mxu0 0
    %6188 = vmatprep.subr.bf16.mxu0 0
    %6189 = vmatpush2.bf16.msra.mxu0 0
    %6190 = vmatprep.subr.bf16.mxu0 0
    %6191 = vmatpush2.bf16.msra.mxu0 0
    %6192 = vmatprep.mubr.bf16.mxu0 0
    %6193 = vmatmul.mubr.bf16.gmra.mxu0 %v5926
    %v6194 = vpop.f32.mrf.mxu0
    %v6195 = vadd.f32 0.0, %v6194
    %v6196 = vpop.f32.mrf.mxu0
    %v6197 = vadd.f32 0.0, %v6196
    %v6198 = vpop.f32.mrf.mxu0
    %v6199 = vpop.f32.mrf.mxu0
    %6200 = vdwg.mxu0
    %v6201 = vtanh.pop %v6154
    %v6202 = vtanh.pop %v6156
    %v6203 = vadd.f32 %v6195, %v6197
    %v6204 = vxor.u32 %v6203, 2147483648
    %v6205 = vmul.f32 %v6204, 1.442695
    %v6206 = vpow.pop %v6205
    %v6207 = vadd.f32 %v6206, 1.0
    %v6208 = vrcp.pop %v6207
    %v6209 = vmul.f32 1.0, %v6208
    %v6210 = vsub.f32 1.0, %v6209
    %v6211 = vmul.f32 %v6201, %v6210
    %v6212 = vmul.f32 %v6209, %v6202
    %v6213 = vadd.f32 %v6211, %v6212
    %v6214 = vtanh.pop %v6213
    %v6215 = vxor.u32 %v6213, 2147483648
    %v6216 = vmul.f32 %v6215, 1.442695
    %v6217 = vpow.pop %v6216
    %v6218 = vadd.f32 %v6217, 1.0
    %v6219 = vrcp.pop %v6218
    %v6220 = vmul.f32 1.0, %v6219
    %v6221 = vsel %vm49, %v6214, %v6220
    %s6222 = scalar_lea.vmem [#allocation7], 48
    %6223 = vst [vmem:[%s6222] sm:$0xff] %v6221
    %s6224 = scalar_lea.vmem [#allocation2], 56
    %v6225 = vld [vmem:[%s6224] sm:$0xff]
    %v6226 = vadd.f32 %v6225, %v5633
    %v6227 = vadd.f32 %v6226, %v48
    %v6228 = vpack.c.bf16 %v6227, %v6227
    %v6229 = vld [vmem:[#allocation5] sm:$0xff]
    %v6230 = vld [vmem:[#allocation5 + $0x8] sm:$0xff]
    %v6231 = vld [vmem:[#allocation5 + $0x10] sm:$0xff]
    %v6232 = vld [vmem:[#allocation5 + $0x18] sm:$0xff]
    %v6233 = vld [vmem:[#allocation5 + $0x20] sm:$0xff]
    %v6234 = vld [vmem:[#allocation5 + $0x28] sm:$0xff]
    %v6235 = vld [vmem:[#allocation5 + $0x30] sm:$0xff]
    %v6236 = vld [vmem:[#allocation5 + $0x38] sm:$0xff]
    %v6237 = vld [vmem:[#allocation5 + $0x40] sm:$0xff]
    %v6238 = vld [vmem:[#allocation5 + $0x48] sm:$0xff]
    %v6239 = vld [vmem:[#allocation5 + $0x50] sm:$0xff]
    %v6240 = vld [vmem:[#allocation5 + $0x58] sm:$0xff]
    %v6241 = vld [vmem:[#allocation5 + $0x60] sm:$0xff]
    %v6242 = vld [vmem:[#allocation5 + $0x68] sm:$0xff]
    %v6243 = vld [vmem:[#allocation5 + $0x70] sm:$0xff]
    %v6244 = vld [vmem:[#allocation5 + $0x78] sm:$0xff]
    %v6245 = vld [vmem:[#allocation5 + $0x80] sm:$0xff]
    %v6246 = vld [vmem:[#allocation5 + $0x88] sm:$0xff]
    %v6247 = vld [vmem:[#allocation5 + $0x90] sm:$0xff]
    %v6248 = vld [vmem:[#allocation5 + $0x98] sm:$0xff]
    %v6249 = vld [vmem:[#allocation5 + $0xa0] sm:$0xff]
    %v6250 = vld [vmem:[#allocation5 + $0xa8] sm:$0xff]
    %v6251 = vld [vmem:[#allocation5 + $0xb0] sm:$0xff]
    %v6252 = vld [vmem:[#allocation5 + $0xb8] sm:$0xff]
    %v6253 = vld [vmem:[#allocation5 + $0xc0] sm:$0xff]
    %v6254 = vld [vmem:[#allocation5 + $0xc8] sm:$0xff]
    %v6255 = vld [vmem:[#allocation5 + $0xd0] sm:$0xff]
    %v6256 = vld [vmem:[#allocation5 + $0xd8] sm:$0xff]
    %v6257 = vld [vmem:[#allocation5 + $0xe0] sm:$0xff]
    %v6258 = vld [vmem:[#allocation5 + $0xe8] sm:$0xff]
    %v6259 = vld [vmem:[#allocation5 + $0xf0] sm:$0xff]
    %v6260 = vld [vmem:[#allocation5 + $0xf8] sm:$0xff]
    %v6293 = vunpack.c.l.b16 %v6229
    %v6294 = vunpack.c.h.b16 %v6229
    %v6295 = vunpack.c.l.b16 %v6230
    %v6296 = vunpack.c.h.b16 %v6230
    %v6297 = vunpack.c.l.b16 %v6231
    %v6298 = vunpack.c.h.b16 %v6231
    %v6299 = vunpack.c.l.b16 %v6232
    %v6300 = vunpack.c.h.b16 %v6232
    %v6301 = vunpack.c.l.b16 %v6233
    %v6302 = vunpack.c.h.b16 %v6233
    %v6303 = vunpack.c.l.b16 %v6234
    %v6304 = vunpack.c.h.b16 %v6234
    %v6305 = vunpack.c.l.b16 %v6235
    %v6306 = vunpack.c.h.b16 %v6235
    %v6307 = vunpack.c.l.b16 %v6236
    %v6308 = vunpack.c.h.b16 %v6236
    %v6309 = vunpack.c.l.b16 %v6237
    %v6310 = vunpack.c.h.b16 %v6237
    %v6311 = vunpack.c.l.b16 %v6238
    %v6312 = vunpack.c.h.b16 %v6238
    %v6313 = vunpack.c.l.b16 %v6239
    %v6314 = vunpack.c.h.b16 %v6239
    %v6315 = vunpack.c.l.b16 %v6240
    %v6316 = vunpack.c.h.b16 %v6240
    %v6317 = vunpack.c.l.b16 %v6241
    %v6318 = vunpack.c.h.b16 %v6241
    %v6319 = vunpack.c.l.b16 %v6242
    %v6320 = vunpack.c.h.b16 %v6242
    %v6321 = vunpack.c.l.b16 %v6243
    %v6322 = vunpack.c.h.b16 %v6243
    %v6323 = vunpack.c.l.b16 %v6244
    %v6324 = vunpack.c.h.b16 %v6244
    %v6325 = vunpack.c.l.b16 %v6245
    %v6326 = vunpack.c.h.b16 %v6245
    %v6327 = vunpack.c.l.b16 %v6246
    %v6328 = vunpack.c.h.b16 %v6246
    %v6329 = vunpack.c.l.b16 %v6247
    %v6330 = vunpack.c.h.b16 %v6247
    %v6331 = vunpack.c.l.b16 %v6248
    %v6332 = vunpack.c.h.b16 %v6248
    %v6333 = vunpack.c.l.b16 %v6249
    %v6334 = vunpack.c.h.b16 %v6249
    %v6335 = vunpack.c.l.b16 %v6250
    %v6336 = vunpack.c.h.b16 %v6250
    %v6337 = vunpack.c.l.b16 %v6251
    %v6338 = vunpack.c.h.b16 %v6251
    %v6339 = vunpack.c.l.b16 %v6252
    %v6340 = vunpack.c.h.b16 %v6252
    %v6341 = vunpack.c.l.b16 %v6253
    %v6342 = vunpack.c.h.b16 %v6253
    %v6343 = vunpack.c.l.b16 %v6254
    %v6344 = vunpack.c.h.b16 %v6254
    %v6345 = vunpack.c.l.b16 %v6255
    %v6346 = vunpack.c.h.b16 %v6255
    %v6347 = vunpack.c.l.b16 %v6256
    %v6348 = vunpack.c.h.b16 %v6256
    %v6349 = vunpack.c.l.b16 %v6257
    %v6350 = vunpack.c.h.b16 %v6257
    %v6351 = vunpack.c.l.b16 %v6258
    %v6352 = vunpack.c.h.b16 %v6258
    %v6353 = vunpack.c.l.b16 %v6259
    %v6354 = vunpack.c.h.b16 %v6259
    %v6355 = vunpack.c.l.b16 %v6260
    %v6356 = vunpack.c.h.b16 %v6260
    %v6357 = vpack.c.b16 %v6297, %v6293
    %v6358 = vpack.c.b16 %v6298, %v6294
    %v6359 = vpack.c.b16 %v6299, %v6295
    %v6360 = vpack.c.b16 %v6300, %v6296
    %v6361 = vpack.c.b16 %v6305, %v6301
    %v6362 = vpack.c.b16 %v6306, %v6302
    %v6363 = vpack.c.b16 %v6307, %v6303
    %v6364 = vpack.c.b16 %v6308, %v6304
    %v6365 = vpack.c.b16 %v6313, %v6309
    %v6366 = vpack.c.b16 %v6314, %v6310
    %v6367 = vpack.c.b16 %v6315, %v6311
    %v6368 = vpack.c.b16 %v6316, %v6312
    %v6369 = vpack.c.b16 %v6321, %v6317
    %v6370 = vpack.c.b16 %v6322, %v6318
    %v6371 = vpack.c.b16 %v6323, %v6319
    %v6372 = vpack.c.b16 %v6324, %v6320
    %v6373 = vpack.c.b16 %v6329, %v6325
    %v6374 = vpack.c.b16 %v6330, %v6326
    %v6375 = vpack.c.b16 %v6331, %v6327
    %v6376 = vpack.c.b16 %v6332, %v6328
    %v6377 = vpack.c.b16 %v6337, %v6333
    %v6378 = vpack.c.b16 %v6338, %v6334
    %v6379 = vpack.c.b16 %v6339, %v6335
    %v6380 = vpack.c.b16 %v6340, %v6336
    %v6381 = vpack.c.b16 %v6345, %v6341
    %v6382 = vpack.c.b16 %v6346, %v6342
    %v6383 = vpack.c.b16 %v6347, %v6343
    %v6384 = vpack.c.b16 %v6348, %v6344
    %v6385 = vpack.c.b16 %v6353, %v6349
    %v6386 = vpack.c.b16 %v6354, %v6350
    %v6387 = vpack.c.b16 %v6355, %v6351
    %v6388 = vpack.c.b16 %v6356, %v6352
    %6421 = vmatprep.subr.bf16.mxu0 %v6386
    %6422 = vmatpush1.bf16.msra.mxu0 %v6385
    %6423 = vmatprep.subr.bf16.mxu0 %v6382
    %6424 = vmatpush1.bf16.msra.mxu0 %v6381
    %6425 = vmatprep.subr.bf16.mxu0 %v6378
    %6426 = vmatpush1.bf16.msra.mxu0 %v6377
    %6427 = vmatprep.subr.bf16.mxu0 %v6374
    %6428 = vmatpush1.bf16.msra.mxu0 %v6373
    %6429 = vmatprep.subr.bf16.mxu0 %v6370
    %6430 = vmatpush1.bf16.msra.mxu0 %v6369
    %6431 = vmatprep.subr.bf16.mxu0 %v6366
    %6432 = vmatpush1.bf16.msra.mxu0 %v6365
    %6433 = vmatprep.subr.bf16.mxu0 %v6362
    %6434 = vmatpush1.bf16.msra.mxu0 %v6361
    %6435 = vmatprep.subr.bf16.mxu0 %v6358
    %6436 = vmatpush1.bf16.msra.mxu0 %v6357
    %6437 = vmatprep.subr.bf16.mxu0 0
    %6438 = vmatpush2.bf16.msra.mxu0 0
    %6439 = vmatprep.subr.bf16.mxu0 0
    %6440 = vmatpush2.bf16.msra.mxu0 0
    %6441 = vmatprep.subr.bf16.mxu0 0
    %6442 = vmatpush2.bf16.msra.mxu0 0
    %6443 = vmatprep.subr.bf16.mxu0 0
    %6444 = vmatpush2.bf16.msra.mxu0 0
    %6445 = vmatprep.subr.bf16.mxu0 0
    %6446 = vmatpush2.bf16.msra.mxu0 0
    %6447 = vmatprep.subr.bf16.mxu0 0
    %6448 = vmatpush2.bf16.msra.mxu0 0
    %6449 = vmatprep.subr.bf16.mxu0 0
    %6450 = vmatpush2.bf16.msra.mxu0 0
    %6451 = vmatprep.subr.bf16.mxu0 0
    %6452 = vmatpush2.bf16.msra.mxu0 0
    %6453 = vmatprep.mubr.bf16.mxu0 0
    %6454 = vmatmul.mubr.bf16.gmra.mxu0 %v6228
    %v6455 = vpop.f32.mrf.mxu0
    %v6456 = vadd.f32 0.0, %v6455
    %v6457 = vpop.f32.mrf.mxu0
    %v6458 = vadd.f32 0.0, %v6457
    %v6459 = vpop.f32.mrf.mxu0
    %v6460 = vpop.f32.mrf.mxu0
    %6461 = vdwg.mxu0
    %6462 = vmatprep.subr.bf16.mxu0 %v6388
    %6463 = vmatpush1.bf16.msra.mxu0 %v6387
    %6464 = vmatprep.subr.bf16.mxu0 %v6384
    %6465 = vmatpush1.bf16.msra.mxu0 %v6383
    %6466 = vmatprep.subr.bf16.mxu0 %v6380
    %6467 = vmatpush1.bf16.msra.mxu0 %v6379
    %6468 = vmatprep.subr.bf16.mxu0 %v6376
    %6469 = vmatpush1.bf16.msra.mxu0 %v6375
    %6470 = vmatprep.subr.bf16.mxu0 %v6372
    %6471 = vmatpush1.bf16.msra.mxu0 %v6371
    %6472 = vmatprep.subr.bf16.mxu0 %v6368
    %6473 = vmatpush1.bf16.msra.mxu0 %v6367
    %6474 = vmatprep.subr.bf16.mxu0 %v6364
    %6475 = vmatpush1.bf16.msra.mxu0 %v6363
    %6476 = vmatprep.subr.bf16.mxu0 %v6360
    %6477 = vmatpush1.bf16.msra.mxu0 %v6359
    %6478 = vmatprep.subr.bf16.mxu0 0
    %6479 = vmatpush2.bf16.msra.mxu0 0
    %6480 = vmatprep.subr.bf16.mxu0 0
    %6481 = vmatpush2.bf16.msra.mxu0 0
    %6482 = vmatprep.subr.bf16.mxu0 0
    %6483 = vmatpush2.bf16.msra.mxu0 0
    %6484 = vmatprep.subr.bf16.mxu0 0
    %6485 = vmatpush2.bf16.msra.mxu0 0
    %6486 = vmatprep.subr.bf16.mxu0 0
    %6487 = vmatpush2.bf16.msra.mxu0 0
    %6488 = vmatprep.subr.bf16.mxu0 0
    %6489 = vmatpush2.bf16.msra.mxu0 0
    %6490 = vmatprep.subr.bf16.mxu0 0
    %6491 = vmatpush2.bf16.msra.mxu0 0
    %6492 = vmatprep.subr.bf16.mxu0 0
    %6493 = vmatpush2.bf16.msra.mxu0 0
    %6494 = vmatprep.mubr.bf16.mxu0 0
    %6495 = vmatmul.mubr.bf16.gmra.mxu0 %v6228
    %v6496 = vpop.f32.mrf.mxu0
    %v6497 = vadd.f32 0.0, %v6496
    %v6498 = vpop.f32.mrf.mxu0
    %v6499 = vadd.f32 0.0, %v6498
    %v6500 = vpop.f32.mrf.mxu0
    %v6501 = vpop.f32.mrf.mxu0
    %6502 = vdwg.mxu0
    %v6503 = vtanh.pop %v6456
    %v6504 = vtanh.pop %v6458
    %v6505 = vadd.f32 %v6497, %v6499
    %v6506 = vxor.u32 %v6505, 2147483648
    %v6507 = vmul.f32 %v6506, 1.442695
    %v6508 = vpow.pop %v6507
    %v6509 = vadd.f32 %v6508, 1.0
    %v6510 = vrcp.pop %v6509
    %v6511 = vmul.f32 1.0, %v6510
    %v6512 = vsub.f32 1.0, %v6511
    %v6513 = vmul.f32 %v6503, %v6512
    %v6514 = vmul.f32 %v6511, %v6504
    %v6515 = vadd.f32 %v6513, %v6514
    %v6516 = vadd.f32 %v6515, %v5923
    %v6517 = vadd.f32 %v6516, %v48
    %v6518 = vpack.c.bf16 %v6517, %v6517
    %v6519 = vld [vmem:[%s344] sm:$0xff]
    %v6520 = vld [vmem:[%s344 + $0x8] sm:$0xff]
    %v6521 = vld [vmem:[%s344 + $0x10] sm:$0xff]
    %v6522 = vld [vmem:[%s344 + $0x18] sm:$0xff]
    %v6523 = vld [vmem:[%s344 + $0x20] sm:$0xff]
    %v6524 = vld [vmem:[%s344 + $0x28] sm:$0xff]
    %v6525 = vld [vmem:[%s344 + $0x30] sm:$0xff]
    %v6526 = vld [vmem:[%s344 + $0x38] sm:$0xff]
    %v6527 = vld [vmem:[%s344 + $0x40] sm:$0xff]
    %v6528 = vld [vmem:[%s344 + $0x48] sm:$0xff]
    %v6529 = vld [vmem:[%s344 + $0x50] sm:$0xff]
    %v6530 = vld [vmem:[%s344 + $0x58] sm:$0xff]
    %v6531 = vld [vmem:[%s344 + $0x60] sm:$0xff]
    %v6532 = vld [vmem:[%s344 + $0x68] sm:$0xff]
    %v6533 = vld [vmem:[%s344 + $0x70] sm:$0xff]
    %v6534 = vld [vmem:[%s344 + $0x78] sm:$0xff]
    %v6535 = vld [vmem:[%s344 + $0x80] sm:$0xff]
    %v6536 = vld [vmem:[%s344 + $0x88] sm:$0xff]
    %v6537 = vld [vmem:[%s344 + $0x90] sm:$0xff]
    %v6538 = vld [vmem:[%s344 + $0x98] sm:$0xff]
    %v6539 = vld [vmem:[%s344 + $0xa0] sm:$0xff]
    %v6540 = vld [vmem:[%s344 + $0xa8] sm:$0xff]
    %v6541 = vld [vmem:[%s344 + $0xb0] sm:$0xff]
    %v6542 = vld [vmem:[%s344 + $0xb8] sm:$0xff]
    %v6543 = vld [vmem:[%s344 + $0xc0] sm:$0xff]
    %v6544 = vld [vmem:[%s344 + $0xc8] sm:$0xff]
    %v6545 = vld [vmem:[%s344 + $0xd0] sm:$0xff]
    %v6546 = vld [vmem:[%s344 + $0xd8] sm:$0xff]
    %v6547 = vld [vmem:[%s344 + $0xe0] sm:$0xff]
    %v6548 = vld [vmem:[%s344 + $0xe8] sm:$0xff]
    %v6549 = vld [vmem:[%s344 + $0xf0] sm:$0xff]
    %v6550 = vld [vmem:[%s344 + $0xf8] sm:$0xff]
    %v6583 = vunpack.c.l.b16 %v6519
    %v6584 = vunpack.c.h.b16 %v6519
    %v6585 = vunpack.c.l.b16 %v6520
    %v6586 = vunpack.c.h.b16 %v6520
    %v6587 = vunpack.c.l.b16 %v6521
    %v6588 = vunpack.c.h.b16 %v6521
    %v6589 = vunpack.c.l.b16 %v6522
    %v6590 = vunpack.c.h.b16 %v6522
    %v6591 = vunpack.c.l.b16 %v6523
    %v6592 = vunpack.c.h.b16 %v6523
    %v6593 = vunpack.c.l.b16 %v6524
    %v6594 = vunpack.c.h.b16 %v6524
    %v6595 = vunpack.c.l.b16 %v6525
    %v6596 = vunpack.c.h.b16 %v6525
    %v6597 = vunpack.c.l.b16 %v6526
    %v6598 = vunpack.c.h.b16 %v6526
    %v6599 = vunpack.c.l.b16 %v6527
    %v6600 = vunpack.c.h.b16 %v6527
    %v6601 = vunpack.c.l.b16 %v6528
    %v6602 = vunpack.c.h.b16 %v6528
    %v6603 = vunpack.c.l.b16 %v6529
    %v6604 = vunpack.c.h.b16 %v6529
    %v6605 = vunpack.c.l.b16 %v6530
    %v6606 = vunpack.c.h.b16 %v6530
    %v6607 = vunpack.c.l.b16 %v6531
    %v6608 = vunpack.c.h.b16 %v6531
    %v6609 = vunpack.c.l.b16 %v6532
    %v6610 = vunpack.c.h.b16 %v6532
    %v6611 = vunpack.c.l.b16 %v6533
    %v6612 = vunpack.c.h.b16 %v6533
    %v6613 = vunpack.c.l.b16 %v6534
    %v6614 = vunpack.c.h.b16 %v6534
    %v6615 = vunpack.c.l.b16 %v6535
    %v6616 = vunpack.c.h.b16 %v6535
    %v6617 = vunpack.c.l.b16 %v6536
    %v6618 = vunpack.c.h.b16 %v6536
    %v6619 = vunpack.c.l.b16 %v6537
    %v6620 = vunpack.c.h.b16 %v6537
    %v6621 = vunpack.c.l.b16 %v6538
    %v6622 = vunpack.c.h.b16 %v6538
    %v6623 = vunpack.c.l.b16 %v6539
    %v6624 = vunpack.c.h.b16 %v6539
    %v6625 = vunpack.c.l.b16 %v6540
    %v6626 = vunpack.c.h.b16 %v6540
    %v6627 = vunpack.c.l.b16 %v6541
    %v6628 = vunpack.c.h.b16 %v6541
    %v6629 = vunpack.c.l.b16 %v6542
    %v6630 = vunpack.c.h.b16 %v6542
    %v6631 = vunpack.c.l.b16 %v6543
    %v6632 = vunpack.c.h.b16 %v6543
    %v6633 = vunpack.c.l.b16 %v6544
    %v6634 = vunpack.c.h.b16 %v6544
    %v6635 = vunpack.c.l.b16 %v6545
    %v6636 = vunpack.c.h.b16 %v6545
    %v6637 = vunpack.c.l.b16 %v6546
    %v6638 = vunpack.c.h.b16 %v6546
    %v6639 = vunpack.c.l.b16 %v6547
    %v6640 = vunpack.c.h.b16 %v6547
    %v6641 = vunpack.c.l.b16 %v6548
    %v6642 = vunpack.c.h.b16 %v6548
    %v6643 = vunpack.c.l.b16 %v6549
    %v6644 = vunpack.c.h.b16 %v6549
    %v6645 = vunpack.c.l.b16 %v6550
    %v6646 = vunpack.c.h.b16 %v6550
    %v6647 = vpack.c.b16 %v6587, %v6583
    %v6648 = vpack.c.b16 %v6588, %v6584
    %v6649 = vpack.c.b16 %v6589, %v6585
    %v6650 = vpack.c.b16 %v6590, %v6586
    %v6651 = vpack.c.b16 %v6595, %v6591
    %v6652 = vpack.c.b16 %v6596, %v6592
    %v6653 = vpack.c.b16 %v6597, %v6593
    %v6654 = vpack.c.b16 %v6598, %v6594
    %v6655 = vpack.c.b16 %v6603, %v6599
    %v6656 = vpack.c.b16 %v6604, %v6600
    %v6657 = vpack.c.b16 %v6605, %v6601
    %v6658 = vpack.c.b16 %v6606, %v6602
    %v6659 = vpack.c.b16 %v6611, %v6607
    %v6660 = vpack.c.b16 %v6612, %v6608
    %v6661 = vpack.c.b16 %v6613, %v6609
    %v6662 = vpack.c.b16 %v6614, %v6610
    %v6663 = vpack.c.b16 %v6619, %v6615
    %v6664 = vpack.c.b16 %v6620, %v6616
    %v6665 = vpack.c.b16 %v6621, %v6617
    %v6666 = vpack.c.b16 %v6622, %v6618
    %v6667 = vpack.c.b16 %v6627, %v6623
    %v6668 = vpack.c.b16 %v6628, %v6624
    %v6669 = vpack.c.b16 %v6629, %v6625
    %v6670 = vpack.c.b16 %v6630, %v6626
    %v6671 = vpack.c.b16 %v6635, %v6631
    %v6672 = vpack.c.b16 %v6636, %v6632
    %v6673 = vpack.c.b16 %v6637, %v6633
    %v6674 = vpack.c.b16 %v6638, %v6634
    %v6675 = vpack.c.b16 %v6643, %v6639
    %v6676 = vpack.c.b16 %v6644, %v6640
    %v6677 = vpack.c.b16 %v6645, %v6641
    %v6678 = vpack.c.b16 %v6646, %v6642
    %6711 = vmatprep.subr.bf16.mxu0 %v6676
    %6712 = vmatpush1.bf16.msra.mxu0 %v6675
    %6713 = vmatprep.subr.bf16.mxu0 %v6672
    %6714 = vmatpush1.bf16.msra.mxu0 %v6671
    %6715 = vmatprep.subr.bf16.mxu0 %v6668
    %6716 = vmatpush1.bf16.msra.mxu0 %v6667
    %6717 = vmatprep.subr.bf16.mxu0 %v6664
    %6718 = vmatpush1.bf16.msra.mxu0 %v6663
    %6719 = vmatprep.subr.bf16.mxu0 %v6660
    %6720 = vmatpush1.bf16.msra.mxu0 %v6659
    %6721 = vmatprep.subr.bf16.mxu0 %v6656
    %6722 = vmatpush1.bf16.msra.mxu0 %v6655
    %6723 = vmatprep.subr.bf16.mxu0 %v6652
    %6724 = vmatpush1.bf16.msra.mxu0 %v6651
    %6725 = vmatprep.subr.bf16.mxu0 %v6648
    %6726 = vmatpush1.bf16.msra.mxu0 %v6647
    %6727 = vmatprep.subr.bf16.mxu0 0
    %6728 = vmatpush2.bf16.msra.mxu0 0
    %6729 = vmatprep.subr.bf16.mxu0 0
    %6730 = vmatpush2.bf16.msra.mxu0 0
    %6731 = vmatprep.subr.bf16.mxu0 0
    %6732 = vmatpush2.bf16.msra.mxu0 0
    %6733 = vmatprep.subr.bf16.mxu0 0
    %6734 = vmatpush2.bf16.msra.mxu0 0
    %6735 = vmatprep.subr.bf16.mxu0 0
    %6736 = vmatpush2.bf16.msra.mxu0 0
    %6737 = vmatprep.subr.bf16.mxu0 0
    %6738 = vmatpush2.bf16.msra.mxu0 0
    %6739 = vmatprep.subr.bf16.mxu0 0
    %6740 = vmatpush2.bf16.msra.mxu0 0
    %6741 = vmatprep.subr.bf16.mxu0 0
    %6742 = vmatpush2.bf16.msra.mxu0 0
    %6743 = vmatprep.mubr.bf16.mxu0 0
    %6744 = vmatmul.mubr.bf16.gmra.mxu0 %v6518
    %v6745 = vpop.f32.mrf.mxu0
    %v6746 = vadd.f32 0.0, %v6745
    %v6747 = vpop.f32.mrf.mxu0
    %v6748 = vadd.f32 0.0, %v6747
    %v6749 = vpop.f32.mrf.mxu0
    %v6750 = vpop.f32.mrf.mxu0
    %6751 = vdwg.mxu0
    %6752 = vmatprep.subr.bf16.mxu0 %v6678
    %6753 = vmatpush1.bf16.msra.mxu0 %v6677
    %6754 = vmatprep.subr.bf16.mxu0 %v6674
    %6755 = vmatpush1.bf16.msra.mxu0 %v6673
    %6756 = vmatprep.subr.bf16.mxu0 %v6670
    %6757 = vmatpush1.bf16.msra.mxu0 %v6669
    %6758 = vmatprep.subr.bf16.mxu0 %v6666
    %6759 = vmatpush1.bf16.msra.mxu0 %v6665
    %6760 = vmatprep.subr.bf16.mxu0 %v6662
    %6761 = vmatpush1.bf16.msra.mxu0 %v6661
    %6762 = vmatprep.subr.bf16.mxu0 %v6658
    %6763 = vmatpush1.bf16.msra.mxu0 %v6657
    %6764 = vmatprep.subr.bf16.mxu0 %v6654
    %6765 = vmatpush1.bf16.msra.mxu0 %v6653
    %6766 = vmatprep.subr.bf16.mxu0 %v6650
    %6767 = vmatpush1.bf16.msra.mxu0 %v6649
    %6768 = vmatprep.subr.bf16.mxu0 0
    %6769 = vmatpush2.bf16.msra.mxu0 0
    %6770 = vmatprep.subr.bf16.mxu0 0
    %6771 = vmatpush2.bf16.msra.mxu0 0
    %6772 = vmatprep.subr.bf16.mxu0 0
    %6773 = vmatpush2.bf16.msra.mxu0 0
    %6774 = vmatprep.subr.bf16.mxu0 0
    %6775 = vmatpush2.bf16.msra.mxu0 0
    %6776 = vmatprep.subr.bf16.mxu0 0
    %6777 = vmatpush2.bf16.msra.mxu0 0
    %6778 = vmatprep.subr.bf16.mxu0 0
    %6779 = vmatpush2.bf16.msra.mxu0 0
    %6780 = vmatprep.subr.bf16.mxu0 0
    %6781 = vmatpush2.bf16.msra.mxu0 0
    %6782 = vmatprep.subr.bf16.mxu0 0
    %6783 = vmatpush2.bf16.msra.mxu0 0
    %6784 = vmatprep.mubr.bf16.mxu0 0
    %6785 = vmatmul.mubr.bf16.gmra.mxu0 %v6518
    %v6786 = vpop.f32.mrf.mxu0
    %v6787 = vadd.f32 0.0, %v6786
    %v6788 = vpop.f32.mrf.mxu0
    %v6789 = vadd.f32 0.0, %v6788
    %v6790 = vpop.f32.mrf.mxu0
    %v6791 = vpop.f32.mrf.mxu0
    %6792 = vdwg.mxu0
    %v6793 = vtanh.pop %v6746
    %v6794 = vtanh.pop %v6748
    %v6795 = vadd.f32 %v6787, %v6789
    %v6796 = vxor.u32 %v6795, 2147483648
    %v6797 = vmul.f32 %v6796, 1.442695
    %v6798 = vpow.pop %v6797
    %v6799 = vadd.f32 %v6798, 1.0
    %v6800 = vrcp.pop %v6799
    %v6801 = vmul.f32 1.0, %v6800
    %v6802 = vsub.f32 1.0, %v6801
    %v6803 = vmul.f32 %v6793, %v6802
    %v6804 = vmul.f32 %v6801, %v6794
    %v6805 = vadd.f32 %v6803, %v6804
    %v6806 = vadd.f32 %v6805, %v6213
    %v6807 = vadd.f32 %v6806, %v48
    %v6808 = vpack.c.bf16 %v6807, %v6807
    %v6809 = vld [vmem:[%s635] sm:$0xff]
    %v6810 = vld [vmem:[%s635 + $0x8] sm:$0xff]
    %v6811 = vld [vmem:[%s635 + $0x10] sm:$0xff]
    %v6812 = vld [vmem:[%s635 + $0x18] sm:$0xff]
    %v6813 = vld [vmem:[%s635 + $0x20] sm:$0xff]
    %v6814 = vld [vmem:[%s635 + $0x28] sm:$0xff]
    %v6815 = vld [vmem:[%s635 + $0x30] sm:$0xff]
    %v6816 = vld [vmem:[%s635 + $0x38] sm:$0xff]
    %v6817 = vld [vmem:[%s635 + $0x40] sm:$0xff]
    %v6818 = vld [vmem:[%s635 + $0x48] sm:$0xff]
    %v6819 = vld [vmem:[%s635 + $0x50] sm:$0xff]
    %v6820 = vld [vmem:[%s635 + $0x58] sm:$0xff]
    %v6821 = vld [vmem:[%s635 + $0x60] sm:$0xff]
    %v6822 = vld [vmem:[%s635 + $0x68] sm:$0xff]
    %v6823 = vld [vmem:[%s635 + $0x70] sm:$0xff]
    %v6824 = vld [vmem:[%s635 + $0x78] sm:$0xff]
    %v6825 = vld [vmem:[%s635 + $0x80] sm:$0xff]
    %v6826 = vld [vmem:[%s635 + $0x88] sm:$0xff]
    %v6827 = vld [vmem:[%s635 + $0x90] sm:$0xff]
    %v6828 = vld [vmem:[%s635 + $0x98] sm:$0xff]
    %v6829 = vld [vmem:[%s635 + $0xa0] sm:$0xff]
    %v6830 = vld [vmem:[%s635 + $0xa8] sm:$0xff]
    %v6831 = vld [vmem:[%s635 + $0xb0] sm:$0xff]
    %v6832 = vld [vmem:[%s635 + $0xb8] sm:$0xff]
    %v6833 = vld [vmem:[%s635 + $0xc0] sm:$0xff]
    %v6834 = vld [vmem:[%s635 + $0xc8] sm:$0xff]
    %v6835 = vld [vmem:[%s635 + $0xd0] sm:$0xff]
    %v6836 = vld [vmem:[%s635 + $0xd8] sm:$0xff]
    %v6837 = vld [vmem:[%s635 + $0xe0] sm:$0xff]
    %v6838 = vld [vmem:[%s635 + $0xe8] sm:$0xff]
    %v6839 = vld [vmem:[%s635 + $0xf0] sm:$0xff]
    %v6840 = vld [vmem:[%s635 + $0xf8] sm:$0xff]
    %v6873 = vunpack.c.l.b16 %v6809
    %v6874 = vunpack.c.h.b16 %v6809
    %v6875 = vunpack.c.l.b16 %v6810
    %v6876 = vunpack.c.h.b16 %v6810
    %v6877 = vunpack.c.l.b16 %v6811
    %v6878 = vunpack.c.h.b16 %v6811
    %v6879 = vunpack.c.l.b16 %v6812
    %v6880 = vunpack.c.h.b16 %v6812
    %v6881 = vunpack.c.l.b16 %v6813
    %v6882 = vunpack.c.h.b16 %v6813
    %v6883 = vunpack.c.l.b16 %v6814
    %v6884 = vunpack.c.h.b16 %v6814
    %v6885 = vunpack.c.l.b16 %v6815
    %v6886 = vunpack.c.h.b16 %v6815
    %v6887 = vunpack.c.l.b16 %v6816
    %v6888 = vunpack.c.h.b16 %v6816
    %v6889 = vunpack.c.l.b16 %v6817
    %v6890 = vunpack.c.h.b16 %v6817
    %v6891 = vunpack.c.l.b16 %v6818
    %v6892 = vunpack.c.h.b16 %v6818
    %v6893 = vunpack.c.l.b16 %v6819
    %v6894 = vunpack.c.h.b16 %v6819
    %v6895 = vunpack.c.l.b16 %v6820
    %v6896 = vunpack.c.h.b16 %v6820
    %v6897 = vunpack.c.l.b16 %v6821
    %v6898 = vunpack.c.h.b16 %v6821
    %v6899 = vunpack.c.l.b16 %v6822
    %v6900 = vunpack.c.h.b16 %v6822
    %v6901 = vunpack.c.l.b16 %v6823
    %v6902 = vunpack.c.h.b16 %v6823
    %v6903 = vunpack.c.l.b16 %v6824
    %v6904 = vunpack.c.h.b16 %v6824
    %v6905 = vunpack.c.l.b16 %v6825
    %v6906 = vunpack.c.h.b16 %v6825
    %v6907 = vunpack.c.l.b16 %v6826
    %v6908 = vunpack.c.h.b16 %v6826
    %v6909 = vunpack.c.l.b16 %v6827
    %v6910 = vunpack.c.h.b16 %v6827
    %v6911 = vunpack.c.l.b16 %v6828
    %v6912 = vunpack.c.h.b16 %v6828
    %v6913 = vunpack.c.l.b16 %v6829
    %v6914 = vunpack.c.h.b16 %v6829
    %v6915 = vunpack.c.l.b16 %v6830
    %v6916 = vunpack.c.h.b16 %v6830
    %v6917 = vunpack.c.l.b16 %v6831
    %v6918 = vunpack.c.h.b16 %v6831
    %v6919 = vunpack.c.l.b16 %v6832
    %v6920 = vunpack.c.h.b16 %v6832
    %v6921 = vunpack.c.l.b16 %v6833
    %v6922 = vunpack.c.h.b16 %v6833
    %v6923 = vunpack.c.l.b16 %v6834
    %v6924 = vunpack.c.h.b16 %v6834
    %v6925 = vunpack.c.l.b16 %v6835
    %v6926 = vunpack.c.h.b16 %v6835
    %v6927 = vunpack.c.l.b16 %v6836
    %v6928 = vunpack.c.h.b16 %v6836
    %v6929 = vunpack.c.l.b16 %v6837
    %v6930 = vunpack.c.h.b16 %v6837
    %v6931 = vunpack.c.l.b16 %v6838
    %v6932 = vunpack.c.h.b16 %v6838
    %v6933 = vunpack.c.l.b16 %v6839
    %v6934 = vunpack.c.h.b16 %v6839
    %v6935 = vunpack.c.l.b16 %v6840
    %v6936 = vunpack.c.h.b16 %v6840
    %v6937 = vpack.c.b16 %v6877, %v6873
    %v6938 = vpack.c.b16 %v6878, %v6874
    %v6939 = vpack.c.b16 %v6879, %v6875
    %v6940 = vpack.c.b16 %v6880, %v6876
    %v6941 = vpack.c.b16 %v6885, %v6881
    %v6942 = vpack.c.b16 %v6886, %v6882
    %v6943 = vpack.c.b16 %v6887, %v6883
    %v6944 = vpack.c.b16 %v6888, %v6884
    %v6945 = vpack.c.b16 %v6893, %v6889
    %v6946 = vpack.c.b16 %v6894, %v6890
    %v6947 = vpack.c.b16 %v6895, %v6891
    %v6948 = vpack.c.b16 %v6896, %v6892
    %v6949 = vpack.c.b16 %v6901, %v6897
    %v6950 = vpack.c.b16 %v6902, %v6898
    %v6951 = vpack.c.b16 %v6903, %v6899
    %v6952 = vpack.c.b16 %v6904, %v6900
    %v6953 = vpack.c.b16 %v6909, %v6905
    %v6954 = vpack.c.b16 %v6910, %v6906
    %v6955 = vpack.c.b16 %v6911, %v6907
    %v6956 = vpack.c.b16 %v6912, %v6908
    %v6957 = vpack.c.b16 %v6917, %v6913
    %v6958 = vpack.c.b16 %v6918, %v6914
    %v6959 = vpack.c.b16 %v6919, %v6915
    %v6960 = vpack.c.b16 %v6920, %v6916
    %v6961 = vpack.c.b16 %v6925, %v6921
    %v6962 = vpack.c.b16 %v6926, %v6922
    %v6963 = vpack.c.b16 %v6927, %v6923
    %v6964 = vpack.c.b16 %v6928, %v6924
    %v6965 = vpack.c.b16 %v6933, %v6929
    %v6966 = vpack.c.b16 %v6934, %v6930
    %v6967 = vpack.c.b16 %v6935, %v6931
    %v6968 = vpack.c.b16 %v6936, %v6932
    %7001 = vmatprep.subr.bf16.mxu0 %v6966
    %7002 = vmatpush1.bf16.msra.mxu0 %v6965
    %7003 = vmatprep.subr.bf16.mxu0 %v6962
    %7004 = vmatpush1.bf16.msra.mxu0 %v6961
    %7005 = vmatprep.subr.bf16.mxu0 %v6958
    %7006 = vmatpush1.bf16.msra.mxu0 %v6957
    %7007 = vmatprep.subr.bf16.mxu0 %v6954
    %7008 = vmatpush1.bf16.msra.mxu0 %v6953
    %7009 = vmatprep.subr.bf16.mxu0 %v6950
    %7010 = vmatpush1.bf16.msra.mxu0 %v6949
    %7011 = vmatprep.subr.bf16.mxu0 %v6946
    %7012 = vmatpush1.bf16.msra.mxu0 %v6945
    %7013 = vmatprep.subr.bf16.mxu0 %v6942
    %7014 = vmatpush1.bf16.msra.mxu0 %v6941
    %7015 = vmatprep.subr.bf16.mxu0 %v6938
    %7016 = vmatpush1.bf16.msra.mxu0 %v6937
    %7017 = vmatprep.subr.bf16.mxu0 0
    %7018 = vmatpush2.bf16.msra.mxu0 0
    %7019 = vmatprep.subr.bf16.mxu0 0
    %7020 = vmatpush2.bf16.msra.mxu0 0
    %7021 = vmatprep.subr.bf16.mxu0 0
    %7022 = vmatpush2.bf16.msra.mxu0 0
    %7023 = vmatprep.subr.bf16.mxu0 0
    %7024 = vmatpush2.bf16.msra.mxu0 0
    %7025 = vmatprep.subr.bf16.mxu0 0
    %7026 = vmatpush2.bf16.msra.mxu0 0
    %7027 = vmatprep.subr.bf16.mxu0 0
    %7028 = vmatpush2.bf16.msra.mxu0 0
    %7029 = vmatprep.subr.bf16.mxu0 0
    %7030 = vmatpush2.bf16.msra.mxu0 0
    %7031 = vmatprep.subr.bf16.mxu0 0
    %7032 = vmatpush2.bf16.msra.mxu0 0
    %7033 = vmatprep.mubr.bf16.mxu0 0
    %7034 = vmatmul.mubr.bf16.gmra.mxu0 %v6808
    %v7035 = vpop.f32.mrf.mxu0
    %v7036 = vadd.f32 0.0, %v7035
    %v7037 = vpop.f32.mrf.mxu0
    %v7038 = vadd.f32 0.0, %v7037
    %v7039 = vpop.f32.mrf.mxu0
    %v7040 = vpop.f32.mrf.mxu0
    %7041 = vdwg.mxu0
    %7042 = vmatprep.subr.bf16.mxu0 %v6968
    %7043 = vmatpush1.bf16.msra.mxu0 %v6967
    %7044 = vmatprep.subr.bf16.mxu0 %v6964
    %7045 = vmatpush1.bf16.msra.mxu0 %v6963
    %7046 = vmatprep.subr.bf16.mxu0 %v6960
    %7047 = vmatpush1.bf16.msra.mxu0 %v6959
    %7048 = vmatprep.subr.bf16.mxu0 %v6956
    %7049 = vmatpush1.bf16.msra.mxu0 %v6955
    %7050 = vmatprep.subr.bf16.mxu0 %v6952
    %7051 = vmatpush1.bf16.msra.mxu0 %v6951
    %7052 = vmatprep.subr.bf16.mxu0 %v6948
    %7053 = vmatpush1.bf16.msra.mxu0 %v6947
    %7054 = vmatprep.subr.bf16.mxu0 %v6944
    %7055 = vmatpush1.bf16.msra.mxu0 %v6943
    %7056 = vmatprep.subr.bf16.mxu0 %v6940
    %7057 = vmatpush1.bf16.msra.mxu0 %v6939
    %7058 = vmatprep.subr.bf16.mxu0 0
    %7059 = vmatpush2.bf16.msra.mxu0 0
    %7060 = vmatprep.subr.bf16.mxu0 0
    %7061 = vmatpush2.bf16.msra.mxu0 0
    %7062 = vmatprep.subr.bf16.mxu0 0
    %7063 = vmatpush2.bf16.msra.mxu0 0
    %7064 = vmatprep.subr.bf16.mxu0 0
    %7065 = vmatpush2.bf16.msra.mxu0 0
    %7066 = vmatprep.subr.bf16.mxu0 0
    %7067 = vmatpush2.bf16.msra.mxu0 0
    %7068 = vmatprep.subr.bf16.mxu0 0
    %7069 = vmatpush2.bf16.msra.mxu0 0
    %7070 = vmatprep.subr.bf16.mxu0 0
    %7071 = vmatpush2.bf16.msra.mxu0 0
    %7072 = vmatprep.subr.bf16.mxu0 0
    %7073 = vmatpush2.bf16.msra.mxu0 0
    %7074 = vmatprep.mubr.bf16.mxu0 0
    %7075 = vmatmul.mubr.bf16.gmra.mxu0 %v6808
    %v7076 = vpop.f32.mrf.mxu0
    %v7077 = vadd.f32 0.0, %v7076
    %v7078 = vpop.f32.mrf.mxu0
    %v7079 = vadd.f32 0.0, %v7078
    %v7080 = vpop.f32.mrf.mxu0
    %v7081 = vpop.f32.mrf.mxu0
    %7082 = vdwg.mxu0
    %v7083 = vtanh.pop %v7036
    %v7084 = vtanh.pop %v7038
    %v7085 = vadd.f32 %v7077, %v7079
    %v7086 = vxor.u32 %v7085, 2147483648
    %v7087 = vmul.f32 %v7086, 1.442695
    %v7088 = vpow.pop %v7087
    %v7089 = vadd.f32 %v7088, 1.0
    %v7090 = vrcp.pop %v7089
    %v7091 = vmul.f32 1.0, %v7090
    %v7092 = vsub.f32 1.0, %v7091
    %v7093 = vmul.f32 %v7083, %v7092
    %v7094 = vmul.f32 %v7091, %v7084
    %v7095 = vadd.f32 %v7093, %v7094
    %v7096 = vtanh.pop %v7095
    %v7097 = vxor.u32 %v7095, 2147483648
    %v7098 = vmul.f32 %v7097, 1.442695
    %v7099 = vpow.pop %v7098
    %v7100 = vadd.f32 %v7099, 1.0
    %v7101 = vrcp.pop %v7100
    %v7102 = vmul.f32 1.0, %v7101
    %v7103 = vsel %vm49, %v7096, %v7102
    %s7104 = scalar_lea.vmem [#allocation7], 56
    %7105 = vst [vmem:[%s7104] sm:$0xff] %v7103
    %7106 = vst [vmem:[#allocation8] sm:$0xff] %v6515
    %s7107 = scalar_lea.vmem [#allocation8], 8
    %7108 = vst [vmem:[%s7107] sm:$0xff] %v6805
    %s7109 = scalar_lea.vmem [#allocation8], 16
    %7110 = vst [vmem:[%s7109] sm:$0xff] %v7095
    // Predicated region
    $region18: #{tpu_custom_call.1} parent=1 // pred_check
      _
    $region19: #{tpu_custom_call.1} parent=1 // pred_check_branch
      %7112 = sbr.rel (0) target = $region21
    $region20: #{tpu_custom_call.1} parent=1 // pred_region
      %s7114 = ssub.s32 1024, 1024
      %7115 = vsyncadd [#allocation4], %s7114
      %s7116 = sshll.u32 [#allocation7], 4
      %s7117 = int_to_ptr.vmem [resolvable:$true] %s7116
      %7122 = dma.vmem_to_hbm [thread:$0]  %s7117, 1024, %s2, [#allocation4], 128, 128, 8
    $region21: #{tpu_custom_call.1} parent=1 // pred_fallthru
      _
    // Predicated region
    $region22: #{tpu_custom_call.1} parent=1 // pred_check
      _
    $region23: #{tpu_custom_call.1} parent=1 // pred_check_branch
      %7124 = sbr.rel (0) target = $region25
    $region24: #{tpu_custom_call.1} parent=1 // pred_region
      %s7126 = ssub.s32 384, 384
      %7127 = vsyncadd [#allocation9], %s7126
      %s7128 = sshll.u32 [#allocation8], 4
      %s7129 = int_to_ptr.vmem [resolvable:$true] %s7128
      %7134 = dma.vmem_to_hbm [thread:$0]  %s7129, 384, %s3, [#allocation9], 128, 128, 8
    $region25: #{tpu_custom_call.1} parent=1 // pred_fallthru
      _
    // Predicated region
    $region26: #{tpu_custom_call.1} parent=1 // pred_check
      _
    $region27: #{tpu_custom_call.1} parent=1 // pred_check_branch
      %7136 = sbr.rel (0) target = $region29
    $region28: #{tpu_custom_call.1} parent=1 // pred_region
      %7137 = dma.done [#allocation4], 1024
    $region29: #{tpu_custom_call.1} parent=1 // pred_fallthru
      _
    // Predicated region
    $region30: #{tpu_custom_call.1} parent=1 // pred_check
      _
    $region31: #{tpu_custom_call.1} parent=1 // pred_check_branch
      %7139 = sbr.rel (0) target = $region33
    $region32: #{tpu_custom_call.1} parent=1 // pred_region
      %7140 = dma.done [#allocation9], 384
    $region33: #{tpu_custom_call.1} parent=1 // pred_fallthru
      _
    %7141 = vsyncpa [#allocation3], 1
    %7142 = vsyncpa [#allocation6], 1
    %7143 = vsyncpa [#allocation4], 1
    %7144 = vsyncpa [#allocation9], 1

</llo_original>
